<compile_context>
chip_gen: v7x
topology: tpu7x:2x2x1
jax: 0.10.0
libtpu: 0.0.40
codegen_flags: <defaults>
</compile_context>

<pallas_src>
import functools

import jax
import jax.numpy as jnp
import numpy as np
from jax import lax
from jax.experimental import pallas as pl
from jax.experimental.pallas import tpu as pltpu

KS = 5          # conv kernel size
PAD = 2         # "same" padding for 5x5, stride 1
C1 = 16         # channels after conv1 (module spec)
C2 = 32         # channels after conv2 (module spec)

# bf16 operands are MXU-native on v5e/v6e/v7x (f32 operands run multi-pass).
# The end-to-end check below uses a 3e-2 tolerance; with jnp.float32 here it
# passes at 1e-4.
MATMUL_DTYPE = jnp.bfloat16


def _round_up(x, m):
    return (x + m - 1) // m * m


# ---------------------------------------------------------------------------
# In-kernel helpers: whole-array shifts with zero fill.  Implemented with a
# slice + concatenate so the shift direction is unambiguous; the work rides
# the copy/shift path and is small next to the matmuls.
# ---------------------------------------------------------------------------
def _shift_rows(x, k):
    """result[r, :] = x[r + k, :]; rows shifted past either edge become 0."""
    if k == 0:
        return x
    rows, cols = x.shape
    zeros = jnp.zeros((abs(k), cols), x.dtype)
    if k > 0:
        return jnp.concatenate([x[k:, :], zeros], axis=0)
    return jnp.concatenate([zeros, x[:rows + k, :]], axis=0)


def _shift_lanes(x, k):
    """result[:, l] = x[:, l + k]  (k > 0); columns past the edge become 0."""
    rows, _ = x.shape
    zeros = jnp.zeros((rows, k), x.dtype)
    return jnp.concatenate([x[:, k:], zeros], axis=1)


# ---------------------------------------------------------------------------
# Fused network kernel: one grid step processes a batch tile of `bt` images.
# Row axis (sublanes) = (image, padded image row); lane axis = (w, channel).
# ---------------------------------------------------------------------------
def _cnn_fused_kernel(x_ref, w1_ref, b1_ref, w2_ref, b2_ref, wf_ref, bf_ref,
                      o_ref, *, bt, s):
    sp = s + 2 * PAD            # padded rows per image (32 for s=28)
    s1, s2 = s // 2, s // 4     # spatial size after pool1 / pool2
    n1, n2 = s * C1, s1 * C2    # conv1 / conv2 lane widths (w major, c minor)
    np1 = _round_up(n1, 128)    # kh-block stride inside the band weights
    np2 = _round_up(n2, 128)
    rows = bt * sp

    x = x_ref[...]                                          # (rows, sp*cin)

    # ---- conv1: one band matmul; the 5 kh taps are accumulated by shifting
    # the matmul *result* (no shifted loads, no im2col scratch). -------------
    z1 = jnp.dot(x, w1_ref[...], preferred_element_type=jnp.float32)
    out1 = z1[:, :n1]
    for kh in range(1, KS):
        out1 = out1 + _shift_rows(z1[:, kh * np1:kh * np1 + n1], kh)

    # Bias + ReLU.  Rows s..sp-1 of every image hold shift wrap-around
    # garbage -> zero them so the later row shifts stay exact.
    row_in_img = lax.broadcasted_iota(jnp.int32, (rows, 1), 0) % sp
    y1 = jnp.where(row_in_img < s,
                   jnp.maximum(out1 + b1_ref[...], 0.0), 0.0)

    # ---- maxpool 2x2: pairwise maxima against shifted copies.  Pooled
    # values live at even rows / even (w)-groups; the stride-2 selection is
    # folded into the next layer's (zero-row) band weights for free. --------
    p1 = jnp.maximum(y1, _shift_lanes(y1, C1))          # pool over w
    p1 = jnp.maximum(p1, _shift_rows(p1, 1))            # pool over h

    # ---- conv2: band matmul on the (still strided) pooled layout ----------
    z2 = jnp.dot(p1.astype(MATMUL_DTYPE), w2_ref[...],
                 preferred_element_type=jnp.float32)
    out2 = _shift_rows(z2[:, :n2], -2 * PAD)
    for kh in range(1, KS):
        out2 = out2 + _shift_rows(z2[:, kh * np2:kh * np2 + n2],
                                  2 * kh - 2 * PAD)
    y2 = jnp.maximum(out2 + b2_ref[...], 0.0)

    # ---- maxpool 2x2 (valid data ends up at rows 4*h2, lanes (2*w2)*C2+c) --
    p2 = jnp.maximum(y2, _shift_lanes(y2, C2))
    p2 = jnp.maximum(p2, _shift_rows(p2, 2))

    # ---- FC: gather the s2 valid rows per image into one lane-dense slab.
    # The even-w selection and the PyTorch NCHW flatten order live in the
    # zero / permuted rows of wf_ref (built at init time).
    p2 = p2.reshape(bt, sp, n2)
    flat = jnp.concatenate([p2[:, 4 * h, :] for h in range(s2)], axis=1)
    logits = jnp.dot(flat.astype(MATMUL_DTYPE), wf_ref[...],
                     preferred_element_type=jnp.float32) + bf_ref[...]
    o_ref[...] = logits.astype(o_ref.dtype)


# ---------------------------------------------------------------------------
# Wrapper: one pallas_call for the whole network.
# ---------------------------------------------------------------------------
def cnn_forward(x_nchw, kparams, *, batch_tile=8):
    w1b, b1r, w2b, b2r, wfb, bfr = kparams
    B, cin, H, W = x_nchw.shape
    assert H == W and H % 4 == 0, "square input with H divisible by 4 expected"
    s = H
    sp = s + 2 * PAD
    s1, s2 = s // 2, s // 4
    n1, n2 = s * C1, s1 * C2
    np1, np2 = _round_up(n1, 128), _round_up(n2, 128)
    ncls = wfb.shape[1]

    bt = min(batch_tile, B)
    assert B % bt == 0, "batch must be divisible by the batch tile"

    # Lane-dense input slab: padded NHWC rows, (w, c) fused on the lane axis.
    x_nhwc = jnp.transpose(x_nchw, (0, 2, 3, 1))
    x_pad = jnp.pad(x_nhwc, ((0, 0), (PAD, PAD), (PAD, PAD), (0, 0)))
    x2d = x_pad.reshape(B * sp, sp * cin).astype(MATMUL_DTYPE)

    kernel = functools.partial(_cnn_fused_kernel, bt=bt, s=s)

    return pl.pallas_call(
        kernel,
        out_shape=jax.ShapeDtypeStruct((B, ncls), jnp.float32),
        grid_spec=pltpu.PrefetchScalarGridSpec(
            num_scalar_prefetch=0,
            grid=(B // bt,),
            in_specs=[
                pl.BlockSpec((bt * sp, sp * cin), lambda i: (i, 0)),
                pl.BlockSpec((sp * cin, KS * np1), lambda i: (0, 0)),
                pl.BlockSpec((1, n1), lambda i: (0, 0)),
                pl.BlockSpec((n1, KS * np2), lambda i: (0, 0)),
                pl.BlockSpec((1, n2), lambda i: (0, 0)),
                pl.BlockSpec((s2 * n2, ncls), lambda i: (0, 0)),
                pl.BlockSpec((1, ncls), lambda i: (0, 0)),
            ],
            out_specs=pl.BlockSpec((bt, ncls), lambda i: (i, 0)),
        ),
        compiler_params=pltpu.CompilerParams(
            # No cross-step state (no scratch, no pl.when init) -> safe to
            # shard across v7x's two TensorCores.
            dimension_semantics=("parallel",),
            # Explicit limit: fits v5e/v6e (128 MiB) and v7x (64 MiB) while
            # comfortably covering weights + compiler-managed temporaries.
            vmem_limit_bytes=48 * 1024 * 1024,
        ),
    )(x2d, w1b, b1r, w2b, b2r, wfb, bfr)


# ---------------------------------------------------------------------------
# Parameters: PyTorch-layout init + init-time conversion to kernel layouts.
# ---------------------------------------------------------------------------
def init_torch_params(key, input_channel, input_size, num_classes):
    """Deterministic params in PyTorch layouts (Conv OIHW, Linear (out, in))."""
    k1, k2, k3, k4, k5, k6 = jax.random.split(key, 6)

    def conv_w(k, cin, cout):
        fan_in = cin * KS * KS
        return jax.random.normal(k, (cout, cin, KS, KS), jnp.float32) / jnp.sqrt(fan_in)

    w1 = conv_w(k1, input_channel, C1)
    b1 = jax.random.normal(k2, (C1,), jnp.float32) * 0.01
    w2 = conv_w(k3, C1, C2)
    b2 = jax.random.normal(k4, (C2,), jnp.float32) * 0.01
    feat = C2 * (input_size // 4) ** 2
    wf = jax.random.normal(k5, (num_classes, feat), jnp.float32) / jnp.sqrt(feat)
    bf = jax.random.normal(k6, (num_classes,), jnp.float32) * 0.01
    return w1, b1, w2, b2, wf, bf


def to_kernel_params(torch_params, input_size):
    """Bake the 5x5 windows, the pooling stride-2 selection and the NCHW
    flatten order into band/selection weight matrices (init time only)."""
    w1, b1, w2, b2, wf, bf = [np.asarray(p, np.float32) for p in torch_params]
    s = input_size
    sp = s + 2 * PAD
    s1, s2 = s // 2, s // 4
    cin = w1.shape[1]
    n1, n2 = s * C1, s1 * C2
    np1, np2 = _round_up(n1, 128), _round_up(n2, 128)
    ncls = wf.shape[0]

    # conv1 band: rows = (w_pad, ci) of one padded image row; cols = (kh, w, c).
    w1b = np.zeros((sp * cin, KS * np1), np.float32)
    for kh in range(KS):
        for w in range(s):
            for kw in range(KS):
                wi = w + kw
                w1b[wi * cin:(wi + 1) * cin,
                    kh * np1 + w * C1: kh * np1 + (w + 1) * C1] = w1[:, :, kh, kw].T

    # conv2 band: rows = the un-downsampled pooled lane index (w, ci); only
    # even-w rows are populated (implements the stride-2 w-pool selection).
    w2b = np.zeros((n1, KS * np2), np.float32)
    for kh in range(KS):
        for w2i in range(s1):
            for kw in range(KS):
                wp = w2i + kw - PAD
                if 0 <= wp < s1:
                    r0 = (2 * wp) * C1
                    w2b[r0:r0 + C1,
                        kh * np2 + w2i * C2: kh * np2 + (w2i + 1) * C2] = \
                        w2[:, :, kh, kw].T

    # FC: rows = (h2, un-downsampled w2 lane index); only even-w2 rows used.
    # PyTorch flattens NCHW: feature index = co*s2*s2 + h*s2 + w.
    wfb = np.zeros((s2 * n2, ncls), np.float32)
    for h in range(s2):
        for w in range(s2):
            for co in range(C2):
                wfb[h * n2 + (2 * w) * C2 + co, :] = wf[:, co * s2 * s2 + h * s2 + w]

    b1r = np.tile(b1, s).reshape(1, n1)      # bias broadcast over w
    b2r = np.tile(b2, s1).reshape(1, n2)
    bfr = bf.reshape(1, ncls)

    as_mm = lambda a: jnp.asarray(a, MATMUL_DTYPE)
    as_f32 = lambda a: jnp.asarray(a, jnp.float32)
    return (as_mm(w1b), as_f32(b1r), as_mm(w2b), as_f32(b2r),
            as_mm(wfb), as_f32(bfr))


# ---------------------------------------------------------------------------
# Pure-JAX reference (mirrors the PyTorch module exactly, NCHW).
# ---------------------------------------------------------------------------
def reference_forward(x_nchw, torch_params):
    w1, b1, w2, b2, wf, bf = torch_params

    def block(x, w, b):
        y = lax.conv_general_dilated(
            x, w, window_strides=(1, 1), padding=((PAD, PAD), (PAD, PAD)),
            dimension_numbers=("NCHW", "OIHW", "NCHW"))
        y = jnp.maximum(y + b.reshape(1, -1, 1, 1), 0.0)
        return lax.reduce_window(y, -jnp.inf, lax.max,
                                 (1, 1, 2, 2), (1, 1, 2, 2), "VALID")

    h = block(block(x_nchw, w1, b1), w2, b2)
    flat = h.reshape(x_nchw.shape[0], -1)
    return flat @ wf.T + bf.reshape(1, -1)


if __name__ == "__main__":
    input_channel, input_size, num_classes = 1, 28, 10
    batch = 2

    key = jax.random.PRNGKey(0)
    pkey, xkey = jax.random.split(key)
    torch_params = init_torch_params(pkey, input_channel, input_size, num_classes)
    kparams = to_kernel_params(torch_params, input_size)
    x = jax.random.normal(
        xkey, (batch, input_channel, input_size, input_size), jnp.float32)

    fwd = jax.jit(cnn_forward)
    out = jax.block_until_ready(fwd(x, kparams))

    ref = reference_forward(x, torch_params)
    # bf16 MXU operands (f32 accumulation); with MATMUL_DTYPE=float32 this
    # passes at 1e-4.
    np.testing.assert_allclose(np.asarray(out), np.asarray(ref),
                               rtol=3e-2, atol=3e-2)
    print("KERNEL_OK")
</pallas_src>

<mosaic_0001>
module attributes {stable_mosaic.version = 11 : i64} {
  func.func @_cnn_fused_kernel(%arg0: i32, %arg1: memref<64x32xbf16, #tpu.memory_space<vmem>>, %arg2: memref<32x2560xbf16, #tpu.memory_space<vmem>>, %arg3: memref<1x448xf32, #tpu.memory_space<vmem>>, %arg4: memref<448x2560xbf16, #tpu.memory_space<vmem>>, %arg5: memref<1x448xf32, #tpu.memory_space<vmem>>, %arg6: memref<3136x10xbf16, #tpu.memory_space<vmem>>, %arg7: memref<1x10xf32, #tpu.memory_space<vmem>>, %arg8: memref<2x10xf32, #tpu.memory_space<vmem>>) attributes {dimension_semantics = [#tpu.dimension_semantics<parallel>], iteration_bounds = array<i64: 1>, scalar_prefetch = 0 : i64, scratch_operands = 0 : i64, tpu.core_type = #tpu.core_type<tc>, window_params = [{transform_indices = @transform_0, window_bounds = array<i64: 64, 32>}, {pipeline_mode = #tpu.pipeline_mode<synchronous>, transform_indices = @transform_1, window_bounds = array<i64: 32, 2560>}, {pipeline_mode = #tpu.pipeline_mode<synchronous>, transform_indices = @transform_2, window_bounds = array<i64: 1, 448>}, {pipeline_mode = #tpu.pipeline_mode<synchronous>, transform_indices = @transform_3, window_bounds = array<i64: 448, 2560>}, {pipeline_mode = #tpu.pipeline_mode<synchronous>, transform_indices = @transform_4, window_bounds = array<i64: 1, 448>}, {pipeline_mode = #tpu.pipeline_mode<synchronous>, transform_indices = @transform_5, window_bounds = array<i64: 3136, 10>}, {pipeline_mode = #tpu.pipeline_mode<synchronous>, transform_indices = @transform_6, window_bounds = array<i64: 1, 10>}, {transform_indices = @transform_7, window_bounds = array<i64: 2, 10>}]} {
    %c0 = arith.constant 0 : index
    %c0_0 = arith.constant 0 : index
    %0 = vector.load %arg1[%c0, %c0_0] : memref<64x32xbf16, #tpu.memory_space<vmem>>, vector<64x32xbf16>
    %c0_1 = arith.constant 0 : index
    %c0_2 = arith.constant 0 : index
    %1 = vector.load %arg2[%c0_1, %c0_2] : memref<32x2560xbf16, #tpu.memory_space<vmem>>, vector<32x2560xbf16>
    %cst = arith.constant dense<0.000000e+00> : vector<64x2560xf32>
    %2 = tpu.matmul %0, %1, %cst {dimension_numbers = #tpu.dot_dimension_numbers<[1], [0], [0], [1], [0, 0, 1, 1], [], []>} : vector<64x32xbf16>, vector<32x2560xbf16>, vector<64x2560xf32> -> vector<64x2560xf32>
    %3 = vector.extract_strided_slice %2 {offsets = [0, 0], sizes = [64, 448], strides = [1, 1]} : vector<64x2560xf32> to vector<64x448xf32>
    %4 = vector.extract_strided_slice %2 {offsets = [0, 512], sizes = [64, 448], strides = [1, 1]} : vector<64x2560xf32> to vector<64x448xf32>
    %cst_3 = arith.constant 0.000000e+00 : f32
    %5 = vector.broadcast %cst_3 : f32 to vector<1x448xf32>
    %6 = vector.extract_strided_slice %4 {offsets = [1, 0], sizes = [63, 448], strides = [1, 1]} : vector<64x448xf32> to vector<63x448xf32>
    %7 = tpu.concatenate %6, %5 in 0 : vector<63x448xf32>, vector<1x448xf32> -> vector<64x448xf32>
    %8 = arith.addf %3, %7 : vector<64x448xf32>
    %9 = vector.extract_strided_slice %2 {offsets = [0, 1024], sizes = [64, 448], strides = [1, 1]} : vector<64x2560xf32> to vector<64x448xf32>
    %cst_4 = arith.constant 0.000000e+00 : f32
    %10 = vector.broadcast %cst_4 : f32 to vector<2x448xf32>
    %11 = vector.extract_strided_slice %9 {offsets = [2, 0], sizes = [62, 448], strides = [1, 1]} : vector<64x448xf32> to vector<62x448xf32>
    %12 = tpu.concatenate %11, %10 in 0 : vector<62x448xf32>, vector<2x448xf32> -> vector<64x448xf32>
    %13 = arith.addf %8, %12 : vector<64x448xf32>
    %14 = vector.extract_strided_slice %2 {offsets = [0, 1536], sizes = [64, 448], strides = [1, 1]} : vector<64x2560xf32> to vector<64x448xf32>
    %cst_5 = arith.constant 0.000000e+00 : f32
    %15 = vector.broadcast %cst_5 : f32 to vector<3x448xf32>
    %16 = vector.extract_strided_slice %14 {offsets = [3, 0], sizes = [61, 448], strides = [1, 1]} : vector<64x448xf32> to vector<61x448xf32>
    %17 = tpu.concatenate %16, %15 in 0 : vector<61x448xf32>, vector<3x448xf32> -> vector<64x448xf32>
    %18 = arith.addf %13, %17 : vector<64x448xf32>
    %19 = vector.extract_strided_slice %2 {offsets = [0, 2048], sizes = [64, 448], strides = [1, 1]} : vector<64x2560xf32> to vector<64x448xf32>
    %cst_6 = arith.constant 0.000000e+00 : f32
    %20 = vector.broadcast %cst_6 : f32 to vector<4x448xf32>
    %21 = vector.extract_strided_slice %19 {offsets = [4, 0], sizes = [60, 448], strides = [1, 1]} : vector<64x448xf32> to vector<60x448xf32>
    %22 = tpu.concatenate %21, %20 in 0 : vector<60x448xf32>, vector<4x448xf32> -> vector<64x448xf32>
    %23 = arith.addf %18, %22 : vector<64x448xf32>
    %24 = tpu.iota {dimensions = array<i32: 0>} : vector<64x1xi32>
    %c32_i32 = arith.constant 32 : i32
    %c0_i32 = arith.constant 0 : i32
    %25 = arith.cmpi eq, %c32_i32, %c0_i32 : i32
    %c1_i32 = arith.constant 1 : i32
    %26 = arith.select %25, %c1_i32, %c32_i32 : i32
    %27 = vector.broadcast %26 : i32 to vector<64x1xi32>
    %28 = arith.remsi %24, %27 : vector<64x1xi32>
    %c0_i32_7 = arith.constant 0 : i32
    %29 = vector.broadcast %c0_i32_7 : i32 to vector<64x1xi32>
    %30 = arith.cmpi ne, %28, %29 : vector<64x1xi32>
    %c0_i32_8 = arith.constant 0 : i32
    %31 = vector.broadcast %c0_i32_8 : i32 to vector<64x1xi32>
    %32 = arith.cmpi slt, %28, %31 : vector<64x1xi32>
    %c0_i32_9 = arith.constant 0 : i32
    %33 = arith.cmpi slt, %26, %c0_i32_9 : i32
    %34 = vector.broadcast %33 : i1 to vector<64x1xi1>
    %35 = vector.broadcast %34 : vector<64x1xi1> to vector<64x1xi1>
    %36 = arith.xori %32, %35 : vector<64x1xi1>
    %37 = arith.andi %36, %30 : vector<64x1xi1>
    %38 = vector.broadcast %26 : i32 to vector<64x1xi32>
    %39 = arith.addi %28, %38 : vector<64x1xi32>
    %40 = arith.select %37, %39, %28 : vector<64x1xi1>, vector<64x1xi32>
    %c28_i32 = arith.constant 28 : i32
    %41 = vector.broadcast %c28_i32 : i32 to vector<64x1xi32>
    %42 = arith.cmpi slt, %40, %41 : vector<64x1xi32>
    %c0_10 = arith.constant 0 : index
    %c0_11 = arith.constant 0 : index
    %43 = vector.load %arg3[%c0_10, %c0_11] : memref<1x448xf32, #tpu.memory_space<vmem>>, vector<1x448xf32>
    %44 = vector.broadcast %43 : vector<1x448xf32> to vector<64x448xf32>
    %45 = arith.addf %23, %44 : vector<64x448xf32>
    %cst_12 = arith.constant 0.000000e+00 : f32
    %46 = vector.broadcast %cst_12 : f32 to vector<64x448xf32>
    %47 = arith.maximumf %45, %46 : vector<64x448xf32>
    %cst_13 = arith.constant 0.000000e+00 : f32
    %48 = vector.shape_cast %42 : vector<64x1xi1> to vector<64x1xi1>
    %49 = vector.broadcast %48 : vector<64x1xi1> to vector<64x448xi1>
    %50 = vector.broadcast %cst_13 : f32 to vector<64x448xf32>
    %51 = arith.select %49, %47, %50 : vector<64x448xi1>, vector<64x448xf32>
    %cst_14 = arith.constant 0.000000e+00 : f32
    %52 = vector.broadcast %cst_14 : f32 to vector<64x16xf32>
    %53 = vector.extract_strided_slice %51 {offsets = [0, 16], sizes = [64, 432], strides = [1, 1]} : vector<64x448xf32> to vector<64x432xf32>
    %54 = tpu.concatenate %53, %52 in 1 : vector<64x432xf32>, vector<64x16xf32> -> vector<64x448xf32>
    %55 = arith.maximumf %51, %54 : vector<64x448xf32>
    %cst_15 = arith.constant 0.000000e+00 : f32
    %56 = vector.broadcast %cst_15 : f32 to vector<1x448xf32>
    %57 = vector.extract_strided_slice %55 {offsets = [1, 0], sizes = [63, 448], strides = [1, 1]} : vector<64x448xf32> to vector<63x448xf32>
    %58 = tpu.concatenate %57, %56 in 0 : vector<63x448xf32>, vector<1x448xf32> -> vector<64x448xf32>
    %59 = arith.maximumf %55, %58 : vector<64x448xf32>
    %60 = arith.truncf %59 : vector<64x448xf32> to vector<64x448xbf16>
    %c0_16 = arith.constant 0 : index
    %c0_17 = arith.constant 0 : index
    %61 = vector.load %arg4[%c0_16, %c0_17] : memref<448x2560xbf16, #tpu.memory_space<vmem>>, vector<448x2560xbf16>
    %cst_18 = arith.constant dense<0.000000e+00> : vector<64x2560xf32>
    %62 = tpu.matmul %60, %61, %cst_18 {dimension_numbers = #tpu.dot_dimension_numbers<[1], [0], [0], [1], [0, 0, 1, 1], [], []>} : vector<64x448xbf16>, vector<448x2560xbf16>, vector<64x2560xf32> -> vector<64x2560xf32>
    %63 = vector.extract_strided_slice %62 {offsets = [0, 0], sizes = [64, 448], strides = [1, 1]} : vector<64x2560xf32> to vector<64x448xf32>
    %cst_19 = arith.constant 0.000000e+00 : f32
    %64 = vector.broadcast %cst_19 : f32 to vector<4x448xf32>
    %65 = vector.extract_strided_slice %63 {offsets = [0, 0], sizes = [60, 448], strides = [1, 1]} : vector<64x448xf32> to vector<60x448xf32>
    %66 = tpu.concatenate %64, %65 in 0 : vector<4x448xf32>, vector<60x448xf32> -> vector<64x448xf32>
    %67 = vector.extract_strided_slice %62 {offsets = [0, 512], sizes = [64, 448], strides = [1, 1]} : vector<64x2560xf32> to vector<64x448xf32>
    %cst_20 = arith.constant 0.000000e+00 : f32
    %68 = vector.broadcast %cst_20 : f32 to vector<2x448xf32>
    %69 = vector.extract_strided_slice %67 {offsets = [0, 0], sizes = [62, 448], strides = [1, 1]} : vector<64x448xf32> to vector<62x448xf32>
    %70 = tpu.concatenate %68, %69 in 0 : vector<2x448xf32>, vector<62x448xf32> -> vector<64x448xf32>
    %71 = arith.addf %66, %70 : vector<64x448xf32>
    %72 = vector.extract_strided_slice %62 {offsets = [0, 1024], sizes = [64, 448], strides = [1, 1]} : vector<64x2560xf32> to vector<64x448xf32>
    %73 = arith.addf %71, %72 : vector<64x448xf32>
    %74 = vector.extract_strided_slice %62 {offsets = [0, 1536], sizes = [64, 448], strides = [1, 1]} : vector<64x2560xf32> to vector<64x448xf32>
    %cst_21 = arith.constant 0.000000e+00 : f32
    %75 = vector.broadcast %cst_21 : f32 to vector<2x448xf32>
    %76 = vector.extract_strided_slice %74 {offsets = [2, 0], sizes = [62, 448], strides = [1, 1]} : vector<64x448xf32> to vector<62x448xf32>
    %77 = tpu.concatenate %76, %75 in 0 : vector<62x448xf32>, vector<2x448xf32> -> vector<64x448xf32>
    %78 = arith.addf %73, %77 : vector<64x448xf32>
    %79 = vector.extract_strided_slice %62 {offsets = [0, 2048], sizes = [64, 448], strides = [1, 1]} : vector<64x2560xf32> to vector<64x448xf32>
    %cst_22 = arith.constant 0.000000e+00 : f32
    %80 = vector.broadcast %cst_22 : f32 to vector<4x448xf32>
    %81 = vector.extract_strided_slice %79 {offsets = [4, 0], sizes = [60, 448], strides = [1, 1]} : vector<64x448xf32> to vector<60x448xf32>
    %82 = tpu.concatenate %81, %80 in 0 : vector<60x448xf32>, vector<4x448xf32> -> vector<64x448xf32>
    %83 = arith.addf %78, %82 : vector<64x448xf32>
    %c0_23 = arith.constant 0 : index
    %c0_24 = arith.constant 0 : index
    %84 = vector.load %arg5[%c0_23, %c0_24] : memref<1x448xf32, #tpu.memory_space<vmem>>, vector<1x448xf32>
    %85 = vector.broadcast %84 : vector<1x448xf32> to vector<64x448xf32>
    %86 = arith.addf %83, %85 : vector<64x448xf32>
    %cst_25 = arith.constant 0.000000e+00 : f32
    %87 = vector.broadcast %cst_25 : f32 to vector<64x448xf32>
    %88 = arith.maximumf %86, %87 : vector<64x448xf32>
    %cst_26 = arith.constant 0.000000e+00 : f32
    %89 = vector.broadcast %cst_26 : f32 to vector<64x32xf32>
    %90 = vector.extract_strided_slice %88 {offsets = [0, 32], sizes = [64, 416], strides = [1, 1]} : vector<64x448xf32> to vector<64x416xf32>
    %91 = tpu.concatenate %90, %89 in 1 : vector<64x416xf32>, vector<64x32xf32> -> vector<64x448xf32>
    %92 = arith.maximumf %88, %91 : vector<64x448xf32>
    %cst_27 = arith.constant 0.000000e+00 : f32
    %93 = vector.broadcast %cst_27 : f32 to vector<2x448xf32>
    %94 = vector.extract_strided_slice %92 {offsets = [2, 0], sizes = [62, 448], strides = [1, 1]} : vector<64x448xf32> to vector<62x448xf32>
    %95 = tpu.concatenate %94, %93 in 0 : vector<62x448xf32>, vector<2x448xf32> -> vector<64x448xf32>
    %96 = arith.maximumf %92, %95 : vector<64x448xf32>
    %97 = vector.shape_cast %96 : vector<64x448xf32> to vector<2x32x448xf32>
    %98 = vector.extract_strided_slice %97 {offsets = [0, 0, 0], sizes = [2, 1, 448], strides = [1, 1, 1]} : vector<2x32x448xf32> to vector<2x1x448xf32>
    %99 = vector.shape_cast %98 : vector<2x1x448xf32> to vector<2x448xf32>
    %100 = vector.extract_strided_slice %97 {offsets = [0, 4, 0], sizes = [2, 1, 448], strides = [1, 1, 1]} : vector<2x32x448xf32> to vector<2x1x448xf32>
    %101 = vector.shape_cast %100 : vector<2x1x448xf32> to vector<2x448xf32>
    %102 = vector.extract_strided_slice %97 {offsets = [0, 8, 0], sizes = [2, 1, 448], strides = [1, 1, 1]} : vector<2x32x448xf32> to vector<2x1x448xf32>
    %103 = vector.shape_cast %102 : vector<2x1x448xf32> to vector<2x448xf32>
    %104 = vector.extract_strided_slice %97 {offsets = [0, 12, 0], sizes = [2, 1, 448], strides = [1, 1, 1]} : vector<2x32x448xf32> to vector<2x1x448xf32>
    %105 = vector.shape_cast %104 : vector<2x1x448xf32> to vector<2x448xf32>
    %106 = vector.extract_strided_slice %97 {offsets = [0, 16, 0], sizes = [2, 1, 448], strides = [1, 1, 1]} : vector<2x32x448xf32> to vector<2x1x448xf32>
    %107 = vector.shape_cast %106 : vector<2x1x448xf32> to vector<2x448xf32>
    %108 = vector.extract_strided_slice %97 {offsets = [0, 20, 0], sizes = [2, 1, 448], strides = [1, 1, 1]} : vector<2x32x448xf32> to vector<2x1x448xf32>
    %109 = vector.shape_cast %108 : vector<2x1x448xf32> to vector<2x448xf32>
    %110 = vector.extract_strided_slice %97 {offsets = [0, 24, 0], sizes = [2, 1, 448], strides = [1, 1, 1]} : vector<2x32x448xf32> to vector<2x1x448xf32>
    %111 = vector.shape_cast %110 : vector<2x1x448xf32> to vector<2x448xf32>
    %112 = tpu.concatenate %99, %101, %103, %105, %107, %109, %111 in 1 : vector<2x448xf32>, vector<2x448xf32>, vector<2x448xf32>, vector<2x448xf32>, vector<2x448xf32>, vector<2x448xf32>, vector<2x448xf32> -> vector<2x3136xf32>
    %113 = arith.truncf %112 : vector<2x3136xf32> to vector<2x3136xbf16>
    %c0_28 = arith.constant 0 : index
    %c0_29 = arith.constant 0 : index
    %114 = vector.load %arg6[%c0_28, %c0_29] : memref<3136x10xbf16, #tpu.memory_space<vmem>>, vector<3136x10xbf16>
    %cst_30 = arith.constant dense<0.000000e+00> : vector<2x10xf32>
    %115 = tpu.matmul %113, %114, %cst_30 {dimension_numbers = #tpu.dot_dimension_numbers<[1], [0], [0], [1], [0, 0, 1, 1], [], []>} : vector<2x3136xbf16>, vector<3136x10xbf16>, vector<2x10xf32> -> vector<2x10xf32>
    %c0_31 = arith.constant 0 : index
    %c0_32 = arith.constant 0 : index
    %116 = vector.load %arg7[%c0_31, %c0_32] : memref<1x10xf32, #tpu.memory_space<vmem>>, vector<1x10xf32>
    %117 = vector.broadcast %116 : vector<1x10xf32> to vector<2x10xf32>
    %118 = arith.addf %115, %117 : vector<2x10xf32>
    %c0_33 = arith.constant 0 : index
    %c0_34 = arith.constant 0 : index
    %119 = vector.load %arg8[%c0_33, %c0_34] : memref<2x10xf32, #tpu.memory_space<vmem>>, vector<2x10xf32>
    tpu.vector_store %arg8[%c0_33, %c0_34], %118 {strides = array<i32>} : memref<2x10xf32, #tpu.memory_space<vmem>>, vector<2x10xf32>,
    return
  }
  func.func @transform_0(%arg0: i32) -> (i32, i32) {
    %c0_i32 = arith.constant 0 : i32
    %c0_i32_0 = arith.constant 0 : i32
    return %arg0, %c0_i32 : i32, i32
  }
  func.func @transform_1(%arg0: i32) -> (i32, i32) {
    %c0_i32 = arith.constant 0 : i32
    %c0_i32_0 = arith.constant 0 : i32
    %c0_i32_1 = arith.constant 0 : i32
    return %c0_i32, %c0_i32_0 : i32, i32
  }
  func.func @transform_2(%arg0: i32) -> (i32, i32) {
    %c0_i32 = arith.constant 0 : i32
    %c0_i32_0 = arith.constant 0 : i32
    %c0_i32_1 = arith.constant 0 : i32
    return %c0_i32, %c0_i32_0 : i32, i32
  }
  func.func @transform_3(%arg0: i32) -> (i32, i32) {
    %c0_i32 = arith.constant 0 : i32
    %c0_i32_0 = arith.constant 0 : i32
    %c0_i32_1 = arith.constant 0 : i32
    return %c0_i32, %c0_i32_0 : i32, i32
  }
  func.func @transform_4(%arg0: i32) -> (i32, i32) {
    %c0_i32 = arith.constant 0 : i32
    %c0_i32_0 = arith.constant 0 : i32
    %c0_i32_1 = arith.constant 0 : i32
    return %c0_i32, %c0_i32_0 : i32, i32
  }
  func.func @transform_5(%arg0: i32) -> (i32, i32) {
    %c0_i32 = arith.constant 0 : i32
    %c0_i32_0 = arith.constant 0 : i32
    %c0_i32_1 = arith.constant 0 : i32
    return %c0_i32, %c0_i32_0 : i32, i32
  }
  func.func @transform_6(%arg0: i32) -> (i32, i32) {
    %c0_i32 = arith.constant 0 : i32
    %c0_i32_0 = arith.constant 0 : i32
    %c0_i32_1 = arith.constant 0 : i32
    return %c0_i32, %c0_i32_0 : i32, i32
  }
  func.func @transform_7(%arg0: i32) -> (i32, i32) {
    %c0_i32 = arith.constant 0 : i32
    %c0_i32_0 = arith.constant 0 : i32
    return %arg0, %c0_i32 : i32, i32
  }
}

</mosaic_0001>

<llo_original>
// kernel: cnn_forward.1
$region0: #{cnn_forward.1}
  #allocation0 [shape = 'u32[]', space=smem, size = 0x4, offset = 0x4, fixed_abs, tag = 'smem constant byte address 0x4 - core index']
  #allocation1 [shape = 'u32[144,128]{1,0:T(1,128)}', space=vmem, size = 0x12000, scoped, tag = 'internal scratch']
  %s0 = inlined_call_operand.vmem [shape: bf16[64,32], index: 0, kind: input, shape index: {}]
  %s1 = inlined_call_operand.hbm [shape: bf16[32,2560], index: 1, kind: input, shape index: {}]
  %s2 = inlined_call_operand.hbm [shape: f32[1,448], index: 2, kind: input, shape index: {}]
  %s3 = inlined_call_operand.hbm [shape: bf16[448,2560], index: 3, kind: input, shape index: {}]
  %s4 = inlined_call_operand.hbm [shape: f32[1,448], index: 4, kind: input, shape index: {}]
  %s5 = inlined_call_operand.vmem [shape: bf16[3136,10], index: 5, kind: input, shape index: {}]
  %s6 = inlined_call_operand.hbm [shape: f32[1,10], index: 6, kind: input, shape index: {}]
  %s7 = inlined_call_operand.hbm [shape: f32[2,10], index: 7, kind: output, shape index: {}]
  %s8 = sld [smem:[#allocation0]]
  $region58: #{cnn_forward.1} parent=0
    _
  %s10 = ssub.s32 1, %s8
  %s11 = scalar_select 0, %s10, %s8
  $region1: #{cnn_forward.1} parent=0
    #allocation2 [shape = 'u8[163840]{0}', space=vmem, size = 0x28000, scoped, tag = 'input window, operand 1, single buffered']
    #allocation3 [shape = 's32[1]{0}', space=sflag, size = 0x4, scoped, tag = 'scoped memory for cnn_forward.1']
    #allocation4 [shape = 's32[1]{0}', space=sflag, size = 0x4, scoped, tag = 'scoped memory for cnn_forward.1']
    #allocation5 [shape = 'u8[2048]{0}', space=vmem, size = 0x800, scoped, tag = 'input window, operand 2, single buffered']
    #allocation6 [shape = 's32[1]{0}', space=sflag, size = 0x4, scoped, tag = 'scoped memory for cnn_forward.1']
    #allocation7 [shape = 'u8[2293760]{0}', space=vmem, size = 0x230000, scoped, tag = 'input window, operand 3, single buffered']
    #allocation8 [shape = 'u8[2048]{0}', space=vmem, size = 0x800, scoped, tag = 'input window, operand 4, single buffered']
    #allocation9 [shape = 's32[1]{0}', space=sflag, size = 0x4, scoped, tag = 'scoped memory for cnn_forward.1']
    #allocation10 [shape = 'u8[512]{0}', space=vmem, size = 0x400, scoped, tag = 'input window, operand 6, single buffered']
    #allocation11 [shape = 'u8[1024]{0}', space=vmem, size = 0x400, scoped, tag = 'output window, operand 0, single buffered']
    %12 = vsyncpa [#allocation3], 0
    %13 = vsyncpa [#allocation6], 0
    %14 = vsyncpa [#allocation9], 0
    %15 = vsyncpa [#allocation4], 0
    // Predicated region
    $region2: #{cnn_forward.1} parent=1 // pred_check
      _
    $region3: #{cnn_forward.1} parent=1 // pred_check_branch
      %17 = sbr.rel (0) target = $region5
    $region4: #{cnn_forward.1} parent=1 // pred_region
      _
    $region5: #{cnn_forward.1} parent=1 // pred_fallthru
      _
    // Predicated region
    $region6: #{cnn_forward.1} parent=1 // pred_check
      _
    $region7: #{cnn_forward.1} parent=1 // pred_check_branch
      %19 = sbr.rel (0) target = $region9
    $region8: #{cnn_forward.1} parent=1 // pred_region
      %s21 = ssub.s32 5120, 5120
      %22 = vsyncadd [#allocation3], %s21
      %s23 = sshll.u32 [#allocation2], 4
      %s24 = int_to_ptr.vmem [resolvable:$true] %s23
      %29 = dma.hbm_to_vmem [thread:$0]  %s1, 5120, %s24, [#allocation3], 1280, 1280, 80
    $region9: #{cnn_forward.1} parent=1 // pred_fallthru
      _
    // Predicated region
    $region10: #{cnn_forward.1} parent=1 // pred_check
      _
    $region11: #{cnn_forward.1} parent=1 // pred_check_branch
      %31 = sbr.rel (0) target = $region13
    $region12: #{cnn_forward.1} parent=1 // pred_region
      %s33 = ssub.s32 64, 64
      %34 = vsyncadd [#allocation6], %s33
      %s36 = sshll.u32 [#allocation5], 4
      %s37 = int_to_ptr.vmem [resolvable:$true] %s36
      %39 = dma.hbm_to_vmem [thread:$0]  %s2, 64, %s37, [#allocation6]
    $region13: #{cnn_forward.1} parent=1 // pred_fallthru
      _
    // Predicated region
    $region14: #{cnn_forward.1} parent=1 // pred_check
      _
    $region15: #{cnn_forward.1} parent=1 // pred_check_branch
      %41 = sbr.rel (0) target = $region17
    $region16: #{cnn_forward.1} parent=1 // pred_region
      %s43 = ssub.s32 71680, 71680
      %44 = vsyncadd [#allocation6], %s43
      %s45 = sshll.u32 [#allocation7], 4
      %s46 = int_to_ptr.vmem [resolvable:$true] %s45
      %51 = dma.hbm_to_vmem [thread:$0]  %s3, 71680, %s46, [#allocation6], 1280, 1280, 80
    $region17: #{cnn_forward.1} parent=1 // pred_fallthru
      _
    // Predicated region
    $region18: #{cnn_forward.1} parent=1 // pred_check
      _
    $region19: #{cnn_forward.1} parent=1 // pred_check_branch
      %53 = sbr.rel (0) target = $region21
    $region20: #{cnn_forward.1} parent=1 // pred_region
      %s55 = ssub.s32 64, 64
      %56 = vsyncadd [#allocation9], %s55
      %s58 = sshll.u32 [#allocation8], 4
      %s59 = int_to_ptr.vmem [resolvable:$true] %s58
      %61 = dma.hbm_to_vmem [thread:$0]  %s4, 64, %s59, [#allocation9]
    $region21: #{cnn_forward.1} parent=1 // pred_fallthru
      _
    // Predicated region
    $region22: #{cnn_forward.1} parent=1 // pred_check
      _
    $region23: #{cnn_forward.1} parent=1 // pred_check_branch
      %63 = sbr.rel (0) target = $region25
    $region24: #{cnn_forward.1} parent=1 // pred_region
      _
    $region25: #{cnn_forward.1} parent=1 // pred_fallthru
      _
    // Predicated region
    $region26: #{cnn_forward.1} parent=1 // pred_check
      _
    $region27: #{cnn_forward.1} parent=1 // pred_check_branch
      %65 = sbr.rel (0) target = $region29
    $region28: #{cnn_forward.1} parent=1 // pred_region
      %s67 = ssub.s32 16, 16
      %68 = vsyncadd [#allocation9], %s67
      %s70 = sshll.u32 [#allocation10], 4
      %s71 = int_to_ptr.vmem [resolvable:$true] %s70
      %73 = dma.hbm_to_vmem [thread:$0]  %s6, 16, %s71, [#allocation9]
    $region29: #{cnn_forward.1} parent=1 // pred_fallthru
      _
    // Predicated region
    $region30: #{cnn_forward.1} parent=1 // pred_check
      _
    $region31: #{cnn_forward.1} parent=1 // pred_check_branch
      %75 = sbr.rel (0) target = $region33
    $region32: #{cnn_forward.1} parent=1 // pred_region
      %76 = dma.done [#allocation3], 5120
    $region33: #{cnn_forward.1} parent=1 // pred_fallthru
      _
    // Predicated region
    $region34: #{cnn_forward.1} parent=1 // pred_check
      _
    $region35: #{cnn_forward.1} parent=1 // pred_check_branch
      %78 = sbr.rel (0) target = $region37
    $region36: #{cnn_forward.1} parent=1 // pred_region
      %79 = dma.done [#allocation6], 64
    $region37: #{cnn_forward.1} parent=1 // pred_fallthru
      _
    // Predicated region
    $region38: #{cnn_forward.1} parent=1 // pred_check
      _
    $region39: #{cnn_forward.1} parent=1 // pred_check_branch
      %81 = sbr.rel (0) target = $region41
    $region40: #{cnn_forward.1} parent=1 // pred_region
      %82 = dma.done [#allocation6], 71680
    $region41: #{cnn_forward.1} parent=1 // pred_fallthru
      _
    // Predicated region
    $region42: #{cnn_forward.1} parent=1 // pred_check
      _
    $region43: #{cnn_forward.1} parent=1 // pred_check_branch
      %84 = sbr.rel (0) target = $region45
    $region44: #{cnn_forward.1} parent=1 // pred_region
      %85 = dma.done [#allocation9], 64
    $region45: #{cnn_forward.1} parent=1 // pred_fallthru
      _
    // Predicated region
    $region46: #{cnn_forward.1} parent=1 // pred_check
      _
    $region47: #{cnn_forward.1} parent=1 // pred_check_branch
      %87 = sbr.rel (0) target = $region49
    $region48: #{cnn_forward.1} parent=1 // pred_region
      %88 = dma.done [#allocation9], 16
    $region49: #{cnn_forward.1} parent=1 // pred_fallthru
      _
    %v90 = vld [vmem:[%s0] sm:$0xf]
    %v91 = vld [vmem:[%s0 + $0x4] sm:$0xf]
    %v92 = vld [vmem:[%s0 + $0x8] sm:$0xf]
    %v93 = vld [vmem:[%s0 + $0xc] sm:$0xf]
    %v94 = vld [vmem:[%s0 + $0x10] sm:$0xf]
    %v95 = vld [vmem:[%s0 + $0x14] sm:$0xf]
    %v96 = vld [vmem:[%s0 + $0x18] sm:$0xf]
    %v97 = vld [vmem:[%s0 + $0x1c] sm:$0xf]
    %v98 = vld [vmem:[#allocation2] sm:$0xff]
    %v99 = vld [vmem:[#allocation2 + $0x8] sm:$0xff]
    %v100 = vld [vmem:[#allocation2 + $0x10] sm:$0xff]
    %v101 = vld [vmem:[#allocation2 + $0x18] sm:$0xff]
    %v102 = vld [vmem:[#allocation2 + $0x20] sm:$0xff]
    %v103 = vld [vmem:[#allocation2 + $0x28] sm:$0xff]
    %v104 = vld [vmem:[#allocation2 + $0x30] sm:$0xff]
    %v105 = vld [vmem:[#allocation2 + $0x38] sm:$0xff]
    %v106 = vld [vmem:[#allocation2 + $0x40] sm:$0xff]
    %v107 = vld [vmem:[#allocation2 + $0x48] sm:$0xff]
    %v108 = vld [vmem:[#allocation2 + $0x50] sm:$0xff]
    %v109 = vld [vmem:[#allocation2 + $0x58] sm:$0xff]
    %v110 = vld [vmem:[#allocation2 + $0x60] sm:$0xff]
    %v111 = vld [vmem:[#allocation2 + $0x68] sm:$0xff]
    %v112 = vld [vmem:[#allocation2 + $0x70] sm:$0xff]
    %v113 = vld [vmem:[#allocation2 + $0x78] sm:$0xff]
    %v114 = vld [vmem:[#allocation2 + $0x80] sm:$0xff]
    %v115 = vld [vmem:[#allocation2 + $0x88] sm:$0xff]
    %v116 = vld [vmem:[#allocation2 + $0x90] sm:$0xff]
    %v117 = vld [vmem:[#allocation2 + $0x98] sm:$0xff]
    %v118 = vld [vmem:[#allocation2 + $0xa0] sm:$0xff]
    %v119 = vld [vmem:[#allocation2 + $0xa8] sm:$0xff]
    %v120 = vld [vmem:[#allocation2 + $0xb0] sm:$0xff]
    %v121 = vld [vmem:[#allocation2 + $0xb8] sm:$0xff]
    %v122 = vld [vmem:[#allocation2 + $0xc0] sm:$0xff]
    %v123 = vld [vmem:[#allocation2 + $0xc8] sm:$0xff]
    %v124 = vld [vmem:[#allocation2 + $0xd0] sm:$0xff]
    %v125 = vld [vmem:[#allocation2 + $0xd8] sm:$0xff]
    %v126 = vld [vmem:[#allocation2 + $0xe0] sm:$0xff]
    %v127 = vld [vmem:[#allocation2 + $0xe8] sm:$0xff]
    %v128 = vld [vmem:[#allocation2 + $0xf0] sm:$0xff]
    %v129 = vld [vmem:[#allocation2 + $0xf8] sm:$0xff]
    %v130 = vld [vmem:[#allocation2 + $0x100] sm:$0xff]
    %v131 = vld [vmem:[#allocation2 + $0x108] sm:$0xff]
    %v132 = vld [vmem:[#allocation2 + $0x110] sm:$0xff]
    %v133 = vld [vmem:[#allocation2 + $0x118] sm:$0xff]
    %v134 = vld [vmem:[#allocation2 + $0x120] sm:$0xff]
    %v135 = vld [vmem:[#allocation2 + $0x128] sm:$0xff]
    %v136 = vld [vmem:[#allocation2 + $0x130] sm:$0xff]
    %v137 = vld [vmem:[#allocation2 + $0x138] sm:$0xff]
    %v146 = vunpack.c.l.b16 %v90
    %v147 = vunpack.c.l.b16 %v91
    %v148 = vunpack.c.l.b16 %v92
    %v149 = vunpack.c.l.b16 %v93
    %v150 = vunpack.c.l.b16 %v94
    %v151 = vunpack.c.l.b16 %v95
    %v152 = vunpack.c.l.b16 %v96
    %v153 = vunpack.c.l.b16 %v97
    %v154 = vpack.c.b16 %v147, %v146
    %v155 = vpack.c.b16 %v149, %v148
    %v156 = vpack.c.b16 %v151, %v150
    %v157 = vpack.c.b16 %v153, %v152
    %v198 = vunpack.c.l.b16 %v98
    %v199 = vunpack.c.h.b16 %v98
    %v200 = vunpack.c.l.b16 %v99
    %v201 = vunpack.c.h.b16 %v99
    %v202 = vunpack.c.l.b16 %v100
    %v203 = vunpack.c.h.b16 %v100
    %v204 = vunpack.c.l.b16 %v101
    %v205 = vunpack.c.h.b16 %v101
    %v206 = vunpack.c.l.b16 %v102
    %v207 = vunpack.c.h.b16 %v102
    %v208 = vunpack.c.l.b16 %v103
    %v209 = vunpack.c.h.b16 %v103
    %v210 = vunpack.c.l.b16 %v104
    %v211 = vunpack.c.h.b16 %v104
    %v212 = vunpack.c.l.b16 %v105
    %v213 = vunpack.c.h.b16 %v105
    %v214 = vunpack.c.l.b16 %v106
    %v215 = vunpack.c.h.b16 %v106
    %v216 = vunpack.c.l.b16 %v107
    %v217 = vunpack.c.h.b16 %v107
    %v218 = vunpack.c.l.b16 %v108
    %v219 = vunpack.c.h.b16 %v108
    %v220 = vunpack.c.l.b16 %v109
    %v221 = vunpack.c.h.b16 %v109
    %v222 = vunpack.c.l.b16 %v110
    %v223 = vunpack.c.h.b16 %v110
    %v224 = vunpack.c.l.b16 %v111
    %v225 = vunpack.c.h.b16 %v111
    %v226 = vunpack.c.l.b16 %v112
    %v227 = vunpack.c.h.b16 %v112
    %v228 = vunpack.c.l.b16 %v113
    %v229 = vunpack.c.h.b16 %v113
    %v230 = vunpack.c.l.b16 %v114
    %v231 = vunpack.c.h.b16 %v114
    %v232 = vunpack.c.l.b16 %v115
    %v233 = vunpack.c.h.b16 %v115
    %v234 = vunpack.c.l.b16 %v116
    %v235 = vunpack.c.h.b16 %v116
    %v236 = vunpack.c.l.b16 %v117
    %v237 = vunpack.c.h.b16 %v117
    %v238 = vunpack.c.l.b16 %v118
    %v239 = vunpack.c.h.b16 %v118
    %v240 = vunpack.c.l.b16 %v119
    %v241 = vunpack.c.h.b16 %v119
    %v242 = vunpack.c.l.b16 %v120
    %v243 = vunpack.c.h.b16 %v120
    %v244 = vunpack.c.l.b16 %v121
    %v245 = vunpack.c.h.b16 %v121
    %v246 = vunpack.c.l.b16 %v122
    %v247 = vunpack.c.h.b16 %v122
    %v248 = vunpack.c.l.b16 %v123
    %v249 = vunpack.c.h.b16 %v123
    %v250 = vunpack.c.l.b16 %v124
    %v251 = vunpack.c.h.b16 %v124
    %v252 = vunpack.c.l.b16 %v125
    %v253 = vunpack.c.h.b16 %v125
    %v254 = vunpack.c.l.b16 %v126
    %v255 = vunpack.c.h.b16 %v126
    %v256 = vunpack.c.l.b16 %v127
    %v257 = vunpack.c.h.b16 %v127
    %v258 = vunpack.c.l.b16 %v128
    %v259 = vunpack.c.h.b16 %v128
    %v260 = vunpack.c.l.b16 %v129
    %v261 = vunpack.c.h.b16 %v129
    %v262 = vunpack.c.l.b16 %v130
    %v263 = vunpack.c.h.b16 %v130
    %v264 = vunpack.c.l.b16 %v131
    %v265 = vunpack.c.h.b16 %v131
    %v266 = vunpack.c.l.b16 %v132
    %v267 = vunpack.c.h.b16 %v132
    %v268 = vunpack.c.l.b16 %v133
    %v269 = vunpack.c.h.b16 %v133
    %v270 = vunpack.c.l.b16 %v134
    %v271 = vunpack.c.h.b16 %v134
    %v272 = vunpack.c.l.b16 %v135
    %v273 = vunpack.c.h.b16 %v135
    %v274 = vunpack.c.l.b16 %v136
    %v275 = vunpack.c.h.b16 %v136
    %v276 = vunpack.c.l.b16 %v137
    %v277 = vunpack.c.h.b16 %v137
    %v278 = vpack.c.b16 %v218, %v198
    %v279 = vpack.c.b16 %v219, %v199
    %v280 = vpack.c.b16 %v220, %v200
    %v281 = vpack.c.b16 %v221, %v201
    %v282 = vpack.c.b16 %v222, %v202
    %v283 = vpack.c.b16 %v223, %v203
    %v284 = vpack.c.b16 %v224, %v204
    %v285 = vpack.c.b16 %v225, %v205
    %v286 = vpack.c.b16 %v226, %v206
    %v287 = vpack.c.b16 %v227, %v207
    %v288 = vpack.c.b16 %v228, %v208
    %v289 = vpack.c.b16 %v229, %v209
    %v290 = vpack.c.b16 %v230, %v210
    %v291 = vpack.c.b16 %v231, %v211
    %v292 = vpack.c.b16 %v232, %v212
    %v293 = vpack.c.b16 %v233, %v213
    %v294 = vpack.c.b16 %v234, %v214
    %v295 = vpack.c.b16 %v235, %v215
    %v296 = vpack.c.b16 %v236, %v216
    %v297 = vpack.c.b16 %v237, %v217
    %v298 = vpack.c.b16 %v258, %v238
    %v299 = vpack.c.b16 %v259, %v239
    %v300 = vpack.c.b16 %v260, %v240
    %v301 = vpack.c.b16 %v261, %v241
    %v302 = vpack.c.b16 %v262, %v242
    %v303 = vpack.c.b16 %v263, %v243
    %v304 = vpack.c.b16 %v264, %v244
    %v305 = vpack.c.b16 %v265, %v245
    %v306 = vpack.c.b16 %v266, %v246
    %v307 = vpack.c.b16 %v267, %v247
    %v308 = vpack.c.b16 %v268, %v248
    %v309 = vpack.c.b16 %v269, %v249
    %v310 = vpack.c.b16 %v270, %v250
    %v311 = vpack.c.b16 %v271, %v251
    %v312 = vpack.c.b16 %v272, %v252
    %v313 = vpack.c.b16 %v273, %v253
    %v314 = vpack.c.b16 %v274, %v254
    %v315 = vpack.c.b16 %v275, %v255
    %v316 = vpack.c.b16 %v276, %v256
    %v317 = vpack.c.b16 %v277, %v257
    %vm358 = vcmask 261120
    %v360 = vsel %vm358, %v154, 0
    %v363 = vsel %vm358, %v155, 0
    %v366 = vsel %vm358, %v156, 0
    %v369 = vsel %vm358, %v157, 0
    %371 = vmatprep.subr.bf16.mxu0 %v279
    %372 = vmatpush1.bf16.msra.mxu0 %v278
    %373 = vmatprep.subr.bf16.mxu0 %v299
    %374 = vmatpush1.bf16.msra.mxu0 %v298
    %375 = vmatprep.subr.bf16.mxu0 0
    %376 = vmatpush1.bf16.msra.mxu0 0
    %377 = vmatprep.subr.bf16.mxu0 0
    %378 = vmatpush1.bf16.msra.mxu0 0
    %379 = vmatprep.subr.bf16.mxu0 0
    %380 = vmatpush1.bf16.msra.mxu0 0
    %381 = vmatprep.subr.bf16.mxu0 0
    %382 = vmatpush1.bf16.msra.mxu0 0
    %383 = vmatprep.subr.bf16.mxu0 0
    %384 = vmatpush1.bf16.msra.mxu0 0
    %385 = vmatprep.subr.bf16.mxu0 0
    %386 = vmatpush1.bf16.msra.mxu0 0
    %387 = vmatprep.subr.bf16.mxu0 0
    %388 = vmatpush1.bf16.msra.mxu0 0
    %389 = vmatprep.subr.bf16.mxu0 0
    %390 = vmatpush1.bf16.msra.mxu0 0
    %391 = vmatprep.subr.bf16.mxu0 0
    %392 = vmatpush1.bf16.msra.mxu0 0
    %393 = vmatprep.subr.bf16.mxu0 0
    %394 = vmatpush1.bf16.msra.mxu0 0
    %395 = vmatprep.subr.bf16.mxu0 0
    %396 = vmatpush1.bf16.msra.mxu0 0
    %397 = vmatprep.subr.bf16.mxu0 0
    %398 = vmatpush1.bf16.msra.mxu0 0
    %399 = vmatprep.subr.bf16.mxu0 0
    %400 = vmatpush1.bf16.msra.mxu0 0
    %401 = vmatprep.subr.bf16.mxu0 0
    %402 = vmatpush1.bf16.msra.mxu0 0
    %403 = vmatprep.mubr.bf16.mxu0 0
    %404 = vmatmul.mubr.bf16.gmra.mrb[0].mxu0 %v360
    %v405 = vpop.f32.mrb[0].mxu0
    %v406 = vadd.f32 0.0, %v405
    %v407 = vpop.f32.mrb[0].mxu0
    %v408 = vadd.f32 0.0, %v407
    %v409 = vpop.f32.mrb[0].mxu0
    %v410 = vadd.f32 0.0, %v409
    %v411 = vpop.f32.mrb[0].mxu0
    %v412 = vadd.f32 0.0, %v411
    %413 = vmatprep.mubr.bf16.mxu0 0
    %414 = vmatmul.mubr.bf16.gmra.mrb[0].mxu0 %v363
    %v415 = vpop.f32.mrb[0].mxu0
    %v416 = vadd.f32 0.0, %v415
    %v417 = vpop.f32.mrb[0].mxu0
    %v418 = vadd.f32 0.0, %v417
    %v419 = vpop.f32.mrb[0].mxu0
    %v420 = vadd.f32 0.0, %v419
    %v421 = vpop.f32.mrb[0].mxu0
    %v422 = vadd.f32 0.0, %v421
    %423 = vmatprep.mubr.bf16.mxu0 0
    %424 = vmatmul.mubr.bf16.gmra.mrb[0].mxu0 %v366
    %v425 = vpop.f32.mrb[0].mxu0
    %v426 = vadd.f32 0.0, %v425
    %v427 = vpop.f32.mrb[0].mxu0
    %v428 = vadd.f32 0.0, %v427
    %v429 = vpop.f32.mrb[0].mxu0
    %v430 = vadd.f32 0.0, %v429
    %v431 = vpop.f32.mrb[0].mxu0
    %v432 = vadd.f32 0.0, %v431
    %433 = vmatprep.mubr.bf16.mxu0 0
    %434 = vmatmul.mubr.bf16.gmra.mrb[0].mxu0 %v369
    %v435 = vpop.f32.mrb[0].mxu0
    %v436 = vadd.f32 0.0, %v435
    %v437 = vpop.f32.mrb[0].mxu0
    %v438 = vadd.f32 0.0, %v437
    %v439 = vpop.f32.mrb[0].mxu0
    %v440 = vadd.f32 0.0, %v439
    %v441 = vpop.f32.mrb[0].mxu0
    %v442 = vadd.f32 0.0, %v441
    %443 = vdwg.mxu0
    %444 = vmatprep.subr.bf16.mxu0 %v281
    %445 = vmatpush1.bf16.msra.mxu0 %v280
    %446 = vmatprep.subr.bf16.mxu0 %v301
    %447 = vmatpush1.bf16.msra.mxu0 %v300
    %448 = vmatprep.subr.bf16.mxu0 0
    %449 = vmatpush1.bf16.msra.mxu0 0
    %450 = vmatprep.subr.bf16.mxu0 0
    %451 = vmatpush1.bf16.msra.mxu0 0
    %452 = vmatprep.subr.bf16.mxu0 0
    %453 = vmatpush1.bf16.msra.mxu0 0
    %454 = vmatprep.subr.bf16.mxu0 0
    %455 = vmatpush1.bf16.msra.mxu0 0
    %456 = vmatprep.subr.bf16.mxu0 0
    %457 = vmatpush1.bf16.msra.mxu0 0
    %458 = vmatprep.subr.bf16.mxu0 0
    %459 = vmatpush1.bf16.msra.mxu0 0
    %460 = vmatprep.subr.bf16.mxu0 0
    %461 = vmatpush1.bf16.msra.mxu0 0
    %462 = vmatprep.subr.bf16.mxu0 0
    %463 = vmatpush1.bf16.msra.mxu0 0
    %464 = vmatprep.subr.bf16.mxu0 0
    %465 = vmatpush1.bf16.msra.mxu0 0
    %466 = vmatprep.subr.bf16.mxu0 0
    %467 = vmatpush1.bf16.msra.mxu0 0
    %468 = vmatprep.subr.bf16.mxu0 0
    %469 = vmatpush1.bf16.msra.mxu0 0
    %470 = vmatprep.subr.bf16.mxu0 0
    %471 = vmatpush1.bf16.msra.mxu0 0
    %472 = vmatprep.subr.bf16.mxu0 0
    %473 = vmatpush1.bf16.msra.mxu0 0
    %474 = vmatprep.subr.bf16.mxu0 0
    %475 = vmatpush1.bf16.msra.mxu0 0
    %476 = vmatprep.mubr.bf16.mxu0 0
    %477 = vmatmul.mubr.bf16.gmra.mrb[0].mxu0 %v360
    %v478 = vpop.f32.mrb[0].mxu0
    %v479 = vadd.f32 0.0, %v478
    %v480 = vpop.f32.mrb[0].mxu0
    %v481 = vadd.f32 0.0, %v480
    %v482 = vpop.f32.mrb[0].mxu0
    %v483 = vadd.f32 0.0, %v482
    %v484 = vpop.f32.mrb[0].mxu0
    %v485 = vadd.f32 0.0, %v484
    %486 = vmatprep.mubr.bf16.mxu0 0
    %487 = vmatmul.mubr.bf16.gmra.mrb[0].mxu0 %v363
    %v488 = vpop.f32.mrb[0].mxu0
    %v489 = vadd.f32 0.0, %v488
    %v490 = vpop.f32.mrb[0].mxu0
    %v491 = vadd.f32 0.0, %v490
    %v492 = vpop.f32.mrb[0].mxu0
    %v493 = vadd.f32 0.0, %v492
    %v494 = vpop.f32.mrb[0].mxu0
    %v495 = vadd.f32 0.0, %v494
    %496 = vmatprep.mubr.bf16.mxu0 0
    %497 = vmatmul.mubr.bf16.gmra.mrb[0].mxu0 %v366
    %v498 = vpop.f32.mrb[0].mxu0
    %v499 = vadd.f32 0.0, %v498
    %v500 = vpop.f32.mrb[0].mxu0
    %v501 = vadd.f32 0.0, %v500
    %v502 = vpop.f32.mrb[0].mxu0
    %v503 = vadd.f32 0.0, %v502
    %v504 = vpop.f32.mrb[0].mxu0
    %v505 = vadd.f32 0.0, %v504
    %506 = vmatprep.mubr.bf16.mxu0 0
    %507 = vmatmul.mubr.bf16.gmra.mrb[0].mxu0 %v369
    %v508 = vpop.f32.mrb[0].mxu0
    %v509 = vadd.f32 0.0, %v508
    %v510 = vpop.f32.mrb[0].mxu0
    %v511 = vadd.f32 0.0, %v510
    %v512 = vpop.f32.mrb[0].mxu0
    %v513 = vadd.f32 0.0, %v512
    %v514 = vpop.f32.mrb[0].mxu0
    %v515 = vadd.f32 0.0, %v514
    %516 = vdwg.mxu0
    %517 = vmatprep.subr.bf16.mxu0 %v283
    %518 = vmatpush1.bf16.msra.mxu0 %v282
    %519 = vmatprep.subr.bf16.mxu0 %v303
    %520 = vmatpush1.bf16.msra.mxu0 %v302
    %521 = vmatprep.subr.bf16.mxu0 0
    %522 = vmatpush1.bf16.msra.mxu0 0
    %523 = vmatprep.subr.bf16.mxu0 0
    %524 = vmatpush1.bf16.msra.mxu0 0
    %525 = vmatprep.subr.bf16.mxu0 0
    %526 = vmatpush1.bf16.msra.mxu0 0
    %527 = vmatprep.subr.bf16.mxu0 0
    %528 = vmatpush1.bf16.msra.mxu0 0
    %529 = vmatprep.subr.bf16.mxu0 0
    %530 = vmatpush1.bf16.msra.mxu0 0
    %531 = vmatprep.subr.bf16.mxu0 0
    %532 = vmatpush1.bf16.msra.mxu0 0
    %533 = vmatprep.subr.bf16.mxu0 0
    %534 = vmatpush1.bf16.msra.mxu0 0
    %535 = vmatprep.subr.bf16.mxu0 0
    %536 = vmatpush1.bf16.msra.mxu0 0
    %537 = vmatprep.subr.bf16.mxu0 0
    %538 = vmatpush1.bf16.msra.mxu0 0
    %539 = vmatprep.subr.bf16.mxu0 0
    %540 = vmatpush1.bf16.msra.mxu0 0
    %541 = vmatprep.subr.bf16.mxu0 0
    %542 = vmatpush1.bf16.msra.mxu0 0
    %543 = vmatprep.subr.bf16.mxu0 0
    %544 = vmatpush1.bf16.msra.mxu0 0
    %545 = vmatprep.subr.bf16.mxu0 0
    %546 = vmatpush1.bf16.msra.mxu0 0
    %547 = vmatprep.subr.bf16.mxu0 0
    %548 = vmatpush1.bf16.msra.mxu0 0
    %549 = vmatprep.mubr.bf16.mxu0 0
    %550 = vmatmul.mubr.bf16.gmra.mrb[0].mxu0 %v360
    %v551 = vpop.f32.mrb[0].mxu0
    %v552 = vadd.f32 0.0, %v551
    %v553 = vpop.f32.mrb[0].mxu0
    %v554 = vadd.f32 0.0, %v553
    %v555 = vpop.f32.mrb[0].mxu0
    %v556 = vadd.f32 0.0, %v555
    %v557 = vpop.f32.mrb[0].mxu0
    %v558 = vadd.f32 0.0, %v557
    %559 = vmatprep.mubr.bf16.mxu0 0
    %560 = vmatmul.mubr.bf16.gmra.mrb[0].mxu0 %v363
    %v561 = vpop.f32.mrb[0].mxu0
    %v562 = vadd.f32 0.0, %v561
    %v563 = vpop.f32.mrb[0].mxu0
    %v564 = vadd.f32 0.0, %v563
    %v565 = vpop.f32.mrb[0].mxu0
    %v566 = vadd.f32 0.0, %v565
    %v567 = vpop.f32.mrb[0].mxu0
    %v568 = vadd.f32 0.0, %v567
    %569 = vmatprep.mubr.bf16.mxu0 0
    %570 = vmatmul.mubr.bf16.gmra.mrb[0].mxu0 %v366
    %v571 = vpop.f32.mrb[0].mxu0
    %v572 = vadd.f32 0.0, %v571
    %v573 = vpop.f32.mrb[0].mxu0
    %v574 = vadd.f32 0.0, %v573
    %v575 = vpop.f32.mrb[0].mxu0
    %v576 = vadd.f32 0.0, %v575
    %v577 = vpop.f32.mrb[0].mxu0
    %v578 = vadd.f32 0.0, %v577
    %579 = vmatprep.mubr.bf16.mxu0 0
    %580 = vmatmul.mubr.bf16.gmra.mrb[0].mxu0 %v369
    %v581 = vpop.f32.mrb[0].mxu0
    %v582 = vadd.f32 0.0, %v581
    %v583 = vpop.f32.mrb[0].mxu0
    %v584 = vadd.f32 0.0, %v583
    %v585 = vpop.f32.mrb[0].mxu0
    %v586 = vadd.f32 0.0, %v585
    %v587 = vpop.f32.mrb[0].mxu0
    %v588 = vadd.f32 0.0, %v587
    %589 = vdwg.mxu0
    %590 = vmatprep.subr.bf16.mxu0 %v285
    %591 = vmatpush1.bf16.msra.mxu0 %v284
    %592 = vmatprep.subr.bf16.mxu0 %v305
    %593 = vmatpush1.bf16.msra.mxu0 %v304
    %594 = vmatprep.subr.bf16.mxu0 0
    %595 = vmatpush1.bf16.msra.mxu0 0
    %596 = vmatprep.subr.bf16.mxu0 0
    %597 = vmatpush1.bf16.msra.mxu0 0
    %598 = vmatprep.subr.bf16.mxu0 0
    %599 = vmatpush1.bf16.msra.mxu0 0
    %600 = vmatprep.subr.bf16.mxu0 0
    %601 = vmatpush1.bf16.msra.mxu0 0
    %602 = vmatprep.subr.bf16.mxu0 0
    %603 = vmatpush1.bf16.msra.mxu0 0
    %604 = vmatprep.subr.bf16.mxu0 0
    %605 = vmatpush1.bf16.msra.mxu0 0
    %606 = vmatprep.subr.bf16.mxu0 0
    %607 = vmatpush1.bf16.msra.mxu0 0
    %608 = vmatprep.subr.bf16.mxu0 0
    %609 = vmatpush1.bf16.msra.mxu0 0
    %610 = vmatprep.subr.bf16.mxu0 0
    %611 = vmatpush1.bf16.msra.mxu0 0
    %612 = vmatprep.subr.bf16.mxu0 0
    %613 = vmatpush1.bf16.msra.mxu0 0
    %614 = vmatprep.subr.bf16.mxu0 0
    %615 = vmatpush1.bf16.msra.mxu0 0
    %616 = vmatprep.subr.bf16.mxu0 0
    %617 = vmatpush1.bf16.msra.mxu0 0
    %618 = vmatprep.subr.bf16.mxu0 0
    %619 = vmatpush1.bf16.msra.mxu0 0
    %620 = vmatprep.subr.bf16.mxu0 0
    %621 = vmatpush1.bf16.msra.mxu0 0
    %622 = vmatprep.mubr.bf16.mxu0 0
    %623 = vmatmul.mubr.bf16.gmra.mrb[0].mxu0 %v360
    %v624 = vpop.f32.mrb[0].mxu0
    %v625 = vadd.f32 0.0, %v624
    %v626 = vpop.f32.mrb[0].mxu0
    %v627 = vadd.f32 0.0, %v626
    %v628 = vpop.f32.mrb[0].mxu0
    %v629 = vadd.f32 0.0, %v628
    %v630 = vpop.f32.mrb[0].mxu0
    %v631 = vadd.f32 0.0, %v630
    %632 = vmatprep.mubr.bf16.mxu0 0
    %633 = vmatmul.mubr.bf16.gmra.mrb[0].mxu0 %v363
    %v634 = vpop.f32.mrb[0].mxu0
    %v635 = vadd.f32 0.0, %v634
    %v636 = vpop.f32.mrb[0].mxu0
    %v637 = vadd.f32 0.0, %v636
    %v638 = vpop.f32.mrb[0].mxu0
    %v639 = vadd.f32 0.0, %v638
    %v640 = vpop.f32.mrb[0].mxu0
    %v641 = vadd.f32 0.0, %v640
    %642 = vmatprep.mubr.bf16.mxu0 0
    %643 = vmatmul.mubr.bf16.gmra.mrb[0].mxu0 %v366
    %v644 = vpop.f32.mrb[0].mxu0
    %v645 = vadd.f32 0.0, %v644
    %v646 = vpop.f32.mrb[0].mxu0
    %v647 = vadd.f32 0.0, %v646
    %v648 = vpop.f32.mrb[0].mxu0
    %v649 = vadd.f32 0.0, %v648
    %v650 = vpop.f32.mrb[0].mxu0
    %v651 = vadd.f32 0.0, %v650
    %652 = vmatprep.mubr.bf16.mxu0 0
    %653 = vmatmul.mubr.bf16.gmra.mrb[0].mxu0 %v369
    %v654 = vpop.f32.mrb[0].mxu0
    %v655 = vadd.f32 0.0, %v654
    %v656 = vpop.f32.mrb[0].mxu0
    %v657 = vadd.f32 0.0, %v656
    %v658 = vpop.f32.mrb[0].mxu0
    %v659 = vadd.f32 0.0, %v658
    %v660 = vpop.f32.mrb[0].mxu0
    %v661 = vadd.f32 0.0, %v660
    %662 = vdwg.mxu0
    %663 = vmatprep.subr.bf16.mxu0 %v287
    %664 = vmatpush1.bf16.msra.mxu0 %v286
    %665 = vmatprep.subr.bf16.mxu0 %v307
    %666 = vmatpush1.bf16.msra.mxu0 %v306
    %667 = vmatprep.subr.bf16.mxu0 0
    %668 = vmatpush1.bf16.msra.mxu0 0
    %669 = vmatprep.subr.bf16.mxu0 0
    %670 = vmatpush1.bf16.msra.mxu0 0
    %671 = vmatprep.subr.bf16.mxu0 0
    %672 = vmatpush1.bf16.msra.mxu0 0
    %673 = vmatprep.subr.bf16.mxu0 0
    %674 = vmatpush1.bf16.msra.mxu0 0
    %675 = vmatprep.subr.bf16.mxu0 0
    %676 = vmatpush1.bf16.msra.mxu0 0
    %677 = vmatprep.subr.bf16.mxu0 0
    %678 = vmatpush1.bf16.msra.mxu0 0
    %679 = vmatprep.subr.bf16.mxu0 0
    %680 = vmatpush1.bf16.msra.mxu0 0
    %681 = vmatprep.subr.bf16.mxu0 0
    %682 = vmatpush1.bf16.msra.mxu0 0
    %683 = vmatprep.subr.bf16.mxu0 0
    %684 = vmatpush1.bf16.msra.mxu0 0
    %685 = vmatprep.subr.bf16.mxu0 0
    %686 = vmatpush1.bf16.msra.mxu0 0
    %687 = vmatprep.subr.bf16.mxu0 0
    %688 = vmatpush1.bf16.msra.mxu0 0
    %689 = vmatprep.subr.bf16.mxu0 0
    %690 = vmatpush1.bf16.msra.mxu0 0
    %691 = vmatprep.subr.bf16.mxu0 0
    %692 = vmatpush1.bf16.msra.mxu0 0
    %693 = vmatprep.subr.bf16.mxu0 0
    %694 = vmatpush1.bf16.msra.mxu0 0
    %695 = vmatprep.mubr.bf16.mxu0 0
    %696 = vmatmul.mubr.bf16.gmra.mrb[0].mxu0 %v360
    %v697 = vpop.f32.mrb[0].mxu0
    %v698 = vadd.f32 0.0, %v697
    %v699 = vpop.f32.mrb[0].mxu0
    %v700 = vadd.f32 0.0, %v699
    %v701 = vpop.f32.mrb[0].mxu0
    %v702 = vadd.f32 0.0, %v701
    %v703 = vpop.f32.mrb[0].mxu0
    %v704 = vadd.f32 0.0, %v703
    %705 = vmatprep.mubr.bf16.mxu0 0
    %706 = vmatmul.mubr.bf16.gmra.mrb[0].mxu0 %v363
    %v707 = vpop.f32.mrb[0].mxu0
    %v708 = vadd.f32 0.0, %v707
    %v709 = vpop.f32.mrb[0].mxu0
    %v710 = vadd.f32 0.0, %v709
    %v711 = vpop.f32.mrb[0].mxu0
    %v712 = vadd.f32 0.0, %v711
    %v713 = vpop.f32.mrb[0].mxu0
    %v714 = vadd.f32 0.0, %v713
    %715 = vmatprep.mubr.bf16.mxu0 0
    %716 = vmatmul.mubr.bf16.gmra.mrb[0].mxu0 %v366
    %v717 = vpop.f32.mrb[0].mxu0
    %v718 = vadd.f32 0.0, %v717
    %v719 = vpop.f32.mrb[0].mxu0
    %v720 = vadd.f32 0.0, %v719
    %v721 = vpop.f32.mrb[0].mxu0
    %v722 = vadd.f32 0.0, %v721
    %v723 = vpop.f32.mrb[0].mxu0
    %v724 = vadd.f32 0.0, %v723
    %725 = vmatprep.mubr.bf16.mxu0 0
    %726 = vmatmul.mubr.bf16.gmra.mrb[0].mxu0 %v369
    %v727 = vpop.f32.mrb[0].mxu0
    %v728 = vadd.f32 0.0, %v727
    %v729 = vpop.f32.mrb[0].mxu0
    %v730 = vadd.f32 0.0, %v729
    %v731 = vpop.f32.mrb[0].mxu0
    %v732 = vadd.f32 0.0, %v731
    %v733 = vpop.f32.mrb[0].mxu0
    %v734 = vadd.f32 0.0, %v733
    %735 = vdwg.mxu0
    %736 = vmatprep.subr.bf16.mxu0 %v289
    %737 = vmatpush1.bf16.msra.mxu0 %v288
    %738 = vmatprep.subr.bf16.mxu0 %v309
    %739 = vmatpush1.bf16.msra.mxu0 %v308
    %740 = vmatprep.subr.bf16.mxu0 0
    %741 = vmatpush1.bf16.msra.mxu0 0
    %742 = vmatprep.subr.bf16.mxu0 0
    %743 = vmatpush1.bf16.msra.mxu0 0
    %744 = vmatprep.subr.bf16.mxu0 0
    %745 = vmatpush1.bf16.msra.mxu0 0
    %746 = vmatprep.subr.bf16.mxu0 0
    %747 = vmatpush1.bf16.msra.mxu0 0
    %748 = vmatprep.subr.bf16.mxu0 0
    %749 = vmatpush1.bf16.msra.mxu0 0
    %750 = vmatprep.subr.bf16.mxu0 0
    %751 = vmatpush1.bf16.msra.mxu0 0
    %752 = vmatprep.subr.bf16.mxu0 0
    %753 = vmatpush1.bf16.msra.mxu0 0
    %754 = vmatprep.subr.bf16.mxu0 0
    %755 = vmatpush1.bf16.msra.mxu0 0
    %756 = vmatprep.subr.bf16.mxu0 0
    %757 = vmatpush1.bf16.msra.mxu0 0
    %758 = vmatprep.subr.bf16.mxu0 0
    %759 = vmatpush1.bf16.msra.mxu0 0
    %760 = vmatprep.subr.bf16.mxu0 0
    %761 = vmatpush1.bf16.msra.mxu0 0
    %762 = vmatprep.subr.bf16.mxu0 0
    %763 = vmatpush1.bf16.msra.mxu0 0
    %764 = vmatprep.subr.bf16.mxu0 0
    %765 = vmatpush1.bf16.msra.mxu0 0
    %766 = vmatprep.subr.bf16.mxu0 0
    %767 = vmatpush1.bf16.msra.mxu0 0
    %768 = vmatprep.mubr.bf16.mxu0 0
    %769 = vmatmul.mubr.bf16.gmra.mrb[0].mxu0 %v360
    %v770 = vpop.f32.mrb[0].mxu0
    %v771 = vadd.f32 0.0, %v770
    %v772 = vpop.f32.mrb[0].mxu0
    %v773 = vadd.f32 0.0, %v772
    %v774 = vpop.f32.mrb[0].mxu0
    %v775 = vadd.f32 0.0, %v774
    %v776 = vpop.f32.mrb[0].mxu0
    %v777 = vadd.f32 0.0, %v776
    %778 = vmatprep.mubr.bf16.mxu0 0
    %779 = vmatmul.mubr.bf16.gmra.mrb[0].mxu0 %v363
    %v780 = vpop.f32.mrb[0].mxu0
    %v781 = vadd.f32 0.0, %v780
    %v782 = vpop.f32.mrb[0].mxu0
    %v783 = vadd.f32 0.0, %v782
    %v784 = vpop.f32.mrb[0].mxu0
    %v785 = vadd.f32 0.0, %v784
    %v786 = vpop.f32.mrb[0].mxu0
    %v787 = vadd.f32 0.0, %v786
    %788 = vmatprep.mubr.bf16.mxu0 0
    %789 = vmatmul.mubr.bf16.gmra.mrb[0].mxu0 %v366
    %v790 = vpop.f32.mrb[0].mxu0
    %v791 = vadd.f32 0.0, %v790
    %v792 = vpop.f32.mrb[0].mxu0
    %v793 = vadd.f32 0.0, %v792
    %v794 = vpop.f32.mrb[0].mxu0
    %v795 = vadd.f32 0.0, %v794
    %v796 = vpop.f32.mrb[0].mxu0
    %v797 = vadd.f32 0.0, %v796
    %798 = vmatprep.mubr.bf16.mxu0 0
    %799 = vmatmul.mubr.bf16.gmra.mrb[0].mxu0 %v369
    %v800 = vpop.f32.mrb[0].mxu0
    %v801 = vadd.f32 0.0, %v800
    %v802 = vpop.f32.mrb[0].mxu0
    %v803 = vadd.f32 0.0, %v802
    %v804 = vpop.f32.mrb[0].mxu0
    %v805 = vadd.f32 0.0, %v804
    %v806 = vpop.f32.mrb[0].mxu0
    %v807 = vadd.f32 0.0, %v806
    %808 = vdwg.mxu0
    %809 = vmatprep.subr.bf16.mxu0 %v291
    %810 = vmatpush1.bf16.msra.mxu0 %v290
    %811 = vmatprep.subr.bf16.mxu0 %v311
    %812 = vmatpush1.bf16.msra.mxu0 %v310
    %813 = vmatprep.subr.bf16.mxu0 0
    %814 = vmatpush1.bf16.msra.mxu0 0
    %815 = vmatprep.subr.bf16.mxu0 0
    %816 = vmatpush1.bf16.msra.mxu0 0
    %817 = vmatprep.subr.bf16.mxu0 0
    %818 = vmatpush1.bf16.msra.mxu0 0
    %819 = vmatprep.subr.bf16.mxu0 0
    %820 = vmatpush1.bf16.msra.mxu0 0
    %821 = vmatprep.subr.bf16.mxu0 0
    %822 = vmatpush1.bf16.msra.mxu0 0
    %823 = vmatprep.subr.bf16.mxu0 0
    %824 = vmatpush1.bf16.msra.mxu0 0
    %825 = vmatprep.subr.bf16.mxu0 0
    %826 = vmatpush1.bf16.msra.mxu0 0
    %827 = vmatprep.subr.bf16.mxu0 0
    %828 = vmatpush1.bf16.msra.mxu0 0
    %829 = vmatprep.subr.bf16.mxu0 0
    %830 = vmatpush1.bf16.msra.mxu0 0
    %831 = vmatprep.subr.bf16.mxu0 0
    %832 = vmatpush1.bf16.msra.mxu0 0
    %833 = vmatprep.subr.bf16.mxu0 0
    %834 = vmatpush1.bf16.msra.mxu0 0
    %835 = vmatprep.subr.bf16.mxu0 0
    %836 = vmatpush1.bf16.msra.mxu0 0
    %837 = vmatprep.subr.bf16.mxu0 0
    %838 = vmatpush1.bf16.msra.mxu0 0
    %839 = vmatprep.subr.bf16.mxu0 0
    %840 = vmatpush1.bf16.msra.mxu0 0
    %841 = vmatprep.mubr.bf16.mxu0 0
    %842 = vmatmul.mubr.bf16.gmra.mrb[0].mxu0 %v360
    %v843 = vpop.f32.mrb[0].mxu0
    %v844 = vadd.f32 0.0, %v843
    %v845 = vpop.f32.mrb[0].mxu0
    %v846 = vadd.f32 0.0, %v845
    %v847 = vpop.f32.mrb[0].mxu0
    %v848 = vadd.f32 0.0, %v847
    %v849 = vpop.f32.mrb[0].mxu0
    %v850 = vadd.f32 0.0, %v849
    %851 = vmatprep.mubr.bf16.mxu0 0
    %852 = vmatmul.mubr.bf16.gmra.mrb[0].mxu0 %v363
    %v853 = vpop.f32.mrb[0].mxu0
    %v854 = vadd.f32 0.0, %v853
    %v855 = vpop.f32.mrb[0].mxu0
    %v856 = vadd.f32 0.0, %v855
    %v857 = vpop.f32.mrb[0].mxu0
    %v858 = vadd.f32 0.0, %v857
    %v859 = vpop.f32.mrb[0].mxu0
    %v860 = vadd.f32 0.0, %v859
    %861 = vmatprep.mubr.bf16.mxu0 0
    %862 = vmatmul.mubr.bf16.gmra.mrb[0].mxu0 %v366
    %v863 = vpop.f32.mrb[0].mxu0
    %v864 = vadd.f32 0.0, %v863
    %v865 = vpop.f32.mrb[0].mxu0
    %v866 = vadd.f32 0.0, %v865
    %v867 = vpop.f32.mrb[0].mxu0
    %v868 = vadd.f32 0.0, %v867
    %v869 = vpop.f32.mrb[0].mxu0
    %v870 = vadd.f32 0.0, %v869
    %871 = vmatprep.mubr.bf16.mxu0 0
    %872 = vmatmul.mubr.bf16.gmra.mrb[0].mxu0 %v369
    %v873 = vpop.f32.mrb[0].mxu0
    %v874 = vadd.f32 0.0, %v873
    %v875 = vpop.f32.mrb[0].mxu0
    %v876 = vadd.f32 0.0, %v875
    %v877 = vpop.f32.mrb[0].mxu0
    %v878 = vadd.f32 0.0, %v877
    %v879 = vpop.f32.mrb[0].mxu0
    %v880 = vadd.f32 0.0, %v879
    %881 = vdwg.mxu0
    %882 = vmatprep.subr.bf16.mxu0 %v293
    %883 = vmatpush1.bf16.msra.mxu0 %v292
    %884 = vmatprep.subr.bf16.mxu0 %v313
    %885 = vmatpush1.bf16.msra.mxu0 %v312
    %886 = vmatprep.subr.bf16.mxu0 0
    %887 = vmatpush1.bf16.msra.mxu0 0
    %888 = vmatprep.subr.bf16.mxu0 0
    %889 = vmatpush1.bf16.msra.mxu0 0
    %890 = vmatprep.subr.bf16.mxu0 0
    %891 = vmatpush1.bf16.msra.mxu0 0
    %892 = vmatprep.subr.bf16.mxu0 0
    %893 = vmatpush1.bf16.msra.mxu0 0
    %894 = vmatprep.subr.bf16.mxu0 0
    %895 = vmatpush1.bf16.msra.mxu0 0
    %896 = vmatprep.subr.bf16.mxu0 0
    %897 = vmatpush1.bf16.msra.mxu0 0
    %898 = vmatprep.subr.bf16.mxu0 0
    %899 = vmatpush1.bf16.msra.mxu0 0
    %900 = vmatprep.subr.bf16.mxu0 0
    %901 = vmatpush1.bf16.msra.mxu0 0
    %902 = vmatprep.subr.bf16.mxu0 0
    %903 = vmatpush1.bf16.msra.mxu0 0
    %904 = vmatprep.subr.bf16.mxu0 0
    %905 = vmatpush1.bf16.msra.mxu0 0
    %906 = vmatprep.subr.bf16.mxu0 0
    %907 = vmatpush1.bf16.msra.mxu0 0
    %908 = vmatprep.subr.bf16.mxu0 0
    %909 = vmatpush1.bf16.msra.mxu0 0
    %910 = vmatprep.subr.bf16.mxu0 0
    %911 = vmatpush1.bf16.msra.mxu0 0
    %912 = vmatprep.subr.bf16.mxu0 0
    %913 = vmatpush1.bf16.msra.mxu0 0
    %914 = vmatprep.mubr.bf16.mxu0 0
    %915 = vmatmul.mubr.bf16.gmra.mrb[0].mxu0 %v360
    %v916 = vpop.f32.mrb[0].mxu0
    %v917 = vadd.f32 0.0, %v916
    %v918 = vpop.f32.mrb[0].mxu0
    %v919 = vadd.f32 0.0, %v918
    %v920 = vpop.f32.mrb[0].mxu0
    %v921 = vadd.f32 0.0, %v920
    %v922 = vpop.f32.mrb[0].mxu0
    %v923 = vadd.f32 0.0, %v922
    %924 = vmatprep.mubr.bf16.mxu0 0
    %925 = vmatmul.mubr.bf16.gmra.mrb[0].mxu0 %v363
    %v926 = vpop.f32.mrb[0].mxu0
    %v927 = vadd.f32 0.0, %v926
    %v928 = vpop.f32.mrb[0].mxu0
    %v929 = vadd.f32 0.0, %v928
    %v930 = vpop.f32.mrb[0].mxu0
    %v931 = vadd.f32 0.0, %v930
    %v932 = vpop.f32.mrb[0].mxu0
    %v933 = vadd.f32 0.0, %v932
    %934 = vmatprep.mubr.bf16.mxu0 0
    %935 = vmatmul.mubr.bf16.gmra.mrb[0].mxu0 %v366
    %v936 = vpop.f32.mrb[0].mxu0
    %v937 = vadd.f32 0.0, %v936
    %v938 = vpop.f32.mrb[0].mxu0
    %v939 = vadd.f32 0.0, %v938
    %v940 = vpop.f32.mrb[0].mxu0
    %v941 = vadd.f32 0.0, %v940
    %v942 = vpop.f32.mrb[0].mxu0
    %v943 = vadd.f32 0.0, %v942
    %944 = vmatprep.mubr.bf16.mxu0 0
    %945 = vmatmul.mubr.bf16.gmra.mrb[0].mxu0 %v369
    %v946 = vpop.f32.mrb[0].mxu0
    %v947 = vadd.f32 0.0, %v946
    %v948 = vpop.f32.mrb[0].mxu0
    %v949 = vadd.f32 0.0, %v948
    %v950 = vpop.f32.mrb[0].mxu0
    %v951 = vadd.f32 0.0, %v950
    %v952 = vpop.f32.mrb[0].mxu0
    %v953 = vadd.f32 0.0, %v952
    %954 = vdwg.mxu0
    %955 = vmatprep.subr.bf16.mxu0 %v295
    %956 = vmatpush1.bf16.msra.mxu0 %v294
    %957 = vmatprep.subr.bf16.mxu0 %v315
    %958 = vmatpush1.bf16.msra.mxu0 %v314
    %959 = vmatprep.subr.bf16.mxu0 0
    %960 = vmatpush1.bf16.msra.mxu0 0
    %961 = vmatprep.subr.bf16.mxu0 0
    %962 = vmatpush1.bf16.msra.mxu0 0
    %963 = vmatprep.subr.bf16.mxu0 0
    %964 = vmatpush1.bf16.msra.mxu0 0
    %965 = vmatprep.subr.bf16.mxu0 0
    %966 = vmatpush1.bf16.msra.mxu0 0
    %967 = vmatprep.subr.bf16.mxu0 0
    %968 = vmatpush1.bf16.msra.mxu0 0
    %969 = vmatprep.subr.bf16.mxu0 0
    %970 = vmatpush1.bf16.msra.mxu0 0
    %971 = vmatprep.subr.bf16.mxu0 0
    %972 = vmatpush1.bf16.msra.mxu0 0
    %973 = vmatprep.subr.bf16.mxu0 0
    %974 = vmatpush1.bf16.msra.mxu0 0
    %975 = vmatprep.subr.bf16.mxu0 0
    %976 = vmatpush1.bf16.msra.mxu0 0
    %977 = vmatprep.subr.bf16.mxu0 0
    %978 = vmatpush1.bf16.msra.mxu0 0
    %979 = vmatprep.subr.bf16.mxu0 0
    %980 = vmatpush1.bf16.msra.mxu0 0
    %981 = vmatprep.subr.bf16.mxu0 0
    %982 = vmatpush1.bf16.msra.mxu0 0
    %983 = vmatprep.subr.bf16.mxu0 0
    %984 = vmatpush1.bf16.msra.mxu0 0
    %985 = vmatprep.subr.bf16.mxu0 0
    %986 = vmatpush1.bf16.msra.mxu0 0
    %987 = vmatprep.mubr.bf16.mxu0 0
    %988 = vmatmul.mubr.bf16.gmra.mrb[0].mxu0 %v360
    %v989 = vpop.f32.mrb[0].mxu0
    %v990 = vadd.f32 0.0, %v989
    %v991 = vpop.f32.mrb[0].mxu0
    %v992 = vadd.f32 0.0, %v991
    %v993 = vpop.f32.mrb[0].mxu0
    %v994 = vadd.f32 0.0, %v993
    %v995 = vpop.f32.mrb[0].mxu0
    %v996 = vadd.f32 0.0, %v995
    %997 = vmatprep.mubr.bf16.mxu0 0
    %998 = vmatmul.mubr.bf16.gmra.mrb[0].mxu0 %v363
    %v999 = vpop.f32.mrb[0].mxu0
    %v1000 = vadd.f32 0.0, %v999
    %v1001 = vpop.f32.mrb[0].mxu0
    %v1002 = vadd.f32 0.0, %v1001
    %v1003 = vpop.f32.mrb[0].mxu0
    %v1004 = vadd.f32 0.0, %v1003
    %v1005 = vpop.f32.mrb[0].mxu0
    %v1006 = vadd.f32 0.0, %v1005
    %1007 = vmatprep.mubr.bf16.mxu0 0
    %1008 = vmatmul.mubr.bf16.gmra.mrb[0].mxu0 %v366
    %v1009 = vpop.f32.mrb[0].mxu0
    %v1010 = vadd.f32 0.0, %v1009
    %v1011 = vpop.f32.mrb[0].mxu0
    %v1012 = vadd.f32 0.0, %v1011
    %v1013 = vpop.f32.mrb[0].mxu0
    %v1014 = vadd.f32 0.0, %v1013
    %v1015 = vpop.f32.mrb[0].mxu0
    %v1016 = vadd.f32 0.0, %v1015
    %1017 = vmatprep.mubr.bf16.mxu0 0
    %1018 = vmatmul.mubr.bf16.gmra.mrb[0].mxu0 %v369
    %v1019 = vpop.f32.mrb[0].mxu0
    %v1020 = vadd.f32 0.0, %v1019
    %v1021 = vpop.f32.mrb[0].mxu0
    %v1022 = vadd.f32 0.0, %v1021
    %v1023 = vpop.f32.mrb[0].mxu0
    %v1024 = vadd.f32 0.0, %v1023
    %v1025 = vpop.f32.mrb[0].mxu0
    %v1026 = vadd.f32 0.0, %v1025
    %1027 = vdwg.mxu0
    %1028 = vmatprep.subr.bf16.mxu0 %v297
    %1029 = vmatpush1.bf16.msra.mxu0 %v296
    %1030 = vmatprep.subr.bf16.mxu0 %v317
    %1031 = vmatpush1.bf16.msra.mxu0 %v316
    %1032 = vmatprep.subr.bf16.mxu0 0
    %1033 = vmatpush1.bf16.msra.mxu0 0
    %1034 = vmatprep.subr.bf16.mxu0 0
    %1035 = vmatpush1.bf16.msra.mxu0 0
    %1036 = vmatprep.subr.bf16.mxu0 0
    %1037 = vmatpush1.bf16.msra.mxu0 0
    %1038 = vmatprep.subr.bf16.mxu0 0
    %1039 = vmatpush1.bf16.msra.mxu0 0
    %1040 = vmatprep.subr.bf16.mxu0 0
    %1041 = vmatpush1.bf16.msra.mxu0 0
    %1042 = vmatprep.subr.bf16.mxu0 0
    %1043 = vmatpush1.bf16.msra.mxu0 0
    %1044 = vmatprep.subr.bf16.mxu0 0
    %1045 = vmatpush1.bf16.msra.mxu0 0
    %1046 = vmatprep.subr.bf16.mxu0 0
    %1047 = vmatpush1.bf16.msra.mxu0 0
    %1048 = vmatprep.subr.bf16.mxu0 0
    %1049 = vmatpush1.bf16.msra.mxu0 0
    %1050 = vmatprep.subr.bf16.mxu0 0
    %1051 = vmatpush1.bf16.msra.mxu0 0
    %1052 = vmatprep.subr.bf16.mxu0 0
    %1053 = vmatpush1.bf16.msra.mxu0 0
    %1054 = vmatprep.subr.bf16.mxu0 0
    %1055 = vmatpush1.bf16.msra.mxu0 0
    %1056 = vmatprep.subr.bf16.mxu0 0
    %1057 = vmatpush1.bf16.msra.mxu0 0
    %1058 = vmatprep.subr.bf16.mxu0 0
    %1059 = vmatpush1.bf16.msra.mxu0 0
    %1060 = vmatprep.mubr.bf16.mxu0 0
    %1061 = vmatmul.mubr.bf16.gmra.mrb[0].mxu0 %v360
    %v1062 = vpop.f32.mrb[0].mxu0
    %v1063 = vadd.f32 0.0, %v1062
    %v1064 = vpop.f32.mrb[0].mxu0
    %v1065 = vadd.f32 0.0, %v1064
    %v1066 = vpop.f32.mrb[0].mxu0
    %v1067 = vadd.f32 0.0, %v1066
    %v1068 = vpop.f32.mrb[0].mxu0
    %v1069 = vadd.f32 0.0, %v1068
    %1070 = vmatprep.mubr.bf16.mxu0 0
    %1071 = vmatmul.mubr.bf16.gmra.mrb[0].mxu0 %v363
    %v1072 = vpop.f32.mrb[0].mxu0
    %v1073 = vadd.f32 0.0, %v1072
    %v1074 = vpop.f32.mrb[0].mxu0
    %v1075 = vadd.f32 0.0, %v1074
    %v1076 = vpop.f32.mrb[0].mxu0
    %v1077 = vadd.f32 0.0, %v1076
    %v1078 = vpop.f32.mrb[0].mxu0
    %v1079 = vadd.f32 0.0, %v1078
    %1080 = vmatprep.mubr.bf16.mxu0 0
    %1081 = vmatmul.mubr.bf16.gmra.mrb[0].mxu0 %v366
    %v1082 = vpop.f32.mrb[0].mxu0
    %v1083 = vadd.f32 0.0, %v1082
    %v1084 = vpop.f32.mrb[0].mxu0
    %v1085 = vadd.f32 0.0, %v1084
    %v1086 = vpop.f32.mrb[0].mxu0
    %v1087 = vadd.f32 0.0, %v1086
    %v1088 = vpop.f32.mrb[0].mxu0
    %v1089 = vadd.f32 0.0, %v1088
    %1090 = vmatprep.mubr.bf16.mxu0 0
    %1091 = vmatmul.mubr.bf16.gmra.mrb[0].mxu0 %v369
    %v1092 = vpop.f32.mrb[0].mxu0
    %v1093 = vadd.f32 0.0, %v1092
    %v1094 = vpop.f32.mrb[0].mxu0
    %v1095 = vadd.f32 0.0, %v1094
    %v1096 = vpop.f32.mrb[0].mxu0
    %v1097 = vadd.f32 0.0, %v1096
    %v1098 = vpop.f32.mrb[0].mxu0
    %v1099 = vadd.f32 0.0, %v1098
    %1100 = vdwg.mxu0
    %vm1133 = vcmask 1046528
    %v1134 = vrot.slane %v552, 1
    %v1135 = vrot.slane %v556, 1
    %v1136 = vsel %vm1133, %v1134, %v1135
    %v1137 = vrot.slane %v554, 1
    %v1138 = vrot.slane %v558, 1
    %v1139 = vsel %vm1133, %v1137, %v1138
    %v1140 = vrot.slane %v625, 1
    %v1141 = vrot.slane %v629, 1
    %v1142 = vsel %vm1133, %v1140, %v1141
    %v1143 = vrot.slane %v627, 1
    %v1144 = vrot.slane %v631, 1
    %v1145 = vsel %vm1133, %v1143, %v1144
    %v1146 = vrot.slane %v562, 1
    %v1147 = vsel %vm1133, %v1135, %v1146
    %v1148 = vrot.slane %v564, 1
    %v1149 = vsel %vm1133, %v1138, %v1148
    %v1150 = vrot.slane %v635, 1
    %v1151 = vsel %vm1133, %v1141, %v1150
    %v1152 = vrot.slane %v637, 1
    %v1153 = vsel %vm1133, %v1144, %v1152
    %v1154 = vrot.slane %v566, 1
    %v1155 = vsel %vm1133, %v1146, %v1154
    %v1156 = vrot.slane %v568, 1
    %v1157 = vsel %vm1133, %v1148, %v1156
    %v1158 = vrot.slane %v639, 1
    %v1159 = vsel %vm1133, %v1150, %v1158
    %v1160 = vrot.slane %v641, 1
    %v1161 = vsel %vm1133, %v1152, %v1160
    %v1162 = vrot.slane %v572, 1
    %v1163 = vsel %vm1133, %v1154, %v1162
    %v1164 = vrot.slane %v574, 1
    %v1165 = vsel %vm1133, %v1156, %v1164
    %v1166 = vrot.slane %v645, 1
    %v1167 = vsel %vm1133, %v1158, %v1166
    %v1168 = vrot.slane %v647, 1
    %v1169 = vsel %vm1133, %v1160, %v1168
    %v1170 = vrot.slane %v576, 1
    %v1171 = vsel %vm1133, %v1162, %v1170
    %v1172 = vrot.slane %v578, 1
    %v1173 = vsel %vm1133, %v1164, %v1172
    %v1174 = vrot.slane %v649, 1
    %v1175 = vsel %vm1133, %v1166, %v1174
    %v1176 = vrot.slane %v651, 1
    %v1177 = vsel %vm1133, %v1168, %v1176
    %v1178 = vrot.slane %v582, 1
    %v1179 = vsel %vm1133, %v1170, %v1178
    %v1180 = vrot.slane %v584, 1
    %v1181 = vsel %vm1133, %v1172, %v1180
    %v1182 = vrot.slane %v655, 1
    %v1183 = vsel %vm1133, %v1174, %v1182
    %v1184 = vrot.slane %v657, 1
    %v1185 = vsel %vm1133, %v1176, %v1184
    %v1186 = vrot.slane %v586, 1
    %v1187 = vsel %vm1133, %v1178, %v1186
    %v1188 = vrot.slane %v588, 1
    %v1189 = vsel %vm1133, %v1180, %v1188
    %v1190 = vrot.slane %v659, 1
    %v1191 = vsel %vm1133, %v1182, %v1190
    %v1192 = vrot.slane %v661, 1
    %v1193 = vsel %vm1133, %v1184, %v1192
    %v1226 = vsel %vm1133, %v1186, 0.0
    %v1227 = vsel %vm1133, %v1188, 0.0
    %v1228 = vsel %vm1133, %v1190, 0.0
    %v1229 = vsel %vm1133, %v1192, 0.0
    %v1230 = vadd.f32 %v406, %v1136
    %v1231 = vadd.f32 %v408, %v1139
    %v1232 = vadd.f32 %v479, %v1142
    %v1233 = vadd.f32 %v481, %v1145
    %v1234 = vadd.f32 %v410, %v1147
    %v1235 = vadd.f32 %v412, %v1149
    %v1236 = vadd.f32 %v483, %v1151
    %v1237 = vadd.f32 %v485, %v1153
    %v1238 = vadd.f32 %v416, %v1155
    %v1239 = vadd.f32 %v418, %v1157
    %v1240 = vadd.f32 %v489, %v1159
    %v1241 = vadd.f32 %v491, %v1161
    %v1242 = vadd.f32 %v420, %v1163
    %v1243 = vadd.f32 %v422, %v1165
    %v1244 = vadd.f32 %v493, %v1167
    %v1245 = vadd.f32 %v495, %v1169
    %v1246 = vadd.f32 %v426, %v1171
    %v1247 = vadd.f32 %v428, %v1173
    %v1248 = vadd.f32 %v499, %v1175
    %v1249 = vadd.f32 %v501, %v1177
    %v1250 = vadd.f32 %v430, %v1179
    %v1251 = vadd.f32 %v432, %v1181
    %v1252 = vadd.f32 %v503, %v1183
    %v1253 = vadd.f32 %v505, %v1185
    %v1254 = vadd.f32 %v436, %v1187
    %v1255 = vadd.f32 %v438, %v1189
    %v1256 = vadd.f32 %v509, %v1191
    %v1257 = vadd.f32 %v511, %v1193
    %v1258 = vadd.f32 %v440, %v1226
    %v1259 = vadd.f32 %v442, %v1227
    %v1260 = vadd.f32 %v513, %v1228
    %v1261 = vadd.f32 %v515, %v1229
    %vm1294 = vcmask 1045504
    %v1295 = vrot.slane %v698, 2
    %v1296 = vrot.slane %v702, 2
    %v1297 = vsel %vm1294, %v1295, %v1296
    %v1298 = vrot.slane %v700, 2
    %v1299 = vrot.slane %v704, 2
    %v1300 = vsel %vm1294, %v1298, %v1299
    %v1301 = vrot.slane %v771, 2
    %v1302 = vrot.slane %v775, 2
    %v1303 = vsel %vm1294, %v1301, %v1302
    %v1304 = vrot.slane %v773, 2
    %v1305 = vrot.slane %v777, 2
    %v1306 = vsel %vm1294, %v1304, %v1305
    %v1307 = vrot.slane %v708, 2
    %v1308 = vsel %vm1294, %v1296, %v1307
    %v1309 = vrot.slane %v710, 2
    %v1310 = vsel %vm1294, %v1299, %v1309
    %v1311 = vrot.slane %v781, 2
    %v1312 = vsel %vm1294, %v1302, %v1311
    %v1313 = vrot.slane %v783, 2
    %v1314 = vsel %vm1294, %v1305, %v1313
    %v1315 = vrot.slane %v712, 2
    %v1316 = vsel %vm1294, %v1307, %v1315
    %v1317 = vrot.slane %v714, 2
    %v1318 = vsel %vm1294, %v1309, %v1317
    %v1319 = vrot.slane %v785, 2
    %v1320 = vsel %vm1294, %v1311, %v1319
    %v1321 = vrot.slane %v787, 2
    %v1322 = vsel %vm1294, %v1313, %v1321
    %v1323 = vrot.slane %v718, 2
    %v1324 = vsel %vm1294, %v1315, %v1323
    %v1325 = vrot.slane %v720, 2
    %v1326 = vsel %vm1294, %v1317, %v1325
    %v1327 = vrot.slane %v791, 2
    %v1328 = vsel %vm1294, %v1319, %v1327
    %v1329 = vrot.slane %v793, 2
    %v1330 = vsel %vm1294, %v1321, %v1329
    %v1331 = vrot.slane %v722, 2
    %v1332 = vsel %vm1294, %v1323, %v1331
    %v1333 = vrot.slane %v724, 2
    %v1334 = vsel %vm1294, %v1325, %v1333
    %v1335 = vrot.slane %v795, 2
    %v1336 = vsel %vm1294, %v1327, %v1335
    %v1337 = vrot.slane %v797, 2
    %v1338 = vsel %vm1294, %v1329, %v1337
    %v1339 = vrot.slane %v728, 2
    %v1340 = vsel %vm1294, %v1331, %v1339
    %v1341 = vrot.slane %v730, 2
    %v1342 = vsel %vm1294, %v1333, %v1341
    %v1343 = vrot.slane %v801, 2
    %v1344 = vsel %vm1294, %v1335, %v1343
    %v1345 = vrot.slane %v803, 2
    %v1346 = vsel %vm1294, %v1337, %v1345
    %v1347 = vrot.slane %v732, 2
    %v1348 = vsel %vm1294, %v1339, %v1347
    %v1349 = vrot.slane %v734, 2
    %v1350 = vsel %vm1294, %v1341, %v1349
    %v1351 = vrot.slane %v805, 2
    %v1352 = vsel %vm1294, %v1343, %v1351
    %v1353 = vrot.slane %v807, 2
    %v1354 = vsel %vm1294, %v1345, %v1353
    %v1387 = vsel %vm1294, %v1347, 0.0
    %v1388 = vsel %vm1294, %v1349, 0.0
    %v1389 = vsel %vm1294, %v1351, 0.0
    %v1390 = vsel %vm1294, %v1353, 0.0
    %v1391 = vadd.f32 %v1230, %v1297
    %v1392 = vadd.f32 %v1231, %v1300
    %v1393 = vadd.f32 %v1232, %v1303
    %v1394 = vadd.f32 %v1233, %v1306
    %v1395 = vadd.f32 %v1234, %v1308
    %v1396 = vadd.f32 %v1235, %v1310
    %v1397 = vadd.f32 %v1236, %v1312
    %v1398 = vadd.f32 %v1237, %v1314
    %v1399 = vadd.f32 %v1238, %v1316
    %v1400 = vadd.f32 %v1239, %v1318
    %v1401 = vadd.f32 %v1240, %v1320
    %v1402 = vadd.f32 %v1241, %v1322
    %v1403 = vadd.f32 %v1242, %v1324
    %v1404 = vadd.f32 %v1243, %v1326
    %v1405 = vadd.f32 %v1244, %v1328
    %v1406 = vadd.f32 %v1245, %v1330
    %v1407 = vadd.f32 %v1246, %v1332
    %v1408 = vadd.f32 %v1247, %v1334
    %v1409 = vadd.f32 %v1248, %v1336
    %v1410 = vadd.f32 %v1249, %v1338
    %v1411 = vadd.f32 %v1250, %v1340
    %v1412 = vadd.f32 %v1251, %v1342
    %v1413 = vadd.f32 %v1252, %v1344
    %v1414 = vadd.f32 %v1253, %v1346
    %v1415 = vadd.f32 %v1254, %v1348
    %v1416 = vadd.f32 %v1255, %v1350
    %v1417 = vadd.f32 %v1256, %v1352
    %v1418 = vadd.f32 %v1257, %v1354
    %v1419 = vadd.f32 %v1258, %v1387
    %v1420 = vadd.f32 %v1259, %v1388
    %v1421 = vadd.f32 %v1260, %v1389
    %v1422 = vadd.f32 %v1261, %v1390
    %vm1455 = vcmask 1044480
    %v1456 = vrot.slane %v844, 3
    %v1457 = vrot.slane %v848, 3
    %v1458 = vsel %vm1455, %v1456, %v1457
    %v1459 = vrot.slane %v846, 3
    %v1460 = vrot.slane %v850, 3
    %v1461 = vsel %vm1455, %v1459, %v1460
    %v1462 = vrot.slane %v917, 3
    %v1463 = vrot.slane %v921, 3
    %v1464 = vsel %vm1455, %v1462, %v1463
    %v1465 = vrot.slane %v919, 3
    %v1466 = vrot.slane %v923, 3
    %v1467 = vsel %vm1455, %v1465, %v1466
    %v1468 = vrot.slane %v854, 3
    %v1469 = vsel %vm1455, %v1457, %v1468
    %v1470 = vrot.slane %v856, 3
    %v1471 = vsel %vm1455, %v1460, %v1470
    %v1472 = vrot.slane %v927, 3
    %v1473 = vsel %vm1455, %v1463, %v1472
    %v1474 = vrot.slane %v929, 3
    %v1475 = vsel %vm1455, %v1466, %v1474
    %v1476 = vrot.slane %v858, 3
    %v1477 = vsel %vm1455, %v1468, %v1476
    %v1478 = vrot.slane %v860, 3
    %v1479 = vsel %vm1455, %v1470, %v1478
    %v1480 = vrot.slane %v931, 3
    %v1481 = vsel %vm1455, %v1472, %v1480
    %v1482 = vrot.slane %v933, 3
    %v1483 = vsel %vm1455, %v1474, %v1482
    %v1484 = vrot.slane %v864, 3
    %v1485 = vsel %vm1455, %v1476, %v1484
    %v1486 = vrot.slane %v866, 3
    %v1487 = vsel %vm1455, %v1478, %v1486
    %v1488 = vrot.slane %v937, 3
    %v1489 = vsel %vm1455, %v1480, %v1488
    %v1490 = vrot.slane %v939, 3
    %v1491 = vsel %vm1455, %v1482, %v1490
    %v1492 = vrot.slane %v868, 3
    %v1493 = vsel %vm1455, %v1484, %v1492
    %v1494 = vrot.slane %v870, 3
    %v1495 = vsel %vm1455, %v1486, %v1494
    %v1496 = vrot.slane %v941, 3
    %v1497 = vsel %vm1455, %v1488, %v1496
    %v1498 = vrot.slane %v943, 3
    %v1499 = vsel %vm1455, %v1490, %v1498
    %v1500 = vrot.slane %v874, 3
    %v1501 = vsel %vm1455, %v1492, %v1500
    %v1502 = vrot.slane %v876, 3
    %v1503 = vsel %vm1455, %v1494, %v1502
    %v1504 = vrot.slane %v947, 3
    %v1505 = vsel %vm1455, %v1496, %v1504
    %v1506 = vrot.slane %v949, 3
    %v1507 = vsel %vm1455, %v1498, %v1506
    %v1508 = vrot.slane %v878, 3
    %v1509 = vsel %vm1455, %v1500, %v1508
    %v1510 = vrot.slane %v880, 3
    %v1511 = vsel %vm1455, %v1502, %v1510
    %v1512 = vrot.slane %v951, 3
    %v1513 = vsel %vm1455, %v1504, %v1512
    %v1514 = vrot.slane %v953, 3
    %v1515 = vsel %vm1455, %v1506, %v1514
    %v1548 = vsel %vm1455, %v1508, 0.0
    %v1549 = vsel %vm1455, %v1510, 0.0
    %v1550 = vsel %vm1455, %v1512, 0.0
    %v1551 = vsel %vm1455, %v1514, 0.0
    %v1552 = vadd.f32 %v1391, %v1458
    %v1553 = vadd.f32 %v1392, %v1461
    %v1554 = vadd.f32 %v1393, %v1464
    %v1555 = vadd.f32 %v1394, %v1467
    %v1556 = vadd.f32 %v1395, %v1469
    %v1557 = vadd.f32 %v1396, %v1471
    %v1558 = vadd.f32 %v1397, %v1473
    %v1559 = vadd.f32 %v1398, %v1475
    %v1560 = vadd.f32 %v1399, %v1477
    %v1561 = vadd.f32 %v1400, %v1479
    %v1562 = vadd.f32 %v1401, %v1481
    %v1563 = vadd.f32 %v1402, %v1483
    %v1564 = vadd.f32 %v1403, %v1485
    %v1565 = vadd.f32 %v1404, %v1487
    %v1566 = vadd.f32 %v1405, %v1489
    %v1567 = vadd.f32 %v1406, %v1491
    %v1568 = vadd.f32 %v1407, %v1493
    %v1569 = vadd.f32 %v1408, %v1495
    %v1570 = vadd.f32 %v1409, %v1497
    %v1571 = vadd.f32 %v1410, %v1499
    %v1572 = vadd.f32 %v1411, %v1501
    %v1573 = vadd.f32 %v1412, %v1503
    %v1574 = vadd.f32 %v1413, %v1505
    %v1575 = vadd.f32 %v1414, %v1507
    %v1576 = vadd.f32 %v1415, %v1509
    %v1577 = vadd.f32 %v1416, %v1511
    %v1578 = vadd.f32 %v1417, %v1513
    %v1579 = vadd.f32 %v1418, %v1515
    %v1580 = vadd.f32 %v1419, %v1548
    %v1581 = vadd.f32 %v1420, %v1549
    %v1582 = vadd.f32 %v1421, %v1550
    %v1583 = vadd.f32 %v1422, %v1551
    %vm1616 = vcmask 1043456
    %v1617 = vrot.slane %v990, 4
    %v1618 = vrot.slane %v994, 4
    %v1619 = vsel %vm1616, %v1617, %v1618
    %v1620 = vrot.slane %v992, 4
    %v1621 = vrot.slane %v996, 4
    %v1622 = vsel %vm1616, %v1620, %v1621
    %v1623 = vrot.slane %v1063, 4
    %v1624 = vrot.slane %v1067, 4
    %v1625 = vsel %vm1616, %v1623, %v1624
    %v1626 = vrot.slane %v1065, 4
    %v1627 = vrot.slane %v1069, 4
    %v1628 = vsel %vm1616, %v1626, %v1627
    %v1629 = vrot.slane %v1000, 4
    %v1630 = vsel %vm1616, %v1618, %v1629
    %v1631 = vrot.slane %v1002, 4
    %v1632 = vsel %vm1616, %v1621, %v1631
    %v1633 = vrot.slane %v1073, 4
    %v1634 = vsel %vm1616, %v1624, %v1633
    %v1635 = vrot.slane %v1075, 4
    %v1636 = vsel %vm1616, %v1627, %v1635
    %v1637 = vrot.slane %v1004, 4
    %v1638 = vsel %vm1616, %v1629, %v1637
    %v1639 = vrot.slane %v1006, 4
    %v1640 = vsel %vm1616, %v1631, %v1639
    %v1641 = vrot.slane %v1077, 4
    %v1642 = vsel %vm1616, %v1633, %v1641
    %v1643 = vrot.slane %v1079, 4
    %v1644 = vsel %vm1616, %v1635, %v1643
    %v1645 = vrot.slane %v1010, 4
    %v1646 = vsel %vm1616, %v1637, %v1645
    %v1647 = vrot.slane %v1012, 4
    %v1648 = vsel %vm1616, %v1639, %v1647
    %v1649 = vrot.slane %v1083, 4
    %v1650 = vsel %vm1616, %v1641, %v1649
    %v1651 = vrot.slane %v1085, 4
    %v1652 = vsel %vm1616, %v1643, %v1651
    %v1653 = vrot.slane %v1014, 4
    %v1654 = vsel %vm1616, %v1645, %v1653
    %v1655 = vrot.slane %v1016, 4
    %v1656 = vsel %vm1616, %v1647, %v1655
    %v1657 = vrot.slane %v1087, 4
    %v1658 = vsel %vm1616, %v1649, %v1657
    %v1659 = vrot.slane %v1089, 4
    %v1660 = vsel %vm1616, %v1651, %v1659
    %v1661 = vrot.slane %v1020, 4
    %v1662 = vsel %vm1616, %v1653, %v1661
    %v1663 = vrot.slane %v1022, 4
    %v1664 = vsel %vm1616, %v1655, %v1663
    %v1665 = vrot.slane %v1093, 4
    %v1666 = vsel %vm1616, %v1657, %v1665
    %v1667 = vrot.slane %v1095, 4
    %v1668 = vsel %vm1616, %v1659, %v1667
    %v1669 = vrot.slane %v1024, 4
    %v1670 = vsel %vm1616, %v1661, %v1669
    %v1671 = vrot.slane %v1026, 4
    %v1672 = vsel %vm1616, %v1663, %v1671
    %v1673 = vrot.slane %v1097, 4
    %v1674 = vsel %vm1616, %v1665, %v1673
    %v1675 = vrot.slane %v1099, 4
    %v1676 = vsel %vm1616, %v1667, %v1675
    %v1709 = vsel %vm1616, %v1669, 0.0
    %v1710 = vsel %vm1616, %v1671, 0.0
    %v1711 = vsel %vm1616, %v1673, 0.0
    %v1712 = vsel %vm1616, %v1675, 0.0
    %v1713 = vadd.f32 %v1552, %v1619
    %v1714 = vadd.f32 %v1553, %v1622
    %v1715 = vadd.f32 %v1554, %v1625
    %v1716 = vadd.f32 %v1555, %v1628
    %v1717 = vadd.f32 %v1556, %v1630
    %v1718 = vadd.f32 %v1557, %v1632
    %v1719 = vadd.f32 %v1558, %v1634
    %v1720 = vadd.f32 %v1559, %v1636
    %v1721 = vadd.f32 %v1560, %v1638
    %v1722 = vadd.f32 %v1561, %v1640
    %v1723 = vadd.f32 %v1562, %v1642
    %v1724 = vadd.f32 %v1563, %v1644
    %v1725 = vadd.f32 %v1564, %v1646
    %v1726 = vadd.f32 %v1565, %v1648
    %v1727 = vadd.f32 %v1566, %v1650
    %v1728 = vadd.f32 %v1567, %v1652
    %v1729 = vadd.f32 %v1568, %v1654
    %v1730 = vadd.f32 %v1569, %v1656
    %v1731 = vadd.f32 %v1570, %v1658
    %v1732 = vadd.f32 %v1571, %v1660
    %v1733 = vadd.f32 %v1572, %v1662
    %v1734 = vadd.f32 %v1573, %v1664
    %v1735 = vadd.f32 %v1574, %v1666
    %v1736 = vadd.f32 %v1575, %v1668
    %v1737 = vadd.f32 %v1576, %v1670
    %v1738 = vadd.f32 %v1577, %v1672
    %v1739 = vadd.f32 %v1578, %v1674
    %v1740 = vadd.f32 %v1579, %v1676
    %v1741 = vadd.f32 %v1580, %v1709
    %v1742 = vadd.f32 %v1581, %v1710
    %v1743 = vadd.f32 %v1582, %v1711
    %v1744 = vadd.f32 %v1583, %v1712
    %v1745 = vlaneseq
    %v1746 = vshrl.u32 %v1745, 7
    %v1747 = vadd.s32 %v1746, 8
    %v1748 = vadd.s32 %v1746, 16
    %v1749 = vadd.s32 %v1746, 24
    %v1750 = vadd.s32 %v1746, 32
    %v1751 = vadd.s32 %v1746, 40
    %v1752 = vadd.s32 %v1746, 48
    %v1753 = vadd.s32 %v1746, 56
    %vm1754 = vcmp.lt.s32.totalorder %v1746, 0
    %v1755 = vsub.s32 0, %v1746
    %v1756 = vsel %vm1754, %v1755, %v1746
    %v1757 = vshrl.u32 %v1756, 5
    %v1758 = vand.u32 %v1756, 31
    %v1759 = vsub.s32 0, %v1758
    %v1760 = vsel %vm1754, %v1759, %v1758
    %vm1761 = vcmp.lt.s32.totalorder %v1747, 0
    %v1762 = vsub.s32 0, %v1747
    %v1763 = vsel %vm1761, %v1762, %v1747
    %v1764 = vshrl.u32 %v1763, 5
    %v1765 = vand.u32 %v1763, 31
    %v1766 = vsub.s32 0, %v1765
    %v1767 = vsel %vm1761, %v1766, %v1765
    %vm1768 = vcmp.lt.s32.totalorder %v1748, 0
    %v1769 = vsub.s32 0, %v1748
    %v1770 = vsel %vm1768, %v1769, %v1748
    %v1771 = vshrl.u32 %v1770, 5
    %v1772 = vand.u32 %v1770, 31
    %v1773 = vsub.s32 0, %v1772
    %v1774 = vsel %vm1768, %v1773, %v1772
    %vm1775 = vcmp.lt.s32.totalorder %v1749, 0
    %v1776 = vsub.s32 0, %v1749
    %v1777 = vsel %vm1775, %v1776, %v1749
    %v1778 = vshrl.u32 %v1777, 5
    %v1779 = vand.u32 %v1777, 31
    %v1780 = vsub.s32 0, %v1779
    %v1781 = vsel %vm1775, %v1780, %v1779
    %vm1782 = vcmp.lt.s32.totalorder %v1750, 0
    %v1783 = vsub.s32 0, %v1750
    %v1784 = vsel %vm1782, %v1783, %v1750
    %v1785 = vshrl.u32 %v1784, 5
    %v1786 = vand.u32 %v1784, 31
    %v1787 = vsub.s32 0, %v1786
    %v1788 = vsel %vm1782, %v1787, %v1786
    %vm1789 = vcmp.lt.s32.totalorder %v1751, 0
    %v1790 = vsub.s32 0, %v1751
    %v1791 = vsel %vm1789, %v1790, %v1751
    %v1792 = vshrl.u32 %v1791, 5
    %v1793 = vand.u32 %v1791, 31
    %v1794 = vsub.s32 0, %v1793
    %v1795 = vsel %vm1789, %v1794, %v1793
    %vm1796 = vcmp.lt.s32.totalorder %v1752, 0
    %v1797 = vsub.s32 0, %v1752
    %v1798 = vsel %vm1796, %v1797, %v1752
    %v1799 = vshrl.u32 %v1798, 5
    %v1800 = vand.u32 %v1798, 31
    %v1801 = vsub.s32 0, %v1800
    %v1802 = vsel %vm1796, %v1801, %v1800
    %vm1803 = vcmp.lt.s32.totalorder %v1753, 0
    %v1804 = vsub.s32 0, %v1753
    %v1805 = vsel %vm1803, %v1804, %v1753
    %v1806 = vshrl.u32 %v1805, 5
    %v1807 = vand.u32 %v1805, 31
    %v1808 = vsub.s32 0, %v1807
    %v1809 = vsel %vm1803, %v1808, %v1807
    %vm1810 = vcmp.ne.s32.totalorder %v1760, 0
    %vm1811 = vcmp.ne.s32.totalorder %v1767, 0
    %vm1812 = vcmp.ne.s32.totalorder %v1774, 0
    %vm1813 = vcmp.ne.s32.totalorder %v1781, 0
    %vm1814 = vcmp.ne.s32.totalorder %v1788, 0
    %vm1815 = vcmp.ne.s32.totalorder %v1795, 0
    %vm1816 = vcmp.ne.s32.totalorder %v1802, 0
    %vm1817 = vcmp.ne.s32.totalorder %v1809, 0
    %vm1818 = vcmp.lt.s32.totalorder %v1760, 0
    %vm1819 = vcmp.lt.s32.totalorder %v1767, 0
    %vm1820 = vcmp.lt.s32.totalorder %v1774, 0
    %vm1821 = vcmp.lt.s32.totalorder %v1781, 0
    %vm1822 = vcmp.lt.s32.totalorder %v1788, 0
    %vm1823 = vcmp.lt.s32.totalorder %v1795, 0
    %vm1824 = vcmp.lt.s32.totalorder %v1802, 0
    %vm1825 = vcmp.lt.s32.totalorder %v1809, 0
    %vm1826 = vmand %vm1818, %vm1810
    %vm1827 = vmand %vm1819, %vm1811
    %vm1828 = vmand %vm1820, %vm1812
    %vm1829 = vmand %vm1821, %vm1813
    %vm1830 = vmand %vm1822, %vm1814
    %vm1831 = vmand %vm1823, %vm1815
    %vm1832 = vmand %vm1824, %vm1816
    %vm1833 = vmand %vm1825, %vm1817
    %v1834 = vadd.s32 %v1760, 32
    %v1835 = vadd.s32 %v1767, 32
    %v1836 = vadd.s32 %v1774, 32
    %v1837 = vadd.s32 %v1781, 32
    %v1838 = vadd.s32 %v1788, 32
    %v1839 = vadd.s32 %v1795, 32
    %v1840 = vadd.s32 %v1802, 32
    %v1841 = vadd.s32 %v1809, 32
    %v1842 = vsel %vm1826, %v1834, %v1760
    %v1843 = vsel %vm1827, %v1835, %v1767
    %v1844 = vsel %vm1828, %v1836, %v1774
    %v1845 = vsel %vm1829, %v1837, %v1781
    %v1846 = vsel %vm1830, %v1838, %v1788
    %v1847 = vsel %vm1831, %v1839, %v1795
    %v1848 = vsel %vm1832, %v1840, %v1802
    %v1849 = vsel %vm1833, %v1841, %v1809
    %vm1850 = vcmp.lt.s32.totalorder %v1842, 28
    %vm1851 = vcmp.lt.s32.totalorder %v1843, 28
    %vm1852 = vcmp.lt.s32.totalorder %v1844, 28
    %vm1853 = vcmp.lt.s32.totalorder %v1845, 28
    %vm1854 = vcmp.lt.s32.totalorder %v1846, 28
    %vm1855 = vcmp.lt.s32.totalorder %v1847, 28
    %vm1856 = vcmp.lt.s32.totalorder %v1848, 28
    %vm1857 = vcmp.lt.s32.totalorder %v1849, 28
    %v1858 = vld [vmem:[#allocation5] sm:$0xf]
    %v1860 = vlaneseq
    %v1861 = vshrl.u32 %v1860, 7
    %v1862 = vsub.s32 0, %v1861
    %v1863 = vrot.slane %v1858, %v1862
    %v1864 = vlaneseq
    %v1865 = vshrl.u32 %v1864, 7
    %v1866 = vsub.s32 1, %v1865
    %v1867 = vrot.slane %v1858, %v1866
    %v1868 = vlaneseq
    %v1869 = vshrl.u32 %v1868, 7
    %v1870 = vsub.s32 2, %v1869
    %v1871 = vrot.slane %v1858, %v1870
    %v1872 = vlaneseq
    %v1873 = vshrl.u32 %v1872, 7
    %v1874 = vsub.s32 3, %v1873
    %v1875 = vrot.slane %v1858, %v1874
    %v1880 = vadd.f32 %v1713, %v1863
    %v1881 = vadd.f32 %v1714, %v1867
    %v1882 = vadd.f32 %v1715, %v1871
    %v1883 = vadd.f32 %v1716, %v1875
    %v1884 = vadd.f32 %v1717, %v1863
    %v1885 = vadd.f32 %v1718, %v1867
    %v1886 = vadd.f32 %v1719, %v1871
    %v1887 = vadd.f32 %v1720, %v1875
    %v1888 = vadd.f32 %v1721, %v1863
    %v1889 = vadd.f32 %v1722, %v1867
    %v1890 = vadd.f32 %v1723, %v1871
    %v1891 = vadd.f32 %v1724, %v1875
    %v1892 = vadd.f32 %v1725, %v1863
    %v1893 = vadd.f32 %v1726, %v1867
    %v1894 = vadd.f32 %v1727, %v1871
    %v1895 = vadd.f32 %v1728, %v1875
    %v1896 = vadd.f32 %v1729, %v1863
    %v1897 = vadd.f32 %v1730, %v1867
    %v1898 = vadd.f32 %v1731, %v1871
    %v1899 = vadd.f32 %v1732, %v1875
    %v1900 = vadd.f32 %v1733, %v1863
    %v1901 = vadd.f32 %v1734, %v1867
    %v1902 = vadd.f32 %v1735, %v1871
    %v1903 = vadd.f32 %v1736, %v1875
    %v1904 = vadd.f32 %v1737, %v1863
    %v1905 = vadd.f32 %v1738, %v1867
    %v1906 = vadd.f32 %v1739, %v1871
    %v1907 = vadd.f32 %v1740, %v1875
    %v1908 = vadd.f32 %v1741, %v1863
    %v1909 = vadd.f32 %v1742, %v1867
    %v1910 = vadd.f32 %v1743, %v1871
    %v1911 = vadd.f32 %v1744, %v1875
    %v1912 = vmax.f32 %v1880, 0.0
    %v1913 = vmax.f32 %v1881, 0.0
    %v1914 = vmax.f32 %v1882, 0.0
    %v1915 = vmax.f32 %v1883, 0.0
    %v1916 = vmax.f32 %v1884, 0.0
    %v1917 = vmax.f32 %v1885, 0.0
    %v1918 = vmax.f32 %v1886, 0.0
    %v1919 = vmax.f32 %v1887, 0.0
    %v1920 = vmax.f32 %v1888, 0.0
    %v1921 = vmax.f32 %v1889, 0.0
    %v1922 = vmax.f32 %v1890, 0.0
    %v1923 = vmax.f32 %v1891, 0.0
    %v1924 = vmax.f32 %v1892, 0.0
    %v1925 = vmax.f32 %v1893, 0.0
    %v1926 = vmax.f32 %v1894, 0.0
    %v1927 = vmax.f32 %v1895, 0.0
    %v1928 = vmax.f32 %v1896, 0.0
    %v1929 = vmax.f32 %v1897, 0.0
    %v1930 = vmax.f32 %v1898, 0.0
    %v1931 = vmax.f32 %v1899, 0.0
    %v1932 = vmax.f32 %v1900, 0.0
    %v1933 = vmax.f32 %v1901, 0.0
    %v1934 = vmax.f32 %v1902, 0.0
    %v1935 = vmax.f32 %v1903, 0.0
    %v1936 = vmax.f32 %v1904, 0.0
    %v1937 = vmax.f32 %v1905, 0.0
    %v1938 = vmax.f32 %v1906, 0.0
    %v1939 = vmax.f32 %v1907, 0.0
    %v1940 = vmax.f32 %v1908, 0.0
    %v1941 = vmax.f32 %v1909, 0.0
    %v1942 = vmax.f32 %v1910, 0.0
    %v1943 = vmax.f32 %v1911, 0.0
    %v1944 = vsel %vm1850, 1, 0
    %v1945 = vsel %vm1851, 1, 0
    %v1946 = vsel %vm1852, 1, 0
    %v1947 = vsel %vm1853, 1, 0
    %v1948 = vsel %vm1854, 1, 0
    %v1949 = vsel %vm1855, 1, 0
    %v1950 = vsel %vm1856, 1, 0
    %v1951 = vsel %vm1857, 1, 0
    %vm1952 = vcmp.eq.s32.totalorder %v1944, 1
    %vm1953 = vcmp.eq.s32.totalorder %v1945, 1
    %vm1954 = vcmp.eq.s32.totalorder %v1946, 1
    %vm1955 = vcmp.eq.s32.totalorder %v1947, 1
    %vm1956 = vcmp.eq.s32.totalorder %v1948, 1
    %vm1957 = vcmp.eq.s32.totalorder %v1949, 1
    %vm1958 = vcmp.eq.s32.totalorder %v1950, 1
    %vm1959 = vcmp.eq.s32.totalorder %v1951, 1
    %v1960 = vsel %vm1952, %v1912, 0.0
    %v1961 = vsel %vm1952, %v1913, 0.0
    %v1962 = vsel %vm1952, %v1914, 0.0
    %v1963 = vsel %vm1952, %v1915, 0.0
    %v1964 = vsel %vm1953, %v1916, 0.0
    %v1965 = vsel %vm1953, %v1917, 0.0
    %v1966 = vsel %vm1953, %v1918, 0.0
    %v1967 = vsel %vm1953, %v1919, 0.0
    %v1968 = vsel %vm1954, %v1920, 0.0
    %v1969 = vsel %vm1954, %v1921, 0.0
    %v1970 = vsel %vm1954, %v1922, 0.0
    %v1971 = vsel %vm1954, %v1923, 0.0
    %v1972 = vsel %vm1955, %v1924, 0.0
    %v1973 = vsel %vm1955, %v1925, 0.0
    %v1974 = vsel %vm1955, %v1926, 0.0
    %v1975 = vsel %vm1955, %v1927, 0.0
    %v1976 = vsel %vm1956, %v1928, 0.0
    %v1977 = vsel %vm1956, %v1929, 0.0
    %v1978 = vsel %vm1956, %v1930, 0.0
    %v1979 = vsel %vm1956, %v1931, 0.0
    %v1980 = vsel %vm1957, %v1932, 0.0
    %v1981 = vsel %vm1957, %v1933, 0.0
    %v1982 = vsel %vm1957, %v1934, 0.0
    %v1983 = vsel %vm1957, %v1935, 0.0
    %v1984 = vsel %vm1958, %v1936, 0.0
    %v1985 = vsel %vm1958, %v1937, 0.0
    %v1986 = vsel %vm1958, %v1938, 0.0
    %v1987 = vsel %vm1958, %v1939, 0.0
    %v1988 = vsel %vm1959, %v1940, 0.0
    %v1989 = vsel %vm1959, %v1941, 0.0
    %v1990 = vsel %vm1959, %v1942, 0.0
    %v1991 = vsel %vm1959, %v1943, 0.0
    %2024 = vrot.lane.b32.xlu0 %v1960, 112
    %v2025 = vpop.permute.xlu0 %2024
    %2026 = vrot.lane.b32.xlu0 %v1961, 112
    %v2027 = vpop.permute.xlu0 %2026
    %2028 = vrot.lane.b32.xlu0 %v1962, 112
    %v2029 = vpop.permute.xlu0 %2028
    %2030 = vrot.lane.b32.xlu0 %v1963, 112
    %v2031 = vpop.permute.xlu0 %2030
    %2032 = vrot.lane.b32.xlu0 %v1964, 112
    %v2033 = vpop.permute.xlu0 %2032
    %2034 = vrot.lane.b32.xlu0 %v1965, 112
    %v2035 = vpop.permute.xlu0 %2034
    %2036 = vrot.lane.b32.xlu0 %v1966, 112
    %v2037 = vpop.permute.xlu0 %2036
    %2038 = vrot.lane.b32.xlu0 %v1967, 112
    %v2039 = vpop.permute.xlu0 %2038
    %2040 = vrot.lane.b32.xlu0 %v1968, 112
    %v2041 = vpop.permute.xlu0 %2040
    %2042 = vrot.lane.b32.xlu0 %v1969, 112
    %v2043 = vpop.permute.xlu0 %2042
    %2044 = vrot.lane.b32.xlu0 %v1970, 112
    %v2045 = vpop.permute.xlu0 %2044
    %2046 = vrot.lane.b32.xlu0 %v1971, 112
    %v2047 = vpop.permute.xlu0 %2046
    %2048 = vrot.lane.b32.xlu0 %v1972, 112
    %v2049 = vpop.permute.xlu0 %2048
    %2050 = vrot.lane.b32.xlu0 %v1973, 112
    %v2051 = vpop.permute.xlu0 %2050
    %2052 = vrot.lane.b32.xlu0 %v1974, 112
    %v2053 = vpop.permute.xlu0 %2052
    %2054 = vrot.lane.b32.xlu0 %v1975, 112
    %v2055 = vpop.permute.xlu0 %2054
    %2056 = vrot.lane.b32.xlu0 %v1976, 112
    %v2057 = vpop.permute.xlu0 %2056
    %2058 = vrot.lane.b32.xlu0 %v1977, 112
    %v2059 = vpop.permute.xlu0 %2058
    %2060 = vrot.lane.b32.xlu0 %v1978, 112
    %v2061 = vpop.permute.xlu0 %2060
    %2062 = vrot.lane.b32.xlu0 %v1979, 112
    %v2063 = vpop.permute.xlu0 %2062
    %2064 = vrot.lane.b32.xlu0 %v1980, 112
    %v2065 = vpop.permute.xlu0 %2064
    %2066 = vrot.lane.b32.xlu0 %v1981, 112
    %v2067 = vpop.permute.xlu0 %2066
    %2068 = vrot.lane.b32.xlu0 %v1982, 112
    %v2069 = vpop.permute.xlu0 %2068
    %2070 = vrot.lane.b32.xlu0 %v1983, 112
    %v2071 = vpop.permute.xlu0 %2070
    %2072 = vrot.lane.b32.xlu0 %v1984, 112
    %v2073 = vpop.permute.xlu0 %2072
    %2074 = vrot.lane.b32.xlu0 %v1985, 112
    %v2075 = vpop.permute.xlu0 %2074
    %2076 = vrot.lane.b32.xlu0 %v1986, 112
    %v2077 = vpop.permute.xlu0 %2076
    %2078 = vrot.lane.b32.xlu0 %v1987, 112
    %v2079 = vpop.permute.xlu0 %2078
    %2080 = vrot.lane.b32.xlu0 %v1988, 112
    %v2081 = vpop.permute.xlu0 %2080
    %2082 = vrot.lane.b32.xlu0 %v1989, 112
    %v2083 = vpop.permute.xlu0 %2082
    %2084 = vrot.lane.b32.xlu0 %v1990, 112
    %v2085 = vpop.permute.xlu0 %2084
    %2086 = vrot.lane.b32.xlu0 %v1991, 112
    %v2087 = vpop.permute.xlu0 %2086
    %vm2088 = vcmask 916480
    %v2089 = vsel %vm2088, %v2025, %v2027
    %v2090 = vsel %vm2088, %v2027, %v2029
    %v2091 = vsel %vm2088, %v2029, %v2031
    %v2092 = vsel %vm2088, %v2033, %v2035
    %v2093 = vsel %vm2088, %v2035, %v2037
    %v2094 = vsel %vm2088, %v2037, %v2039
    %v2095 = vsel %vm2088, %v2041, %v2043
    %v2096 = vsel %vm2088, %v2043, %v2045
    %v2097 = vsel %vm2088, %v2045, %v2047
    %v2098 = vsel %vm2088, %v2049, %v2051
    %v2099 = vsel %vm2088, %v2051, %v2053
    %v2100 = vsel %vm2088, %v2053, %v2055
    %v2101 = vsel %vm2088, %v2057, %v2059
    %v2102 = vsel %vm2088, %v2059, %v2061
    %v2103 = vsel %vm2088, %v2061, %v2063
    %v2104 = vsel %vm2088, %v2065, %v2067
    %v2105 = vsel %vm2088, %v2067, %v2069
    %v2106 = vsel %vm2088, %v2069, %v2071
    %v2107 = vsel %vm2088, %v2073, %v2075
    %v2108 = vsel %vm2088, %v2075, %v2077
    %v2109 = vsel %vm2088, %v2077, %v2079
    %v2110 = vsel %vm2088, %v2081, %v2083
    %v2111 = vsel %vm2088, %v2083, %v2085
    %v2112 = vsel %vm2088, %v2085, %v2087
    %vm2145 = vcmask 392192
    %v2146 = vsel %vm2145, %v2031, 0.0
    %v2147 = vsel %vm2145, %v2039, 0.0
    %v2148 = vsel %vm2145, %v2047, 0.0
    %v2149 = vsel %vm2145, %v2055, 0.0
    %v2150 = vsel %vm2145, %v2063, 0.0
    %v2151 = vsel %vm2145, %v2071, 0.0
    %v2152 = vsel %vm2145, %v2079, 0.0
    %v2153 = vsel %vm2145, %v2087, 0.0
    %v2154 = vmax.f32 %v1960, %v2089
    %v2155 = vmax.f32 %v1961, %v2090
    %v2156 = vmax.f32 %v1962, %v2091
    %v2157 = vmax.f32 %v1963, %v2146
    %v2158 = vmax.f32 %v1964, %v2092
    %v2159 = vmax.f32 %v1965, %v2093
    %v2160 = vmax.f32 %v1966, %v2094
    %v2161 = vmax.f32 %v1967, %v2147
    %v2162 = vmax.f32 %v1968, %v2095
    %v2163 = vmax.f32 %v1969, %v2096
    %v2164 = vmax.f32 %v1970, %v2097
    %v2165 = vmax.f32 %v1971, %v2148
    %v2166 = vmax.f32 %v1972, %v2098
    %v2167 = vmax.f32 %v1973, %v2099
    %v2168 = vmax.f32 %v1974, %v2100
    %v2169 = vmax.f32 %v1975, %v2149
    %v2170 = vmax.f32 %v1976, %v2101
    %v2171 = vmax.f32 %v1977, %v2102
    %v2172 = vmax.f32 %v1978, %v2103
    %v2173 = vmax.f32 %v1979, %v2150
    %v2174 = vmax.f32 %v1980, %v2104
    %v2175 = vmax.f32 %v1981, %v2105
    %v2176 = vmax.f32 %v1982, %v2106
    %v2177 = vmax.f32 %v1983, %v2151
    %v2178 = vmax.f32 %v1984, %v2107
    %v2179 = vmax.f32 %v1985, %v2108
    %v2180 = vmax.f32 %v1986, %v2109
    %v2181 = vmax.f32 %v1987, %v2152
    %v2182 = vmax.f32 %v1988, %v2110
    %v2183 = vmax.f32 %v1989, %v2111
    %v2184 = vmax.f32 %v1990, %v2112
    %v2185 = vmax.f32 %v1991, %v2153
    %v2218 = vrot.slane %v2154, 1
    %v2219 = vrot.slane %v2158, 1
    %v2220 = vsel %vm1133, %v2218, %v2219
    %v2221 = vrot.slane %v2155, 1
    %v2222 = vrot.slane %v2159, 1
    %v2223 = vsel %vm1133, %v2221, %v2222
    %v2224 = vrot.slane %v2156, 1
    %v2225 = vrot.slane %v2160, 1
    %v2226 = vsel %vm1133, %v2224, %v2225
    %v2227 = vrot.slane %v2157, 1
    %v2228 = vrot.slane %v2161, 1
    %v2229 = vsel %vm1133, %v2227, %v2228
    %v2230 = vrot.slane %v2162, 1
    %v2231 = vsel %vm1133, %v2219, %v2230
    %v2232 = vrot.slane %v2163, 1
    %v2233 = vsel %vm1133, %v2222, %v2232
    %v2234 = vrot.slane %v2164, 1
    %v2235 = vsel %vm1133, %v2225, %v2234
    %v2236 = vrot.slane %v2165, 1
    %v2237 = vsel %vm1133, %v2228, %v2236
    %v2238 = vrot.slane %v2166, 1
    %v2239 = vsel %vm1133, %v2230, %v2238
    %v2240 = vrot.slane %v2167, 1
    %v2241 = vsel %vm1133, %v2232, %v2240
    %v2242 = vrot.slane %v2168, 1
    %v2243 = vsel %vm1133, %v2234, %v2242
    %v2244 = vrot.slane %v2169, 1
    %v2245 = vsel %vm1133, %v2236, %v2244
    %v2246 = vrot.slane %v2170, 1
    %v2247 = vsel %vm1133, %v2238, %v2246
    %v2248 = vrot.slane %v2171, 1
    %v2249 = vsel %vm1133, %v2240, %v2248
    %v2250 = vrot.slane %v2172, 1
    %v2251 = vsel %vm1133, %v2242, %v2250
    %v2252 = vrot.slane %v2173, 1
    %v2253 = vsel %vm1133, %v2244, %v2252
    %v2254 = vrot.slane %v2174, 1
    %v2255 = vsel %vm1133, %v2246, %v2254
    %v2256 = vrot.slane %v2175, 1
    %v2257 = vsel %vm1133, %v2248, %v2256
    %v2258 = vrot.slane %v2176, 1
    %v2259 = vsel %vm1133, %v2250, %v2258
    %v2260 = vrot.slane %v2177, 1
    %v2261 = vsel %vm1133, %v2252, %v2260
    %v2262 = vrot.slane %v2178, 1
    %v2263 = vsel %vm1133, %v2254, %v2262
    %v2264 = vrot.slane %v2179, 1
    %v2265 = vsel %vm1133, %v2256, %v2264
    %v2266 = vrot.slane %v2180, 1
    %v2267 = vsel %vm1133, %v2258, %v2266
    %v2268 = vrot.slane %v2181, 1
    %v2269 = vsel %vm1133, %v2260, %v2268
    %v2270 = vrot.slane %v2182, 1
    %v2271 = vsel %vm1133, %v2262, %v2270
    %v2272 = vrot.slane %v2183, 1
    %v2273 = vsel %vm1133, %v2264, %v2272
    %v2274 = vrot.slane %v2184, 1
    %v2275 = vsel %vm1133, %v2266, %v2274
    %v2276 = vrot.slane %v2185, 1
    %v2277 = vsel %vm1133, %v2268, %v2276
    %v2310 = vsel %vm1133, %v2270, 0.0
    %v2311 = vsel %vm1133, %v2272, 0.0
    %v2312 = vsel %vm1133, %v2274, 0.0
    %v2313 = vsel %vm1133, %v2276, 0.0
    %v2314 = vmax.f32 %v2154, %v2220
    %v2315 = vmax.f32 %v2155, %v2223
    %v2316 = vmax.f32 %v2156, %v2226
    %v2317 = vmax.f32 %v2157, %v2229
    %v2318 = vmax.f32 %v2158, %v2231
    %v2319 = vmax.f32 %v2159, %v2233
    %v2320 = vmax.f32 %v2160, %v2235
    %v2321 = vmax.f32 %v2161, %v2237
    %v2322 = vmax.f32 %v2162, %v2239
    %v2323 = vmax.f32 %v2163, %v2241
    %v2324 = vmax.f32 %v2164, %v2243
    %v2325 = vmax.f32 %v2165, %v2245
    %v2326 = vmax.f32 %v2166, %v2247
    %v2327 = vmax.f32 %v2167, %v2249
    %v2328 = vmax.f32 %v2168, %v2251
    %v2329 = vmax.f32 %v2169, %v2253
    %v2330 = vmax.f32 %v2170, %v2255
    %v2331 = vmax.f32 %v2171, %v2257
    %v2332 = vmax.f32 %v2172, %v2259
    %v2333 = vmax.f32 %v2173, %v2261
    %v2334 = vmax.f32 %v2174, %v2263
    %v2335 = vmax.f32 %v2175, %v2265
    %v2336 = vmax.f32 %v2176, %v2267
    %v2337 = vmax.f32 %v2177, %v2269
    %v2338 = vmax.f32 %v2178, %v2271
    %v2339 = vmax.f32 %v2179, %v2273
    %v2340 = vmax.f32 %v2180, %v2275
    %v2341 = vmax.f32 %v2181, %v2277
    %v2342 = vmax.f32 %v2182, %v2310
    %v2343 = vmax.f32 %v2183, %v2311
    %v2344 = vmax.f32 %v2184, %v2312
    %v2345 = vmax.f32 %v2185, %v2313
    %v2346 = vpack.c.bf16 %v2318, %v2314
    %v2347 = vpack.c.bf16 %v2319, %v2315
    %v2348 = vpack.c.bf16 %v2320, %v2316
    %v2349 = vpack.c.bf16 %v2321, %v2317
    %v2350 = vpack.c.bf16 %v2326, %v2322
    %v2351 = vpack.c.bf16 %v2327, %v2323
    %v2352 = vpack.c.bf16 %v2328, %v2324
    %v2353 = vpack.c.bf16 %v2329, %v2325
    %v2354 = vpack.c.bf16 %v2334, %v2330
    %v2355 = vpack.c.bf16 %v2335, %v2331
    %v2356 = vpack.c.bf16 %v2336, %v2332
    %v2357 = vpack.c.bf16 %v2337, %v2333
    %v2358 = vpack.c.bf16 %v2342, %v2338
    %v2359 = vpack.c.bf16 %v2343, %v2339
    %v2360 = vpack.c.bf16 %v2344, %v2340
    %v2361 = vpack.c.bf16 %v2345, %v2341
    %v2362 = vld [vmem:[#allocation7] sm:$0xff]
    %v2363 = vld [vmem:[#allocation7 + $0x8] sm:$0xff]
    %v2364 = vld [vmem:[#allocation7 + $0x10] sm:$0xff]
    %v2365 = vld [vmem:[#allocation7 + $0x18] sm:$0xff]
    %v2366 = vld [vmem:[#allocation7 + $0x20] sm:$0xff]
    %v2367 = vld [vmem:[#allocation7 + $0x28] sm:$0xff]
    %v2368 = vld [vmem:[#allocation7 + $0x30] sm:$0xff]
    %v2369 = vld [vmem:[#allocation7 + $0x38] sm:$0xff]
    %v2370 = vld [vmem:[#allocation7 + $0x40] sm:$0xff]
    %v2371 = vld [vmem:[#allocation7 + $0x48] sm:$0xff]
    %v2372 = vld [vmem:[#allocation7 + $0x50] sm:$0xff]
    %v2373 = vld [vmem:[#allocation7 + $0x58] sm:$0xff]
    %v2374 = vld [vmem:[#allocation7 + $0x60] sm:$0xff]
    %v2375 = vld [vmem:[#allocation7 + $0x68] sm:$0xff]
    %v2376 = vld [vmem:[#allocation7 + $0x70] sm:$0xff]
    %v2377 = vld [vmem:[#allocation7 + $0x78] sm:$0xff]
    %v2378 = vld [vmem:[#allocation7 + $0x80] sm:$0xff]
    %v2379 = vld [vmem:[#allocation7 + $0x88] sm:$0xff]
    %v2380 = vld [vmem:[#allocation7 + $0x90] sm:$0xff]
    %v2381 = vld [vmem:[#allocation7 + $0x98] sm:$0xff]
    %v2382 = vld [vmem:[#allocation7 + $0xa0] sm:$0xff]
    %v2383 = vld [vmem:[#allocation7 + $0xa8] sm:$0xff]
    %v2384 = vld [vmem:[#allocation7 + $0xb0] sm:$0xff]
    %v2385 = vld [vmem:[#allocation7 + $0xb8] sm:$0xff]
    %v2386 = vld [vmem:[#allocation7 + $0xc0] sm:$0xff]
    %v2387 = vld [vmem:[#allocation7 + $0xc8] sm:$0xff]
    %v2388 = vld [vmem:[#allocation7 + $0xd0] sm:$0xff]
    %v2389 = vld [vmem:[#allocation7 + $0xd8] sm:$0xff]
    %v2390 = vld [vmem:[#allocation7 + $0xe0] sm:$0xff]
    %v2391 = vld [vmem:[#allocation7 + $0xe8] sm:$0xff]
    %v2392 = vld [vmem:[#allocation7 + $0xf0] sm:$0xff]
    %v2393 = vld [vmem:[#allocation7 + $0xf8] sm:$0xff]
    %v2394 = vld [vmem:[#allocation7 + $0x100] sm:$0xff]
    %v2395 = vld [vmem:[#allocation7 + $0x108] sm:$0xff]
    %v2396 = vld [vmem:[#allocation7 + $0x110] sm:$0xff]
    %v2397 = vld [vmem:[#allocation7 + $0x118] sm:$0xff]
    %v2398 = vld [vmem:[#allocation7 + $0x120] sm:$0xff]
    %v2399 = vld [vmem:[#allocation7 + $0x128] sm:$0xff]
    %v2400 = vld [vmem:[#allocation7 + $0x130] sm:$0xff]
    %v2401 = vld [vmem:[#allocation7 + $0x138] sm:$0xff]
    %v2402 = vld [vmem:[#allocation7 + $0x140] sm:$0xff]
    %v2403 = vld [vmem:[#allocation7 + $0x148] sm:$0xff]
    %v2404 = vld [vmem:[#allocation7 + $0x150] sm:$0xff]
    %v2405 = vld [vmem:[#allocation7 + $0x158] sm:$0xff]
    %v2406 = vld [vmem:[#allocation7 + $0x160] sm:$0xff]
    %v2407 = vld [vmem:[#allocation7 + $0x168] sm:$0xff]
    %v2408 = vld [vmem:[#allocation7 + $0x170] sm:$0xff]
    %v2409 = vld [vmem:[#allocation7 + $0x178] sm:$0xff]
    %v2410 = vld [vmem:[#allocation7 + $0x180] sm:$0xff]
    %v2411 = vld [vmem:[#allocation7 + $0x188] sm:$0xff]
    %v2412 = vld [vmem:[#allocation7 + $0x190] sm:$0xff]
    %v2413 = vld [vmem:[#allocation7 + $0x198] sm:$0xff]
    %v2414 = vld [vmem:[#allocation7 + $0x1a0] sm:$0xff]
    %v2415 = vld [vmem:[#allocation7 + $0x1a8] sm:$0xff]
    %v2416 = vld [vmem:[#allocation7 + $0x1b0] sm:$0xff]
    %v2417 = vld [vmem:[#allocation7 + $0x1b8] sm:$0xff]
    %v2418 = vld [vmem:[#allocation7 + $0x1c0] sm:$0xff]
    %v2419 = vld [vmem:[#allocation7 + $0x1c8] sm:$0xff]
    %v2420 = vld [vmem:[#allocation7 + $0x1d0] sm:$0xff]
    %v2421 = vld [vmem:[#allocation7 + $0x1d8] sm:$0xff]
    %v2422 = vld [vmem:[#allocation7 + $0x1e0] sm:$0xff]
    %v2423 = vld [vmem:[#allocation7 + $0x1e8] sm:$0xff]
    %v2424 = vld [vmem:[#allocation7 + $0x1f0] sm:$0xff]
    %v2425 = vld [vmem:[#allocation7 + $0x1f8] sm:$0xff]
    %v2426 = vld [vmem:[#allocation7 + $0x200] sm:$0xff]
    %v2427 = vld [vmem:[#allocation7 + $0x208] sm:$0xff]
    %v2428 = vld [vmem:[#allocation7 + $0x210] sm:$0xff]
    %v2429 = vld [vmem:[#allocation7 + $0x218] sm:$0xff]
    %v2430 = vld [vmem:[#allocation7 + $0x220] sm:$0xff]
    %v2431 = vld [vmem:[#allocation7 + $0x228] sm:$0xff]
    %v2432 = vld [vmem:[#allocation7 + $0x230] sm:$0xff]
    %v2433 = vld [vmem:[#allocation7 + $0x238] sm:$0xff]
    %v2434 = vld [vmem:[#allocation7 + $0x240] sm:$0xff]
    %v2435 = vld [vmem:[#allocation7 + $0x248] sm:$0xff]
    %v2436 = vld [vmem:[#allocation7 + $0x250] sm:$0xff]
    %v2437 = vld [vmem:[#allocation7 + $0x258] sm:$0xff]
    %v2438 = vld [vmem:[#allocation7 + $0x260] sm:$0xff]
    %v2439 = vld [vmem:[#allocation7 + $0x268] sm:$0xff]
    %v2440 = vld [vmem:[#allocation7 + $0x270] sm:$0xff]
    %v2441 = vld [vmem:[#allocation7 + $0x278] sm:$0xff]
    %v2442 = vld [vmem:[#allocation7 + $0x280] sm:$0xff]
    %v2443 = vld [vmem:[#allocation7 + $0x288] sm:$0xff]
    %v2444 = vld [vmem:[#allocation7 + $0x290] sm:$0xff]
    %v2445 = vld [vmem:[#allocation7 + $0x298] sm:$0xff]
    %v2446 = vld [vmem:[#allocation7 + $0x2a0] sm:$0xff]
    %v2447 = vld [vmem:[#allocation7 + $0x2a8] sm:$0xff]
    %v2448 = vld [vmem:[#allocation7 + $0x2b0] sm:$0xff]
    %v2449 = vld [vmem:[#allocation7 + $0x2b8] sm:$0xff]
    %v2450 = vld [vmem:[#allocation7 + $0x2c0] sm:$0xff]
    %v2451 = vld [vmem:[#allocation7 + $0x2c8] sm:$0xff]
    %v2452 = vld [vmem:[#allocation7 + $0x2d0] sm:$0xff]
    %v2453 = vld [vmem:[#allocation7 + $0x2d8] sm:$0xff]
    %v2454 = vld [vmem:[#allocation7 + $0x2e0] sm:$0xff]
    %v2455 = vld [vmem:[#allocation7 + $0x2e8] sm:$0xff]
    %v2456 = vld [vmem:[#allocation7 + $0x2f0] sm:$0xff]
    %v2457 = vld [vmem:[#allocation7 + $0x2f8] sm:$0xff]
    %v2458 = vld [vmem:[#allocation7 + $0x300] sm:$0xff]
    %v2459 = vld [vmem:[#allocation7 + $0x308] sm:$0xff]
    %v2460 = vld [vmem:[#allocation7 + $0x310] sm:$0xff]
    %v2461 = vld [vmem:[#allocation7 + $0x318] sm:$0xff]
    %v2462 = vld [vmem:[#allocation7 + $0x320] sm:$0xff]
    %v2463 = vld [vmem:[#allocation7 + $0x328] sm:$0xff]
    %v2464 = vld [vmem:[#allocation7 + $0x330] sm:$0xff]
    %v2465 = vld [vmem:[#allocation7 + $0x338] sm:$0xff]
    %v2466 = vld [vmem:[#allocation7 + $0x340] sm:$0xff]
    %v2467 = vld [vmem:[#allocation7 + $0x348] sm:$0xff]
    %v2468 = vld [vmem:[#allocation7 + $0x350] sm:$0xff]
    %v2469 = vld [vmem:[#allocation7 + $0x358] sm:$0xff]
    %v2470 = vld [vmem:[#allocation7 + $0x360] sm:$0xff]
    %v2471 = vld [vmem:[#allocation7 + $0x368] sm:$0xff]
    %v2472 = vld [vmem:[#allocation7 + $0x370] sm:$0xff]
    %v2473 = vld [vmem:[#allocation7 + $0x378] sm:$0xff]
    %v2474 = vld [vmem:[#allocation7 + $0x380] sm:$0xff]
    %v2475 = vld [vmem:[#allocation7 + $0x388] sm:$0xff]
    %v2476 = vld [vmem:[#allocation7 + $0x390] sm:$0xff]
    %v2477 = vld [vmem:[#allocation7 + $0x398] sm:$0xff]
    %v2478 = vld [vmem:[#allocation7 + $0x3a0] sm:$0xff]
    %v2479 = vld [vmem:[#allocation7 + $0x3a8] sm:$0xff]
    %v2480 = vld [vmem:[#allocation7 + $0x3b0] sm:$0xff]
    %v2481 = vld [vmem:[#allocation7 + $0x3b8] sm:$0xff]
    %v2482 = vld [vmem:[#allocation7 + $0x3c0] sm:$0xff]
    %v2483 = vld [vmem:[#allocation7 + $0x3c8] sm:$0xff]
    %v2484 = vld [vmem:[#allocation7 + $0x3d0] sm:$0xff]
    %v2485 = vld [vmem:[#allocation7 + $0x3d8] sm:$0xff]
    %v2486 = vld [vmem:[#allocation7 + $0x3e0] sm:$0xff]
    %v2487 = vld [vmem:[#allocation7 + $0x3e8] sm:$0xff]
    %v2488 = vld [vmem:[#allocation7 + $0x3f0] sm:$0xff]
    %v2489 = vld [vmem:[#allocation7 + $0x3f8] sm:$0xff]
    %v2490 = vld [vmem:[#allocation7 + $0x400] sm:$0xff]
    %v2491 = vld [vmem:[#allocation7 + $0x408] sm:$0xff]
    %v2492 = vld [vmem:[#allocation7 + $0x410] sm:$0xff]
    %v2493 = vld [vmem:[#allocation7 + $0x418] sm:$0xff]
    %v2494 = vld [vmem:[#allocation7 + $0x420] sm:$0xff]
    %v2495 = vld [vmem:[#allocation7 + $0x428] sm:$0xff]
    %v2496 = vld [vmem:[#allocation7 + $0x430] sm:$0xff]
    %v2497 = vld [vmem:[#allocation7 + $0x438] sm:$0xff]
    %v2498 = vld [vmem:[#allocation7 + $0x440] sm:$0xff]
    %v2499 = vld [vmem:[#allocation7 + $0x448] sm:$0xff]
    %v2500 = vld [vmem:[#allocation7 + $0x450] sm:$0xff]
    %v2501 = vld [vmem:[#allocation7 + $0x458] sm:$0xff]
    %v2502 = vld [vmem:[#allocation7 + $0x460] sm:$0xff]
    %v2503 = vld [vmem:[#allocation7 + $0x468] sm:$0xff]
    %v2504 = vld [vmem:[#allocation7 + $0x470] sm:$0xff]
    %v2505 = vld [vmem:[#allocation7 + $0x478] sm:$0xff]
    %v2506 = vld [vmem:[#allocation7 + $0x480] sm:$0xff]
    %v2507 = vld [vmem:[#allocation7 + $0x488] sm:$0xff]
    %v2508 = vld [vmem:[#allocation7 + $0x490] sm:$0xff]
    %v2509 = vld [vmem:[#allocation7 + $0x498] sm:$0xff]
    %v2510 = vld [vmem:[#allocation7 + $0x4a0] sm:$0xff]
    %v2511 = vld [vmem:[#allocation7 + $0x4a8] sm:$0xff]
    %v2512 = vld [vmem:[#allocation7 + $0x4b0] sm:$0xff]
    %v2513 = vld [vmem:[#allocation7 + $0x4b8] sm:$0xff]
    %v2514 = vld [vmem:[#allocation7 + $0x4c0] sm:$0xff]
    %v2515 = vld [vmem:[#allocation7 + $0x4c8] sm:$0xff]
    %v2516 = vld [vmem:[#allocation7 + $0x4d0] sm:$0xff]
    %v2517 = vld [vmem:[#allocation7 + $0x4d8] sm:$0xff]
    %v2518 = vld [vmem:[#allocation7 + $0x4e0] sm:$0xff]
    %v2519 = vld [vmem:[#allocation7 + $0x4e8] sm:$0xff]
    %v2520 = vld [vmem:[#allocation7 + $0x4f0] sm:$0xff]
    %v2521 = vld [vmem:[#allocation7 + $0x4f8] sm:$0xff]
    %v2522 = vld [vmem:[#allocation7 + $0x500] sm:$0xff]
    %v2523 = vld [vmem:[#allocation7 + $0x508] sm:$0xff]
    %v2524 = vld [vmem:[#allocation7 + $0x510] sm:$0xff]
    %v2525 = vld [vmem:[#allocation7 + $0x518] sm:$0xff]
    %v2526 = vld [vmem:[#allocation7 + $0x520] sm:$0xff]
    %v2527 = vld [vmem:[#allocation7 + $0x528] sm:$0xff]
    %v2528 = vld [vmem:[#allocation7 + $0x530] sm:$0xff]
    %v2529 = vld [vmem:[#allocation7 + $0x538] sm:$0xff]
    %v2530 = vld [vmem:[#allocation7 + $0x540] sm:$0xff]
    %v2531 = vld [vmem:[#allocation7 + $0x548] sm:$0xff]
    %v2532 = vld [vmem:[#allocation7 + $0x550] sm:$0xff]
    %v2533 = vld [vmem:[#allocation7 + $0x558] sm:$0xff]
    %v2534 = vld [vmem:[#allocation7 + $0x560] sm:$0xff]
    %v2535 = vld [vmem:[#allocation7 + $0x568] sm:$0xff]
    %v2536 = vld [vmem:[#allocation7 + $0x570] sm:$0xff]
    %v2537 = vld [vmem:[#allocation7 + $0x578] sm:$0xff]
    %v2538 = vld [vmem:[#allocation7 + $0x580] sm:$0xff]
    %v2539 = vld [vmem:[#allocation7 + $0x588] sm:$0xff]
    %v2540 = vld [vmem:[#allocation7 + $0x590] sm:$0xff]
    %v2541 = vld [vmem:[#allocation7 + $0x598] sm:$0xff]
    %v2542 = vld [vmem:[#allocation7 + $0x5a0] sm:$0xff]
    %v2543 = vld [vmem:[#allocation7 + $0x5a8] sm:$0xff]
    %v2544 = vld [vmem:[#allocation7 + $0x5b0] sm:$0xff]
    %v2545 = vld [vmem:[#allocation7 + $0x5b8] sm:$0xff]
    %v2546 = vld [vmem:[#allocation7 + $0x5c0] sm:$0xff]
    %v2547 = vld [vmem:[#allocation7 + $0x5c8] sm:$0xff]
    %v2548 = vld [vmem:[#allocation7 + $0x5d0] sm:$0xff]
    %v2549 = vld [vmem:[#allocation7 + $0x5d8] sm:$0xff]
    %v2550 = vld [vmem:[#allocation7 + $0x5e0] sm:$0xff]
    %v2551 = vld [vmem:[#allocation7 + $0x5e8] sm:$0xff]
    %v2552 = vld [vmem:[#allocation7 + $0x5f0] sm:$0xff]
    %v2553 = vld [vmem:[#allocation7 + $0x5f8] sm:$0xff]
    %v2554 = vld [vmem:[#allocation7 + $0x600] sm:$0xff]
    %v2555 = vld [vmem:[#allocation7 + $0x608] sm:$0xff]
    %v2556 = vld [vmem:[#allocation7 + $0x610] sm:$0xff]
    %v2557 = vld [vmem:[#allocation7 + $0x618] sm:$0xff]
    %v2558 = vld [vmem:[#allocation7 + $0x620] sm:$0xff]
    %v2559 = vld [vmem:[#allocation7 + $0x628] sm:$0xff]
    %v2560 = vld [vmem:[#allocation7 + $0x630] sm:$0xff]
    %v2561 = vld [vmem:[#allocation7 + $0x638] sm:$0xff]
    %v2562 = vld [vmem:[#allocation7 + $0x640] sm:$0xff]
    %v2563 = vld [vmem:[#allocation7 + $0x648] sm:$0xff]
    %v2564 = vld [vmem:[#allocation7 + $0x650] sm:$0xff]
    %v2565 = vld [vmem:[#allocation7 + $0x658] sm:$0xff]
    %v2566 = vld [vmem:[#allocation7 + $0x660] sm:$0xff]
    %v2567 = vld [vmem:[#allocation7 + $0x668] sm:$0xff]
    %v2568 = vld [vmem:[#allocation7 + $0x670] sm:$0xff]
    %v2569 = vld [vmem:[#allocation7 + $0x678] sm:$0xff]
    %v2570 = vld [vmem:[#allocation7 + $0x680] sm:$0xff]
    %v2571 = vld [vmem:[#allocation7 + $0x688] sm:$0xff]
    %v2572 = vld [vmem:[#allocation7 + $0x690] sm:$0xff]
    %v2573 = vld [vmem:[#allocation7 + $0x698] sm:$0xff]
    %v2574 = vld [vmem:[#allocation7 + $0x6a0] sm:$0xff]
    %v2575 = vld [vmem:[#allocation7 + $0x6a8] sm:$0xff]
    %v2576 = vld [vmem:[#allocation7 + $0x6b0] sm:$0xff]
    %v2577 = vld [vmem:[#allocation7 + $0x6b8] sm:$0xff]
    %v2578 = vld [vmem:[#allocation7 + $0x6c0] sm:$0xff]
    %v2579 = vld [vmem:[#allocation7 + $0x6c8] sm:$0xff]
    %v2580 = vld [vmem:[#allocation7 + $0x6d0] sm:$0xff]
    %v2581 = vld [vmem:[#allocation7 + $0x6d8] sm:$0xff]
    %v2582 = vld [vmem:[#allocation7 + $0x6e0] sm:$0xff]
    %v2583 = vld [vmem:[#allocation7 + $0x6e8] sm:$0xff]
    %v2584 = vld [vmem:[#allocation7 + $0x6f0] sm:$0xff]
    %v2585 = vld [vmem:[#allocation7 + $0x6f8] sm:$0xff]
    %v2586 = vld [vmem:[#allocation7 + $0x700] sm:$0xff]
    %v2587 = vld [vmem:[#allocation7 + $0x708] sm:$0xff]
    %v2588 = vld [vmem:[#allocation7 + $0x710] sm:$0xff]
    %v2589 = vld [vmem:[#allocation7 + $0x718] sm:$0xff]
    %v2590 = vld [vmem:[#allocation7 + $0x720] sm:$0xff]
    %v2591 = vld [vmem:[#allocation7 + $0x728] sm:$0xff]
    %v2592 = vld [vmem:[#allocation7 + $0x730] sm:$0xff]
    %v2593 = vld [vmem:[#allocation7 + $0x738] sm:$0xff]
    %v2594 = vld [vmem:[#allocation7 + $0x740] sm:$0xff]
    %v2595 = vld [vmem:[#allocation7 + $0x748] sm:$0xff]
    %v2596 = vld [vmem:[#allocation7 + $0x750] sm:$0xff]
    %v2597 = vld [vmem:[#allocation7 + $0x758] sm:$0xff]
    %v2598 = vld [vmem:[#allocation7 + $0x760] sm:$0xff]
    %v2599 = vld [vmem:[#allocation7 + $0x768] sm:$0xff]
    %v2600 = vld [vmem:[#allocation7 + $0x770] sm:$0xff]
    %v2601 = vld [vmem:[#allocation7 + $0x778] sm:$0xff]
    %v2602 = vld [vmem:[#allocation7 + $0x780] sm:$0xff]
    %v2603 = vld [vmem:[#allocation7 + $0x788] sm:$0xff]
    %v2604 = vld [vmem:[#allocation7 + $0x790] sm:$0xff]
    %v2605 = vld [vmem:[#allocation7 + $0x798] sm:$0xff]
    %v2606 = vld [vmem:[#allocation7 + $0x7a0] sm:$0xff]
    %v2607 = vld [vmem:[#allocation7 + $0x7a8] sm:$0xff]
    %v2608 = vld [vmem:[#allocation7 + $0x7b0] sm:$0xff]
    %v2609 = vld [vmem:[#allocation7 + $0x7b8] sm:$0xff]
    %v2610 = vld [vmem:[#allocation7 + $0x7c0] sm:$0xff]
    %v2611 = vld [vmem:[#allocation7 + $0x7c8] sm:$0xff]
    %v2612 = vld [vmem:[#allocation7 + $0x7d0] sm:$0xff]
    %v2613 = vld [vmem:[#allocation7 + $0x7d8] sm:$0xff]
    %v2614 = vld [vmem:[#allocation7 + $0x7e0] sm:$0xff]
    %v2615 = vld [vmem:[#allocation7 + $0x7e8] sm:$0xff]
    %v2616 = vld [vmem:[#allocation7 + $0x7f0] sm:$0xff]
    %v2617 = vld [vmem:[#allocation7 + $0x7f8] sm:$0xff]
    %v2618 = vld [vmem:[#allocation7 + $0x800] sm:$0xff]
    %v2619 = vld [vmem:[#allocation7 + $0x808] sm:$0xff]
    %v2620 = vld [vmem:[#allocation7 + $0x810] sm:$0xff]
    %v2621 = vld [vmem:[#allocation7 + $0x818] sm:$0xff]
    %v2622 = vld [vmem:[#allocation7 + $0x820] sm:$0xff]
    %v2623 = vld [vmem:[#allocation7 + $0x828] sm:$0xff]
    %v2624 = vld [vmem:[#allocation7 + $0x830] sm:$0xff]
    %v2625 = vld [vmem:[#allocation7 + $0x838] sm:$0xff]
    %v2626 = vld [vmem:[#allocation7 + $0x840] sm:$0xff]
    %v2627 = vld [vmem:[#allocation7 + $0x848] sm:$0xff]
    %v2628 = vld [vmem:[#allocation7 + $0x850] sm:$0xff]
    %v2629 = vld [vmem:[#allocation7 + $0x858] sm:$0xff]
    %v2630 = vld [vmem:[#allocation7 + $0x860] sm:$0xff]
    %v2631 = vld [vmem:[#allocation7 + $0x868] sm:$0xff]
    %v2632 = vld [vmem:[#allocation7 + $0x870] sm:$0xff]
    %v2633 = vld [vmem:[#allocation7 + $0x878] sm:$0xff]
    %v2634 = vld [vmem:[#allocation7 + $0x880] sm:$0xff]
    %v2635 = vld [vmem:[#allocation7 + $0x888] sm:$0xff]
    %v2636 = vld [vmem:[#allocation7 + $0x890] sm:$0xff]
    %v2637 = vld [vmem:[#allocation7 + $0x898] sm:$0xff]
    %v2638 = vld [vmem:[#allocation7 + $0x8a0] sm:$0xff]
    %v2639 = vld [vmem:[#allocation7 + $0x8a8] sm:$0xff]
    %v2640 = vld [vmem:[#allocation7 + $0x8b0] sm:$0xff]
    %v2641 = vld [vmem:[#allocation7 + $0x8b8] sm:$0xff]
    %v2642 = vld [vmem:[#allocation7 + $0x8c0] sm:$0xff]
    %v2643 = vld [vmem:[#allocation7 + $0x8c8] sm:$0xff]
    %v2644 = vld [vmem:[#allocation7 + $0x8d0] sm:$0xff]
    %v2645 = vld [vmem:[#allocation7 + $0x8d8] sm:$0xff]
    %v2646 = vld [vmem:[#allocation7 + $0x8e0] sm:$0xff]
    %v2647 = vld [vmem:[#allocation7 + $0x8e8] sm:$0xff]
    %v2648 = vld [vmem:[#allocation7 + $0x8f0] sm:$0xff]
    %v2649 = vld [vmem:[#allocation7 + $0x8f8] sm:$0xff]
    %v2650 = vld [vmem:[#allocation7 + $0x900] sm:$0xff]
    %v2651 = vld [vmem:[#allocation7 + $0x908] sm:$0xff]
    %v2652 = vld [vmem:[#allocation7 + $0x910] sm:$0xff]
    %v2653 = vld [vmem:[#allocation7 + $0x918] sm:$0xff]
    %v2654 = vld [vmem:[#allocation7 + $0x920] sm:$0xff]
    %v2655 = vld [vmem:[#allocation7 + $0x928] sm:$0xff]
    %v2656 = vld [vmem:[#allocation7 + $0x930] sm:$0xff]
    %v2657 = vld [vmem:[#allocation7 + $0x938] sm:$0xff]
    %v2658 = vld [vmem:[#allocation7 + $0x940] sm:$0xff]
    %v2659 = vld [vmem:[#allocation7 + $0x948] sm:$0xff]
    %v2660 = vld [vmem:[#allocation7 + $0x950] sm:$0xff]
    %v2661 = vld [vmem:[#allocation7 + $0x958] sm:$0xff]
    %v2662 = vld [vmem:[#allocation7 + $0x960] sm:$0xff]
    %v2663 = vld [vmem:[#allocation7 + $0x968] sm:$0xff]
    %v2664 = vld [vmem:[#allocation7 + $0x970] sm:$0xff]
    %v2665 = vld [vmem:[#allocation7 + $0x978] sm:$0xff]
    %v2666 = vld [vmem:[#allocation7 + $0x980] sm:$0xff]
    %v2667 = vld [vmem:[#allocation7 + $0x988] sm:$0xff]
    %v2668 = vld [vmem:[#allocation7 + $0x990] sm:$0xff]
    %v2669 = vld [vmem:[#allocation7 + $0x998] sm:$0xff]
    %v2670 = vld [vmem:[#allocation7 + $0x9a0] sm:$0xff]
    %v2671 = vld [vmem:[#allocation7 + $0x9a8] sm:$0xff]
    %v2672 = vld [vmem:[#allocation7 + $0x9b0] sm:$0xff]
    %v2673 = vld [vmem:[#allocation7 + $0x9b8] sm:$0xff]
    %v2674 = vld [vmem:[#allocation7 + $0x9c0] sm:$0xff]
    %v2675 = vld [vmem:[#allocation7 + $0x9c8] sm:$0xff]
    %v2676 = vld [vmem:[#allocation7 + $0x9d0] sm:$0xff]
    %v2677 = vld [vmem:[#allocation7 + $0x9d8] sm:$0xff]
    %v2678 = vld [vmem:[#allocation7 + $0x9e0] sm:$0xff]
    %v2679 = vld [vmem:[#allocation7 + $0x9e8] sm:$0xff]
    %v2680 = vld [vmem:[#allocation7 + $0x9f0] sm:$0xff]
    %v2681 = vld [vmem:[#allocation7 + $0x9f8] sm:$0xff]
    %v2682 = vld [vmem:[#allocation7 + $0xa00] sm:$0xff]
    %v2683 = vld [vmem:[#allocation7 + $0xa08] sm:$0xff]
    %v2684 = vld [vmem:[#allocation7 + $0xa10] sm:$0xff]
    %v2685 = vld [vmem:[#allocation7 + $0xa18] sm:$0xff]
    %v2686 = vld [vmem:[#allocation7 + $0xa20] sm:$0xff]
    %v2687 = vld [vmem:[#allocation7 + $0xa28] sm:$0xff]
    %v2688 = vld [vmem:[#allocation7 + $0xa30] sm:$0xff]
    %v2689 = vld [vmem:[#allocation7 + $0xa38] sm:$0xff]
    %v2690 = vld [vmem:[#allocation7 + $0xa40] sm:$0xff]
    %v2691 = vld [vmem:[#allocation7 + $0xa48] sm:$0xff]
    %v2692 = vld [vmem:[#allocation7 + $0xa50] sm:$0xff]
    %v2693 = vld [vmem:[#allocation7 + $0xa58] sm:$0xff]
    %v2694 = vld [vmem:[#allocation7 + $0xa60] sm:$0xff]
    %v2695 = vld [vmem:[#allocation7 + $0xa68] sm:$0xff]
    %v2696 = vld [vmem:[#allocation7 + $0xa70] sm:$0xff]
    %v2697 = vld [vmem:[#allocation7 + $0xa78] sm:$0xff]
    %v2698 = vld [vmem:[#allocation7 + $0xa80] sm:$0xff]
    %v2699 = vld [vmem:[#allocation7 + $0xa88] sm:$0xff]
    %v2700 = vld [vmem:[#allocation7 + $0xa90] sm:$0xff]
    %v2701 = vld [vmem:[#allocation7 + $0xa98] sm:$0xff]
    %v2702 = vld [vmem:[#allocation7 + $0xaa0] sm:$0xff]
    %v2703 = vld [vmem:[#allocation7 + $0xaa8] sm:$0xff]
    %v2704 = vld [vmem:[#allocation7 + $0xab0] sm:$0xff]
    %v2705 = vld [vmem:[#allocation7 + $0xab8] sm:$0xff]
    %v2706 = vld [vmem:[#allocation7 + $0xac0] sm:$0xff]
    %v2707 = vld [vmem:[#allocation7 + $0xac8] sm:$0xff]
    %v2708 = vld [vmem:[#allocation7 + $0xad0] sm:$0xff]
    %v2709 = vld [vmem:[#allocation7 + $0xad8] sm:$0xff]
    %v2710 = vld [vmem:[#allocation7 + $0xae0] sm:$0xff]
    %v2711 = vld [vmem:[#allocation7 + $0xae8] sm:$0xff]
    %v2712 = vld [vmem:[#allocation7 + $0xaf0] sm:$0xff]
    %v2713 = vld [vmem:[#allocation7 + $0xaf8] sm:$0xff]
    %v2714 = vld [vmem:[#allocation7 + $0xb00] sm:$0xff]
    %v2715 = vld [vmem:[#allocation7 + $0xb08] sm:$0xff]
    %v2716 = vld [vmem:[#allocation7 + $0xb10] sm:$0xff]
    %v2717 = vld [vmem:[#allocation7 + $0xb18] sm:$0xff]
    %v2718 = vld [vmem:[#allocation7 + $0xb20] sm:$0xff]
    %v2719 = vld [vmem:[#allocation7 + $0xb28] sm:$0xff]
    %v2720 = vld [vmem:[#allocation7 + $0xb30] sm:$0xff]
    %v2721 = vld [vmem:[#allocation7 + $0xb38] sm:$0xff]
    %v2722 = vld [vmem:[#allocation7 + $0xb40] sm:$0xff]
    %v2723 = vld [vmem:[#allocation7 + $0xb48] sm:$0xff]
    %v2724 = vld [vmem:[#allocation7 + $0xb50] sm:$0xff]
    %v2725 = vld [vmem:[#allocation7 + $0xb58] sm:$0xff]
    %v2726 = vld [vmem:[#allocation7 + $0xb60] sm:$0xff]
    %v2727 = vld [vmem:[#allocation7 + $0xb68] sm:$0xff]
    %v2728 = vld [vmem:[#allocation7 + $0xb70] sm:$0xff]
    %v2729 = vld [vmem:[#allocation7 + $0xb78] sm:$0xff]
    %v2730 = vld [vmem:[#allocation7 + $0xb80] sm:$0xff]
    %v2731 = vld [vmem:[#allocation7 + $0xb88] sm:$0xff]
    %v2732 = vld [vmem:[#allocation7 + $0xb90] sm:$0xff]
    %v2733 = vld [vmem:[#allocation7 + $0xb98] sm:$0xff]
    %v2734 = vld [vmem:[#allocation7 + $0xba0] sm:$0xff]
    %v2735 = vld [vmem:[#allocation7 + $0xba8] sm:$0xff]
    %v2736 = vld [vmem:[#allocation7 + $0xbb0] sm:$0xff]
    %v2737 = vld [vmem:[#allocation7 + $0xbb8] sm:$0xff]
    %v2738 = vld [vmem:[#allocation7 + $0xbc0] sm:$0xff]
    %v2739 = vld [vmem:[#allocation7 + $0xbc8] sm:$0xff]
    %v2740 = vld [vmem:[#allocation7 + $0xbd0] sm:$0xff]
    %v2741 = vld [vmem:[#allocation7 + $0xbd8] sm:$0xff]
    %v2742 = vld [vmem:[#allocation7 + $0xbe0] sm:$0xff]
    %v2743 = vld [vmem:[#allocation7 + $0xbe8] sm:$0xff]
    %v2744 = vld [vmem:[#allocation7 + $0xbf0] sm:$0xff]
    %v2745 = vld [vmem:[#allocation7 + $0xbf8] sm:$0xff]
    %v2746 = vld [vmem:[#allocation7 + $0xc00] sm:$0xff]
    %v2747 = vld [vmem:[#allocation7 + $0xc08] sm:$0xff]
    %v2748 = vld [vmem:[#allocation7 + $0xc10] sm:$0xff]
    %v2749 = vld [vmem:[#allocation7 + $0xc18] sm:$0xff]
    %v2750 = vld [vmem:[#allocation7 + $0xc20] sm:$0xff]
    %v2751 = vld [vmem:[#allocation7 + $0xc28] sm:$0xff]
    %v2752 = vld [vmem:[#allocation7 + $0xc30] sm:$0xff]
    %v2753 = vld [vmem:[#allocation7 + $0xc38] sm:$0xff]
    %v2754 = vld [vmem:[#allocation7 + $0xc40] sm:$0xff]
    %v2755 = vld [vmem:[#allocation7 + $0xc48] sm:$0xff]
    %v2756 = vld [vmem:[#allocation7 + $0xc50] sm:$0xff]
    %v2757 = vld [vmem:[#allocation7 + $0xc58] sm:$0xff]
    %v2758 = vld [vmem:[#allocation7 + $0xc60] sm:$0xff]
    %v2759 = vld [vmem:[#allocation7 + $0xc68] sm:$0xff]
    %v2760 = vld [vmem:[#allocation7 + $0xc70] sm:$0xff]
    %v2761 = vld [vmem:[#allocation7 + $0xc78] sm:$0xff]
    %v2762 = vld [vmem:[#allocation7 + $0xc80] sm:$0xff]
    %v2763 = vld [vmem:[#allocation7 + $0xc88] sm:$0xff]
    %v2764 = vld [vmem:[#allocation7 + $0xc90] sm:$0xff]
    %v2765 = vld [vmem:[#allocation7 + $0xc98] sm:$0xff]
    %v2766 = vld [vmem:[#allocation7 + $0xca0] sm:$0xff]
    %v2767 = vld [vmem:[#allocation7 + $0xca8] sm:$0xff]
    %v2768 = vld [vmem:[#allocation7 + $0xcb0] sm:$0xff]
    %v2769 = vld [vmem:[#allocation7 + $0xcb8] sm:$0xff]
    %v2770 = vld [vmem:[#allocation7 + $0xcc0] sm:$0xff]
    %v2771 = vld [vmem:[#allocation7 + $0xcc8] sm:$0xff]
    %v2772 = vld [vmem:[#allocation7 + $0xcd0] sm:$0xff]
    %v2773 = vld [vmem:[#allocation7 + $0xcd8] sm:$0xff]
    %v2774 = vld [vmem:[#allocation7 + $0xce0] sm:$0xff]
    %v2775 = vld [vmem:[#allocation7 + $0xce8] sm:$0xff]
    %v2776 = vld [vmem:[#allocation7 + $0xcf0] sm:$0xff]
    %v2777 = vld [vmem:[#allocation7 + $0xcf8] sm:$0xff]
    %v2778 = vld [vmem:[#allocation7 + $0xd00] sm:$0xff]
    %v2779 = vld [vmem:[#allocation7 + $0xd08] sm:$0xff]
    %v2780 = vld [vmem:[#allocation7 + $0xd10] sm:$0xff]
    %v2781 = vld [vmem:[#allocation7 + $0xd18] sm:$0xff]
    %v2782 = vld [vmem:[#allocation7 + $0xd20] sm:$0xff]
    %v2783 = vld [vmem:[#allocation7 + $0xd28] sm:$0xff]
    %v2784 = vld [vmem:[#allocation7 + $0xd30] sm:$0xff]
    %v2785 = vld [vmem:[#allocation7 + $0xd38] sm:$0xff]
    %v2786 = vld [vmem:[#allocation7 + $0xd40] sm:$0xff]
    %v2787 = vld [vmem:[#allocation7 + $0xd48] sm:$0xff]
    %v2788 = vld [vmem:[#allocation7 + $0xd50] sm:$0xff]
    %v2789 = vld [vmem:[#allocation7 + $0xd58] sm:$0xff]
    %v2790 = vld [vmem:[#allocation7 + $0xd60] sm:$0xff]
    %v2791 = vld [vmem:[#allocation7 + $0xd68] sm:$0xff]
    %v2792 = vld [vmem:[#allocation7 + $0xd70] sm:$0xff]
    %v2793 = vld [vmem:[#allocation7 + $0xd78] sm:$0xff]
    %v2794 = vld [vmem:[#allocation7 + $0xd80] sm:$0xff]
    %v2795 = vld [vmem:[#allocation7 + $0xd88] sm:$0xff]
    %v2796 = vld [vmem:[#allocation7 + $0xd90] sm:$0xff]
    %v2797 = vld [vmem:[#allocation7 + $0xd98] sm:$0xff]
    %v2798 = vld [vmem:[#allocation7 + $0xda0] sm:$0xff]
    %v2799 = vld [vmem:[#allocation7 + $0xda8] sm:$0xff]
    %v2800 = vld [vmem:[#allocation7 + $0xdb0] sm:$0xff]
    %v2801 = vld [vmem:[#allocation7 + $0xdb8] sm:$0xff]
    %v2802 = vld [vmem:[#allocation7 + $0xdc0] sm:$0xff]
    %v2803 = vld [vmem:[#allocation7 + $0xdc8] sm:$0xff]
    %v2804 = vld [vmem:[#allocation7 + $0xdd0] sm:$0xff]
    %v2805 = vld [vmem:[#allocation7 + $0xdd8] sm:$0xff]
    %v2806 = vld [vmem:[#allocation7 + $0xde0] sm:$0xff]
    %v2807 = vld [vmem:[#allocation7 + $0xde8] sm:$0xff]
    %v2808 = vld [vmem:[#allocation7 + $0xdf0] sm:$0xff]
    %v2809 = vld [vmem:[#allocation7 + $0xdf8] sm:$0xff]
    %v2810 = vld [vmem:[#allocation7 + $0xe00] sm:$0xff]
    %v2811 = vld [vmem:[#allocation7 + $0xe08] sm:$0xff]
    %v2812 = vld [vmem:[#allocation7 + $0xe10] sm:$0xff]
    %v2813 = vld [vmem:[#allocation7 + $0xe18] sm:$0xff]
    %v2814 = vld [vmem:[#allocation7 + $0xe20] sm:$0xff]
    %v2815 = vld [vmem:[#allocation7 + $0xe28] sm:$0xff]
    %v2816 = vld [vmem:[#allocation7 + $0xe30] sm:$0xff]
    %v2817 = vld [vmem:[#allocation7 + $0xe38] sm:$0xff]
    %v2818 = vld [vmem:[#allocation7 + $0xe40] sm:$0xff]
    %v2819 = vld [vmem:[#allocation7 + $0xe48] sm:$0xff]
    %v2820 = vld [vmem:[#allocation7 + $0xe50] sm:$0xff]
    %v2821 = vld [vmem:[#allocation7 + $0xe58] sm:$0xff]
    %v2822 = vld [vmem:[#allocation7 + $0xe60] sm:$0xff]
    %v2823 = vld [vmem:[#allocation7 + $0xe68] sm:$0xff]
    %v2824 = vld [vmem:[#allocation7 + $0xe70] sm:$0xff]
    %v2825 = vld [vmem:[#allocation7 + $0xe78] sm:$0xff]
    %v2826 = vld [vmem:[#allocation7 + $0xe80] sm:$0xff]
    %v2827 = vld [vmem:[#allocation7 + $0xe88] sm:$0xff]
    %v2828 = vld [vmem:[#allocation7 + $0xe90] sm:$0xff]
    %v2829 = vld [vmem:[#allocation7 + $0xe98] sm:$0xff]
    %v2830 = vld [vmem:[#allocation7 + $0xea0] sm:$0xff]
    %v2831 = vld [vmem:[#allocation7 + $0xea8] sm:$0xff]
    %v2832 = vld [vmem:[#allocation7 + $0xeb0] sm:$0xff]
    %v2833 = vld [vmem:[#allocation7 + $0xeb8] sm:$0xff]
    %v2834 = vld [vmem:[#allocation7 + $0xec0] sm:$0xff]
    %v2835 = vld [vmem:[#allocation7 + $0xec8] sm:$0xff]
    %v2836 = vld [vmem:[#allocation7 + $0xed0] sm:$0xff]
    %v2837 = vld [vmem:[#allocation7 + $0xed8] sm:$0xff]
    %v2838 = vld [vmem:[#allocation7 + $0xee0] sm:$0xff]
    %v2839 = vld [vmem:[#allocation7 + $0xee8] sm:$0xff]
    %v2840 = vld [vmem:[#allocation7 + $0xef0] sm:$0xff]
    %v2841 = vld [vmem:[#allocation7 + $0xef8] sm:$0xff]
    %v2842 = vld [vmem:[#allocation7 + $0xf00] sm:$0xff]
    %v2843 = vld [vmem:[#allocation7 + $0xf08] sm:$0xff]
    %v2844 = vld [vmem:[#allocation7 + $0xf10] sm:$0xff]
    %v2845 = vld [vmem:[#allocation7 + $0xf18] sm:$0xff]
    %v2846 = vld [vmem:[#allocation7 + $0xf20] sm:$0xff]
    %v2847 = vld [vmem:[#allocation7 + $0xf28] sm:$0xff]
    %v2848 = vld [vmem:[#allocation7 + $0xf30] sm:$0xff]
    %v2849 = vld [vmem:[#allocation7 + $0xf38] sm:$0xff]
    %v2850 = vld [vmem:[#allocation7 + $0xf40] sm:$0xff]
    %v2851 = vld [vmem:[#allocation7 + $0xf48] sm:$0xff]
    %v2852 = vld [vmem:[#allocation7 + $0xf50] sm:$0xff]
    %v2853 = vld [vmem:[#allocation7 + $0xf58] sm:$0xff]
    %v2854 = vld [vmem:[#allocation7 + $0xf60] sm:$0xff]
    %v2855 = vld [vmem:[#allocation7 + $0xf68] sm:$0xff]
    %v2856 = vld [vmem:[#allocation7 + $0xf70] sm:$0xff]
    %v2857 = vld [vmem:[#allocation7 + $0xf78] sm:$0xff]
    %v2858 = vld [vmem:[#allocation7 + $0xf80] sm:$0xff]
    %v2859 = vld [vmem:[#allocation7 + $0xf88] sm:$0xff]
    %v2860 = vld [vmem:[#allocation7 + $0xf90] sm:$0xff]
    %v2861 = vld [vmem:[#allocation7 + $0xf98] sm:$0xff]
    %v2862 = vld [vmem:[#allocation7 + $0xfa0] sm:$0xff]
    %v2863 = vld [vmem:[#allocation7 + $0xfa8] sm:$0xff]
    %v2864 = vld [vmem:[#allocation7 + $0xfb0] sm:$0xff]
    %v2865 = vld [vmem:[#allocation7 + $0xfb8] sm:$0xff]
    %v2866 = vld [vmem:[#allocation7 + $0xfc0] sm:$0xff]
    %v2867 = vld [vmem:[#allocation7 + $0xfc8] sm:$0xff]
    %v2868 = vld [vmem:[#allocation7 + $0xfd0] sm:$0xff]
    %v2869 = vld [vmem:[#allocation7 + $0xfd8] sm:$0xff]
    %v2870 = vld [vmem:[#allocation7 + $0xfe0] sm:$0xff]
    %v2871 = vld [vmem:[#allocation7 + $0xfe8] sm:$0xff]
    %v2872 = vld [vmem:[#allocation7 + $0xff0] sm:$0xff]
    %v2873 = vld [vmem:[#allocation7 + $0xff8] sm:$0xff]
    %v2874 = vld [vmem:[#allocation7 + $0x1000] sm:$0xff]
    %v2875 = vld [vmem:[#allocation7 + $0x1008] sm:$0xff]
    %v2876 = vld [vmem:[#allocation7 + $0x1010] sm:$0xff]
    %v2877 = vld [vmem:[#allocation7 + $0x1018] sm:$0xff]
    %v2878 = vld [vmem:[#allocation7 + $0x1020] sm:$0xff]
    %v2879 = vld [vmem:[#allocation7 + $0x1028] sm:$0xff]
    %v2880 = vld [vmem:[#allocation7 + $0x1030] sm:$0xff]
    %v2881 = vld [vmem:[#allocation7 + $0x1038] sm:$0xff]
    %v2882 = vld [vmem:[#allocation7 + $0x1040] sm:$0xff]
    %v2883 = vld [vmem:[#allocation7 + $0x1048] sm:$0xff]
    %v2884 = vld [vmem:[#allocation7 + $0x1050] sm:$0xff]
    %v2885 = vld [vmem:[#allocation7 + $0x1058] sm:$0xff]
    %v2886 = vld [vmem:[#allocation7 + $0x1060] sm:$0xff]
    %v2887 = vld [vmem:[#allocation7 + $0x1068] sm:$0xff]
    %v2888 = vld [vmem:[#allocation7 + $0x1070] sm:$0xff]
    %v2889 = vld [vmem:[#allocation7 + $0x1078] sm:$0xff]
    %v2890 = vld [vmem:[#allocation7 + $0x1080] sm:$0xff]
    %v2891 = vld [vmem:[#allocation7 + $0x1088] sm:$0xff]
    %v2892 = vld [vmem:[#allocation7 + $0x1090] sm:$0xff]
    %v2893 = vld [vmem:[#allocation7 + $0x1098] sm:$0xff]
    %v2894 = vld [vmem:[#allocation7 + $0x10a0] sm:$0xff]
    %v2895 = vld [vmem:[#allocation7 + $0x10a8] sm:$0xff]
    %v2896 = vld [vmem:[#allocation7 + $0x10b0] sm:$0xff]
    %v2897 = vld [vmem:[#allocation7 + $0x10b8] sm:$0xff]
    %v2898 = vld [vmem:[#allocation7 + $0x10c0] sm:$0xff]
    %v2899 = vld [vmem:[#allocation7 + $0x10c8] sm:$0xff]
    %v2900 = vld [vmem:[#allocation7 + $0x10d0] sm:$0xff]
    %v2901 = vld [vmem:[#allocation7 + $0x10d8] sm:$0xff]
    %v2902 = vld [vmem:[#allocation7 + $0x10e0] sm:$0xff]
    %v2903 = vld [vmem:[#allocation7 + $0x10e8] sm:$0xff]
    %v2904 = vld [vmem:[#allocation7 + $0x10f0] sm:$0xff]
    %v2905 = vld [vmem:[#allocation7 + $0x10f8] sm:$0xff]
    %v2906 = vld [vmem:[#allocation7 + $0x1100] sm:$0xff]
    %v2907 = vld [vmem:[#allocation7 + $0x1108] sm:$0xff]
    %v2908 = vld [vmem:[#allocation7 + $0x1110] sm:$0xff]
    %v2909 = vld [vmem:[#allocation7 + $0x1118] sm:$0xff]
    %v2910 = vld [vmem:[#allocation7 + $0x1120] sm:$0xff]
    %v2911 = vld [vmem:[#allocation7 + $0x1128] sm:$0xff]
    %v2912 = vld [vmem:[#allocation7 + $0x1130] sm:$0xff]
    %v2913 = vld [vmem:[#allocation7 + $0x1138] sm:$0xff]
    %v2914 = vld [vmem:[#allocation7 + $0x1140] sm:$0xff]
    %v2915 = vld [vmem:[#allocation7 + $0x1148] sm:$0xff]
    %v2916 = vld [vmem:[#allocation7 + $0x1150] sm:$0xff]
    %v2917 = vld [vmem:[#allocation7 + $0x1158] sm:$0xff]
    %v2918 = vld [vmem:[#allocation7 + $0x1160] sm:$0xff]
    %v2919 = vld [vmem:[#allocation7 + $0x1168] sm:$0xff]
    %v2920 = vld [vmem:[#allocation7 + $0x1170] sm:$0xff]
    %v2921 = vld [vmem:[#allocation7 + $0x1178] sm:$0xff]
    %v3482 = vunpack.c.l.b16 %v2362
    %v3483 = vunpack.c.h.b16 %v2362
    %v3484 = vunpack.c.l.b16 %v2363
    %v3485 = vunpack.c.h.b16 %v2363
    %v3486 = vunpack.c.l.b16 %v2364
    %v3487 = vunpack.c.h.b16 %v2364
    %v3488 = vunpack.c.l.b16 %v2365
    %v3489 = vunpack.c.h.b16 %v2365
    %v3490 = vunpack.c.l.b16 %v2366
    %v3491 = vunpack.c.h.b16 %v2366
    %v3492 = vunpack.c.l.b16 %v2367
    %v3493 = vunpack.c.h.b16 %v2367
    %v3494 = vunpack.c.l.b16 %v2368
    %v3495 = vunpack.c.h.b16 %v2368
    %v3496 = vunpack.c.l.b16 %v2369
    %v3497 = vunpack.c.h.b16 %v2369
    %v3498 = vunpack.c.l.b16 %v2370
    %v3499 = vunpack.c.h.b16 %v2370
    %v3500 = vunpack.c.l.b16 %v2371
    %v3501 = vunpack.c.h.b16 %v2371
    %v3502 = vunpack.c.l.b16 %v2372
    %v3503 = vunpack.c.h.b16 %v2372
    %v3504 = vunpack.c.l.b16 %v2373
    %v3505 = vunpack.c.h.b16 %v2373
    %v3506 = vunpack.c.l.b16 %v2374
    %v3507 = vunpack.c.h.b16 %v2374
    %v3508 = vunpack.c.l.b16 %v2375
    %v3509 = vunpack.c.h.b16 %v2375
    %v3510 = vunpack.c.l.b16 %v2376
    %v3511 = vunpack.c.h.b16 %v2376
    %v3512 = vunpack.c.l.b16 %v2377
    %v3513 = vunpack.c.h.b16 %v2377
    %v3514 = vunpack.c.l.b16 %v2378
    %v3515 = vunpack.c.h.b16 %v2378
    %v3516 = vunpack.c.l.b16 %v2379
    %v3517 = vunpack.c.h.b16 %v2379
    %v3518 = vunpack.c.l.b16 %v2380
    %v3519 = vunpack.c.h.b16 %v2380
    %v3520 = vunpack.c.l.b16 %v2381
    %v3521 = vunpack.c.h.b16 %v2381
    %v3522 = vunpack.c.l.b16 %v2382
    %v3523 = vunpack.c.h.b16 %v2382
    %v3524 = vunpack.c.l.b16 %v2383
    %v3525 = vunpack.c.h.b16 %v2383
    %v3526 = vunpack.c.l.b16 %v2384
    %v3527 = vunpack.c.h.b16 %v2384
    %v3528 = vunpack.c.l.b16 %v2385
    %v3529 = vunpack.c.h.b16 %v2385
    %v3530 = vunpack.c.l.b16 %v2386
    %v3531 = vunpack.c.h.b16 %v2386
    %v3532 = vunpack.c.l.b16 %v2387
    %v3533 = vunpack.c.h.b16 %v2387
    %v3534 = vunpack.c.l.b16 %v2388
    %v3535 = vunpack.c.h.b16 %v2388
    %v3536 = vunpack.c.l.b16 %v2389
    %v3537 = vunpack.c.h.b16 %v2389
    %v3538 = vunpack.c.l.b16 %v2390
    %v3539 = vunpack.c.h.b16 %v2390
    %v3540 = vunpack.c.l.b16 %v2391
    %v3541 = vunpack.c.h.b16 %v2391
    %v3542 = vunpack.c.l.b16 %v2392
    %v3543 = vunpack.c.h.b16 %v2392
    %v3544 = vunpack.c.l.b16 %v2393
    %v3545 = vunpack.c.h.b16 %v2393
    %v3546 = vunpack.c.l.b16 %v2394
    %v3547 = vunpack.c.h.b16 %v2394
    %v3548 = vunpack.c.l.b16 %v2395
    %v3549 = vunpack.c.h.b16 %v2395
    %v3550 = vunpack.c.l.b16 %v2396
    %v3551 = vunpack.c.h.b16 %v2396
    %v3552 = vunpack.c.l.b16 %v2397
    %v3553 = vunpack.c.h.b16 %v2397
    %v3554 = vunpack.c.l.b16 %v2398
    %v3555 = vunpack.c.h.b16 %v2398
    %v3556 = vunpack.c.l.b16 %v2399
    %v3557 = vunpack.c.h.b16 %v2399
    %v3558 = vunpack.c.l.b16 %v2400
    %v3559 = vunpack.c.h.b16 %v2400
    %v3560 = vunpack.c.l.b16 %v2401
    %v3561 = vunpack.c.h.b16 %v2401
    %v3562 = vunpack.c.l.b16 %v2402
    %v3563 = vunpack.c.h.b16 %v2402
    %v3564 = vunpack.c.l.b16 %v2403
    %v3565 = vunpack.c.h.b16 %v2403
    %v3566 = vunpack.c.l.b16 %v2404
    %v3567 = vunpack.c.h.b16 %v2404
    %v3568 = vunpack.c.l.b16 %v2405
    %v3569 = vunpack.c.h.b16 %v2405
    %v3570 = vunpack.c.l.b16 %v2406
    %v3571 = vunpack.c.h.b16 %v2406
    %v3572 = vunpack.c.l.b16 %v2407
    %v3573 = vunpack.c.h.b16 %v2407
    %v3574 = vunpack.c.l.b16 %v2408
    %v3575 = vunpack.c.h.b16 %v2408
    %v3576 = vunpack.c.l.b16 %v2409
    %v3577 = vunpack.c.h.b16 %v2409
    %v3578 = vunpack.c.l.b16 %v2410
    %v3579 = vunpack.c.h.b16 %v2410
    %v3580 = vunpack.c.l.b16 %v2411
    %v3581 = vunpack.c.h.b16 %v2411
    %v3582 = vunpack.c.l.b16 %v2412
    %v3583 = vunpack.c.h.b16 %v2412
    %v3584 = vunpack.c.l.b16 %v2413
    %v3585 = vunpack.c.h.b16 %v2413
    %v3586 = vunpack.c.l.b16 %v2414
    %v3587 = vunpack.c.h.b16 %v2414
    %v3588 = vunpack.c.l.b16 %v2415
    %v3589 = vunpack.c.h.b16 %v2415
    %v3590 = vunpack.c.l.b16 %v2416
    %v3591 = vunpack.c.h.b16 %v2416
    %v3592 = vunpack.c.l.b16 %v2417
    %v3593 = vunpack.c.h.b16 %v2417
    %v3594 = vunpack.c.l.b16 %v2418
    %v3595 = vunpack.c.h.b16 %v2418
    %v3596 = vunpack.c.l.b16 %v2419
    %v3597 = vunpack.c.h.b16 %v2419
    %v3598 = vunpack.c.l.b16 %v2420
    %v3599 = vunpack.c.h.b16 %v2420
    %v3600 = vunpack.c.l.b16 %v2421
    %v3601 = vunpack.c.h.b16 %v2421
    %v3602 = vunpack.c.l.b16 %v2422
    %v3603 = vunpack.c.h.b16 %v2422
    %v3604 = vunpack.c.l.b16 %v2423
    %v3605 = vunpack.c.h.b16 %v2423
    %v3606 = vunpack.c.l.b16 %v2424
    %v3607 = vunpack.c.h.b16 %v2424
    %v3608 = vunpack.c.l.b16 %v2425
    %v3609 = vunpack.c.h.b16 %v2425
    %v3610 = vunpack.c.l.b16 %v2426
    %v3611 = vunpack.c.h.b16 %v2426
    %v3612 = vunpack.c.l.b16 %v2427
    %v3613 = vunpack.c.h.b16 %v2427
    %v3614 = vunpack.c.l.b16 %v2428
    %v3615 = vunpack.c.h.b16 %v2428
    %v3616 = vunpack.c.l.b16 %v2429
    %v3617 = vunpack.c.h.b16 %v2429
    %v3618 = vunpack.c.l.b16 %v2430
    %v3619 = vunpack.c.h.b16 %v2430
    %v3620 = vunpack.c.l.b16 %v2431
    %v3621 = vunpack.c.h.b16 %v2431
    %v3622 = vunpack.c.l.b16 %v2432
    %v3623 = vunpack.c.h.b16 %v2432
    %v3624 = vunpack.c.l.b16 %v2433
    %v3625 = vunpack.c.h.b16 %v2433
    %v3626 = vunpack.c.l.b16 %v2434
    %v3627 = vunpack.c.h.b16 %v2434
    %v3628 = vunpack.c.l.b16 %v2435
    %v3629 = vunpack.c.h.b16 %v2435
    %v3630 = vunpack.c.l.b16 %v2436
    %v3631 = vunpack.c.h.b16 %v2436
    %v3632 = vunpack.c.l.b16 %v2437
    %v3633 = vunpack.c.h.b16 %v2437
    %v3634 = vunpack.c.l.b16 %v2438
    %v3635 = vunpack.c.h.b16 %v2438
    %v3636 = vunpack.c.l.b16 %v2439
    %v3637 = vunpack.c.h.b16 %v2439
    %v3638 = vunpack.c.l.b16 %v2440
    %v3639 = vunpack.c.h.b16 %v2440
    %v3640 = vunpack.c.l.b16 %v2441
    %v3641 = vunpack.c.h.b16 %v2441
    %v3642 = vunpack.c.l.b16 %v2442
    %v3643 = vunpack.c.h.b16 %v2442
    %v3644 = vunpack.c.l.b16 %v2443
    %v3645 = vunpack.c.h.b16 %v2443
    %v3646 = vunpack.c.l.b16 %v2444
    %v3647 = vunpack.c.h.b16 %v2444
    %v3648 = vunpack.c.l.b16 %v2445
    %v3649 = vunpack.c.h.b16 %v2445
    %v3650 = vunpack.c.l.b16 %v2446
    %v3651 = vunpack.c.h.b16 %v2446
    %v3652 = vunpack.c.l.b16 %v2447
    %v3653 = vunpack.c.h.b16 %v2447
    %v3654 = vunpack.c.l.b16 %v2448
    %v3655 = vunpack.c.h.b16 %v2448
    %v3656 = vunpack.c.l.b16 %v2449
    %v3657 = vunpack.c.h.b16 %v2449
    %v3658 = vunpack.c.l.b16 %v2450
    %v3659 = vunpack.c.h.b16 %v2450
    %v3660 = vunpack.c.l.b16 %v2451
    %v3661 = vunpack.c.h.b16 %v2451
    %v3662 = vunpack.c.l.b16 %v2452
    %v3663 = vunpack.c.h.b16 %v2452
    %v3664 = vunpack.c.l.b16 %v2453
    %v3665 = vunpack.c.h.b16 %v2453
    %v3666 = vunpack.c.l.b16 %v2454
    %v3667 = vunpack.c.h.b16 %v2454
    %v3668 = vunpack.c.l.b16 %v2455
    %v3669 = vunpack.c.h.b16 %v2455
    %v3670 = vunpack.c.l.b16 %v2456
    %v3671 = vunpack.c.h.b16 %v2456
    %v3672 = vunpack.c.l.b16 %v2457
    %v3673 = vunpack.c.h.b16 %v2457
    %v3674 = vunpack.c.l.b16 %v2458
    %v3675 = vunpack.c.h.b16 %v2458
    %v3676 = vunpack.c.l.b16 %v2459
    %v3677 = vunpack.c.h.b16 %v2459
    %v3678 = vunpack.c.l.b16 %v2460
    %v3679 = vunpack.c.h.b16 %v2460
    %v3680 = vunpack.c.l.b16 %v2461
    %v3681 = vunpack.c.h.b16 %v2461
    %v3682 = vunpack.c.l.b16 %v2462
    %v3683 = vunpack.c.h.b16 %v2462
    %v3684 = vunpack.c.l.b16 %v2463
    %v3685 = vunpack.c.h.b16 %v2463
    %v3686 = vunpack.c.l.b16 %v2464
    %v3687 = vunpack.c.h.b16 %v2464
    %v3688 = vunpack.c.l.b16 %v2465
    %v3689 = vunpack.c.h.b16 %v2465
    %v3690 = vunpack.c.l.b16 %v2466
    %v3691 = vunpack.c.h.b16 %v2466
    %v3692 = vunpack.c.l.b16 %v2467
    %v3693 = vunpack.c.h.b16 %v2467
    %v3694 = vunpack.c.l.b16 %v2468
    %v3695 = vunpack.c.h.b16 %v2468
    %v3696 = vunpack.c.l.b16 %v2469
    %v3697 = vunpack.c.h.b16 %v2469
    %v3698 = vunpack.c.l.b16 %v2470
    %v3699 = vunpack.c.h.b16 %v2470
    %v3700 = vunpack.c.l.b16 %v2471
    %v3701 = vunpack.c.h.b16 %v2471
    %v3702 = vunpack.c.l.b16 %v2472
    %v3703 = vunpack.c.h.b16 %v2472
    %v3704 = vunpack.c.l.b16 %v2473
    %v3705 = vunpack.c.h.b16 %v2473
    %v3706 = vunpack.c.l.b16 %v2474
    %v3707 = vunpack.c.h.b16 %v2474
    %v3708 = vunpack.c.l.b16 %v2475
    %v3709 = vunpack.c.h.b16 %v2475
    %v3710 = vunpack.c.l.b16 %v2476
    %v3711 = vunpack.c.h.b16 %v2476
    %v3712 = vunpack.c.l.b16 %v2477
    %v3713 = vunpack.c.h.b16 %v2477
    %v3714 = vunpack.c.l.b16 %v2478
    %v3715 = vunpack.c.h.b16 %v2478
    %v3716 = vunpack.c.l.b16 %v2479
    %v3717 = vunpack.c.h.b16 %v2479
    %v3718 = vunpack.c.l.b16 %v2480
    %v3719 = vunpack.c.h.b16 %v2480
    %v3720 = vunpack.c.l.b16 %v2481
    %v3721 = vunpack.c.h.b16 %v2481
    %v3722 = vunpack.c.l.b16 %v2482
    %v3723 = vunpack.c.h.b16 %v2482
    %v3724 = vunpack.c.l.b16 %v2483
    %v3725 = vunpack.c.h.b16 %v2483
    %v3726 = vunpack.c.l.b16 %v2484
    %v3727 = vunpack.c.h.b16 %v2484
    %v3728 = vunpack.c.l.b16 %v2485
    %v3729 = vunpack.c.h.b16 %v2485
    %v3730 = vunpack.c.l.b16 %v2486
    %v3731 = vunpack.c.h.b16 %v2486
    %v3732 = vunpack.c.l.b16 %v2487
    %v3733 = vunpack.c.h.b16 %v2487
    %v3734 = vunpack.c.l.b16 %v2488
    %v3735 = vunpack.c.h.b16 %v2488
    %v3736 = vunpack.c.l.b16 %v2489
    %v3737 = vunpack.c.h.b16 %v2489
    %v3738 = vunpack.c.l.b16 %v2490
    %v3739 = vunpack.c.h.b16 %v2490
    %v3740 = vunpack.c.l.b16 %v2491
    %v3741 = vunpack.c.h.b16 %v2491
    %v3742 = vunpack.c.l.b16 %v2492
    %v3743 = vunpack.c.h.b16 %v2492
    %v3744 = vunpack.c.l.b16 %v2493
    %v3745 = vunpack.c.h.b16 %v2493
    %v3746 = vunpack.c.l.b16 %v2494
    %v3747 = vunpack.c.h.b16 %v2494
    %v3748 = vunpack.c.l.b16 %v2495
    %v3749 = vunpack.c.h.b16 %v2495
    %v3750 = vunpack.c.l.b16 %v2496
    %v3751 = vunpack.c.h.b16 %v2496
    %v3752 = vunpack.c.l.b16 %v2497
    %v3753 = vunpack.c.h.b16 %v2497
    %v3754 = vunpack.c.l.b16 %v2498
    %v3755 = vunpack.c.h.b16 %v2498
    %v3756 = vunpack.c.l.b16 %v2499
    %v3757 = vunpack.c.h.b16 %v2499
    %v3758 = vunpack.c.l.b16 %v2500
    %v3759 = vunpack.c.h.b16 %v2500
    %v3760 = vunpack.c.l.b16 %v2501
    %v3761 = vunpack.c.h.b16 %v2501
    %v3762 = vunpack.c.l.b16 %v2502
    %v3763 = vunpack.c.h.b16 %v2502
    %v3764 = vunpack.c.l.b16 %v2503
    %v3765 = vunpack.c.h.b16 %v2503
    %v3766 = vunpack.c.l.b16 %v2504
    %v3767 = vunpack.c.h.b16 %v2504
    %v3768 = vunpack.c.l.b16 %v2505
    %v3769 = vunpack.c.h.b16 %v2505
    %v3770 = vunpack.c.l.b16 %v2506
    %v3771 = vunpack.c.h.b16 %v2506
    %v3772 = vunpack.c.l.b16 %v2507
    %v3773 = vunpack.c.h.b16 %v2507
    %v3774 = vunpack.c.l.b16 %v2508
    %v3775 = vunpack.c.h.b16 %v2508
    %v3776 = vunpack.c.l.b16 %v2509
    %v3777 = vunpack.c.h.b16 %v2509
    %v3778 = vunpack.c.l.b16 %v2510
    %v3779 = vunpack.c.h.b16 %v2510
    %v3780 = vunpack.c.l.b16 %v2511
    %v3781 = vunpack.c.h.b16 %v2511
    %v3782 = vunpack.c.l.b16 %v2512
    %v3783 = vunpack.c.h.b16 %v2512
    %v3784 = vunpack.c.l.b16 %v2513
    %v3785 = vunpack.c.h.b16 %v2513
    %v3786 = vunpack.c.l.b16 %v2514
    %v3787 = vunpack.c.h.b16 %v2514
    %v3788 = vunpack.c.l.b16 %v2515
    %v3789 = vunpack.c.h.b16 %v2515
    %v3790 = vunpack.c.l.b16 %v2516
    %v3791 = vunpack.c.h.b16 %v2516
    %v3792 = vunpack.c.l.b16 %v2517
    %v3793 = vunpack.c.h.b16 %v2517
    %v3794 = vunpack.c.l.b16 %v2518
    %v3795 = vunpack.c.h.b16 %v2518
    %v3796 = vunpack.c.l.b16 %v2519
    %v3797 = vunpack.c.h.b16 %v2519
    %v3798 = vunpack.c.l.b16 %v2520
    %v3799 = vunpack.c.h.b16 %v2520
    %v3800 = vunpack.c.l.b16 %v2521
    %v3801 = vunpack.c.h.b16 %v2521
    %v3802 = vunpack.c.l.b16 %v2522
    %v3803 = vunpack.c.h.b16 %v2522
    %v3804 = vunpack.c.l.b16 %v2523
    %v3805 = vunpack.c.h.b16 %v2523
    %v3806 = vunpack.c.l.b16 %v2524
    %v3807 = vunpack.c.h.b16 %v2524
    %v3808 = vunpack.c.l.b16 %v2525
    %v3809 = vunpack.c.h.b16 %v2525
    %v3810 = vunpack.c.l.b16 %v2526
    %v3811 = vunpack.c.h.b16 %v2526
    %v3812 = vunpack.c.l.b16 %v2527
    %v3813 = vunpack.c.h.b16 %v2527
    %v3814 = vunpack.c.l.b16 %v2528
    %v3815 = vunpack.c.h.b16 %v2528
    %v3816 = vunpack.c.l.b16 %v2529
    %v3817 = vunpack.c.h.b16 %v2529
    %v3818 = vunpack.c.l.b16 %v2530
    %v3819 = vunpack.c.h.b16 %v2530
    %v3820 = vunpack.c.l.b16 %v2531
    %v3821 = vunpack.c.h.b16 %v2531
    %v3822 = vunpack.c.l.b16 %v2532
    %v3823 = vunpack.c.h.b16 %v2532
    %v3824 = vunpack.c.l.b16 %v2533
    %v3825 = vunpack.c.h.b16 %v2533
    %v3826 = vunpack.c.l.b16 %v2534
    %v3827 = vunpack.c.h.b16 %v2534
    %v3828 = vunpack.c.l.b16 %v2535
    %v3829 = vunpack.c.h.b16 %v2535
    %v3830 = vunpack.c.l.b16 %v2536
    %v3831 = vunpack.c.h.b16 %v2536
    %v3832 = vunpack.c.l.b16 %v2537
    %v3833 = vunpack.c.h.b16 %v2537
    %v3834 = vunpack.c.l.b16 %v2538
    %v3835 = vunpack.c.h.b16 %v2538
    %v3836 = vunpack.c.l.b16 %v2539
    %v3837 = vunpack.c.h.b16 %v2539
    %v3838 = vunpack.c.l.b16 %v2540
    %v3839 = vunpack.c.h.b16 %v2540
    %v3840 = vunpack.c.l.b16 %v2541
    %v3841 = vunpack.c.h.b16 %v2541
    %v3842 = vunpack.c.l.b16 %v2542
    %v3843 = vunpack.c.h.b16 %v2542
    %v3844 = vunpack.c.l.b16 %v2543
    %v3845 = vunpack.c.h.b16 %v2543
    %v3846 = vunpack.c.l.b16 %v2544
    %v3847 = vunpack.c.h.b16 %v2544
    %v3848 = vunpack.c.l.b16 %v2545
    %v3849 = vunpack.c.h.b16 %v2545
    %v3850 = vunpack.c.l.b16 %v2546
    %v3851 = vunpack.c.h.b16 %v2546
    %v3852 = vunpack.c.l.b16 %v2547
    %v3853 = vunpack.c.h.b16 %v2547
    %v3854 = vunpack.c.l.b16 %v2548
    %v3855 = vunpack.c.h.b16 %v2548
    %v3856 = vunpack.c.l.b16 %v2549
    %v3857 = vunpack.c.h.b16 %v2549
    %v3858 = vunpack.c.l.b16 %v2550
    %v3859 = vunpack.c.h.b16 %v2550
    %v3860 = vunpack.c.l.b16 %v2551
    %v3861 = vunpack.c.h.b16 %v2551
    %v3862 = vunpack.c.l.b16 %v2552
    %v3863 = vunpack.c.h.b16 %v2552
    %v3864 = vunpack.c.l.b16 %v2553
    %v3865 = vunpack.c.h.b16 %v2553
    %v3866 = vunpack.c.l.b16 %v2554
    %v3867 = vunpack.c.h.b16 %v2554
    %v3868 = vunpack.c.l.b16 %v2555
    %v3869 = vunpack.c.h.b16 %v2555
    %v3870 = vunpack.c.l.b16 %v2556
    %v3871 = vunpack.c.h.b16 %v2556
    %v3872 = vunpack.c.l.b16 %v2557
    %v3873 = vunpack.c.h.b16 %v2557
    %v3874 = vunpack.c.l.b16 %v2558
    %v3875 = vunpack.c.h.b16 %v2558
    %v3876 = vunpack.c.l.b16 %v2559
    %v3877 = vunpack.c.h.b16 %v2559
    %v3878 = vunpack.c.l.b16 %v2560
    %v3879 = vunpack.c.h.b16 %v2560
    %v3880 = vunpack.c.l.b16 %v2561
    %v3881 = vunpack.c.h.b16 %v2561
    %v3882 = vunpack.c.l.b16 %v2562
    %v3883 = vunpack.c.h.b16 %v2562
    %v3884 = vunpack.c.l.b16 %v2563
    %v3885 = vunpack.c.h.b16 %v2563
    %v3886 = vunpack.c.l.b16 %v2564
    %v3887 = vunpack.c.h.b16 %v2564
    %v3888 = vunpack.c.l.b16 %v2565
    %v3889 = vunpack.c.h.b16 %v2565
    %v3890 = vunpack.c.l.b16 %v2566
    %v3891 = vunpack.c.h.b16 %v2566
    %v3892 = vunpack.c.l.b16 %v2567
    %v3893 = vunpack.c.h.b16 %v2567
    %v3894 = vunpack.c.l.b16 %v2568
    %v3895 = vunpack.c.h.b16 %v2568
    %v3896 = vunpack.c.l.b16 %v2569
    %v3897 = vunpack.c.h.b16 %v2569
    %v3898 = vunpack.c.l.b16 %v2570
    %v3899 = vunpack.c.h.b16 %v2570
    %v3900 = vunpack.c.l.b16 %v2571
    %v3901 = vunpack.c.h.b16 %v2571
    %v3902 = vunpack.c.l.b16 %v2572
    %v3903 = vunpack.c.h.b16 %v2572
    %v3904 = vunpack.c.l.b16 %v2573
    %v3905 = vunpack.c.h.b16 %v2573
    %v3906 = vunpack.c.l.b16 %v2574
    %v3907 = vunpack.c.h.b16 %v2574
    %v3908 = vunpack.c.l.b16 %v2575
    %v3909 = vunpack.c.h.b16 %v2575
    %v3910 = vunpack.c.l.b16 %v2576
    %v3911 = vunpack.c.h.b16 %v2576
    %v3912 = vunpack.c.l.b16 %v2577
    %v3913 = vunpack.c.h.b16 %v2577
    %v3914 = vunpack.c.l.b16 %v2578
    %v3915 = vunpack.c.h.b16 %v2578
    %v3916 = vunpack.c.l.b16 %v2579
    %v3917 = vunpack.c.h.b16 %v2579
    %v3918 = vunpack.c.l.b16 %v2580
    %v3919 = vunpack.c.h.b16 %v2580
    %v3920 = vunpack.c.l.b16 %v2581
    %v3921 = vunpack.c.h.b16 %v2581
    %v3922 = vunpack.c.l.b16 %v2582
    %v3923 = vunpack.c.h.b16 %v2582
    %v3924 = vunpack.c.l.b16 %v2583
    %v3925 = vunpack.c.h.b16 %v2583
    %v3926 = vunpack.c.l.b16 %v2584
    %v3927 = vunpack.c.h.b16 %v2584
    %v3928 = vunpack.c.l.b16 %v2585
    %v3929 = vunpack.c.h.b16 %v2585
    %v3930 = vunpack.c.l.b16 %v2586
    %v3931 = vunpack.c.h.b16 %v2586
    %v3932 = vunpack.c.l.b16 %v2587
    %v3933 = vunpack.c.h.b16 %v2587
    %v3934 = vunpack.c.l.b16 %v2588
    %v3935 = vunpack.c.h.b16 %v2588
    %v3936 = vunpack.c.l.b16 %v2589
    %v3937 = vunpack.c.h.b16 %v2589
    %v3938 = vunpack.c.l.b16 %v2590
    %v3939 = vunpack.c.h.b16 %v2590
    %v3940 = vunpack.c.l.b16 %v2591
    %v3941 = vunpack.c.h.b16 %v2591
    %v3942 = vunpack.c.l.b16 %v2592
    %v3943 = vunpack.c.h.b16 %v2592
    %v3944 = vunpack.c.l.b16 %v2593
    %v3945 = vunpack.c.h.b16 %v2593
    %v3946 = vunpack.c.l.b16 %v2594
    %v3947 = vunpack.c.h.b16 %v2594
    %v3948 = vunpack.c.l.b16 %v2595
    %v3949 = vunpack.c.h.b16 %v2595
    %v3950 = vunpack.c.l.b16 %v2596
    %v3951 = vunpack.c.h.b16 %v2596
    %v3952 = vunpack.c.l.b16 %v2597
    %v3953 = vunpack.c.h.b16 %v2597
    %v3954 = vunpack.c.l.b16 %v2598
    %v3955 = vunpack.c.h.b16 %v2598
    %v3956 = vunpack.c.l.b16 %v2599
    %v3957 = vunpack.c.h.b16 %v2599
    %v3958 = vunpack.c.l.b16 %v2600
    %v3959 = vunpack.c.h.b16 %v2600
    %v3960 = vunpack.c.l.b16 %v2601
    %v3961 = vunpack.c.h.b16 %v2601
    %v3962 = vunpack.c.l.b16 %v2602
    %v3963 = vunpack.c.h.b16 %v2602
    %v3964 = vunpack.c.l.b16 %v2603
    %v3965 = vunpack.c.h.b16 %v2603
    %v3966 = vunpack.c.l.b16 %v2604
    %v3967 = vunpack.c.h.b16 %v2604
    %v3968 = vunpack.c.l.b16 %v2605
    %v3969 = vunpack.c.h.b16 %v2605
    %v3970 = vunpack.c.l.b16 %v2606
    %v3971 = vunpack.c.h.b16 %v2606
    %v3972 = vunpack.c.l.b16 %v2607
    %v3973 = vunpack.c.h.b16 %v2607
    %v3974 = vunpack.c.l.b16 %v2608
    %v3975 = vunpack.c.h.b16 %v2608
    %v3976 = vunpack.c.l.b16 %v2609
    %v3977 = vunpack.c.h.b16 %v2609
    %v3978 = vunpack.c.l.b16 %v2610
    %v3979 = vunpack.c.h.b16 %v2610
    %v3980 = vunpack.c.l.b16 %v2611
    %v3981 = vunpack.c.h.b16 %v2611
    %v3982 = vunpack.c.l.b16 %v2612
    %v3983 = vunpack.c.h.b16 %v2612
    %v3984 = vunpack.c.l.b16 %v2613
    %v3985 = vunpack.c.h.b16 %v2613
    %v3986 = vunpack.c.l.b16 %v2614
    %v3987 = vunpack.c.h.b16 %v2614
    %v3988 = vunpack.c.l.b16 %v2615
    %v3989 = vunpack.c.h.b16 %v2615
    %v3990 = vunpack.c.l.b16 %v2616
    %v3991 = vunpack.c.h.b16 %v2616
    %v3992 = vunpack.c.l.b16 %v2617
    %v3993 = vunpack.c.h.b16 %v2617
    %v3994 = vunpack.c.l.b16 %v2618
    %v3995 = vunpack.c.h.b16 %v2618
    %v3996 = vunpack.c.l.b16 %v2619
    %v3997 = vunpack.c.h.b16 %v2619
    %v3998 = vunpack.c.l.b16 %v2620
    %v3999 = vunpack.c.h.b16 %v2620
    %v4000 = vunpack.c.l.b16 %v2621
    %v4001 = vunpack.c.h.b16 %v2621
    %v4002 = vunpack.c.l.b16 %v2622
    %v4003 = vunpack.c.h.b16 %v2622
    %v4004 = vunpack.c.l.b16 %v2623
    %v4005 = vunpack.c.h.b16 %v2623
    %v4006 = vunpack.c.l.b16 %v2624
    %v4007 = vunpack.c.h.b16 %v2624
    %v4008 = vunpack.c.l.b16 %v2625
    %v4009 = vunpack.c.h.b16 %v2625
    %v4010 = vunpack.c.l.b16 %v2626
    %v4011 = vunpack.c.h.b16 %v2626
    %v4012 = vunpack.c.l.b16 %v2627
    %v4013 = vunpack.c.h.b16 %v2627
    %v4014 = vunpack.c.l.b16 %v2628
    %v4015 = vunpack.c.h.b16 %v2628
    %v4016 = vunpack.c.l.b16 %v2629
    %v4017 = vunpack.c.h.b16 %v2629
    %v4018 = vunpack.c.l.b16 %v2630
    %v4019 = vunpack.c.h.b16 %v2630
    %v4020 = vunpack.c.l.b16 %v2631
    %v4021 = vunpack.c.h.b16 %v2631
    %v4022 = vunpack.c.l.b16 %v2632
    %v4023 = vunpack.c.h.b16 %v2632
    %v4024 = vunpack.c.l.b16 %v2633
    %v4025 = vunpack.c.h.b16 %v2633
    %v4026 = vunpack.c.l.b16 %v2634
    %v4027 = vunpack.c.h.b16 %v2634
    %v4028 = vunpack.c.l.b16 %v2635
    %v4029 = vunpack.c.h.b16 %v2635
    %v4030 = vunpack.c.l.b16 %v2636
    %v4031 = vunpack.c.h.b16 %v2636
    %v4032 = vunpack.c.l.b16 %v2637
    %v4033 = vunpack.c.h.b16 %v2637
    %v4034 = vunpack.c.l.b16 %v2638
    %v4035 = vunpack.c.h.b16 %v2638
    %v4036 = vunpack.c.l.b16 %v2639
    %v4037 = vunpack.c.h.b16 %v2639
    %v4038 = vunpack.c.l.b16 %v2640
    %v4039 = vunpack.c.h.b16 %v2640
    %v4040 = vunpack.c.l.b16 %v2641
    %v4041 = vunpack.c.h.b16 %v2641
    %v4042 = vunpack.c.l.b16 %v2642
    %v4043 = vunpack.c.h.b16 %v2642
    %v4044 = vunpack.c.l.b16 %v2643
    %v4045 = vunpack.c.h.b16 %v2643
    %v4046 = vunpack.c.l.b16 %v2644
    %v4047 = vunpack.c.h.b16 %v2644
    %v4048 = vunpack.c.l.b16 %v2645
    %v4049 = vunpack.c.h.b16 %v2645
    %v4050 = vunpack.c.l.b16 %v2646
    %v4051 = vunpack.c.h.b16 %v2646
    %v4052 = vunpack.c.l.b16 %v2647
    %v4053 = vunpack.c.h.b16 %v2647
    %v4054 = vunpack.c.l.b16 %v2648
    %v4055 = vunpack.c.h.b16 %v2648
    %v4056 = vunpack.c.l.b16 %v2649
    %v4057 = vunpack.c.h.b16 %v2649
    %v4058 = vunpack.c.l.b16 %v2650
    %v4059 = vunpack.c.h.b16 %v2650
    %v4060 = vunpack.c.l.b16 %v2651
    %v4061 = vunpack.c.h.b16 %v2651
    %v4062 = vunpack.c.l.b16 %v2652
    %v4063 = vunpack.c.h.b16 %v2652
    %v4064 = vunpack.c.l.b16 %v2653
    %v4065 = vunpack.c.h.b16 %v2653
    %v4066 = vunpack.c.l.b16 %v2654
    %v4067 = vunpack.c.h.b16 %v2654
    %v4068 = vunpack.c.l.b16 %v2655
    %v4069 = vunpack.c.h.b16 %v2655
    %v4070 = vunpack.c.l.b16 %v2656
    %v4071 = vunpack.c.h.b16 %v2656
    %v4072 = vunpack.c.l.b16 %v2657
    %v4073 = vunpack.c.h.b16 %v2657
    %v4074 = vunpack.c.l.b16 %v2658
    %v4075 = vunpack.c.h.b16 %v2658
    %v4076 = vunpack.c.l.b16 %v2659
    %v4077 = vunpack.c.h.b16 %v2659
    %v4078 = vunpack.c.l.b16 %v2660
    %v4079 = vunpack.c.h.b16 %v2660
    %v4080 = vunpack.c.l.b16 %v2661
    %v4081 = vunpack.c.h.b16 %v2661
    %v4082 = vunpack.c.l.b16 %v2662
    %v4083 = vunpack.c.h.b16 %v2662
    %v4084 = vunpack.c.l.b16 %v2663
    %v4085 = vunpack.c.h.b16 %v2663
    %v4086 = vunpack.c.l.b16 %v2664
    %v4087 = vunpack.c.h.b16 %v2664
    %v4088 = vunpack.c.l.b16 %v2665
    %v4089 = vunpack.c.h.b16 %v2665
    %v4090 = vunpack.c.l.b16 %v2666
    %v4091 = vunpack.c.h.b16 %v2666
    %v4092 = vunpack.c.l.b16 %v2667
    %v4093 = vunpack.c.h.b16 %v2667
    %v4094 = vunpack.c.l.b16 %v2668
    %v4095 = vunpack.c.h.b16 %v2668
    %v4096 = vunpack.c.l.b16 %v2669
    %v4097 = vunpack.c.h.b16 %v2669
    %v4098 = vunpack.c.l.b16 %v2670
    %v4099 = vunpack.c.h.b16 %v2670
    %v4100 = vunpack.c.l.b16 %v2671
    %v4101 = vunpack.c.h.b16 %v2671
    %v4102 = vunpack.c.l.b16 %v2672
    %v4103 = vunpack.c.h.b16 %v2672
    %v4104 = vunpack.c.l.b16 %v2673
    %v4105 = vunpack.c.h.b16 %v2673
    %v4106 = vunpack.c.l.b16 %v2674
    %v4107 = vunpack.c.h.b16 %v2674
    %v4108 = vunpack.c.l.b16 %v2675
    %v4109 = vunpack.c.h.b16 %v2675
    %v4110 = vunpack.c.l.b16 %v2676
    %v4111 = vunpack.c.h.b16 %v2676
    %v4112 = vunpack.c.l.b16 %v2677
    %v4113 = vunpack.c.h.b16 %v2677
    %v4114 = vunpack.c.l.b16 %v2678
    %v4115 = vunpack.c.h.b16 %v2678
    %v4116 = vunpack.c.l.b16 %v2679
    %v4117 = vunpack.c.h.b16 %v2679
    %v4118 = vunpack.c.l.b16 %v2680
    %v4119 = vunpack.c.h.b16 %v2680
    %v4120 = vunpack.c.l.b16 %v2681
    %v4121 = vunpack.c.h.b16 %v2681
    %v4122 = vunpack.c.l.b16 %v2682
    %v4123 = vunpack.c.h.b16 %v2682
    %v4124 = vunpack.c.l.b16 %v2683
    %v4125 = vunpack.c.h.b16 %v2683
    %v4126 = vunpack.c.l.b16 %v2684
    %v4127 = vunpack.c.h.b16 %v2684
    %v4128 = vunpack.c.l.b16 %v2685
    %v4129 = vunpack.c.h.b16 %v2685
    %v4130 = vunpack.c.l.b16 %v2686
    %v4131 = vunpack.c.h.b16 %v2686
    %v4132 = vunpack.c.l.b16 %v2687
    %v4133 = vunpack.c.h.b16 %v2687
    %v4134 = vunpack.c.l.b16 %v2688
    %v4135 = vunpack.c.h.b16 %v2688
    %v4136 = vunpack.c.l.b16 %v2689
    %v4137 = vunpack.c.h.b16 %v2689
    %v4138 = vunpack.c.l.b16 %v2690
    %v4139 = vunpack.c.h.b16 %v2690
    %v4140 = vunpack.c.l.b16 %v2691
    %v4141 = vunpack.c.h.b16 %v2691
    %v4142 = vunpack.c.l.b16 %v2692
    %v4143 = vunpack.c.h.b16 %v2692
    %v4144 = vunpack.c.l.b16 %v2693
    %v4145 = vunpack.c.h.b16 %v2693
    %v4146 = vunpack.c.l.b16 %v2694
    %v4147 = vunpack.c.h.b16 %v2694
    %v4148 = vunpack.c.l.b16 %v2695
    %v4149 = vunpack.c.h.b16 %v2695
    %v4150 = vunpack.c.l.b16 %v2696
    %v4151 = vunpack.c.h.b16 %v2696
    %v4152 = vunpack.c.l.b16 %v2697
    %v4153 = vunpack.c.h.b16 %v2697
    %v4154 = vunpack.c.l.b16 %v2698
    %v4155 = vunpack.c.h.b16 %v2698
    %v4156 = vunpack.c.l.b16 %v2699
    %v4157 = vunpack.c.h.b16 %v2699
    %v4158 = vunpack.c.l.b16 %v2700
    %v4159 = vunpack.c.h.b16 %v2700
    %v4160 = vunpack.c.l.b16 %v2701
    %v4161 = vunpack.c.h.b16 %v2701
    %v4162 = vunpack.c.l.b16 %v2702
    %v4163 = vunpack.c.h.b16 %v2702
    %v4164 = vunpack.c.l.b16 %v2703
    %v4165 = vunpack.c.h.b16 %v2703
    %v4166 = vunpack.c.l.b16 %v2704
    %v4167 = vunpack.c.h.b16 %v2704
    %v4168 = vunpack.c.l.b16 %v2705
    %v4169 = vunpack.c.h.b16 %v2705
    %v4170 = vunpack.c.l.b16 %v2706
    %v4171 = vunpack.c.h.b16 %v2706
    %v4172 = vunpack.c.l.b16 %v2707
    %v4173 = vunpack.c.h.b16 %v2707
    %v4174 = vunpack.c.l.b16 %v2708
    %v4175 = vunpack.c.h.b16 %v2708
    %v4176 = vunpack.c.l.b16 %v2709
    %v4177 = vunpack.c.h.b16 %v2709
    %v4178 = vunpack.c.l.b16 %v2710
    %v4179 = vunpack.c.h.b16 %v2710
    %v4180 = vunpack.c.l.b16 %v2711
    %v4181 = vunpack.c.h.b16 %v2711
    %v4182 = vunpack.c.l.b16 %v2712
    %v4183 = vunpack.c.h.b16 %v2712
    %v4184 = vunpack.c.l.b16 %v2713
    %v4185 = vunpack.c.h.b16 %v2713
    %v4186 = vunpack.c.l.b16 %v2714
    %v4187 = vunpack.c.h.b16 %v2714
    %v4188 = vunpack.c.l.b16 %v2715
    %v4189 = vunpack.c.h.b16 %v2715
    %v4190 = vunpack.c.l.b16 %v2716
    %v4191 = vunpack.c.h.b16 %v2716
    %v4192 = vunpack.c.l.b16 %v2717
    %v4193 = vunpack.c.h.b16 %v2717
    %v4194 = vunpack.c.l.b16 %v2718
    %v4195 = vunpack.c.h.b16 %v2718
    %v4196 = vunpack.c.l.b16 %v2719
    %v4197 = vunpack.c.h.b16 %v2719
    %v4198 = vunpack.c.l.b16 %v2720
    %v4199 = vunpack.c.h.b16 %v2720
    %v4200 = vunpack.c.l.b16 %v2721
    %v4201 = vunpack.c.h.b16 %v2721
    %v4202 = vunpack.c.l.b16 %v2722
    %v4203 = vunpack.c.h.b16 %v2722
    %v4204 = vunpack.c.l.b16 %v2723
    %v4205 = vunpack.c.h.b16 %v2723
    %v4206 = vunpack.c.l.b16 %v2724
    %v4207 = vunpack.c.h.b16 %v2724
    %v4208 = vunpack.c.l.b16 %v2725
    %v4209 = vunpack.c.h.b16 %v2725
    %v4210 = vunpack.c.l.b16 %v2726
    %v4211 = vunpack.c.h.b16 %v2726
    %v4212 = vunpack.c.l.b16 %v2727
    %v4213 = vunpack.c.h.b16 %v2727
    %v4214 = vunpack.c.l.b16 %v2728
    %v4215 = vunpack.c.h.b16 %v2728
    %v4216 = vunpack.c.l.b16 %v2729
    %v4217 = vunpack.c.h.b16 %v2729
    %v4218 = vunpack.c.l.b16 %v2730
    %v4219 = vunpack.c.h.b16 %v2730
    %v4220 = vunpack.c.l.b16 %v2731
    %v4221 = vunpack.c.h.b16 %v2731
    %v4222 = vunpack.c.l.b16 %v2732
    %v4223 = vunpack.c.h.b16 %v2732
    %v4224 = vunpack.c.l.b16 %v2733
    %v4225 = vunpack.c.h.b16 %v2733
    %v4226 = vunpack.c.l.b16 %v2734
    %v4227 = vunpack.c.h.b16 %v2734
    %v4228 = vunpack.c.l.b16 %v2735
    %v4229 = vunpack.c.h.b16 %v2735
    %v4230 = vunpack.c.l.b16 %v2736
    %v4231 = vunpack.c.h.b16 %v2736
    %v4232 = vunpack.c.l.b16 %v2737
    %v4233 = vunpack.c.h.b16 %v2737
    %v4234 = vunpack.c.l.b16 %v2738
    %v4235 = vunpack.c.h.b16 %v2738
    %v4236 = vunpack.c.l.b16 %v2739
    %v4237 = vunpack.c.h.b16 %v2739
    %v4238 = vunpack.c.l.b16 %v2740
    %v4239 = vunpack.c.h.b16 %v2740
    %v4240 = vunpack.c.l.b16 %v2741
    %v4241 = vunpack.c.h.b16 %v2741
    %v4242 = vunpack.c.l.b16 %v2742
    %v4243 = vunpack.c.h.b16 %v2742
    %v4244 = vunpack.c.l.b16 %v2743
    %v4245 = vunpack.c.h.b16 %v2743
    %v4246 = vunpack.c.l.b16 %v2744
    %v4247 = vunpack.c.h.b16 %v2744
    %v4248 = vunpack.c.l.b16 %v2745
    %v4249 = vunpack.c.h.b16 %v2745
    %v4250 = vunpack.c.l.b16 %v2746
    %v4251 = vunpack.c.h.b16 %v2746
    %v4252 = vunpack.c.l.b16 %v2747
    %v4253 = vunpack.c.h.b16 %v2747
    %v4254 = vunpack.c.l.b16 %v2748
    %v4255 = vunpack.c.h.b16 %v2748
    %v4256 = vunpack.c.l.b16 %v2749
    %v4257 = vunpack.c.h.b16 %v2749
    %v4258 = vunpack.c.l.b16 %v2750
    %v4259 = vunpack.c.h.b16 %v2750
    %v4260 = vunpack.c.l.b16 %v2751
    %v4261 = vunpack.c.h.b16 %v2751
    %v4262 = vunpack.c.l.b16 %v2752
    %v4263 = vunpack.c.h.b16 %v2752
    %v4264 = vunpack.c.l.b16 %v2753
    %v4265 = vunpack.c.h.b16 %v2753
    %v4266 = vunpack.c.l.b16 %v2754
    %v4267 = vunpack.c.h.b16 %v2754
    %v4268 = vunpack.c.l.b16 %v2755
    %v4269 = vunpack.c.h.b16 %v2755
    %v4270 = vunpack.c.l.b16 %v2756
    %v4271 = vunpack.c.h.b16 %v2756
    %v4272 = vunpack.c.l.b16 %v2757
    %v4273 = vunpack.c.h.b16 %v2757
    %v4274 = vunpack.c.l.b16 %v2758
    %v4275 = vunpack.c.h.b16 %v2758
    %v4276 = vunpack.c.l.b16 %v2759
    %v4277 = vunpack.c.h.b16 %v2759
    %v4278 = vunpack.c.l.b16 %v2760
    %v4279 = vunpack.c.h.b16 %v2760
    %v4280 = vunpack.c.l.b16 %v2761
    %v4281 = vunpack.c.h.b16 %v2761
    %v4282 = vunpack.c.l.b16 %v2762
    %v4283 = vunpack.c.h.b16 %v2762
    %v4284 = vunpack.c.l.b16 %v2763
    %v4285 = vunpack.c.h.b16 %v2763
    %v4286 = vunpack.c.l.b16 %v2764
    %v4287 = vunpack.c.h.b16 %v2764
    %v4288 = vunpack.c.l.b16 %v2765
    %v4289 = vunpack.c.h.b16 %v2765
    %v4290 = vunpack.c.l.b16 %v2766
    %v4291 = vunpack.c.h.b16 %v2766
    %v4292 = vunpack.c.l.b16 %v2767
    %v4293 = vunpack.c.h.b16 %v2767
    %v4294 = vunpack.c.l.b16 %v2768
    %v4295 = vunpack.c.h.b16 %v2768
    %v4296 = vunpack.c.l.b16 %v2769
    %v4297 = vunpack.c.h.b16 %v2769
    %v4298 = vunpack.c.l.b16 %v2770
    %v4299 = vunpack.c.h.b16 %v2770
    %v4300 = vunpack.c.l.b16 %v2771
    %v4301 = vunpack.c.h.b16 %v2771
    %v4302 = vunpack.c.l.b16 %v2772
    %v4303 = vunpack.c.h.b16 %v2772
    %v4304 = vunpack.c.l.b16 %v2773
    %v4305 = vunpack.c.h.b16 %v2773
    %v4306 = vunpack.c.l.b16 %v2774
    %v4307 = vunpack.c.h.b16 %v2774
    %v4308 = vunpack.c.l.b16 %v2775
    %v4309 = vunpack.c.h.b16 %v2775
    %v4310 = vunpack.c.l.b16 %v2776
    %v4311 = vunpack.c.h.b16 %v2776
    %v4312 = vunpack.c.l.b16 %v2777
    %v4313 = vunpack.c.h.b16 %v2777
    %v4314 = vunpack.c.l.b16 %v2778
    %v4315 = vunpack.c.h.b16 %v2778
    %v4316 = vunpack.c.l.b16 %v2779
    %v4317 = vunpack.c.h.b16 %v2779
    %v4318 = vunpack.c.l.b16 %v2780
    %v4319 = vunpack.c.h.b16 %v2780
    %v4320 = vunpack.c.l.b16 %v2781
    %v4321 = vunpack.c.h.b16 %v2781
    %v4322 = vunpack.c.l.b16 %v2782
    %v4323 = vunpack.c.h.b16 %v2782
    %v4324 = vunpack.c.l.b16 %v2783
    %v4325 = vunpack.c.h.b16 %v2783
    %v4326 = vunpack.c.l.b16 %v2784
    %v4327 = vunpack.c.h.b16 %v2784
    %v4328 = vunpack.c.l.b16 %v2785
    %v4329 = vunpack.c.h.b16 %v2785
    %v4330 = vunpack.c.l.b16 %v2786
    %v4331 = vunpack.c.h.b16 %v2786
    %v4332 = vunpack.c.l.b16 %v2787
    %v4333 = vunpack.c.h.b16 %v2787
    %v4334 = vunpack.c.l.b16 %v2788
    %v4335 = vunpack.c.h.b16 %v2788
    %v4336 = vunpack.c.l.b16 %v2789
    %v4337 = vunpack.c.h.b16 %v2789
    %v4338 = vunpack.c.l.b16 %v2790
    %v4339 = vunpack.c.h.b16 %v2790
    %v4340 = vunpack.c.l.b16 %v2791
    %v4341 = vunpack.c.h.b16 %v2791
    %v4342 = vunpack.c.l.b16 %v2792
    %v4343 = vunpack.c.h.b16 %v2792
    %v4344 = vunpack.c.l.b16 %v2793
    %v4345 = vunpack.c.h.b16 %v2793
    %v4346 = vunpack.c.l.b16 %v2794
    %v4347 = vunpack.c.h.b16 %v2794
    %v4348 = vunpack.c.l.b16 %v2795
    %v4349 = vunpack.c.h.b16 %v2795
    %v4350 = vunpack.c.l.b16 %v2796
    %v4351 = vunpack.c.h.b16 %v2796
    %v4352 = vunpack.c.l.b16 %v2797
    %v4353 = vunpack.c.h.b16 %v2797
    %v4354 = vunpack.c.l.b16 %v2798
    %v4355 = vunpack.c.h.b16 %v2798
    %v4356 = vunpack.c.l.b16 %v2799
    %v4357 = vunpack.c.h.b16 %v2799
    %v4358 = vunpack.c.l.b16 %v2800
    %v4359 = vunpack.c.h.b16 %v2800
    %v4360 = vunpack.c.l.b16 %v2801
    %v4361 = vunpack.c.h.b16 %v2801
    %v4362 = vunpack.c.l.b16 %v2802
    %v4363 = vunpack.c.h.b16 %v2802
    %v4364 = vunpack.c.l.b16 %v2803
    %v4365 = vunpack.c.h.b16 %v2803
    %v4366 = vunpack.c.l.b16 %v2804
    %v4367 = vunpack.c.h.b16 %v2804
    %v4368 = vunpack.c.l.b16 %v2805
    %v4369 = vunpack.c.h.b16 %v2805
    %v4370 = vunpack.c.l.b16 %v2806
    %v4371 = vunpack.c.h.b16 %v2806
    %v4372 = vunpack.c.l.b16 %v2807
    %v4373 = vunpack.c.h.b16 %v2807
    %v4374 = vunpack.c.l.b16 %v2808
    %v4375 = vunpack.c.h.b16 %v2808
    %v4376 = vunpack.c.l.b16 %v2809
    %v4377 = vunpack.c.h.b16 %v2809
    %v4378 = vunpack.c.l.b16 %v2810
    %v4379 = vunpack.c.h.b16 %v2810
    %v4380 = vunpack.c.l.b16 %v2811
    %v4381 = vunpack.c.h.b16 %v2811
    %v4382 = vunpack.c.l.b16 %v2812
    %v4383 = vunpack.c.h.b16 %v2812
    %v4384 = vunpack.c.l.b16 %v2813
    %v4385 = vunpack.c.h.b16 %v2813
    %v4386 = vunpack.c.l.b16 %v2814
    %v4387 = vunpack.c.h.b16 %v2814
    %v4388 = vunpack.c.l.b16 %v2815
    %v4389 = vunpack.c.h.b16 %v2815
    %v4390 = vunpack.c.l.b16 %v2816
    %v4391 = vunpack.c.h.b16 %v2816
    %v4392 = vunpack.c.l.b16 %v2817
    %v4393 = vunpack.c.h.b16 %v2817
    %v4394 = vunpack.c.l.b16 %v2818
    %v4395 = vunpack.c.h.b16 %v2818
    %v4396 = vunpack.c.l.b16 %v2819
    %v4397 = vunpack.c.h.b16 %v2819
    %v4398 = vunpack.c.l.b16 %v2820
    %v4399 = vunpack.c.h.b16 %v2820
    %v4400 = vunpack.c.l.b16 %v2821
    %v4401 = vunpack.c.h.b16 %v2821
    %v4402 = vunpack.c.l.b16 %v2822
    %v4403 = vunpack.c.h.b16 %v2822
    %v4404 = vunpack.c.l.b16 %v2823
    %v4405 = vunpack.c.h.b16 %v2823
    %v4406 = vunpack.c.l.b16 %v2824
    %v4407 = vunpack.c.h.b16 %v2824
    %v4408 = vunpack.c.l.b16 %v2825
    %v4409 = vunpack.c.h.b16 %v2825
    %v4410 = vunpack.c.l.b16 %v2826
    %v4411 = vunpack.c.h.b16 %v2826
    %v4412 = vunpack.c.l.b16 %v2827
    %v4413 = vunpack.c.h.b16 %v2827
    %v4414 = vunpack.c.l.b16 %v2828
    %v4415 = vunpack.c.h.b16 %v2828
    %v4416 = vunpack.c.l.b16 %v2829
    %v4417 = vunpack.c.h.b16 %v2829
    %v4418 = vunpack.c.l.b16 %v2830
    %v4419 = vunpack.c.h.b16 %v2830
    %v4420 = vunpack.c.l.b16 %v2831
    %v4421 = vunpack.c.h.b16 %v2831
    %v4422 = vunpack.c.l.b16 %v2832
    %v4423 = vunpack.c.h.b16 %v2832
    %v4424 = vunpack.c.l.b16 %v2833
    %v4425 = vunpack.c.h.b16 %v2833
    %v4426 = vunpack.c.l.b16 %v2834
    %v4427 = vunpack.c.h.b16 %v2834
    %v4428 = vunpack.c.l.b16 %v2835
    %v4429 = vunpack.c.h.b16 %v2835
    %v4430 = vunpack.c.l.b16 %v2836
    %v4431 = vunpack.c.h.b16 %v2836
    %v4432 = vunpack.c.l.b16 %v2837
    %v4433 = vunpack.c.h.b16 %v2837
    %v4434 = vunpack.c.l.b16 %v2838
    %v4435 = vunpack.c.h.b16 %v2838
    %v4436 = vunpack.c.l.b16 %v2839
    %v4437 = vunpack.c.h.b16 %v2839
    %v4438 = vunpack.c.l.b16 %v2840
    %v4439 = vunpack.c.h.b16 %v2840
    %v4440 = vunpack.c.l.b16 %v2841
    %v4441 = vunpack.c.h.b16 %v2841
    %v4442 = vunpack.c.l.b16 %v2842
    %v4443 = vunpack.c.h.b16 %v2842
    %v4444 = vunpack.c.l.b16 %v2843
    %v4445 = vunpack.c.h.b16 %v2843
    %v4446 = vunpack.c.l.b16 %v2844
    %v4447 = vunpack.c.h.b16 %v2844
    %v4448 = vunpack.c.l.b16 %v2845
    %v4449 = vunpack.c.h.b16 %v2845
    %v4450 = vunpack.c.l.b16 %v2846
    %v4451 = vunpack.c.h.b16 %v2846
    %v4452 = vunpack.c.l.b16 %v2847
    %v4453 = vunpack.c.h.b16 %v2847
    %v4454 = vunpack.c.l.b16 %v2848
    %v4455 = vunpack.c.h.b16 %v2848
    %v4456 = vunpack.c.l.b16 %v2849
    %v4457 = vunpack.c.h.b16 %v2849
    %v4458 = vunpack.c.l.b16 %v2850
    %v4459 = vunpack.c.h.b16 %v2850
    %v4460 = vunpack.c.l.b16 %v2851
    %v4461 = vunpack.c.h.b16 %v2851
    %v4462 = vunpack.c.l.b16 %v2852
    %v4463 = vunpack.c.h.b16 %v2852
    %v4464 = vunpack.c.l.b16 %v2853
    %v4465 = vunpack.c.h.b16 %v2853
    %v4466 = vunpack.c.l.b16 %v2854
    %v4467 = vunpack.c.h.b16 %v2854
    %v4468 = vunpack.c.l.b16 %v2855
    %v4469 = vunpack.c.h.b16 %v2855
    %v4470 = vunpack.c.l.b16 %v2856
    %v4471 = vunpack.c.h.b16 %v2856
    %v4472 = vunpack.c.l.b16 %v2857
    %v4473 = vunpack.c.h.b16 %v2857
    %v4474 = vunpack.c.l.b16 %v2858
    %v4475 = vunpack.c.h.b16 %v2858
    %v4476 = vunpack.c.l.b16 %v2859
    %v4477 = vunpack.c.h.b16 %v2859
    %v4478 = vunpack.c.l.b16 %v2860
    %v4479 = vunpack.c.h.b16 %v2860
    %v4480 = vunpack.c.l.b16 %v2861
    %v4481 = vunpack.c.h.b16 %v2861
    %v4482 = vunpack.c.l.b16 %v2862
    %v4483 = vunpack.c.h.b16 %v2862
    %v4484 = vunpack.c.l.b16 %v2863
    %v4485 = vunpack.c.h.b16 %v2863
    %v4486 = vunpack.c.l.b16 %v2864
    %v4487 = vunpack.c.h.b16 %v2864
    %v4488 = vunpack.c.l.b16 %v2865
    %v4489 = vunpack.c.h.b16 %v2865
    %v4490 = vunpack.c.l.b16 %v2866
    %v4491 = vunpack.c.h.b16 %v2866
    %v4492 = vunpack.c.l.b16 %v2867
    %v4493 = vunpack.c.h.b16 %v2867
    %v4494 = vunpack.c.l.b16 %v2868
    %v4495 = vunpack.c.h.b16 %v2868
    %v4496 = vunpack.c.l.b16 %v2869
    %v4497 = vunpack.c.h.b16 %v2869
    %v4498 = vunpack.c.l.b16 %v2870
    %v4499 = vunpack.c.h.b16 %v2870
    %v4500 = vunpack.c.l.b16 %v2871
    %v4501 = vunpack.c.h.b16 %v2871
    %v4502 = vunpack.c.l.b16 %v2872
    %v4503 = vunpack.c.h.b16 %v2872
    %v4504 = vunpack.c.l.b16 %v2873
    %v4505 = vunpack.c.h.b16 %v2873
    %v4506 = vunpack.c.l.b16 %v2874
    %v4507 = vunpack.c.h.b16 %v2874
    %v4508 = vunpack.c.l.b16 %v2875
    %v4509 = vunpack.c.h.b16 %v2875
    %v4510 = vunpack.c.l.b16 %v2876
    %v4511 = vunpack.c.h.b16 %v2876
    %v4512 = vunpack.c.l.b16 %v2877
    %v4513 = vunpack.c.h.b16 %v2877
    %v4514 = vunpack.c.l.b16 %v2878
    %v4515 = vunpack.c.h.b16 %v2878
    %v4516 = vunpack.c.l.b16 %v2879
    %v4517 = vunpack.c.h.b16 %v2879
    %v4518 = vunpack.c.l.b16 %v2880
    %v4519 = vunpack.c.h.b16 %v2880
    %v4520 = vunpack.c.l.b16 %v2881
    %v4521 = vunpack.c.h.b16 %v2881
    %v4522 = vunpack.c.l.b16 %v2882
    %v4523 = vunpack.c.h.b16 %v2882
    %v4524 = vunpack.c.l.b16 %v2883
    %v4525 = vunpack.c.h.b16 %v2883
    %v4526 = vunpack.c.l.b16 %v2884
    %v4527 = vunpack.c.h.b16 %v2884
    %v4528 = vunpack.c.l.b16 %v2885
    %v4529 = vunpack.c.h.b16 %v2885
    %v4530 = vunpack.c.l.b16 %v2886
    %v4531 = vunpack.c.h.b16 %v2886
    %v4532 = vunpack.c.l.b16 %v2887
    %v4533 = vunpack.c.h.b16 %v2887
    %v4534 = vunpack.c.l.b16 %v2888
    %v4535 = vunpack.c.h.b16 %v2888
    %v4536 = vunpack.c.l.b16 %v2889
    %v4537 = vunpack.c.h.b16 %v2889
    %v4538 = vunpack.c.l.b16 %v2890
    %v4539 = vunpack.c.h.b16 %v2890
    %v4540 = vunpack.c.l.b16 %v2891
    %v4541 = vunpack.c.h.b16 %v2891
    %v4542 = vunpack.c.l.b16 %v2892
    %v4543 = vunpack.c.h.b16 %v2892
    %v4544 = vunpack.c.l.b16 %v2893
    %v4545 = vunpack.c.h.b16 %v2893
    %v4546 = vunpack.c.l.b16 %v2894
    %v4547 = vunpack.c.h.b16 %v2894
    %v4548 = vunpack.c.l.b16 %v2895
    %v4549 = vunpack.c.h.b16 %v2895
    %v4550 = vunpack.c.l.b16 %v2896
    %v4551 = vunpack.c.h.b16 %v2896
    %v4552 = vunpack.c.l.b16 %v2897
    %v4553 = vunpack.c.h.b16 %v2897
    %v4554 = vunpack.c.l.b16 %v2898
    %v4555 = vunpack.c.h.b16 %v2898
    %v4556 = vunpack.c.l.b16 %v2899
    %v4557 = vunpack.c.h.b16 %v2899
    %v4558 = vunpack.c.l.b16 %v2900
    %v4559 = vunpack.c.h.b16 %v2900
    %v4560 = vunpack.c.l.b16 %v2901
    %v4561 = vunpack.c.h.b16 %v2901
    %v4562 = vunpack.c.l.b16 %v2902
    %v4563 = vunpack.c.h.b16 %v2902
    %v4564 = vunpack.c.l.b16 %v2903
    %v4565 = vunpack.c.h.b16 %v2903
    %v4566 = vunpack.c.l.b16 %v2904
    %v4567 = vunpack.c.h.b16 %v2904
    %v4568 = vunpack.c.l.b16 %v2905
    %v4569 = vunpack.c.h.b16 %v2905
    %v4570 = vunpack.c.l.b16 %v2906
    %v4571 = vunpack.c.h.b16 %v2906
    %v4572 = vunpack.c.l.b16 %v2907
    %v4573 = vunpack.c.h.b16 %v2907
    %v4574 = vunpack.c.l.b16 %v2908
    %v4575 = vunpack.c.h.b16 %v2908
    %v4576 = vunpack.c.l.b16 %v2909
    %v4577 = vunpack.c.h.b16 %v2909
    %v4578 = vunpack.c.l.b16 %v2910
    %v4579 = vunpack.c.h.b16 %v2910
    %v4580 = vunpack.c.l.b16 %v2911
    %v4581 = vunpack.c.h.b16 %v2911
    %v4582 = vunpack.c.l.b16 %v2912
    %v4583 = vunpack.c.h.b16 %v2912
    %v4584 = vunpack.c.l.b16 %v2913
    %v4585 = vunpack.c.h.b16 %v2913
    %v4586 = vunpack.c.l.b16 %v2914
    %v4587 = vunpack.c.h.b16 %v2914
    %v4588 = vunpack.c.l.b16 %v2915
    %v4589 = vunpack.c.h.b16 %v2915
    %v4590 = vunpack.c.l.b16 %v2916
    %v4591 = vunpack.c.h.b16 %v2916
    %v4592 = vunpack.c.l.b16 %v2917
    %v4593 = vunpack.c.h.b16 %v2917
    %v4594 = vunpack.c.l.b16 %v2918
    %v4595 = vunpack.c.h.b16 %v2918
    %v4596 = vunpack.c.l.b16 %v2919
    %v4597 = vunpack.c.h.b16 %v2919
    %v4598 = vunpack.c.l.b16 %v2920
    %v4599 = vunpack.c.h.b16 %v2920
    %v4600 = vunpack.c.l.b16 %v2921
    %v4601 = vunpack.c.h.b16 %v2921
    %v4602 = vpack.c.b16 %v3502, %v3482
    %v4603 = vpack.c.b16 %v3503, %v3483
    %v4604 = vpack.c.b16 %v3504, %v3484
    %v4605 = vpack.c.b16 %v3505, %v3485
    %v4606 = vpack.c.b16 %v3506, %v3486
    %v4607 = vpack.c.b16 %v3507, %v3487
    %v4608 = vpack.c.b16 %v3508, %v3488
    %v4609 = vpack.c.b16 %v3509, %v3489
    %v4610 = vpack.c.b16 %v3510, %v3490
    %v4611 = vpack.c.b16 %v3511, %v3491
    %v4612 = vpack.c.b16 %v3512, %v3492
    %v4613 = vpack.c.b16 %v3513, %v3493
    %v4614 = vpack.c.b16 %v3514, %v3494
    %v4615 = vpack.c.b16 %v3515, %v3495
    %v4616 = vpack.c.b16 %v3516, %v3496
    %v4617 = vpack.c.b16 %v3517, %v3497
    %v4618 = vpack.c.b16 %v3518, %v3498
    %v4619 = vpack.c.b16 %v3519, %v3499
    %v4620 = vpack.c.b16 %v3520, %v3500
    %v4621 = vpack.c.b16 %v3521, %v3501
    %v4622 = vpack.c.b16 %v3542, %v3522
    %v4623 = vpack.c.b16 %v3543, %v3523
    %v4624 = vpack.c.b16 %v3544, %v3524
    %v4625 = vpack.c.b16 %v3545, %v3525
    %v4626 = vpack.c.b16 %v3546, %v3526
    %v4627 = vpack.c.b16 %v3547, %v3527
    %v4628 = vpack.c.b16 %v3548, %v3528
    %v4629 = vpack.c.b16 %v3549, %v3529
    %v4630 = vpack.c.b16 %v3550, %v3530
    %v4631 = vpack.c.b16 %v3551, %v3531
    %v4632 = vpack.c.b16 %v3552, %v3532
    %v4633 = vpack.c.b16 %v3553, %v3533
    %v4634 = vpack.c.b16 %v3554, %v3534
    %v4635 = vpack.c.b16 %v3555, %v3535
    %v4636 = vpack.c.b16 %v3556, %v3536
    %v4637 = vpack.c.b16 %v3557, %v3537
    %v4638 = vpack.c.b16 %v3558, %v3538
    %v4639 = vpack.c.b16 %v3559, %v3539
    %v4640 = vpack.c.b16 %v3560, %v3540
    %v4641 = vpack.c.b16 %v3561, %v3541
    %v4642 = vpack.c.b16 %v3582, %v3562
    %v4643 = vpack.c.b16 %v3583, %v3563
    %v4644 = vpack.c.b16 %v3584, %v3564
    %v4645 = vpack.c.b16 %v3585, %v3565
    %v4646 = vpack.c.b16 %v3586, %v3566
    %v4647 = vpack.c.b16 %v3587, %v3567
    %v4648 = vpack.c.b16 %v3588, %v3568
    %v4649 = vpack.c.b16 %v3589, %v3569
    %v4650 = vpack.c.b16 %v3590, %v3570
    %v4651 = vpack.c.b16 %v3591, %v3571
    %v4652 = vpack.c.b16 %v3592, %v3572
    %v4653 = vpack.c.b16 %v3593, %v3573
    %v4654 = vpack.c.b16 %v3594, %v3574
    %v4655 = vpack.c.b16 %v3595, %v3575
    %v4656 = vpack.c.b16 %v3596, %v3576
    %v4657 = vpack.c.b16 %v3597, %v3577
    %v4658 = vpack.c.b16 %v3598, %v3578
    %v4659 = vpack.c.b16 %v3599, %v3579
    %v4660 = vpack.c.b16 %v3600, %v3580
    %v4661 = vpack.c.b16 %v3601, %v3581
    %v4662 = vpack.c.b16 %v3622, %v3602
    %v4663 = vpack.c.b16 %v3623, %v3603
    %v4664 = vpack.c.b16 %v3624, %v3604
    %v4665 = vpack.c.b16 %v3625, %v3605
    %v4666 = vpack.c.b16 %v3626, %v3606
    %v4667 = vpack.c.b16 %v3627, %v3607
    %v4668 = vpack.c.b16 %v3628, %v3608
    %v4669 = vpack.c.b16 %v3629, %v3609
    %v4670 = vpack.c.b16 %v3630, %v3610
    %v4671 = vpack.c.b16 %v3631, %v3611
    %v4672 = vpack.c.b16 %v3632, %v3612
    %v4673 = vpack.c.b16 %v3633, %v3613
    %v4674 = vpack.c.b16 %v3634, %v3614
    %v4675 = vpack.c.b16 %v3635, %v3615
    %v4676 = vpack.c.b16 %v3636, %v3616
    %v4677 = vpack.c.b16 %v3637, %v3617
    %v4678 = vpack.c.b16 %v3638, %v3618
    %v4679 = vpack.c.b16 %v3639, %v3619
    %v4680 = vpack.c.b16 %v3640, %v3620
    %v4681 = vpack.c.b16 %v3641, %v3621
    %v4682 = vpack.c.b16 %v3662, %v3642
    %v4683 = vpack.c.b16 %v3663, %v3643
    %v4684 = vpack.c.b16 %v3664, %v3644
    %v4685 = vpack.c.b16 %v3665, %v3645
    %v4686 = vpack.c.b16 %v3666, %v3646
    %v4687 = vpack.c.b16 %v3667, %v3647
    %v4688 = vpack.c.b16 %v3668, %v3648
    %v4689 = vpack.c.b16 %v3669, %v3649
    %v4690 = vpack.c.b16 %v3670, %v3650
    %v4691 = vpack.c.b16 %v3671, %v3651
    %v4692 = vpack.c.b16 %v3672, %v3652
    %v4693 = vpack.c.b16 %v3673, %v3653
    %v4694 = vpack.c.b16 %v3674, %v3654
    %v4695 = vpack.c.b16 %v3675, %v3655
    %v4696 = vpack.c.b16 %v3676, %v3656
    %v4697 = vpack.c.b16 %v3677, %v3657
    %v4698 = vpack.c.b16 %v3678, %v3658
    %v4699 = vpack.c.b16 %v3679, %v3659
    %v4700 = vpack.c.b16 %v3680, %v3660
    %v4701 = vpack.c.b16 %v3681, %v3661
    %v4702 = vpack.c.b16 %v3702, %v3682
    %v4703 = vpack.c.b16 %v3703, %v3683
    %v4704 = vpack.c.b16 %v3704, %v3684
    %v4705 = vpack.c.b16 %v3705, %v3685
    %v4706 = vpack.c.b16 %v3706, %v3686
    %v4707 = vpack.c.b16 %v3707, %v3687
    %v4708 = vpack.c.b16 %v3708, %v3688
    %v4709 = vpack.c.b16 %v3709, %v3689
    %v4710 = vpack.c.b16 %v3710, %v3690
    %v4711 = vpack.c.b16 %v3711, %v3691
    %v4712 = vpack.c.b16 %v3712, %v3692
    %v4713 = vpack.c.b16 %v3713, %v3693
    %v4714 = vpack.c.b16 %v3714, %v3694
    %v4715 = vpack.c.b16 %v3715, %v3695
    %v4716 = vpack.c.b16 %v3716, %v3696
    %v4717 = vpack.c.b16 %v3717, %v3697
    %v4718 = vpack.c.b16 %v3718, %v3698
    %v4719 = vpack.c.b16 %v3719, %v3699
    %v4720 = vpack.c.b16 %v3720, %v3700
    %v4721 = vpack.c.b16 %v3721, %v3701
    %v4722 = vpack.c.b16 %v3742, %v3722
    %v4723 = vpack.c.b16 %v3743, %v3723
    %v4724 = vpack.c.b16 %v3744, %v3724
    %v4725 = vpack.c.b16 %v3745, %v3725
    %v4726 = vpack.c.b16 %v3746, %v3726
    %v4727 = vpack.c.b16 %v3747, %v3727
    %v4728 = vpack.c.b16 %v3748, %v3728
    %v4729 = vpack.c.b16 %v3749, %v3729
    %v4730 = vpack.c.b16 %v3750, %v3730
    %v4731 = vpack.c.b16 %v3751, %v3731
    %v4732 = vpack.c.b16 %v3752, %v3732
    %v4733 = vpack.c.b16 %v3753, %v3733
    %v4734 = vpack.c.b16 %v3754, %v3734
    %v4735 = vpack.c.b16 %v3755, %v3735
    %v4736 = vpack.c.b16 %v3756, %v3736
    %v4737 = vpack.c.b16 %v3757, %v3737
    %v4738 = vpack.c.b16 %v3758, %v3738
    %v4739 = vpack.c.b16 %v3759, %v3739
    %v4740 = vpack.c.b16 %v3760, %v3740
    %v4741 = vpack.c.b16 %v3761, %v3741
    %v4742 = vpack.c.b16 %v3782, %v3762
    %v4743 = vpack.c.b16 %v3783, %v3763
    %v4744 = vpack.c.b16 %v3784, %v3764
    %v4745 = vpack.c.b16 %v3785, %v3765
    %v4746 = vpack.c.b16 %v3786, %v3766
    %v4747 = vpack.c.b16 %v3787, %v3767
    %v4748 = vpack.c.b16 %v3788, %v3768
    %v4749 = vpack.c.b16 %v3789, %v3769
    %v4750 = vpack.c.b16 %v3790, %v3770
    %v4751 = vpack.c.b16 %v3791, %v3771
    %v4752 = vpack.c.b16 %v3792, %v3772
    %v4753 = vpack.c.b16 %v3793, %v3773
    %v4754 = vpack.c.b16 %v3794, %v3774
    %v4755 = vpack.c.b16 %v3795, %v3775
    %v4756 = vpack.c.b16 %v3796, %v3776
    %v4757 = vpack.c.b16 %v3797, %v3777
    %v4758 = vpack.c.b16 %v3798, %v3778
    %v4759 = vpack.c.b16 %v3799, %v3779
    %v4760 = vpack.c.b16 %v3800, %v3780
    %v4761 = vpack.c.b16 %v3801, %v3781
    %v4762 = vpack.c.b16 %v3822, %v3802
    %v4763 = vpack.c.b16 %v3823, %v3803
    %v4764 = vpack.c.b16 %v3824, %v3804
    %v4765 = vpack.c.b16 %v3825, %v3805
    %v4766 = vpack.c.b16 %v3826, %v3806
    %v4767 = vpack.c.b16 %v3827, %v3807
    %v4768 = vpack.c.b16 %v3828, %v3808
    %v4769 = vpack.c.b16 %v3829, %v3809
    %v4770 = vpack.c.b16 %v3830, %v3810
    %v4771 = vpack.c.b16 %v3831, %v3811
    %v4772 = vpack.c.b16 %v3832, %v3812
    %v4773 = vpack.c.b16 %v3833, %v3813
    %v4774 = vpack.c.b16 %v3834, %v3814
    %v4775 = vpack.c.b16 %v3835, %v3815
    %v4776 = vpack.c.b16 %v3836, %v3816
    %v4777 = vpack.c.b16 %v3837, %v3817
    %v4778 = vpack.c.b16 %v3838, %v3818
    %v4779 = vpack.c.b16 %v3839, %v3819
    %v4780 = vpack.c.b16 %v3840, %v3820
    %v4781 = vpack.c.b16 %v3841, %v3821
    %v4782 = vpack.c.b16 %v3862, %v3842
    %v4783 = vpack.c.b16 %v3863, %v3843
    %v4784 = vpack.c.b16 %v3864, %v3844
    %v4785 = vpack.c.b16 %v3865, %v3845
    %v4786 = vpack.c.b16 %v3866, %v3846
    %v4787 = vpack.c.b16 %v3867, %v3847
    %v4788 = vpack.c.b16 %v3868, %v3848
    %v4789 = vpack.c.b16 %v3869, %v3849
    %v4790 = vpack.c.b16 %v3870, %v3850
    %v4791 = vpack.c.b16 %v3871, %v3851
    %v4792 = vpack.c.b16 %v3872, %v3852
    %v4793 = vpack.c.b16 %v3873, %v3853
    %v4794 = vpack.c.b16 %v3874, %v3854
    %v4795 = vpack.c.b16 %v3875, %v3855
    %v4796 = vpack.c.b16 %v3876, %v3856
    %v4797 = vpack.c.b16 %v3877, %v3857
    %v4798 = vpack.c.b16 %v3878, %v3858
    %v4799 = vpack.c.b16 %v3879, %v3859
    %v4800 = vpack.c.b16 %v3880, %v3860
    %v4801 = vpack.c.b16 %v3881, %v3861
    %v4802 = vpack.c.b16 %v3902, %v3882
    %v4803 = vpack.c.b16 %v3903, %v3883
    %v4804 = vpack.c.b16 %v3904, %v3884
    %v4805 = vpack.c.b16 %v3905, %v3885
    %v4806 = vpack.c.b16 %v3906, %v3886
    %v4807 = vpack.c.b16 %v3907, %v3887
    %v4808 = vpack.c.b16 %v3908, %v3888
    %v4809 = vpack.c.b16 %v3909, %v3889
    %v4810 = vpack.c.b16 %v3910, %v3890
    %v4811 = vpack.c.b16 %v3911, %v3891
    %v4812 = vpack.c.b16 %v3912, %v3892
    %v4813 = vpack.c.b16 %v3913, %v3893
    %v4814 = vpack.c.b16 %v3914, %v3894
    %v4815 = vpack.c.b16 %v3915, %v3895
    %v4816 = vpack.c.b16 %v3916, %v3896
    %v4817 = vpack.c.b16 %v3917, %v3897
    %v4818 = vpack.c.b16 %v3918, %v3898
    %v4819 = vpack.c.b16 %v3919, %v3899
    %v4820 = vpack.c.b16 %v3920, %v3900
    %v4821 = vpack.c.b16 %v3921, %v3901
    %v4822 = vpack.c.b16 %v3942, %v3922
    %v4823 = vpack.c.b16 %v3943, %v3923
    %v4824 = vpack.c.b16 %v3944, %v3924
    %v4825 = vpack.c.b16 %v3945, %v3925
    %v4826 = vpack.c.b16 %v3946, %v3926
    %v4827 = vpack.c.b16 %v3947, %v3927
    %v4828 = vpack.c.b16 %v3948, %v3928
    %v4829 = vpack.c.b16 %v3949, %v3929
    %v4830 = vpack.c.b16 %v3950, %v3930
    %v4831 = vpack.c.b16 %v3951, %v3931
    %v4832 = vpack.c.b16 %v3952, %v3932
    %v4833 = vpack.c.b16 %v3953, %v3933
    %v4834 = vpack.c.b16 %v3954, %v3934
    %v4835 = vpack.c.b16 %v3955, %v3935
    %v4836 = vpack.c.b16 %v3956, %v3936
    %v4837 = vpack.c.b16 %v3957, %v3937
    %v4838 = vpack.c.b16 %v3958, %v3938
    %v4839 = vpack.c.b16 %v3959, %v3939
    %v4840 = vpack.c.b16 %v3960, %v3940
    %v4841 = vpack.c.b16 %v3961, %v3941
    %v4842 = vpack.c.b16 %v3982, %v3962
    %v4843 = vpack.c.b16 %v3983, %v3963
    %v4844 = vpack.c.b16 %v3984, %v3964
    %v4845 = vpack.c.b16 %v3985, %v3965
    %v4846 = vpack.c.b16 %v3986, %v3966
    %v4847 = vpack.c.b16 %v3987, %v3967
    %v4848 = vpack.c.b16 %v3988, %v3968
    %v4849 = vpack.c.b16 %v3989, %v3969
    %v4850 = vpack.c.b16 %v3990, %v3970
    %v4851 = vpack.c.b16 %v3991, %v3971
    %v4852 = vpack.c.b16 %v3992, %v3972
    %v4853 = vpack.c.b16 %v3993, %v3973
    %v4854 = vpack.c.b16 %v3994, %v3974
    %v4855 = vpack.c.b16 %v3995, %v3975
    %v4856 = vpack.c.b16 %v3996, %v3976
    %v4857 = vpack.c.b16 %v3997, %v3977
    %v4858 = vpack.c.b16 %v3998, %v3978
    %v4859 = vpack.c.b16 %v3999, %v3979
    %v4860 = vpack.c.b16 %v4000, %v3980
    %v4861 = vpack.c.b16 %v4001, %v3981
    %v4862 = vpack.c.b16 %v4022, %v4002
    %v4863 = vpack.c.b16 %v4023, %v4003
    %v4864 = vpack.c.b16 %v4024, %v4004
    %v4865 = vpack.c.b16 %v4025, %v4005
    %v4866 = vpack.c.b16 %v4026, %v4006
    %v4867 = vpack.c.b16 %v4027, %v4007
    %v4868 = vpack.c.b16 %v4028, %v4008
    %v4869 = vpack.c.b16 %v4029, %v4009
    %v4870 = vpack.c.b16 %v4030, %v4010
    %v4871 = vpack.c.b16 %v4031, %v4011
    %v4872 = vpack.c.b16 %v4032, %v4012
    %v4873 = vpack.c.b16 %v4033, %v4013
    %v4874 = vpack.c.b16 %v4034, %v4014
    %v4875 = vpack.c.b16 %v4035, %v4015
    %v4876 = vpack.c.b16 %v4036, %v4016
    %v4877 = vpack.c.b16 %v4037, %v4017
    %v4878 = vpack.c.b16 %v4038, %v4018
    %v4879 = vpack.c.b16 %v4039, %v4019
    %v4880 = vpack.c.b16 %v4040, %v4020
    %v4881 = vpack.c.b16 %v4041, %v4021
    %v4882 = vpack.c.b16 %v4062, %v4042
    %v4883 = vpack.c.b16 %v4063, %v4043
    %v4884 = vpack.c.b16 %v4064, %v4044
    %v4885 = vpack.c.b16 %v4065, %v4045
    %v4886 = vpack.c.b16 %v4066, %v4046
    %v4887 = vpack.c.b16 %v4067, %v4047
    %v4888 = vpack.c.b16 %v4068, %v4048
    %v4889 = vpack.c.b16 %v4069, %v4049
    %v4890 = vpack.c.b16 %v4070, %v4050
    %v4891 = vpack.c.b16 %v4071, %v4051
    %v4892 = vpack.c.b16 %v4072, %v4052
    %v4893 = vpack.c.b16 %v4073, %v4053
    %v4894 = vpack.c.b16 %v4074, %v4054
    %v4895 = vpack.c.b16 %v4075, %v4055
    %v4896 = vpack.c.b16 %v4076, %v4056
    %v4897 = vpack.c.b16 %v4077, %v4057
    %v4898 = vpack.c.b16 %v4078, %v4058
    %v4899 = vpack.c.b16 %v4079, %v4059
    %v4900 = vpack.c.b16 %v4080, %v4060
    %v4901 = vpack.c.b16 %v4081, %v4061
    %v4902 = vpack.c.b16 %v4102, %v4082
    %v4903 = vpack.c.b16 %v4103, %v4083
    %v4904 = vpack.c.b16 %v4104, %v4084
    %v4905 = vpack.c.b16 %v4105, %v4085
    %v4906 = vpack.c.b16 %v4106, %v4086
    %v4907 = vpack.c.b16 %v4107, %v4087
    %v4908 = vpack.c.b16 %v4108, %v4088
    %v4909 = vpack.c.b16 %v4109, %v4089
    %v4910 = vpack.c.b16 %v4110, %v4090
    %v4911 = vpack.c.b16 %v4111, %v4091
    %v4912 = vpack.c.b16 %v4112, %v4092
    %v4913 = vpack.c.b16 %v4113, %v4093
    %v4914 = vpack.c.b16 %v4114, %v4094
    %v4915 = vpack.c.b16 %v4115, %v4095
    %v4916 = vpack.c.b16 %v4116, %v4096
    %v4917 = vpack.c.b16 %v4117, %v4097
    %v4918 = vpack.c.b16 %v4118, %v4098
    %v4919 = vpack.c.b16 %v4119, %v4099
    %v4920 = vpack.c.b16 %v4120, %v4100
    %v4921 = vpack.c.b16 %v4121, %v4101
    %v4922 = vpack.c.b16 %v4142, %v4122
    %v4923 = vpack.c.b16 %v4143, %v4123
    %v4924 = vpack.c.b16 %v4144, %v4124
    %v4925 = vpack.c.b16 %v4145, %v4125
    %v4926 = vpack.c.b16 %v4146, %v4126
    %v4927 = vpack.c.b16 %v4147, %v4127
    %v4928 = vpack.c.b16 %v4148, %v4128
    %v4929 = vpack.c.b16 %v4149, %v4129
    %v4930 = vpack.c.b16 %v4150, %v4130
    %v4931 = vpack.c.b16 %v4151, %v4131
    %v4932 = vpack.c.b16 %v4152, %v4132
    %v4933 = vpack.c.b16 %v4153, %v4133
    %v4934 = vpack.c.b16 %v4154, %v4134
    %v4935 = vpack.c.b16 %v4155, %v4135
    %v4936 = vpack.c.b16 %v4156, %v4136
    %v4937 = vpack.c.b16 %v4157, %v4137
    %v4938 = vpack.c.b16 %v4158, %v4138
    %v4939 = vpack.c.b16 %v4159, %v4139
    %v4940 = vpack.c.b16 %v4160, %v4140
    %v4941 = vpack.c.b16 %v4161, %v4141
    %v4942 = vpack.c.b16 %v4182, %v4162
    %v4943 = vpack.c.b16 %v4183, %v4163
    %v4944 = vpack.c.b16 %v4184, %v4164
    %v4945 = vpack.c.b16 %v4185, %v4165
    %v4946 = vpack.c.b16 %v4186, %v4166
    %v4947 = vpack.c.b16 %v4187, %v4167
    %v4948 = vpack.c.b16 %v4188, %v4168
    %v4949 = vpack.c.b16 %v4189, %v4169
    %v4950 = vpack.c.b16 %v4190, %v4170
    %v4951 = vpack.c.b16 %v4191, %v4171
    %v4952 = vpack.c.b16 %v4192, %v4172
    %v4953 = vpack.c.b16 %v4193, %v4173
    %v4954 = vpack.c.b16 %v4194, %v4174
    %v4955 = vpack.c.b16 %v4195, %v4175
    %v4956 = vpack.c.b16 %v4196, %v4176
    %v4957 = vpack.c.b16 %v4197, %v4177
    %v4958 = vpack.c.b16 %v4198, %v4178
    %v4959 = vpack.c.b16 %v4199, %v4179
    %v4960 = vpack.c.b16 %v4200, %v4180
    %v4961 = vpack.c.b16 %v4201, %v4181
    %v4962 = vpack.c.b16 %v4222, %v4202
    %v4963 = vpack.c.b16 %v4223, %v4203
    %v4964 = vpack.c.b16 %v4224, %v4204
    %v4965 = vpack.c.b16 %v4225, %v4205
    %v4966 = vpack.c.b16 %v4226, %v4206
    %v4967 = vpack.c.b16 %v4227, %v4207
    %v4968 = vpack.c.b16 %v4228, %v4208
    %v4969 = vpack.c.b16 %v4229, %v4209
    %v4970 = vpack.c.b16 %v4230, %v4210
    %v4971 = vpack.c.b16 %v4231, %v4211
    %v4972 = vpack.c.b16 %v4232, %v4212
    %v4973 = vpack.c.b16 %v4233, %v4213
    %v4974 = vpack.c.b16 %v4234, %v4214
    %v4975 = vpack.c.b16 %v4235, %v4215
    %v4976 = vpack.c.b16 %v4236, %v4216
    %v4977 = vpack.c.b16 %v4237, %v4217
    %v4978 = vpack.c.b16 %v4238, %v4218
    %v4979 = vpack.c.b16 %v4239, %v4219
    %v4980 = vpack.c.b16 %v4240, %v4220
    %v4981 = vpack.c.b16 %v4241, %v4221
    %v4982 = vpack.c.b16 %v4262, %v4242
    %v4983 = vpack.c.b16 %v4263, %v4243
    %v4984 = vpack.c.b16 %v4264, %v4244
    %v4985 = vpack.c.b16 %v4265, %v4245
    %v4986 = vpack.c.b16 %v4266, %v4246
    %v4987 = vpack.c.b16 %v4267, %v4247
    %v4988 = vpack.c.b16 %v4268, %v4248
    %v4989 = vpack.c.b16 %v4269, %v4249
    %v4990 = vpack.c.b16 %v4270, %v4250
    %v4991 = vpack.c.b16 %v4271, %v4251
    %v4992 = vpack.c.b16 %v4272, %v4252
    %v4993 = vpack.c.b16 %v4273, %v4253
    %v4994 = vpack.c.b16 %v4274, %v4254
    %v4995 = vpack.c.b16 %v4275, %v4255
    %v4996 = vpack.c.b16 %v4276, %v4256
    %v4997 = vpack.c.b16 %v4277, %v4257
    %v4998 = vpack.c.b16 %v4278, %v4258
    %v4999 = vpack.c.b16 %v4279, %v4259
    %v5000 = vpack.c.b16 %v4280, %v4260
    %v5001 = vpack.c.b16 %v4281, %v4261
    %v5002 = vpack.c.b16 %v4302, %v4282
    %v5003 = vpack.c.b16 %v4303, %v4283
    %v5004 = vpack.c.b16 %v4304, %v4284
    %v5005 = vpack.c.b16 %v4305, %v4285
    %v5006 = vpack.c.b16 %v4306, %v4286
    %v5007 = vpack.c.b16 %v4307, %v4287
    %v5008 = vpack.c.b16 %v4308, %v4288
    %v5009 = vpack.c.b16 %v4309, %v4289
    %v5010 = vpack.c.b16 %v4310, %v4290
    %v5011 = vpack.c.b16 %v4311, %v4291
    %v5012 = vpack.c.b16 %v4312, %v4292
    %v5013 = vpack.c.b16 %v4313, %v4293
    %v5014 = vpack.c.b16 %v4314, %v4294
    %v5015 = vpack.c.b16 %v4315, %v4295
    %v5016 = vpack.c.b16 %v4316, %v4296
    %v5017 = vpack.c.b16 %v4317, %v4297
    %v5018 = vpack.c.b16 %v4318, %v4298
    %v5019 = vpack.c.b16 %v4319, %v4299
    %v5020 = vpack.c.b16 %v4320, %v4300
    %v5021 = vpack.c.b16 %v4321, %v4301
    %v5022 = vpack.c.b16 %v4342, %v4322
    %v5023 = vpack.c.b16 %v4343, %v4323
    %v5024 = vpack.c.b16 %v4344, %v4324
    %v5025 = vpack.c.b16 %v4345, %v4325
    %v5026 = vpack.c.b16 %v4346, %v4326
    %v5027 = vpack.c.b16 %v4347, %v4327
    %v5028 = vpack.c.b16 %v4348, %v4328
    %v5029 = vpack.c.b16 %v4349, %v4329
    %v5030 = vpack.c.b16 %v4350, %v4330
    %v5031 = vpack.c.b16 %v4351, %v4331
    %v5032 = vpack.c.b16 %v4352, %v4332
    %v5033 = vpack.c.b16 %v4353, %v4333
    %v5034 = vpack.c.b16 %v4354, %v4334
    %v5035 = vpack.c.b16 %v4355, %v4335
    %v5036 = vpack.c.b16 %v4356, %v4336
    %v5037 = vpack.c.b16 %v4357, %v4337
    %v5038 = vpack.c.b16 %v4358, %v4338
    %v5039 = vpack.c.b16 %v4359, %v4339
    %v5040 = vpack.c.b16 %v4360, %v4340
    %v5041 = vpack.c.b16 %v4361, %v4341
    %v5042 = vpack.c.b16 %v4382, %v4362
    %v5043 = vpack.c.b16 %v4383, %v4363
    %v5044 = vpack.c.b16 %v4384, %v4364
    %v5045 = vpack.c.b16 %v4385, %v4365
    %v5046 = vpack.c.b16 %v4386, %v4366
    %v5047 = vpack.c.b16 %v4387, %v4367
    %v5048 = vpack.c.b16 %v4388, %v4368
    %v5049 = vpack.c.b16 %v4389, %v4369
    %v5050 = vpack.c.b16 %v4390, %v4370
    %v5051 = vpack.c.b16 %v4391, %v4371
    %v5052 = vpack.c.b16 %v4392, %v4372
    %v5053 = vpack.c.b16 %v4393, %v4373
    %v5054 = vpack.c.b16 %v4394, %v4374
    %v5055 = vpack.c.b16 %v4395, %v4375
    %v5056 = vpack.c.b16 %v4396, %v4376
    %v5057 = vpack.c.b16 %v4397, %v4377
    %v5058 = vpack.c.b16 %v4398, %v4378
    %v5059 = vpack.c.b16 %v4399, %v4379
    %v5060 = vpack.c.b16 %v4400, %v4380
    %v5061 = vpack.c.b16 %v4401, %v4381
    %v5062 = vpack.c.b16 %v4422, %v4402
    %v5063 = vpack.c.b16 %v4423, %v4403
    %v5064 = vpack.c.b16 %v4424, %v4404
    %v5065 = vpack.c.b16 %v4425, %v4405
    %v5066 = vpack.c.b16 %v4426, %v4406
    %v5067 = vpack.c.b16 %v4427, %v4407
    %v5068 = vpack.c.b16 %v4428, %v4408
    %v5069 = vpack.c.b16 %v4429, %v4409
    %v5070 = vpack.c.b16 %v4430, %v4410
    %v5071 = vpack.c.b16 %v4431, %v4411
    %v5072 = vpack.c.b16 %v4432, %v4412
    %v5073 = vpack.c.b16 %v4433, %v4413
    %v5074 = vpack.c.b16 %v4434, %v4414
    %v5075 = vpack.c.b16 %v4435, %v4415
    %v5076 = vpack.c.b16 %v4436, %v4416
    %v5077 = vpack.c.b16 %v4437, %v4417
    %v5078 = vpack.c.b16 %v4438, %v4418
    %v5079 = vpack.c.b16 %v4439, %v4419
    %v5080 = vpack.c.b16 %v4440, %v4420
    %v5081 = vpack.c.b16 %v4441, %v4421
    %v5082 = vpack.c.b16 %v4462, %v4442
    %v5083 = vpack.c.b16 %v4463, %v4443
    %v5084 = vpack.c.b16 %v4464, %v4444
    %v5085 = vpack.c.b16 %v4465, %v4445
    %v5086 = vpack.c.b16 %v4466, %v4446
    %v5087 = vpack.c.b16 %v4467, %v4447
    %v5088 = vpack.c.b16 %v4468, %v4448
    %v5089 = vpack.c.b16 %v4469, %v4449
    %v5090 = vpack.c.b16 %v4470, %v4450
    %v5091 = vpack.c.b16 %v4471, %v4451
    %v5092 = vpack.c.b16 %v4472, %v4452
    %v5093 = vpack.c.b16 %v4473, %v4453
    %v5094 = vpack.c.b16 %v4474, %v4454
    %v5095 = vpack.c.b16 %v4475, %v4455
    %v5096 = vpack.c.b16 %v4476, %v4456
    %v5097 = vpack.c.b16 %v4477, %v4457
    %v5098 = vpack.c.b16 %v4478, %v4458
    %v5099 = vpack.c.b16 %v4479, %v4459
    %v5100 = vpack.c.b16 %v4480, %v4460
    %v5101 = vpack.c.b16 %v4481, %v4461
    %v5102 = vpack.c.b16 %v4502, %v4482
    %v5103 = vpack.c.b16 %v4503, %v4483
    %v5104 = vpack.c.b16 %v4504, %v4484
    %v5105 = vpack.c.b16 %v4505, %v4485
    %v5106 = vpack.c.b16 %v4506, %v4486
    %v5107 = vpack.c.b16 %v4507, %v4487
    %v5108 = vpack.c.b16 %v4508, %v4488
    %v5109 = vpack.c.b16 %v4509, %v4489
    %v5110 = vpack.c.b16 %v4510, %v4490
    %v5111 = vpack.c.b16 %v4511, %v4491
    %v5112 = vpack.c.b16 %v4512, %v4492
    %v5113 = vpack.c.b16 %v4513, %v4493
    %v5114 = vpack.c.b16 %v4514, %v4494
    %v5115 = vpack.c.b16 %v4515, %v4495
    %v5116 = vpack.c.b16 %v4516, %v4496
    %v5117 = vpack.c.b16 %v4517, %v4497
    %v5118 = vpack.c.b16 %v4518, %v4498
    %v5119 = vpack.c.b16 %v4519, %v4499
    %v5120 = vpack.c.b16 %v4520, %v4500
    %v5121 = vpack.c.b16 %v4521, %v4501
    %v5122 = vpack.c.b16 %v4542, %v4522
    %v5123 = vpack.c.b16 %v4543, %v4523
    %v5124 = vpack.c.b16 %v4544, %v4524
    %v5125 = vpack.c.b16 %v4545, %v4525
    %v5126 = vpack.c.b16 %v4546, %v4526
    %v5127 = vpack.c.b16 %v4547, %v4527
    %v5128 = vpack.c.b16 %v4548, %v4528
    %v5129 = vpack.c.b16 %v4549, %v4529
    %v5130 = vpack.c.b16 %v4550, %v4530
    %v5131 = vpack.c.b16 %v4551, %v4531
    %v5132 = vpack.c.b16 %v4552, %v4532
    %v5133 = vpack.c.b16 %v4553, %v4533
    %v5134 = vpack.c.b16 %v4554, %v4534
    %v5135 = vpack.c.b16 %v4555, %v4535
    %v5136 = vpack.c.b16 %v4556, %v4536
    %v5137 = vpack.c.b16 %v4557, %v4537
    %v5138 = vpack.c.b16 %v4558, %v4538
    %v5139 = vpack.c.b16 %v4559, %v4539
    %v5140 = vpack.c.b16 %v4560, %v4540
    %v5141 = vpack.c.b16 %v4561, %v4541
    %v5142 = vpack.c.b16 %v4582, %v4562
    %v5143 = vpack.c.b16 %v4583, %v4563
    %v5144 = vpack.c.b16 %v4584, %v4564
    %v5145 = vpack.c.b16 %v4585, %v4565
    %v5146 = vpack.c.b16 %v4586, %v4566
    %v5147 = vpack.c.b16 %v4587, %v4567
    %v5148 = vpack.c.b16 %v4588, %v4568
    %v5149 = vpack.c.b16 %v4589, %v4569
    %v5150 = vpack.c.b16 %v4590, %v4570
    %v5151 = vpack.c.b16 %v4591, %v4571
    %v5152 = vpack.c.b16 %v4592, %v4572
    %v5153 = vpack.c.b16 %v4593, %v4573
    %v5154 = vpack.c.b16 %v4594, %v4574
    %v5155 = vpack.c.b16 %v4595, %v4575
    %v5156 = vpack.c.b16 %v4596, %v4576
    %v5157 = vpack.c.b16 %v4597, %v4577
    %v5158 = vpack.c.b16 %v4598, %v4578
    %v5159 = vpack.c.b16 %v4599, %v4579
    %v5160 = vpack.c.b16 %v4600, %v4580
    %v5161 = vpack.c.b16 %v4601, %v4581
    %vm5722 = vcmask 523264
    %v5724 = vsel %vm5722, %v2349, 0
    %v5727 = vsel %vm5722, %v2353, 0
    %v5730 = vsel %vm5722, %v2357, 0
    %v5733 = vsel %vm5722, %v2361, 0
    %5735 = vmatprep.subr.bf16.mxu0 %v4603
    %5736 = vmatpush1.bf16.msra.mxu0 %v4602
    %5737 = vmatprep.subr.bf16.mxu0 %v4623
    %5738 = vmatpush1.bf16.msra.mxu0 %v4622
    %5739 = vmatprep.subr.bf16.mxu0 %v4643
    %5740 = vmatpush1.bf16.msra.mxu0 %v4642
    %5741 = vmatprep.subr.bf16.mxu0 %v4663
    %5742 = vmatpush1.bf16.msra.mxu0 %v4662
    %5743 = vmatprep.subr.bf16.mxu0 %v4683
    %5744 = vmatpush1.bf16.msra.mxu0 %v4682
    %5745 = vmatprep.subr.bf16.mxu0 %v4703
    %5746 = vmatpush1.bf16.msra.mxu0 %v4702
    %5747 = vmatprep.subr.bf16.mxu0 %v4723
    %5748 = vmatpush1.bf16.msra.mxu0 %v4722
    %5749 = vmatprep.subr.bf16.mxu0 %v4743
    %5750 = vmatpush1.bf16.msra.mxu0 %v4742
    %5751 = vmatprep.subr.bf16.mxu0 %v4763
    %5752 = vmatpush1.bf16.msra.mxu0 %v4762
    %5753 = vmatprep.subr.bf16.mxu0 %v4783
    %5754 = vmatpush1.bf16.msra.mxu0 %v4782
    %5755 = vmatprep.subr.bf16.mxu0 %v4803
    %5756 = vmatpush1.bf16.msra.mxu0 %v4802
    %5757 = vmatprep.subr.bf16.mxu0 %v4823
    %5758 = vmatpush1.bf16.msra.mxu0 %v4822
    %5759 = vmatprep.subr.bf16.mxu0 %v4843
    %5760 = vmatpush1.bf16.msra.mxu0 %v4842
    %5761 = vmatprep.subr.bf16.mxu0 %v4863
    %5762 = vmatpush1.bf16.msra.mxu0 %v4862
    %5763 = vmatprep.subr.bf16.mxu0 %v4883
    %5764 = vmatpush1.bf16.msra.mxu0 %v4882
    %5765 = vmatprep.subr.bf16.mxu0 %v4903
    %5766 = vmatpush1.bf16.msra.mxu0 %v4902
    %5767 = vmatprep.mubr.bf16.mxu0 %v2347
    %5768 = vmatmul.mubr.bf16.gmra.mrb[0].mxu0 %v2346
    %v5769 = vpop.f32.mrb[0].mxu0
    %v5770 = vadd.f32 0.0, %v5769
    %v5771 = vpop.f32.mrb[0].mxu0
    %v5772 = vadd.f32 0.0, %v5771
    %v5773 = vpop.f32.mrb[0].mxu0
    %v5774 = vadd.f32 0.0, %v5773
    %v5775 = vpop.f32.mrb[0].mxu0
    %v5776 = vadd.f32 0.0, %v5775
    %5777 = vmatprep.mubr.bf16.mxu0 %v2351
    %5778 = vmatmul.mubr.bf16.gmra.mrb[0].mxu0 %v2350
    %v5779 = vpop.f32.mrb[0].mxu0
    %v5780 = vadd.f32 0.0, %v5779
    %v5781 = vpop.f32.mrb[0].mxu0
    %v5782 = vadd.f32 0.0, %v5781
    %v5783 = vpop.f32.mrb[0].mxu0
    %v5784 = vadd.f32 0.0, %v5783
    %v5785 = vpop.f32.mrb[0].mxu0
    %v5786 = vadd.f32 0.0, %v5785
    %5787 = vmatprep.mubr.bf16.mxu0 %v2355
    %5788 = vmatmul.mubr.bf16.gmra.mrb[0].mxu0 %v2354
    %v5789 = vpop.f32.mrb[0].mxu0
    %v5790 = vadd.f32 0.0, %v5789
    %v5791 = vpop.f32.mrb[0].mxu0
    %v5792 = vadd.f32 0.0, %v5791
    %v5793 = vpop.f32.mrb[0].mxu0
    %v5794 = vadd.f32 0.0, %v5793
    %v5795 = vpop.f32.mrb[0].mxu0
    %v5796 = vadd.f32 0.0, %v5795
    %5797 = vmatprep.mubr.bf16.mxu0 %v2359
    %5798 = vmatmul.mubr.bf16.gmra.mrb[0].mxu0 %v2358
    %v5799 = vpop.f32.mrb[0].mxu0
    %v5800 = vadd.f32 0.0, %v5799
    %v5801 = vpop.f32.mrb[0].mxu0
    %v5802 = vadd.f32 0.0, %v5801
    %v5803 = vpop.f32.mrb[0].mxu0
    %v5804 = vadd.f32 0.0, %v5803
    %v5805 = vpop.f32.mrb[0].mxu0
    %v5806 = vadd.f32 0.0, %v5805
    %5807 = vdwg.mxu0
    %5808 = vmatprep.subr.bf16.mxu0 %v4923
    %5809 = vmatpush1.bf16.msra.mxu0 %v4922
    %5810 = vmatprep.subr.bf16.mxu0 %v4943
    %5811 = vmatpush1.bf16.msra.mxu0 %v4942
    %5812 = vmatprep.subr.bf16.mxu0 %v4963
    %5813 = vmatpush1.bf16.msra.mxu0 %v4962
    %5814 = vmatprep.subr.bf16.mxu0 %v4983
    %5815 = vmatpush1.bf16.msra.mxu0 %v4982
    %5816 = vmatprep.subr.bf16.mxu0 %v5003
    %5817 = vmatpush1.bf16.msra.mxu0 %v5002
    %5818 = vmatprep.subr.bf16.mxu0 %v5023
    %5819 = vmatpush1.bf16.msra.mxu0 %v5022
    %5820 = vmatprep.subr.bf16.mxu0 %v5043
    %5821 = vmatpush1.bf16.msra.mxu0 %v5042
    %5822 = vmatprep.subr.bf16.mxu0 %v5063
    %5823 = vmatpush1.bf16.msra.mxu0 %v5062
    %5824 = vmatprep.subr.bf16.mxu0 %v5083
    %5825 = vmatpush1.bf16.msra.mxu0 %v5082
    %5826 = vmatprep.subr.bf16.mxu0 %v5103
    %5827 = vmatpush1.bf16.msra.mxu0 %v5102
    %5828 = vmatprep.subr.bf16.mxu0 %v5123
    %5829 = vmatpush1.bf16.msra.mxu0 %v5122
    %5830 = vmatprep.subr.bf16.mxu0 %v5143
    %5831 = vmatpush1.bf16.msra.mxu0 %v5142
    %5832 = vmatprep.subr.bf16.mxu0 0
    %5833 = vmatpush1.bf16.msra.mxu0 0
    %5834 = vmatprep.subr.bf16.mxu0 0
    %5835 = vmatpush1.bf16.msra.mxu0 0
    %5836 = vmatprep.subr.bf16.mxu0 0
    %5837 = vmatpush1.bf16.msra.mxu0 0
    %5838 = vmatprep.subr.bf16.mxu0 0
    %5839 = vmatpush1.bf16.msra.mxu0 0
    %5840 = vmatprep.mubr.bf16.mxu0 %v5724
    %5841 = vmatmul.mubr.bf16.gmra.mrb[0].mxu0 %v2348
    %v5842 = vpop.f32.mrb[0].mxu0
    %v5843 = vadd.f32 %v5770, %v5842
    %v5844 = vpop.f32.mrb[0].mxu0
    %v5845 = vadd.f32 %v5772, %v5844
    %v5846 = vpop.f32.mrb[0].mxu0
    %v5847 = vadd.f32 %v5774, %v5846
    %v5848 = vpop.f32.mrb[0].mxu0
    %v5849 = vadd.f32 %v5776, %v5848
    %5850 = vmatprep.mubr.bf16.mxu0 %v5727
    %5851 = vmatmul.mubr.bf16.gmra.mrb[0].mxu0 %v2352
    %v5852 = vpop.f32.mrb[0].mxu0
    %v5853 = vadd.f32 %v5780, %v5852
    %v5854 = vpop.f32.mrb[0].mxu0
    %v5855 = vadd.f32 %v5782, %v5854
    %v5856 = vpop.f32.mrb[0].mxu0
    %v5857 = vadd.f32 %v5784, %v5856
    %v5858 = vpop.f32.mrb[0].mxu0
    %v5859 = vadd.f32 %v5786, %v5858
    %5860 = vmatprep.mubr.bf16.mxu0 %v5730
    %5861 = vmatmul.mubr.bf16.gmra.mrb[0].mxu0 %v2356
    %v5862 = vpop.f32.mrb[0].mxu0
    %v5863 = vadd.f32 %v5790, %v5862
    %v5864 = vpop.f32.mrb[0].mxu0
    %v5865 = vadd.f32 %v5792, %v5864
    %v5866 = vpop.f32.mrb[0].mxu0
    %v5867 = vadd.f32 %v5794, %v5866
    %v5868 = vpop.f32.mrb[0].mxu0
    %v5869 = vadd.f32 %v5796, %v5868
    %5870 = vmatprep.mubr.bf16.mxu0 %v5733
    %5871 = vmatmul.mubr.bf16.gmra.mrb[0].mxu0 %v2360
    %v5872 = vpop.f32.mrb[0].mxu0
    %v5873 = vadd.f32 %v5800, %v5872
    %v5874 = vpop.f32.mrb[0].mxu0
    %v5875 = vadd.f32 %v5802, %v5874
    %v5876 = vpop.f32.mrb[0].mxu0
    %v5877 = vadd.f32 %v5804, %v5876
    %v5878 = vpop.f32.mrb[0].mxu0
    %v5879 = vadd.f32 %v5806, %v5878
    %5880 = vdwg.mxu0
    %5881 = vmatprep.subr.bf16.mxu0 %v4605
    %5882 = vmatpush1.bf16.msra.mxu0 %v4604
    %5883 = vmatprep.subr.bf16.mxu0 %v4625
    %5884 = vmatpush1.bf16.msra.mxu0 %v4624
    %5885 = vmatprep.subr.bf16.mxu0 %v4645
    %5886 = vmatpush1.bf16.msra.mxu0 %v4644
    %5887 = vmatprep.subr.bf16.mxu0 %v4665
    %5888 = vmatpush1.bf16.msra.mxu0 %v4664
    %5889 = vmatprep.subr.bf16.mxu0 %v4685
    %5890 = vmatpush1.bf16.msra.mxu0 %v4684
    %5891 = vmatprep.subr.bf16.mxu0 %v4705
    %5892 = vmatpush1.bf16.msra.mxu0 %v4704
    %5893 = vmatprep.subr.bf16.mxu0 %v4725
    %5894 = vmatpush1.bf16.msra.mxu0 %v4724
    %5895 = vmatprep.subr.bf16.mxu0 %v4745
    %5896 = vmatpush1.bf16.msra.mxu0 %v4744
    %5897 = vmatprep.subr.bf16.mxu0 %v4765
    %5898 = vmatpush1.bf16.msra.mxu0 %v4764
    %5899 = vmatprep.subr.bf16.mxu0 %v4785
    %5900 = vmatpush1.bf16.msra.mxu0 %v4784
    %5901 = vmatprep.subr.bf16.mxu0 %v4805
    %5902 = vmatpush1.bf16.msra.mxu0 %v4804
    %5903 = vmatprep.subr.bf16.mxu0 %v4825
    %5904 = vmatpush1.bf16.msra.mxu0 %v4824
    %5905 = vmatprep.subr.bf16.mxu0 %v4845
    %5906 = vmatpush1.bf16.msra.mxu0 %v4844
    %5907 = vmatprep.subr.bf16.mxu0 %v4865
    %5908 = vmatpush1.bf16.msra.mxu0 %v4864
    %5909 = vmatprep.subr.bf16.mxu0 %v4885
    %5910 = vmatpush1.bf16.msra.mxu0 %v4884
    %5911 = vmatprep.subr.bf16.mxu0 %v4905
    %5912 = vmatpush1.bf16.msra.mxu0 %v4904
    %5913 = vmatprep.mubr.bf16.mxu0 %v2347
    %5914 = vmatmul.mubr.bf16.gmra.mrb[0].mxu0 %v2346
    %v5915 = vpop.f32.mrb[0].mxu0
    %v5916 = vadd.f32 0.0, %v5915
    %v5917 = vpop.f32.mrb[0].mxu0
    %v5918 = vadd.f32 0.0, %v5917
    %v5919 = vpop.f32.mrb[0].mxu0
    %v5920 = vadd.f32 0.0, %v5919
    %v5921 = vpop.f32.mrb[0].mxu0
    %v5922 = vadd.f32 0.0, %v5921
    %5923 = vmatprep.mubr.bf16.mxu0 %v2351
    %5924 = vmatmul.mubr.bf16.gmra.mrb[0].mxu0 %v2350
    %v5925 = vpop.f32.mrb[0].mxu0
    %v5926 = vadd.f32 0.0, %v5925
    %v5927 = vpop.f32.mrb[0].mxu0
    %v5928 = vadd.f32 0.0, %v5927
    %v5929 = vpop.f32.mrb[0].mxu0
    %v5930 = vadd.f32 0.0, %v5929
    %v5931 = vpop.f32.mrb[0].mxu0
    %v5932 = vadd.f32 0.0, %v5931
    %5933 = vmatprep.mubr.bf16.mxu0 %v2355
    %5934 = vmatmul.mubr.bf16.gmra.mrb[0].mxu0 %v2354
    %v5935 = vpop.f32.mrb[0].mxu0
    %v5936 = vadd.f32 0.0, %v5935
    %v5937 = vpop.f32.mrb[0].mxu0
    %v5938 = vadd.f32 0.0, %v5937
    %v5939 = vpop.f32.mrb[0].mxu0
    %v5940 = vadd.f32 0.0, %v5939
    %v5941 = vpop.f32.mrb[0].mxu0
    %v5942 = vadd.f32 0.0, %v5941
    %5943 = vmatprep.mubr.bf16.mxu0 %v2359
    %5944 = vmatmul.mubr.bf16.gmra.mrb[0].mxu0 %v2358
    %v5945 = vpop.f32.mrb[0].mxu0
    %v5946 = vadd.f32 0.0, %v5945
    %v5947 = vpop.f32.mrb[0].mxu0
    %v5948 = vadd.f32 0.0, %v5947
    %v5949 = vpop.f32.mrb[0].mxu0
    %v5950 = vadd.f32 0.0, %v5949
    %v5951 = vpop.f32.mrb[0].mxu0
    %v5952 = vadd.f32 0.0, %v5951
    %5953 = vdwg.mxu0
    %5954 = vmatprep.subr.bf16.mxu0 %v4925
    %5955 = vmatpush1.bf16.msra.mxu0 %v4924
    %5956 = vmatprep.subr.bf16.mxu0 %v4945
    %5957 = vmatpush1.bf16.msra.mxu0 %v4944
    %5958 = vmatprep.subr.bf16.mxu0 %v4965
    %5959 = vmatpush1.bf16.msra.mxu0 %v4964
    %5960 = vmatprep.subr.bf16.mxu0 %v4985
    %5961 = vmatpush1.bf16.msra.mxu0 %v4984
    %5962 = vmatprep.subr.bf16.mxu0 %v5005
    %5963 = vmatpush1.bf16.msra.mxu0 %v5004
    %5964 = vmatprep.subr.bf16.mxu0 %v5025
    %5965 = vmatpush1.bf16.msra.mxu0 %v5024
    %5966 = vmatprep.subr.bf16.mxu0 %v5045
    %5967 = vmatpush1.bf16.msra.mxu0 %v5044
    %5968 = vmatprep.subr.bf16.mxu0 %v5065
    %5969 = vmatpush1.bf16.msra.mxu0 %v5064
    %5970 = vmatprep.subr.bf16.mxu0 %v5085
    %5971 = vmatpush1.bf16.msra.mxu0 %v5084
    %5972 = vmatprep.subr.bf16.mxu0 %v5105
    %5973 = vmatpush1.bf16.msra.mxu0 %v5104
    %5974 = vmatprep.subr.bf16.mxu0 %v5125
    %5975 = vmatpush1.bf16.msra.mxu0 %v5124
    %5976 = vmatprep.subr.bf16.mxu0 %v5145
    %5977 = vmatpush1.bf16.msra.mxu0 %v5144
    %5978 = vmatprep.subr.bf16.mxu0 0
    %5979 = vmatpush1.bf16.msra.mxu0 0
    %5980 = vmatprep.subr.bf16.mxu0 0
    %5981 = vmatpush1.bf16.msra.mxu0 0
    %5982 = vmatprep.subr.bf16.mxu0 0
    %5983 = vmatpush1.bf16.msra.mxu0 0
    %5984 = vmatprep.subr.bf16.mxu0 0
    %5985 = vmatpush1.bf16.msra.mxu0 0
    %5986 = vmatprep.mubr.bf16.mxu0 %v5724
    %5987 = vmatmul.mubr.bf16.gmra.mrb[0].mxu0 %v2348
    %v5988 = vpop.f32.mrb[0].mxu0
    %v5989 = vadd.f32 %v5916, %v5988
    %v5990 = vpop.f32.mrb[0].mxu0
    %v5991 = vadd.f32 %v5918, %v5990
    %v5992 = vpop.f32.mrb[0].mxu0
    %v5993 = vadd.f32 %v5920, %v5992
    %v5994 = vpop.f32.mrb[0].mxu0
    %v5995 = vadd.f32 %v5922, %v5994
    %5996 = vmatprep.mubr.bf16.mxu0 %v5727
    %5997 = vmatmul.mubr.bf16.gmra.mrb[0].mxu0 %v2352
    %v5998 = vpop.f32.mrb[0].mxu0
    %v5999 = vadd.f32 %v5926, %v5998
    %v6000 = vpop.f32.mrb[0].mxu0
    %v6001 = vadd.f32 %v5928, %v6000
    %v6002 = vpop.f32.mrb[0].mxu0
    %v6003 = vadd.f32 %v5930, %v6002
    %v6004 = vpop.f32.mrb[0].mxu0
    %v6005 = vadd.f32 %v5932, %v6004
    %6006 = vmatprep.mubr.bf16.mxu0 %v5730
    %6007 = vmatmul.mubr.bf16.gmra.mrb[0].mxu0 %v2356
    %v6008 = vpop.f32.mrb[0].mxu0
    %v6009 = vadd.f32 %v5936, %v6008
    %v6010 = vpop.f32.mrb[0].mxu0
    %v6011 = vadd.f32 %v5938, %v6010
    %v6012 = vpop.f32.mrb[0].mxu0
    %v6013 = vadd.f32 %v5940, %v6012
    %v6014 = vpop.f32.mrb[0].mxu0
    %v6015 = vadd.f32 %v5942, %v6014
    %6016 = vmatprep.mubr.bf16.mxu0 %v5733
    %6017 = vmatmul.mubr.bf16.gmra.mrb[0].mxu0 %v2360
    %v6018 = vpop.f32.mrb[0].mxu0
    %v6019 = vadd.f32 %v5946, %v6018
    %v6020 = vpop.f32.mrb[0].mxu0
    %v6021 = vadd.f32 %v5948, %v6020
    %v6022 = vpop.f32.mrb[0].mxu0
    %v6023 = vadd.f32 %v5950, %v6022
    %v6024 = vpop.f32.mrb[0].mxu0
    %v6025 = vadd.f32 %v5952, %v6024
    %6026 = vdwg.mxu0
    %6027 = vmatprep.subr.bf16.mxu0 %v4607
    %6028 = vmatpush1.bf16.msra.mxu0 %v4606
    %6029 = vmatprep.subr.bf16.mxu0 %v4627
    %6030 = vmatpush1.bf16.msra.mxu0 %v4626
    %6031 = vmatprep.subr.bf16.mxu0 %v4647
    %6032 = vmatpush1.bf16.msra.mxu0 %v4646
    %6033 = vmatprep.subr.bf16.mxu0 %v4667
    %6034 = vmatpush1.bf16.msra.mxu0 %v4666
    %6035 = vmatprep.subr.bf16.mxu0 %v4687
    %6036 = vmatpush1.bf16.msra.mxu0 %v4686
    %6037 = vmatprep.subr.bf16.mxu0 %v4707
    %6038 = vmatpush1.bf16.msra.mxu0 %v4706
    %6039 = vmatprep.subr.bf16.mxu0 %v4727
    %6040 = vmatpush1.bf16.msra.mxu0 %v4726
    %6041 = vmatprep.subr.bf16.mxu0 %v4747
    %6042 = vmatpush1.bf16.msra.mxu0 %v4746
    %6043 = vmatprep.subr.bf16.mxu0 %v4767
    %6044 = vmatpush1.bf16.msra.mxu0 %v4766
    %6045 = vmatprep.subr.bf16.mxu0 %v4787
    %6046 = vmatpush1.bf16.msra.mxu0 %v4786
    %6047 = vmatprep.subr.bf16.mxu0 %v4807
    %6048 = vmatpush1.bf16.msra.mxu0 %v4806
    %6049 = vmatprep.subr.bf16.mxu0 %v4827
    %6050 = vmatpush1.bf16.msra.mxu0 %v4826
    %6051 = vmatprep.subr.bf16.mxu0 %v4847
    %6052 = vmatpush1.bf16.msra.mxu0 %v4846
    %6053 = vmatprep.subr.bf16.mxu0 %v4867
    %6054 = vmatpush1.bf16.msra.mxu0 %v4866
    %6055 = vmatprep.subr.bf16.mxu0 %v4887
    %6056 = vmatpush1.bf16.msra.mxu0 %v4886
    %6057 = vmatprep.subr.bf16.mxu0 %v4907
    %6058 = vmatpush1.bf16.msra.mxu0 %v4906
    %6059 = vmatprep.mubr.bf16.mxu0 %v2347
    %6060 = vmatmul.mubr.bf16.gmra.mrb[0].mxu0 %v2346
    %v6061 = vpop.f32.mrb[0].mxu0
    %v6062 = vadd.f32 0.0, %v6061
    %v6063 = vpop.f32.mrb[0].mxu0
    %v6064 = vadd.f32 0.0, %v6063
    %v6065 = vpop.f32.mrb[0].mxu0
    %v6066 = vadd.f32 0.0, %v6065
    %v6067 = vpop.f32.mrb[0].mxu0
    %v6068 = vadd.f32 0.0, %v6067
    %6069 = vmatprep.mubr.bf16.mxu0 %v2351
    %6070 = vmatmul.mubr.bf16.gmra.mrb[0].mxu0 %v2350
    %v6071 = vpop.f32.mrb[0].mxu0
    %v6072 = vadd.f32 0.0, %v6071
    %v6073 = vpop.f32.mrb[0].mxu0
    %v6074 = vadd.f32 0.0, %v6073
    %v6075 = vpop.f32.mrb[0].mxu0
    %v6076 = vadd.f32 0.0, %v6075
    %v6077 = vpop.f32.mrb[0].mxu0
    %v6078 = vadd.f32 0.0, %v6077
    %6079 = vmatprep.mubr.bf16.mxu0 %v2355
    %6080 = vmatmul.mubr.bf16.gmra.mrb[0].mxu0 %v2354
    %v6081 = vpop.f32.mrb[0].mxu0
    %v6082 = vadd.f32 0.0, %v6081
    %v6083 = vpop.f32.mrb[0].mxu0
    %v6084 = vadd.f32 0.0, %v6083
    %v6085 = vpop.f32.mrb[0].mxu0
    %v6086 = vadd.f32 0.0, %v6085
    %v6087 = vpop.f32.mrb[0].mxu0
    %v6088 = vadd.f32 0.0, %v6087
    %6089 = vmatprep.mubr.bf16.mxu0 %v2359
    %6090 = vmatmul.mubr.bf16.gmra.mrb[0].mxu0 %v2358
    %v6091 = vpop.f32.mrb[0].mxu0
    %v6092 = vadd.f32 0.0, %v6091
    %v6093 = vpop.f32.mrb[0].mxu0
    %v6094 = vadd.f32 0.0, %v6093
    %v6095 = vpop.f32.mrb[0].mxu0
    %v6096 = vadd.f32 0.0, %v6095
    %v6097 = vpop.f32.mrb[0].mxu0
    %v6098 = vadd.f32 0.0, %v6097
    %6099 = vdwg.mxu0
    %6100 = vmatprep.subr.bf16.mxu0 %v4927
    %6101 = vmatpush1.bf16.msra.mxu0 %v4926
    %6102 = vmatprep.subr.bf16.mxu0 %v4947
    %6103 = vmatpush1.bf16.msra.mxu0 %v4946
    %6104 = vmatprep.subr.bf16.mxu0 %v4967
    %6105 = vmatpush1.bf16.msra.mxu0 %v4966
    %6106 = vmatprep.subr.bf16.mxu0 %v4987
    %6107 = vmatpush1.bf16.msra.mxu0 %v4986
    %6108 = vmatprep.subr.bf16.mxu0 %v5007
    %6109 = vmatpush1.bf16.msra.mxu0 %v5006
    %6110 = vmatprep.subr.bf16.mxu0 %v5027
    %6111 = vmatpush1.bf16.msra.mxu0 %v5026
    %6112 = vmatprep.subr.bf16.mxu0 %v5047
    %6113 = vmatpush1.bf16.msra.mxu0 %v5046
    %6114 = vmatprep.subr.bf16.mxu0 %v5067
    %6115 = vmatpush1.bf16.msra.mxu0 %v5066
    %6116 = vmatprep.subr.bf16.mxu0 %v5087
    %6117 = vmatpush1.bf16.msra.mxu0 %v5086
    %6118 = vmatprep.subr.bf16.mxu0 %v5107
    %6119 = vmatpush1.bf16.msra.mxu0 %v5106
    %6120 = vmatprep.subr.bf16.mxu0 %v5127
    %6121 = vmatpush1.bf16.msra.mxu0 %v5126
    %6122 = vmatprep.subr.bf16.mxu0 %v5147
    %6123 = vmatpush1.bf16.msra.mxu0 %v5146
    %6124 = vmatprep.subr.bf16.mxu0 0
    %6125 = vmatpush1.bf16.msra.mxu0 0
    %6126 = vmatprep.subr.bf16.mxu0 0
    %6127 = vmatpush1.bf16.msra.mxu0 0
    %6128 = vmatprep.subr.bf16.mxu0 0
    %6129 = vmatpush1.bf16.msra.mxu0 0
    %6130 = vmatprep.subr.bf16.mxu0 0
    %6131 = vmatpush1.bf16.msra.mxu0 0
    %6132 = vmatprep.mubr.bf16.mxu0 %v5724
    %6133 = vmatmul.mubr.bf16.gmra.mrb[0].mxu0 %v2348
    %v6134 = vpop.f32.mrb[0].mxu0
    %v6135 = vadd.f32 %v6062, %v6134
    %v6136 = vpop.f32.mrb[0].mxu0
    %v6137 = vadd.f32 %v6064, %v6136
    %v6138 = vpop.f32.mrb[0].mxu0
    %v6139 = vadd.f32 %v6066, %v6138
    %v6140 = vpop.f32.mrb[0].mxu0
    %v6141 = vadd.f32 %v6068, %v6140
    %6142 = vmatprep.mubr.bf16.mxu0 %v5727
    %6143 = vmatmul.mubr.bf16.gmra.mrb[0].mxu0 %v2352
    %v6144 = vpop.f32.mrb[0].mxu0
    %v6145 = vadd.f32 %v6072, %v6144
    %v6146 = vpop.f32.mrb[0].mxu0
    %v6147 = vadd.f32 %v6074, %v6146
    %v6148 = vpop.f32.mrb[0].mxu0
    %v6149 = vadd.f32 %v6076, %v6148
    %v6150 = vpop.f32.mrb[0].mxu0
    %v6151 = vadd.f32 %v6078, %v6150
    %6152 = vmatprep.mubr.bf16.mxu0 %v5730
    %6153 = vmatmul.mubr.bf16.gmra.mrb[0].mxu0 %v2356
    %v6154 = vpop.f32.mrb[0].mxu0
    %v6155 = vadd.f32 %v6082, %v6154
    %v6156 = vpop.f32.mrb[0].mxu0
    %v6157 = vadd.f32 %v6084, %v6156
    %v6158 = vpop.f32.mrb[0].mxu0
    %v6159 = vadd.f32 %v6086, %v6158
    %v6160 = vpop.f32.mrb[0].mxu0
    %v6161 = vadd.f32 %v6088, %v6160
    %6162 = vmatprep.mubr.bf16.mxu0 %v5733
    %6163 = vmatmul.mubr.bf16.gmra.mrb[0].mxu0 %v2360
    %v6164 = vpop.f32.mrb[0].mxu0
    %v6165 = vadd.f32 %v6092, %v6164
    %v6166 = vpop.f32.mrb[0].mxu0
    %v6167 = vadd.f32 %v6094, %v6166
    %v6168 = vpop.f32.mrb[0].mxu0
    %v6169 = vadd.f32 %v6096, %v6168
    %v6170 = vpop.f32.mrb[0].mxu0
    %v6171 = vadd.f32 %v6098, %v6170
    %6172 = vdwg.mxu0
    %6173 = vmatprep.subr.bf16.mxu0 %v4609
    %6174 = vmatpush1.bf16.msra.mxu0 %v4608
    %6175 = vmatprep.subr.bf16.mxu0 %v4629
    %6176 = vmatpush1.bf16.msra.mxu0 %v4628
    %6177 = vmatprep.subr.bf16.mxu0 %v4649
    %6178 = vmatpush1.bf16.msra.mxu0 %v4648
    %6179 = vmatprep.subr.bf16.mxu0 %v4669
    %6180 = vmatpush1.bf16.msra.mxu0 %v4668
    %6181 = vmatprep.subr.bf16.mxu0 %v4689
    %6182 = vmatpush1.bf16.msra.mxu0 %v4688
    %6183 = vmatprep.subr.bf16.mxu0 %v4709
    %6184 = vmatpush1.bf16.msra.mxu0 %v4708
    %6185 = vmatprep.subr.bf16.mxu0 %v4729
    %6186 = vmatpush1.bf16.msra.mxu0 %v4728
    %6187 = vmatprep.subr.bf16.mxu0 %v4749
    %6188 = vmatpush1.bf16.msra.mxu0 %v4748
    %6189 = vmatprep.subr.bf16.mxu0 %v4769
    %6190 = vmatpush1.bf16.msra.mxu0 %v4768
    %6191 = vmatprep.subr.bf16.mxu0 %v4789
    %6192 = vmatpush1.bf16.msra.mxu0 %v4788
    %6193 = vmatprep.subr.bf16.mxu0 %v4809
    %6194 = vmatpush1.bf16.msra.mxu0 %v4808
    %6195 = vmatprep.subr.bf16.mxu0 %v4829
    %6196 = vmatpush1.bf16.msra.mxu0 %v4828
    %6197 = vmatprep.subr.bf16.mxu0 %v4849
    %6198 = vmatpush1.bf16.msra.mxu0 %v4848
    %6199 = vmatprep.subr.bf16.mxu0 %v4869
    %6200 = vmatpush1.bf16.msra.mxu0 %v4868
    %6201 = vmatprep.subr.bf16.mxu0 %v4889
    %6202 = vmatpush1.bf16.msra.mxu0 %v4888
    %6203 = vmatprep.subr.bf16.mxu0 %v4909
    %6204 = vmatpush1.bf16.msra.mxu0 %v4908
    %6205 = vmatprep.mubr.bf16.mxu0 %v2347
    %6206 = vmatmul.mubr.bf16.gmra.mrb[0].mxu0 %v2346
    %v6207 = vpop.f32.mrb[0].mxu0
    %v6208 = vadd.f32 0.0, %v6207
    %v6209 = vpop.f32.mrb[0].mxu0
    %v6210 = vadd.f32 0.0, %v6209
    %v6211 = vpop.f32.mrb[0].mxu0
    %v6212 = vadd.f32 0.0, %v6211
    %v6213 = vpop.f32.mrb[0].mxu0
    %v6214 = vadd.f32 0.0, %v6213
    %6215 = vmatprep.mubr.bf16.mxu0 %v2351
    %6216 = vmatmul.mubr.bf16.gmra.mrb[0].mxu0 %v2350
    %v6217 = vpop.f32.mrb[0].mxu0
    %v6218 = vadd.f32 0.0, %v6217
    %v6219 = vpop.f32.mrb[0].mxu0
    %v6220 = vadd.f32 0.0, %v6219
    %v6221 = vpop.f32.mrb[0].mxu0
    %v6222 = vadd.f32 0.0, %v6221
    %v6223 = vpop.f32.mrb[0].mxu0
    %v6224 = vadd.f32 0.0, %v6223
    %6225 = vmatprep.mubr.bf16.mxu0 %v2355
    %6226 = vmatmul.mubr.bf16.gmra.mrb[0].mxu0 %v2354
    %v6227 = vpop.f32.mrb[0].mxu0
    %v6228 = vadd.f32 0.0, %v6227
    %v6229 = vpop.f32.mrb[0].mxu0
    %v6230 = vadd.f32 0.0, %v6229
    %v6231 = vpop.f32.mrb[0].mxu0
    %v6232 = vadd.f32 0.0, %v6231
    %v6233 = vpop.f32.mrb[0].mxu0
    %v6234 = vadd.f32 0.0, %v6233
    %6235 = vmatprep.mubr.bf16.mxu0 %v2359
    %6236 = vmatmul.mubr.bf16.gmra.mrb[0].mxu0 %v2358
    %v6237 = vpop.f32.mrb[0].mxu0
    %v6238 = vadd.f32 0.0, %v6237
    %v6239 = vpop.f32.mrb[0].mxu0
    %v6240 = vadd.f32 0.0, %v6239
    %v6241 = vpop.f32.mrb[0].mxu0
    %v6242 = vadd.f32 0.0, %v6241
    %v6243 = vpop.f32.mrb[0].mxu0
    %v6244 = vadd.f32 0.0, %v6243
    %6245 = vdwg.mxu0
    %6246 = vmatprep.subr.bf16.mxu0 %v4929
    %6247 = vmatpush1.bf16.msra.mxu0 %v4928
    %6248 = vmatprep.subr.bf16.mxu0 %v4949
    %6249 = vmatpush1.bf16.msra.mxu0 %v4948
    %6250 = vmatprep.subr.bf16.mxu0 %v4969
    %6251 = vmatpush1.bf16.msra.mxu0 %v4968
    %6252 = vmatprep.subr.bf16.mxu0 %v4989
    %6253 = vmatpush1.bf16.msra.mxu0 %v4988
    %6254 = vmatprep.subr.bf16.mxu0 %v5009
    %6255 = vmatpush1.bf16.msra.mxu0 %v5008
    %6256 = vmatprep.subr.bf16.mxu0 %v5029
    %6257 = vmatpush1.bf16.msra.mxu0 %v5028
    %6258 = vmatprep.subr.bf16.mxu0 %v5049
    %6259 = vmatpush1.bf16.msra.mxu0 %v5048
    %6260 = vmatprep.subr.bf16.mxu0 %v5069
    %6261 = vmatpush1.bf16.msra.mxu0 %v5068
    %6262 = vmatprep.subr.bf16.mxu0 %v5089
    %6263 = vmatpush1.bf16.msra.mxu0 %v5088
    %6264 = vmatprep.subr.bf16.mxu0 %v5109
    %6265 = vmatpush1.bf16.msra.mxu0 %v5108
    %6266 = vmatprep.subr.bf16.mxu0 %v5129
    %6267 = vmatpush1.bf16.msra.mxu0 %v5128
    %6268 = vmatprep.subr.bf16.mxu0 %v5149
    %6269 = vmatpush1.bf16.msra.mxu0 %v5148
    %6270 = vmatprep.subr.bf16.mxu0 0
    %6271 = vmatpush1.bf16.msra.mxu0 0
    %6272 = vmatprep.subr.bf16.mxu0 0
    %6273 = vmatpush1.bf16.msra.mxu0 0
    %6274 = vmatprep.subr.bf16.mxu0 0
    %6275 = vmatpush1.bf16.msra.mxu0 0
    %6276 = vmatprep.subr.bf16.mxu0 0
    %6277 = vmatpush1.bf16.msra.mxu0 0
    %6278 = vmatprep.mubr.bf16.mxu0 %v5724
    %6279 = vmatmul.mubr.bf16.gmra.mrb[0].mxu0 %v2348
    %v6280 = vpop.f32.mrb[0].mxu0
    %v6281 = vadd.f32 %v6208, %v6280
    %v6282 = vpop.f32.mrb[0].mxu0
    %v6283 = vadd.f32 %v6210, %v6282
    %v6284 = vpop.f32.mrb[0].mxu0
    %v6285 = vadd.f32 %v6212, %v6284
    %v6286 = vpop.f32.mrb[0].mxu0
    %v6287 = vadd.f32 %v6214, %v6286
    %6288 = vmatprep.mubr.bf16.mxu0 %v5727
    %6289 = vmatmul.mubr.bf16.gmra.mrb[0].mxu0 %v2352
    %v6290 = vpop.f32.mrb[0].mxu0
    %v6291 = vadd.f32 %v6218, %v6290
    %v6292 = vpop.f32.mrb[0].mxu0
    %v6293 = vadd.f32 %v6220, %v6292
    %v6294 = vpop.f32.mrb[0].mxu0
    %v6295 = vadd.f32 %v6222, %v6294
    %v6296 = vpop.f32.mrb[0].mxu0
    %v6297 = vadd.f32 %v6224, %v6296
    %6298 = vmatprep.mubr.bf16.mxu0 %v5730
    %6299 = vmatmul.mubr.bf16.gmra.mrb[0].mxu0 %v2356
    %v6300 = vpop.f32.mrb[0].mxu0
    %v6301 = vadd.f32 %v6228, %v6300
    %v6302 = vpop.f32.mrb[0].mxu0
    %v6303 = vadd.f32 %v6230, %v6302
    %v6304 = vpop.f32.mrb[0].mxu0
    %v6305 = vadd.f32 %v6232, %v6304
    %v6306 = vpop.f32.mrb[0].mxu0
    %v6307 = vadd.f32 %v6234, %v6306
    %6308 = vmatprep.mubr.bf16.mxu0 %v5733
    %6309 = vmatmul.mubr.bf16.gmra.mrb[0].mxu0 %v2360
    %v6310 = vpop.f32.mrb[0].mxu0
    %v6311 = vadd.f32 %v6238, %v6310
    %v6312 = vpop.f32.mrb[0].mxu0
    %v6313 = vadd.f32 %v6240, %v6312
    %v6314 = vpop.f32.mrb[0].mxu0
    %v6315 = vadd.f32 %v6242, %v6314
    %v6316 = vpop.f32.mrb[0].mxu0
    %v6317 = vadd.f32 %v6244, %v6316
    %6318 = vdwg.mxu0
    %6319 = vmatprep.subr.bf16.mxu0 %v4611
    %6320 = vmatpush1.bf16.msra.mxu0 %v4610
    %6321 = vmatprep.subr.bf16.mxu0 %v4631
    %6322 = vmatpush1.bf16.msra.mxu0 %v4630
    %6323 = vmatprep.subr.bf16.mxu0 %v4651
    %6324 = vmatpush1.bf16.msra.mxu0 %v4650
    %6325 = vmatprep.subr.bf16.mxu0 %v4671
    %6326 = vmatpush1.bf16.msra.mxu0 %v4670
    %6327 = vmatprep.subr.bf16.mxu0 %v4691
    %6328 = vmatpush1.bf16.msra.mxu0 %v4690
    %6329 = vmatprep.subr.bf16.mxu0 %v4711
    %6330 = vmatpush1.bf16.msra.mxu0 %v4710
    %6331 = vmatprep.subr.bf16.mxu0 %v4731
    %6332 = vmatpush1.bf16.msra.mxu0 %v4730
    %6333 = vmatprep.subr.bf16.mxu0 %v4751
    %6334 = vmatpush1.bf16.msra.mxu0 %v4750
    %6335 = vmatprep.subr.bf16.mxu0 %v4771
    %6336 = vmatpush1.bf16.msra.mxu0 %v4770
    %6337 = vmatprep.subr.bf16.mxu0 %v4791
    %6338 = vmatpush1.bf16.msra.mxu0 %v4790
    %6339 = vmatprep.subr.bf16.mxu0 %v4811
    %6340 = vmatpush1.bf16.msra.mxu0 %v4810
    %6341 = vmatprep.subr.bf16.mxu0 %v4831
    %6342 = vmatpush1.bf16.msra.mxu0 %v4830
    %6343 = vmatprep.subr.bf16.mxu0 %v4851
    %6344 = vmatpush1.bf16.msra.mxu0 %v4850
    %6345 = vmatprep.subr.bf16.mxu0 %v4871
    %6346 = vmatpush1.bf16.msra.mxu0 %v4870
    %6347 = vmatprep.subr.bf16.mxu0 %v4891
    %6348 = vmatpush1.bf16.msra.mxu0 %v4890
    %6349 = vmatprep.subr.bf16.mxu0 %v4911
    %6350 = vmatpush1.bf16.msra.mxu0 %v4910
    %6351 = vmatprep.mubr.bf16.mxu0 %v2347
    %6352 = vmatmul.mubr.bf16.gmra.mrb[0].mxu0 %v2346
    %v6353 = vpop.f32.mrb[0].mxu0
    %v6354 = vadd.f32 0.0, %v6353
    %v6355 = vpop.f32.mrb[0].mxu0
    %v6356 = vadd.f32 0.0, %v6355
    %v6357 = vpop.f32.mrb[0].mxu0
    %v6358 = vadd.f32 0.0, %v6357
    %v6359 = vpop.f32.mrb[0].mxu0
    %v6360 = vadd.f32 0.0, %v6359
    %6361 = vmatprep.mubr.bf16.mxu0 %v2351
    %6362 = vmatmul.mubr.bf16.gmra.mrb[0].mxu0 %v2350
    %v6363 = vpop.f32.mrb[0].mxu0
    %v6364 = vadd.f32 0.0, %v6363
    %v6365 = vpop.f32.mrb[0].mxu0
    %v6366 = vadd.f32 0.0, %v6365
    %v6367 = vpop.f32.mrb[0].mxu0
    %v6368 = vadd.f32 0.0, %v6367
    %v6369 = vpop.f32.mrb[0].mxu0
    %v6370 = vadd.f32 0.0, %v6369
    %6371 = vmatprep.mubr.bf16.mxu0 %v2355
    %6372 = vmatmul.mubr.bf16.gmra.mrb[0].mxu0 %v2354
    %v6373 = vpop.f32.mrb[0].mxu0
    %v6374 = vadd.f32 0.0, %v6373
    %v6375 = vpop.f32.mrb[0].mxu0
    %v6376 = vadd.f32 0.0, %v6375
    %v6377 = vpop.f32.mrb[0].mxu0
    %v6378 = vadd.f32 0.0, %v6377
    %v6379 = vpop.f32.mrb[0].mxu0
    %v6380 = vadd.f32 0.0, %v6379
    %6381 = vmatprep.mubr.bf16.mxu0 %v2359
    %6382 = vmatmul.mubr.bf16.gmra.mrb[0].mxu0 %v2358
    %v6383 = vpop.f32.mrb[0].mxu0
    %v6384 = vadd.f32 0.0, %v6383
    %v6385 = vpop.f32.mrb[0].mxu0
    %v6386 = vadd.f32 0.0, %v6385
    %v6387 = vpop.f32.mrb[0].mxu0
    %v6388 = vadd.f32 0.0, %v6387
    %v6389 = vpop.f32.mrb[0].mxu0
    %v6390 = vadd.f32 0.0, %v6389
    %6391 = vdwg.mxu0
    %6392 = vmatprep.subr.bf16.mxu0 %v4931
    %6393 = vmatpush1.bf16.msra.mxu0 %v4930
    %6394 = vmatprep.subr.bf16.mxu0 %v4951
    %6395 = vmatpush1.bf16.msra.mxu0 %v4950
    %6396 = vmatprep.subr.bf16.mxu0 %v4971
    %6397 = vmatpush1.bf16.msra.mxu0 %v4970
    %6398 = vmatprep.subr.bf16.mxu0 %v4991
    %6399 = vmatpush1.bf16.msra.mxu0 %v4990
    %6400 = vmatprep.subr.bf16.mxu0 %v5011
    %6401 = vmatpush1.bf16.msra.mxu0 %v5010
    %6402 = vmatprep.subr.bf16.mxu0 %v5031
    %6403 = vmatpush1.bf16.msra.mxu0 %v5030
    %6404 = vmatprep.subr.bf16.mxu0 %v5051
    %6405 = vmatpush1.bf16.msra.mxu0 %v5050
    %6406 = vmatprep.subr.bf16.mxu0 %v5071
    %6407 = vmatpush1.bf16.msra.mxu0 %v5070
    %6408 = vmatprep.subr.bf16.mxu0 %v5091
    %6409 = vmatpush1.bf16.msra.mxu0 %v5090
    %6410 = vmatprep.subr.bf16.mxu0 %v5111
    %6411 = vmatpush1.bf16.msra.mxu0 %v5110
    %6412 = vmatprep.subr.bf16.mxu0 %v5131
    %6413 = vmatpush1.bf16.msra.mxu0 %v5130
    %6414 = vmatprep.subr.bf16.mxu0 %v5151
    %6415 = vmatpush1.bf16.msra.mxu0 %v5150
    %6416 = vmatprep.subr.bf16.mxu0 0
    %6417 = vmatpush1.bf16.msra.mxu0 0
    %6418 = vmatprep.subr.bf16.mxu0 0
    %6419 = vmatpush1.bf16.msra.mxu0 0
    %6420 = vmatprep.subr.bf16.mxu0 0
    %6421 = vmatpush1.bf16.msra.mxu0 0
    %6422 = vmatprep.subr.bf16.mxu0 0
    %6423 = vmatpush1.bf16.msra.mxu0 0
    %6424 = vmatprep.mubr.bf16.mxu0 %v5724
    %6425 = vmatmul.mubr.bf16.gmra.mrb[0].mxu0 %v2348
    %v6426 = vpop.f32.mrb[0].mxu0
    %v6427 = vadd.f32 %v6354, %v6426
    %v6428 = vpop.f32.mrb[0].mxu0
    %v6429 = vadd.f32 %v6356, %v6428
    %v6430 = vpop.f32.mrb[0].mxu0
    %v6431 = vadd.f32 %v6358, %v6430
    %v6432 = vpop.f32.mrb[0].mxu0
    %v6433 = vadd.f32 %v6360, %v6432
    %6434 = vmatprep.mubr.bf16.mxu0 %v5727
    %6435 = vmatmul.mubr.bf16.gmra.mrb[0].mxu0 %v2352
    %v6436 = vpop.f32.mrb[0].mxu0
    %v6437 = vadd.f32 %v6364, %v6436
    %v6438 = vpop.f32.mrb[0].mxu0
    %v6439 = vadd.f32 %v6366, %v6438
    %v6440 = vpop.f32.mrb[0].mxu0
    %v6441 = vadd.f32 %v6368, %v6440
    %v6442 = vpop.f32.mrb[0].mxu0
    %v6443 = vadd.f32 %v6370, %v6442
    %6444 = vmatprep.mubr.bf16.mxu0 %v5730
    %6445 = vmatmul.mubr.bf16.gmra.mrb[0].mxu0 %v2356
    %v6446 = vpop.f32.mrb[0].mxu0
    %v6447 = vadd.f32 %v6374, %v6446
    %v6448 = vpop.f32.mrb[0].mxu0
    %v6449 = vadd.f32 %v6376, %v6448
    %v6450 = vpop.f32.mrb[0].mxu0
    %v6451 = vadd.f32 %v6378, %v6450
    %v6452 = vpop.f32.mrb[0].mxu0
    %v6453 = vadd.f32 %v6380, %v6452
    %6454 = vmatprep.mubr.bf16.mxu0 %v5733
    %6455 = vmatmul.mubr.bf16.gmra.mrb[0].mxu0 %v2360
    %v6456 = vpop.f32.mrb[0].mxu0
    %v6457 = vadd.f32 %v6384, %v6456
    %v6458 = vpop.f32.mrb[0].mxu0
    %v6459 = vadd.f32 %v6386, %v6458
    %v6460 = vpop.f32.mrb[0].mxu0
    %v6461 = vadd.f32 %v6388, %v6460
    %v6462 = vpop.f32.mrb[0].mxu0
    %v6463 = vadd.f32 %v6390, %v6462
    %6464 = vdwg.mxu0
    %6465 = vmatprep.subr.bf16.mxu0 %v4613
    %6466 = vmatpush1.bf16.msra.mxu0 %v4612
    %6467 = vmatprep.subr.bf16.mxu0 %v4633
    %6468 = vmatpush1.bf16.msra.mxu0 %v4632
    %6469 = vmatprep.subr.bf16.mxu0 %v4653
    %6470 = vmatpush1.bf16.msra.mxu0 %v4652
    %6471 = vmatprep.subr.bf16.mxu0 %v4673
    %6472 = vmatpush1.bf16.msra.mxu0 %v4672
    %6473 = vmatprep.subr.bf16.mxu0 %v4693
    %6474 = vmatpush1.bf16.msra.mxu0 %v4692
    %6475 = vmatprep.subr.bf16.mxu0 %v4713
    %6476 = vmatpush1.bf16.msra.mxu0 %v4712
    %6477 = vmatprep.subr.bf16.mxu0 %v4733
    %6478 = vmatpush1.bf16.msra.mxu0 %v4732
    %6479 = vmatprep.subr.bf16.mxu0 %v4753
    %6480 = vmatpush1.bf16.msra.mxu0 %v4752
    %6481 = vmatprep.subr.bf16.mxu0 %v4773
    %6482 = vmatpush1.bf16.msra.mxu0 %v4772
    %6483 = vmatprep.subr.bf16.mxu0 %v4793
    %6484 = vmatpush1.bf16.msra.mxu0 %v4792
    %6485 = vmatprep.subr.bf16.mxu0 %v4813
    %6486 = vmatpush1.bf16.msra.mxu0 %v4812
    %6487 = vmatprep.subr.bf16.mxu0 %v4833
    %6488 = vmatpush1.bf16.msra.mxu0 %v4832
    %6489 = vmatprep.subr.bf16.mxu0 %v4853
    %6490 = vmatpush1.bf16.msra.mxu0 %v4852
    %6491 = vmatprep.subr.bf16.mxu0 %v4873
    %6492 = vmatpush1.bf16.msra.mxu0 %v4872
    %6493 = vmatprep.subr.bf16.mxu0 %v4893
    %6494 = vmatpush1.bf16.msra.mxu0 %v4892
    %6495 = vmatprep.subr.bf16.mxu0 %v4913
    %6496 = vmatpush1.bf16.msra.mxu0 %v4912
    %6497 = vmatprep.mubr.bf16.mxu0 %v2347
    %6498 = vmatmul.mubr.bf16.gmra.mrb[0].mxu0 %v2346
    %v6499 = vpop.f32.mrb[0].mxu0
    %v6500 = vadd.f32 0.0, %v6499
    %v6501 = vpop.f32.mrb[0].mxu0
    %v6502 = vadd.f32 0.0, %v6501
    %v6503 = vpop.f32.mrb[0].mxu0
    %v6504 = vadd.f32 0.0, %v6503
    %v6505 = vpop.f32.mrb[0].mxu0
    %v6506 = vadd.f32 0.0, %v6505
    %6507 = vmatprep.mubr.bf16.mxu0 %v2351
    %6508 = vmatmul.mubr.bf16.gmra.mrb[0].mxu0 %v2350
    %v6509 = vpop.f32.mrb[0].mxu0
    %v6510 = vadd.f32 0.0, %v6509
    %v6511 = vpop.f32.mrb[0].mxu0
    %v6512 = vadd.f32 0.0, %v6511
    %v6513 = vpop.f32.mrb[0].mxu0
    %v6514 = vadd.f32 0.0, %v6513
    %v6515 = vpop.f32.mrb[0].mxu0
    %v6516 = vadd.f32 0.0, %v6515
    %6517 = vmatprep.mubr.bf16.mxu0 %v2355
    %6518 = vmatmul.mubr.bf16.gmra.mrb[0].mxu0 %v2354
    %v6519 = vpop.f32.mrb[0].mxu0
    %v6520 = vadd.f32 0.0, %v6519
    %v6521 = vpop.f32.mrb[0].mxu0
    %v6522 = vadd.f32 0.0, %v6521
    %v6523 = vpop.f32.mrb[0].mxu0
    %v6524 = vadd.f32 0.0, %v6523
    %v6525 = vpop.f32.mrb[0].mxu0
    %v6526 = vadd.f32 0.0, %v6525
    %6527 = vmatprep.mubr.bf16.mxu0 %v2359
    %6528 = vmatmul.mubr.bf16.gmra.mrb[0].mxu0 %v2358
    %v6529 = vpop.f32.mrb[0].mxu0
    %v6530 = vadd.f32 0.0, %v6529
    %v6531 = vpop.f32.mrb[0].mxu0
    %v6532 = vadd.f32 0.0, %v6531
    %v6533 = vpop.f32.mrb[0].mxu0
    %v6534 = vadd.f32 0.0, %v6533
    %v6535 = vpop.f32.mrb[0].mxu0
    %v6536 = vadd.f32 0.0, %v6535
    %6537 = vdwg.mxu0
    %6538 = vmatprep.subr.bf16.mxu0 %v4933
    %6539 = vmatpush1.bf16.msra.mxu0 %v4932
    %6540 = vmatprep.subr.bf16.mxu0 %v4953
    %6541 = vmatpush1.bf16.msra.mxu0 %v4952
    %6542 = vmatprep.subr.bf16.mxu0 %v4973
    %6543 = vmatpush1.bf16.msra.mxu0 %v4972
    %6544 = vmatprep.subr.bf16.mxu0 %v4993
    %6545 = vmatpush1.bf16.msra.mxu0 %v4992
    %6546 = vmatprep.subr.bf16.mxu0 %v5013
    %6547 = vmatpush1.bf16.msra.mxu0 %v5012
    %6548 = vmatprep.subr.bf16.mxu0 %v5033
    %6549 = vmatpush1.bf16.msra.mxu0 %v5032
    %6550 = vmatprep.subr.bf16.mxu0 %v5053
    %6551 = vmatpush1.bf16.msra.mxu0 %v5052
    %6552 = vmatprep.subr.bf16.mxu0 %v5073
    %6553 = vmatpush1.bf16.msra.mxu0 %v5072
    %6554 = vmatprep.subr.bf16.mxu0 %v5093
    %6555 = vmatpush1.bf16.msra.mxu0 %v5092
    %6556 = vmatprep.subr.bf16.mxu0 %v5113
    %6557 = vmatpush1.bf16.msra.mxu0 %v5112
    %6558 = vmatprep.subr.bf16.mxu0 %v5133
    %6559 = vmatpush1.bf16.msra.mxu0 %v5132
    %6560 = vmatprep.subr.bf16.mxu0 %v5153
    %6561 = vmatpush1.bf16.msra.mxu0 %v5152
    %6562 = vmatprep.subr.bf16.mxu0 0
    %6563 = vmatpush1.bf16.msra.mxu0 0
    %6564 = vmatprep.subr.bf16.mxu0 0
    %6565 = vmatpush1.bf16.msra.mxu0 0
    %6566 = vmatprep.subr.bf16.mxu0 0
    %6567 = vmatpush1.bf16.msra.mxu0 0
    %6568 = vmatprep.subr.bf16.mxu0 0
    %6569 = vmatpush1.bf16.msra.mxu0 0
    %6570 = vmatprep.mubr.bf16.mxu0 %v5724
    %6571 = vmatmul.mubr.bf16.gmra.mrb[0].mxu0 %v2348
    %v6572 = vpop.f32.mrb[0].mxu0
    %v6573 = vadd.f32 %v6500, %v6572
    %v6574 = vpop.f32.mrb[0].mxu0
    %v6575 = vadd.f32 %v6502, %v6574
    %v6576 = vpop.f32.mrb[0].mxu0
    %v6577 = vadd.f32 %v6504, %v6576
    %v6578 = vpop.f32.mrb[0].mxu0
    %v6579 = vadd.f32 %v6506, %v6578
    %6580 = vmatprep.mubr.bf16.mxu0 %v5727
    %6581 = vmatmul.mubr.bf16.gmra.mrb[0].mxu0 %v2352
    %v6582 = vpop.f32.mrb[0].mxu0
    %v6583 = vadd.f32 %v6510, %v6582
    %v6584 = vpop.f32.mrb[0].mxu0
    %v6585 = vadd.f32 %v6512, %v6584
    %v6586 = vpop.f32.mrb[0].mxu0
    %v6587 = vadd.f32 %v6514, %v6586
    %v6588 = vpop.f32.mrb[0].mxu0
    %v6589 = vadd.f32 %v6516, %v6588
    %6590 = vmatprep.mubr.bf16.mxu0 %v5730
    %6591 = vmatmul.mubr.bf16.gmra.mrb[0].mxu0 %v2356
    %v6592 = vpop.f32.mrb[0].mxu0
    %v6593 = vadd.f32 %v6520, %v6592
    %v6594 = vpop.f32.mrb[0].mxu0
    %v6595 = vadd.f32 %v6522, %v6594
    %v6596 = vpop.f32.mrb[0].mxu0
    %v6597 = vadd.f32 %v6524, %v6596
    %v6598 = vpop.f32.mrb[0].mxu0
    %v6599 = vadd.f32 %v6526, %v6598
    %6600 = vmatprep.mubr.bf16.mxu0 %v5733
    %6601 = vmatmul.mubr.bf16.gmra.mrb[0].mxu0 %v2360
    %v6602 = vpop.f32.mrb[0].mxu0
    %v6603 = vadd.f32 %v6530, %v6602
    %v6604 = vpop.f32.mrb[0].mxu0
    %v6605 = vadd.f32 %v6532, %v6604
    %v6606 = vpop.f32.mrb[0].mxu0
    %v6607 = vadd.f32 %v6534, %v6606
    %v6608 = vpop.f32.mrb[0].mxu0
    %v6609 = vadd.f32 %v6536, %v6608
    %6610 = vdwg.mxu0
    %6611 = vmatprep.subr.bf16.mxu0 %v4615
    %6612 = vmatpush1.bf16.msra.mxu0 %v4614
    %6613 = vmatprep.subr.bf16.mxu0 %v4635
    %6614 = vmatpush1.bf16.msra.mxu0 %v4634
    %6615 = vmatprep.subr.bf16.mxu0 %v4655
    %6616 = vmatpush1.bf16.msra.mxu0 %v4654
    %6617 = vmatprep.subr.bf16.mxu0 %v4675
    %6618 = vmatpush1.bf16.msra.mxu0 %v4674
    %6619 = vmatprep.subr.bf16.mxu0 %v4695
    %6620 = vmatpush1.bf16.msra.mxu0 %v4694
    %6621 = vmatprep.subr.bf16.mxu0 %v4715
    %6622 = vmatpush1.bf16.msra.mxu0 %v4714
    %6623 = vmatprep.subr.bf16.mxu0 %v4735
    %6624 = vmatpush1.bf16.msra.mxu0 %v4734
    %6625 = vmatprep.subr.bf16.mxu0 %v4755
    %6626 = vmatpush1.bf16.msra.mxu0 %v4754
    %6627 = vmatprep.subr.bf16.mxu0 %v4775
    %6628 = vmatpush1.bf16.msra.mxu0 %v4774
    %6629 = vmatprep.subr.bf16.mxu0 %v4795
    %6630 = vmatpush1.bf16.msra.mxu0 %v4794
    %6631 = vmatprep.subr.bf16.mxu0 %v4815
    %6632 = vmatpush1.bf16.msra.mxu0 %v4814
    %6633 = vmatprep.subr.bf16.mxu0 %v4835
    %6634 = vmatpush1.bf16.msra.mxu0 %v4834
    %6635 = vmatprep.subr.bf16.mxu0 %v4855
    %6636 = vmatpush1.bf16.msra.mxu0 %v4854
    %6637 = vmatprep.subr.bf16.mxu0 %v4875
    %6638 = vmatpush1.bf16.msra.mxu0 %v4874
    %6639 = vmatprep.subr.bf16.mxu0 %v4895
    %6640 = vmatpush1.bf16.msra.mxu0 %v4894
    %6641 = vmatprep.subr.bf16.mxu0 %v4915
    %6642 = vmatpush1.bf16.msra.mxu0 %v4914
    %6643 = vmatprep.mubr.bf16.mxu0 %v2347
    %6644 = vmatmul.mubr.bf16.gmra.mrb[0].mxu0 %v2346
    %v6645 = vpop.f32.mrb[0].mxu0
    %v6646 = vadd.f32 0.0, %v6645
    %v6647 = vpop.f32.mrb[0].mxu0
    %v6648 = vadd.f32 0.0, %v6647
    %v6649 = vpop.f32.mrb[0].mxu0
    %v6650 = vadd.f32 0.0, %v6649
    %v6651 = vpop.f32.mrb[0].mxu0
    %v6652 = vadd.f32 0.0, %v6651
    %6653 = vmatprep.mubr.bf16.mxu0 %v2351
    %6654 = vmatmul.mubr.bf16.gmra.mrb[0].mxu0 %v2350
    %v6655 = vpop.f32.mrb[0].mxu0
    %v6656 = vadd.f32 0.0, %v6655
    %v6657 = vpop.f32.mrb[0].mxu0
    %v6658 = vadd.f32 0.0, %v6657
    %v6659 = vpop.f32.mrb[0].mxu0
    %v6660 = vadd.f32 0.0, %v6659
    %v6661 = vpop.f32.mrb[0].mxu0
    %v6662 = vadd.f32 0.0, %v6661
    %6663 = vmatprep.mubr.bf16.mxu0 %v2355
    %6664 = vmatmul.mubr.bf16.gmra.mrb[0].mxu0 %v2354
    %v6665 = vpop.f32.mrb[0].mxu0
    %v6666 = vadd.f32 0.0, %v6665
    %v6667 = vpop.f32.mrb[0].mxu0
    %v6668 = vadd.f32 0.0, %v6667
    %v6669 = vpop.f32.mrb[0].mxu0
    %v6670 = vadd.f32 0.0, %v6669
    %v6671 = vpop.f32.mrb[0].mxu0
    %v6672 = vadd.f32 0.0, %v6671
    %6673 = vmatprep.mubr.bf16.mxu0 %v2359
    %6674 = vmatmul.mubr.bf16.gmra.mrb[0].mxu0 %v2358
    %v6675 = vpop.f32.mrb[0].mxu0
    %v6676 = vadd.f32 0.0, %v6675
    %v6677 = vpop.f32.mrb[0].mxu0
    %v6678 = vadd.f32 0.0, %v6677
    %v6679 = vpop.f32.mrb[0].mxu0
    %v6680 = vadd.f32 0.0, %v6679
    %v6681 = vpop.f32.mrb[0].mxu0
    %v6682 = vadd.f32 0.0, %v6681
    %6683 = vdwg.mxu0
    %6684 = vmatprep.subr.bf16.mxu0 %v4935
    %6685 = vmatpush1.bf16.msra.mxu0 %v4934
    %6686 = vmatprep.subr.bf16.mxu0 %v4955
    %6687 = vmatpush1.bf16.msra.mxu0 %v4954
    %6688 = vmatprep.subr.bf16.mxu0 %v4975
    %6689 = vmatpush1.bf16.msra.mxu0 %v4974
    %6690 = vmatprep.subr.bf16.mxu0 %v4995
    %6691 = vmatpush1.bf16.msra.mxu0 %v4994
    %6692 = vmatprep.subr.bf16.mxu0 %v5015
    %6693 = vmatpush1.bf16.msra.mxu0 %v5014
    %6694 = vmatprep.subr.bf16.mxu0 %v5035
    %6695 = vmatpush1.bf16.msra.mxu0 %v5034
    %6696 = vmatprep.subr.bf16.mxu0 %v5055
    %6697 = vmatpush1.bf16.msra.mxu0 %v5054
    %6698 = vmatprep.subr.bf16.mxu0 %v5075
    %6699 = vmatpush1.bf16.msra.mxu0 %v5074
    %6700 = vmatprep.subr.bf16.mxu0 %v5095
    %6701 = vmatpush1.bf16.msra.mxu0 %v5094
    %6702 = vmatprep.subr.bf16.mxu0 %v5115
    %6703 = vmatpush1.bf16.msra.mxu0 %v5114
    %6704 = vmatprep.subr.bf16.mxu0 %v5135
    %6705 = vmatpush1.bf16.msra.mxu0 %v5134
    %6706 = vmatprep.subr.bf16.mxu0 %v5155
    %6707 = vmatpush1.bf16.msra.mxu0 %v5154
    %6708 = vmatprep.subr.bf16.mxu0 0
    %6709 = vmatpush1.bf16.msra.mxu0 0
    %6710 = vmatprep.subr.bf16.mxu0 0
    %6711 = vmatpush1.bf16.msra.mxu0 0
    %6712 = vmatprep.subr.bf16.mxu0 0
    %6713 = vmatpush1.bf16.msra.mxu0 0
    %6714 = vmatprep.subr.bf16.mxu0 0
    %6715 = vmatpush1.bf16.msra.mxu0 0
    %6716 = vmatprep.mubr.bf16.mxu0 %v5724
    %6717 = vmatmul.mubr.bf16.gmra.mrb[0].mxu0 %v2348
    %v6718 = vpop.f32.mrb[0].mxu0
    %v6719 = vadd.f32 %v6646, %v6718
    %v6720 = vpop.f32.mrb[0].mxu0
    %v6721 = vadd.f32 %v6648, %v6720
    %v6722 = vpop.f32.mrb[0].mxu0
    %v6723 = vadd.f32 %v6650, %v6722
    %v6724 = vpop.f32.mrb[0].mxu0
    %v6725 = vadd.f32 %v6652, %v6724
    %6726 = vmatprep.mubr.bf16.mxu0 %v5727
    %6727 = vmatmul.mubr.bf16.gmra.mrb[0].mxu0 %v2352
    %v6728 = vpop.f32.mrb[0].mxu0
    %v6729 = vadd.f32 %v6656, %v6728
    %v6730 = vpop.f32.mrb[0].mxu0
    %v6731 = vadd.f32 %v6658, %v6730
    %v6732 = vpop.f32.mrb[0].mxu0
    %v6733 = vadd.f32 %v6660, %v6732
    %v6734 = vpop.f32.mrb[0].mxu0
    %v6735 = vadd.f32 %v6662, %v6734
    %6736 = vmatprep.mubr.bf16.mxu0 %v5730
    %6737 = vmatmul.mubr.bf16.gmra.mrb[0].mxu0 %v2356
    %v6738 = vpop.f32.mrb[0].mxu0
    %v6739 = vadd.f32 %v6666, %v6738
    %v6740 = vpop.f32.mrb[0].mxu0
    %v6741 = vadd.f32 %v6668, %v6740
    %v6742 = vpop.f32.mrb[0].mxu0
    %v6743 = vadd.f32 %v6670, %v6742
    %v6744 = vpop.f32.mrb[0].mxu0
    %v6745 = vadd.f32 %v6672, %v6744
    %6746 = vmatprep.mubr.bf16.mxu0 %v5733
    %6747 = vmatmul.mubr.bf16.gmra.mrb[0].mxu0 %v2360
    %v6748 = vpop.f32.mrb[0].mxu0
    %v6749 = vadd.f32 %v6676, %v6748
    %v6750 = vpop.f32.mrb[0].mxu0
    %v6751 = vadd.f32 %v6678, %v6750
    %v6752 = vpop.f32.mrb[0].mxu0
    %v6753 = vadd.f32 %v6680, %v6752
    %v6754 = vpop.f32.mrb[0].mxu0
    %v6755 = vadd.f32 %v6682, %v6754
    %6756 = vdwg.mxu0
    %6757 = vmatprep.subr.bf16.mxu0 %v4617
    %6758 = vmatpush1.bf16.msra.mxu0 %v4616
    %6759 = vmatprep.subr.bf16.mxu0 %v4637
    %6760 = vmatpush1.bf16.msra.mxu0 %v4636
    %6761 = vmatprep.subr.bf16.mxu0 %v4657
    %6762 = vmatpush1.bf16.msra.mxu0 %v4656
    %6763 = vmatprep.subr.bf16.mxu0 %v4677
    %6764 = vmatpush1.bf16.msra.mxu0 %v4676
    %6765 = vmatprep.subr.bf16.mxu0 %v4697
    %6766 = vmatpush1.bf16.msra.mxu0 %v4696
    %6767 = vmatprep.subr.bf16.mxu0 %v4717
    %6768 = vmatpush1.bf16.msra.mxu0 %v4716
    %6769 = vmatprep.subr.bf16.mxu0 %v4737
    %6770 = vmatpush1.bf16.msra.mxu0 %v4736
    %6771 = vmatprep.subr.bf16.mxu0 %v4757
    %6772 = vmatpush1.bf16.msra.mxu0 %v4756
    %6773 = vmatprep.subr.bf16.mxu0 %v4777
    %6774 = vmatpush1.bf16.msra.mxu0 %v4776
    %6775 = vmatprep.subr.bf16.mxu0 %v4797
    %6776 = vmatpush1.bf16.msra.mxu0 %v4796
    %6777 = vmatprep.subr.bf16.mxu0 %v4817
    %6778 = vmatpush1.bf16.msra.mxu0 %v4816
    %6779 = vmatprep.subr.bf16.mxu0 %v4837
    %6780 = vmatpush1.bf16.msra.mxu0 %v4836
    %6781 = vmatprep.subr.bf16.mxu0 %v4857
    %6782 = vmatpush1.bf16.msra.mxu0 %v4856
    %6783 = vmatprep.subr.bf16.mxu0 %v4877
    %6784 = vmatpush1.bf16.msra.mxu0 %v4876
    %6785 = vmatprep.subr.bf16.mxu0 %v4897
    %6786 = vmatpush1.bf16.msra.mxu0 %v4896
    %6787 = vmatprep.subr.bf16.mxu0 %v4917
    %6788 = vmatpush1.bf16.msra.mxu0 %v4916
    %6789 = vmatprep.mubr.bf16.mxu0 %v2347
    %6790 = vmatmul.mubr.bf16.gmra.mrb[0].mxu0 %v2346
    %v6791 = vpop.f32.mrb[0].mxu0
    %v6792 = vadd.f32 0.0, %v6791
    %v6793 = vpop.f32.mrb[0].mxu0
    %v6794 = vadd.f32 0.0, %v6793
    %v6795 = vpop.f32.mrb[0].mxu0
    %v6796 = vadd.f32 0.0, %v6795
    %v6797 = vpop.f32.mrb[0].mxu0
    %v6798 = vadd.f32 0.0, %v6797
    %6799 = vmatprep.mubr.bf16.mxu0 %v2351
    %6800 = vmatmul.mubr.bf16.gmra.mrb[0].mxu0 %v2350
    %v6801 = vpop.f32.mrb[0].mxu0
    %v6802 = vadd.f32 0.0, %v6801
    %v6803 = vpop.f32.mrb[0].mxu0
    %v6804 = vadd.f32 0.0, %v6803
    %v6805 = vpop.f32.mrb[0].mxu0
    %v6806 = vadd.f32 0.0, %v6805
    %v6807 = vpop.f32.mrb[0].mxu0
    %v6808 = vadd.f32 0.0, %v6807
    %6809 = vmatprep.mubr.bf16.mxu0 %v2355
    %6810 = vmatmul.mubr.bf16.gmra.mrb[0].mxu0 %v2354
    %v6811 = vpop.f32.mrb[0].mxu0
    %v6812 = vadd.f32 0.0, %v6811
    %v6813 = vpop.f32.mrb[0].mxu0
    %v6814 = vadd.f32 0.0, %v6813
    %v6815 = vpop.f32.mrb[0].mxu0
    %v6816 = vadd.f32 0.0, %v6815
    %v6817 = vpop.f32.mrb[0].mxu0
    %v6818 = vadd.f32 0.0, %v6817
    %6819 = vmatprep.mubr.bf16.mxu0 %v2359
    %6820 = vmatmul.mubr.bf16.gmra.mrb[0].mxu0 %v2358
    %v6821 = vpop.f32.mrb[0].mxu0
    %v6822 = vadd.f32 0.0, %v6821
    %v6823 = vpop.f32.mrb[0].mxu0
    %v6824 = vadd.f32 0.0, %v6823
    %v6825 = vpop.f32.mrb[0].mxu0
    %v6826 = vadd.f32 0.0, %v6825
    %v6827 = vpop.f32.mrb[0].mxu0
    %v6828 = vadd.f32 0.0, %v6827
    %6829 = vdwg.mxu0
    %6830 = vmatprep.subr.bf16.mxu0 %v4937
    %6831 = vmatpush1.bf16.msra.mxu0 %v4936
    %6832 = vmatprep.subr.bf16.mxu0 %v4957
    %6833 = vmatpush1.bf16.msra.mxu0 %v4956
    %6834 = vmatprep.subr.bf16.mxu0 %v4977
    %6835 = vmatpush1.bf16.msra.mxu0 %v4976
    %6836 = vmatprep.subr.bf16.mxu0 %v4997
    %6837 = vmatpush1.bf16.msra.mxu0 %v4996
    %6838 = vmatprep.subr.bf16.mxu0 %v5017
    %6839 = vmatpush1.bf16.msra.mxu0 %v5016
    %6840 = vmatprep.subr.bf16.mxu0 %v5037
    %6841 = vmatpush1.bf16.msra.mxu0 %v5036
    %6842 = vmatprep.subr.bf16.mxu0 %v5057
    %6843 = vmatpush1.bf16.msra.mxu0 %v5056
    %6844 = vmatprep.subr.bf16.mxu0 %v5077
    %6845 = vmatpush1.bf16.msra.mxu0 %v5076
    %6846 = vmatprep.subr.bf16.mxu0 %v5097
    %6847 = vmatpush1.bf16.msra.mxu0 %v5096
    %6848 = vmatprep.subr.bf16.mxu0 %v5117
    %6849 = vmatpush1.bf16.msra.mxu0 %v5116
    %6850 = vmatprep.subr.bf16.mxu0 %v5137
    %6851 = vmatpush1.bf16.msra.mxu0 %v5136
    %6852 = vmatprep.subr.bf16.mxu0 %v5157
    %6853 = vmatpush1.bf16.msra.mxu0 %v5156
    %6854 = vmatprep.subr.bf16.mxu0 0
    %6855 = vmatpush1.bf16.msra.mxu0 0
    %6856 = vmatprep.subr.bf16.mxu0 0
    %6857 = vmatpush1.bf16.msra.mxu0 0
    %6858 = vmatprep.subr.bf16.mxu0 0
    %6859 = vmatpush1.bf16.msra.mxu0 0
    %6860 = vmatprep.subr.bf16.mxu0 0
    %6861 = vmatpush1.bf16.msra.mxu0 0
    %6862 = vmatprep.mubr.bf16.mxu0 %v5724
    %6863 = vmatmul.mubr.bf16.gmra.mrb[0].mxu0 %v2348
    %v6864 = vpop.f32.mrb[0].mxu0
    %v6865 = vadd.f32 %v6792, %v6864
    %v6866 = vpop.f32.mrb[0].mxu0
    %v6867 = vadd.f32 %v6794, %v6866
    %v6868 = vpop.f32.mrb[0].mxu0
    %v6869 = vadd.f32 %v6796, %v6868
    %v6870 = vpop.f32.mrb[0].mxu0
    %v6871 = vadd.f32 %v6798, %v6870
    %6872 = vmatprep.mubr.bf16.mxu0 %v5727
    %6873 = vmatmul.mubr.bf16.gmra.mrb[0].mxu0 %v2352
    %v6874 = vpop.f32.mrb[0].mxu0
    %v6875 = vadd.f32 %v6802, %v6874
    %v6876 = vpop.f32.mrb[0].mxu0
    %v6877 = vadd.f32 %v6804, %v6876
    %v6878 = vpop.f32.mrb[0].mxu0
    %v6879 = vadd.f32 %v6806, %v6878
    %v6880 = vpop.f32.mrb[0].mxu0
    %v6881 = vadd.f32 %v6808, %v6880
    %6882 = vmatprep.mubr.bf16.mxu0 %v5730
    %6883 = vmatmul.mubr.bf16.gmra.mrb[0].mxu0 %v2356
    %v6884 = vpop.f32.mrb[0].mxu0
    %v6885 = vadd.f32 %v6812, %v6884
    %v6886 = vpop.f32.mrb[0].mxu0
    %v6887 = vadd.f32 %v6814, %v6886
    %v6888 = vpop.f32.mrb[0].mxu0
    %v6889 = vadd.f32 %v6816, %v6888
    %v6890 = vpop.f32.mrb[0].mxu0
    %v6891 = vadd.f32 %v6818, %v6890
    %6892 = vmatprep.mubr.bf16.mxu0 %v5733
    %6893 = vmatmul.mubr.bf16.gmra.mrb[0].mxu0 %v2360
    %v6894 = vpop.f32.mrb[0].mxu0
    %v6895 = vadd.f32 %v6822, %v6894
    %v6896 = vpop.f32.mrb[0].mxu0
    %v6897 = vadd.f32 %v6824, %v6896
    %v6898 = vpop.f32.mrb[0].mxu0
    %v6899 = vadd.f32 %v6826, %v6898
    %v6900 = vpop.f32.mrb[0].mxu0
    %v6901 = vadd.f32 %v6828, %v6900
    %6902 = vdwg.mxu0
    %6903 = vmatprep.subr.bf16.mxu0 %v4619
    %6904 = vmatpush1.bf16.msra.mxu0 %v4618
    %6905 = vmatprep.subr.bf16.mxu0 %v4639
    %6906 = vmatpush1.bf16.msra.mxu0 %v4638
    %6907 = vmatprep.subr.bf16.mxu0 %v4659
    %6908 = vmatpush1.bf16.msra.mxu0 %v4658
    %6909 = vmatprep.subr.bf16.mxu0 %v4679
    %6910 = vmatpush1.bf16.msra.mxu0 %v4678
    %6911 = vmatprep.subr.bf16.mxu0 %v4699
    %6912 = vmatpush1.bf16.msra.mxu0 %v4698
    %6913 = vmatprep.subr.bf16.mxu0 %v4719
    %6914 = vmatpush1.bf16.msra.mxu0 %v4718
    %6915 = vmatprep.subr.bf16.mxu0 %v4739
    %6916 = vmatpush1.bf16.msra.mxu0 %v4738
    %6917 = vmatprep.subr.bf16.mxu0 %v4759
    %6918 = vmatpush1.bf16.msra.mxu0 %v4758
    %6919 = vmatprep.subr.bf16.mxu0 %v4779
    %6920 = vmatpush1.bf16.msra.mxu0 %v4778
    %6921 = vmatprep.subr.bf16.mxu0 %v4799
    %6922 = vmatpush1.bf16.msra.mxu0 %v4798
    %6923 = vmatprep.subr.bf16.mxu0 %v4819
    %6924 = vmatpush1.bf16.msra.mxu0 %v4818
    %6925 = vmatprep.subr.bf16.mxu0 %v4839
    %6926 = vmatpush1.bf16.msra.mxu0 %v4838
    %6927 = vmatprep.subr.bf16.mxu0 %v4859
    %6928 = vmatpush1.bf16.msra.mxu0 %v4858
    %6929 = vmatprep.subr.bf16.mxu0 %v4879
    %6930 = vmatpush1.bf16.msra.mxu0 %v4878
    %6931 = vmatprep.subr.bf16.mxu0 %v4899
    %6932 = vmatpush1.bf16.msra.mxu0 %v4898
    %6933 = vmatprep.subr.bf16.mxu0 %v4919
    %6934 = vmatpush1.bf16.msra.mxu0 %v4918
    %6935 = vmatprep.mubr.bf16.mxu0 %v2347
    %6936 = vmatmul.mubr.bf16.gmra.mrb[0].mxu0 %v2346
    %v6937 = vpop.f32.mrb[0].mxu0
    %v6938 = vadd.f32 0.0, %v6937
    %v6939 = vpop.f32.mrb[0].mxu0
    %v6940 = vadd.f32 0.0, %v6939
    %v6941 = vpop.f32.mrb[0].mxu0
    %v6942 = vadd.f32 0.0, %v6941
    %v6943 = vpop.f32.mrb[0].mxu0
    %v6944 = vadd.f32 0.0, %v6943
    %6945 = vmatprep.mubr.bf16.mxu0 %v2351
    %6946 = vmatmul.mubr.bf16.gmra.mrb[0].mxu0 %v2350
    %v6947 = vpop.f32.mrb[0].mxu0
    %v6948 = vadd.f32 0.0, %v6947
    %v6949 = vpop.f32.mrb[0].mxu0
    %v6950 = vadd.f32 0.0, %v6949
    %v6951 = vpop.f32.mrb[0].mxu0
    %v6952 = vadd.f32 0.0, %v6951
    %v6953 = vpop.f32.mrb[0].mxu0
    %v6954 = vadd.f32 0.0, %v6953
    %6955 = vmatprep.mubr.bf16.mxu0 %v2355
    %6956 = vmatmul.mubr.bf16.gmra.mrb[0].mxu0 %v2354
    %v6957 = vpop.f32.mrb[0].mxu0
    %v6958 = vadd.f32 0.0, %v6957
    %v6959 = vpop.f32.mrb[0].mxu0
    %v6960 = vadd.f32 0.0, %v6959
    %v6961 = vpop.f32.mrb[0].mxu0
    %v6962 = vadd.f32 0.0, %v6961
    %v6963 = vpop.f32.mrb[0].mxu0
    %v6964 = vadd.f32 0.0, %v6963
    %6965 = vmatprep.mubr.bf16.mxu0 %v2359
    %6966 = vmatmul.mubr.bf16.gmra.mrb[0].mxu0 %v2358
    %v6967 = vpop.f32.mrb[0].mxu0
    %v6968 = vadd.f32 0.0, %v6967
    %v6969 = vpop.f32.mrb[0].mxu0
    %v6970 = vadd.f32 0.0, %v6969
    %v6971 = vpop.f32.mrb[0].mxu0
    %v6972 = vadd.f32 0.0, %v6971
    %v6973 = vpop.f32.mrb[0].mxu0
    %v6974 = vadd.f32 0.0, %v6973
    %6975 = vdwg.mxu0
    %6976 = vmatprep.subr.bf16.mxu0 %v4939
    %6977 = vmatpush1.bf16.msra.mxu0 %v4938
    %6978 = vmatprep.subr.bf16.mxu0 %v4959
    %6979 = vmatpush1.bf16.msra.mxu0 %v4958
    %6980 = vmatprep.subr.bf16.mxu0 %v4979
    %6981 = vmatpush1.bf16.msra.mxu0 %v4978
    %6982 = vmatprep.subr.bf16.mxu0 %v4999
    %6983 = vmatpush1.bf16.msra.mxu0 %v4998
    %6984 = vmatprep.subr.bf16.mxu0 %v5019
    %6985 = vmatpush1.bf16.msra.mxu0 %v5018
    %6986 = vmatprep.subr.bf16.mxu0 %v5039
    %6987 = vmatpush1.bf16.msra.mxu0 %v5038
    %6988 = vmatprep.subr.bf16.mxu0 %v5059
    %6989 = vmatpush1.bf16.msra.mxu0 %v5058
    %6990 = vmatprep.subr.bf16.mxu0 %v5079
    %6991 = vmatpush1.bf16.msra.mxu0 %v5078
    %6992 = vmatprep.subr.bf16.mxu0 %v5099
    %6993 = vmatpush1.bf16.msra.mxu0 %v5098
    %6994 = vmatprep.subr.bf16.mxu0 %v5119
    %6995 = vmatpush1.bf16.msra.mxu0 %v5118
    %6996 = vmatprep.subr.bf16.mxu0 %v5139
    %6997 = vmatpush1.bf16.msra.mxu0 %v5138
    %6998 = vmatprep.subr.bf16.mxu0 %v5159
    %6999 = vmatpush1.bf16.msra.mxu0 %v5158
    %7000 = vmatprep.subr.bf16.mxu0 0
    %7001 = vmatpush1.bf16.msra.mxu0 0
    %7002 = vmatprep.subr.bf16.mxu0 0
    %7003 = vmatpush1.bf16.msra.mxu0 0
    %7004 = vmatprep.subr.bf16.mxu0 0
    %7005 = vmatpush1.bf16.msra.mxu0 0
    %7006 = vmatprep.subr.bf16.mxu0 0
    %7007 = vmatpush1.bf16.msra.mxu0 0
    %7008 = vmatprep.mubr.bf16.mxu0 %v5724
    %7009 = vmatmul.mubr.bf16.gmra.mrb[0].mxu0 %v2348
    %v7010 = vpop.f32.mrb[0].mxu0
    %v7011 = vadd.f32 %v6938, %v7010
    %v7012 = vpop.f32.mrb[0].mxu0
    %v7013 = vadd.f32 %v6940, %v7012
    %v7014 = vpop.f32.mrb[0].mxu0
    %v7015 = vadd.f32 %v6942, %v7014
    %v7016 = vpop.f32.mrb[0].mxu0
    %v7017 = vadd.f32 %v6944, %v7016
    %7018 = vmatprep.mubr.bf16.mxu0 %v5727
    %7019 = vmatmul.mubr.bf16.gmra.mrb[0].mxu0 %v2352
    %v7020 = vpop.f32.mrb[0].mxu0
    %v7021 = vadd.f32 %v6948, %v7020
    %v7022 = vpop.f32.mrb[0].mxu0
    %v7023 = vadd.f32 %v6950, %v7022
    %v7024 = vpop.f32.mrb[0].mxu0
    %v7025 = vadd.f32 %v6952, %v7024
    %v7026 = vpop.f32.mrb[0].mxu0
    %v7027 = vadd.f32 %v6954, %v7026
    %7028 = vmatprep.mubr.bf16.mxu0 %v5730
    %7029 = vmatmul.mubr.bf16.gmra.mrb[0].mxu0 %v2356
    %v7030 = vpop.f32.mrb[0].mxu0
    %v7031 = vadd.f32 %v6958, %v7030
    %v7032 = vpop.f32.mrb[0].mxu0
    %v7033 = vadd.f32 %v6960, %v7032
    %v7034 = vpop.f32.mrb[0].mxu0
    %v7035 = vadd.f32 %v6962, %v7034
    %v7036 = vpop.f32.mrb[0].mxu0
    %v7037 = vadd.f32 %v6964, %v7036
    %7038 = vmatprep.mubr.bf16.mxu0 %v5733
    %7039 = vmatmul.mubr.bf16.gmra.mrb[0].mxu0 %v2360
    %v7040 = vpop.f32.mrb[0].mxu0
    %v7041 = vadd.f32 %v6968, %v7040
    %v7042 = vpop.f32.mrb[0].mxu0
    %v7043 = vadd.f32 %v6970, %v7042
    %v7044 = vpop.f32.mrb[0].mxu0
    %v7045 = vadd.f32 %v6972, %v7044
    %v7046 = vpop.f32.mrb[0].mxu0
    %v7047 = vadd.f32 %v6974, %v7046
    %7048 = vdwg.mxu0
    %7049 = vmatprep.subr.bf16.mxu0 %v4621
    %7050 = vmatpush1.bf16.msra.mxu0 %v4620
    %7051 = vmatprep.subr.bf16.mxu0 %v4641
    %7052 = vmatpush1.bf16.msra.mxu0 %v4640
    %7053 = vmatprep.subr.bf16.mxu0 %v4661
    %7054 = vmatpush1.bf16.msra.mxu0 %v4660
    %7055 = vmatprep.subr.bf16.mxu0 %v4681
    %7056 = vmatpush1.bf16.msra.mxu0 %v4680
    %7057 = vmatprep.subr.bf16.mxu0 %v4701
    %7058 = vmatpush1.bf16.msra.mxu0 %v4700
    %7059 = vmatprep.subr.bf16.mxu0 %v4721
    %7060 = vmatpush1.bf16.msra.mxu0 %v4720
    %7061 = vmatprep.subr.bf16.mxu0 %v4741
    %7062 = vmatpush1.bf16.msra.mxu0 %v4740
    %7063 = vmatprep.subr.bf16.mxu0 %v4761
    %7064 = vmatpush1.bf16.msra.mxu0 %v4760
    %7065 = vmatprep.subr.bf16.mxu0 %v4781
    %7066 = vmatpush1.bf16.msra.mxu0 %v4780
    %7067 = vmatprep.subr.bf16.mxu0 %v4801
    %7068 = vmatpush1.bf16.msra.mxu0 %v4800
    %7069 = vmatprep.subr.bf16.mxu0 %v4821
    %7070 = vmatpush1.bf16.msra.mxu0 %v4820
    %7071 = vmatprep.subr.bf16.mxu0 %v4841
    %7072 = vmatpush1.bf16.msra.mxu0 %v4840
    %7073 = vmatprep.subr.bf16.mxu0 %v4861
    %7074 = vmatpush1.bf16.msra.mxu0 %v4860
    %7075 = vmatprep.subr.bf16.mxu0 %v4881
    %7076 = vmatpush1.bf16.msra.mxu0 %v4880
    %7077 = vmatprep.subr.bf16.mxu0 %v4901
    %7078 = vmatpush1.bf16.msra.mxu0 %v4900
    %7079 = vmatprep.subr.bf16.mxu0 %v4921
    %7080 = vmatpush1.bf16.msra.mxu0 %v4920
    %7081 = vmatprep.mubr.bf16.mxu0 %v2347
    %7082 = vmatmul.mubr.bf16.gmra.mrb[0].mxu0 %v2346
    %v7083 = vpop.f32.mrb[0].mxu0
    %v7084 = vadd.f32 0.0, %v7083
    %v7085 = vpop.f32.mrb[0].mxu0
    %v7086 = vadd.f32 0.0, %v7085
    %v7087 = vpop.f32.mrb[0].mxu0
    %v7088 = vadd.f32 0.0, %v7087
    %v7089 = vpop.f32.mrb[0].mxu0
    %v7090 = vadd.f32 0.0, %v7089
    %7091 = vmatprep.mubr.bf16.mxu0 %v2351
    %7092 = vmatmul.mubr.bf16.gmra.mrb[0].mxu0 %v2350
    %v7093 = vpop.f32.mrb[0].mxu0
    %v7094 = vadd.f32 0.0, %v7093
    %v7095 = vpop.f32.mrb[0].mxu0
    %v7096 = vadd.f32 0.0, %v7095
    %v7097 = vpop.f32.mrb[0].mxu0
    %v7098 = vadd.f32 0.0, %v7097
    %v7099 = vpop.f32.mrb[0].mxu0
    %v7100 = vadd.f32 0.0, %v7099
    %7101 = vmatprep.mubr.bf16.mxu0 %v2355
    %7102 = vmatmul.mubr.bf16.gmra.mrb[0].mxu0 %v2354
    %v7103 = vpop.f32.mrb[0].mxu0
    %v7104 = vadd.f32 0.0, %v7103
    %v7105 = vpop.f32.mrb[0].mxu0
    %v7106 = vadd.f32 0.0, %v7105
    %v7107 = vpop.f32.mrb[0].mxu0
    %v7108 = vadd.f32 0.0, %v7107
    %v7109 = vpop.f32.mrb[0].mxu0
    %v7110 = vadd.f32 0.0, %v7109
    %7111 = vmatprep.mubr.bf16.mxu0 %v2359
    %7112 = vmatmul.mubr.bf16.gmra.mrb[0].mxu0 %v2358
    %v7113 = vpop.f32.mrb[0].mxu0
    %v7114 = vadd.f32 0.0, %v7113
    %v7115 = vpop.f32.mrb[0].mxu0
    %v7116 = vadd.f32 0.0, %v7115
    %v7117 = vpop.f32.mrb[0].mxu0
    %v7118 = vadd.f32 0.0, %v7117
    %v7119 = vpop.f32.mrb[0].mxu0
    %v7120 = vadd.f32 0.0, %v7119
    %7121 = vdwg.mxu0
    %7122 = vmatprep.subr.bf16.mxu0 %v4941
    %7123 = vmatpush1.bf16.msra.mxu0 %v4940
    %7124 = vmatprep.subr.bf16.mxu0 %v4961
    %7125 = vmatpush1.bf16.msra.mxu0 %v4960
    %7126 = vmatprep.subr.bf16.mxu0 %v4981
    %7127 = vmatpush1.bf16.msra.mxu0 %v4980
    %7128 = vmatprep.subr.bf16.mxu0 %v5001
    %7129 = vmatpush1.bf16.msra.mxu0 %v5000
    %7130 = vmatprep.subr.bf16.mxu0 %v5021
    %7131 = vmatpush1.bf16.msra.mxu0 %v5020
    %7132 = vmatprep.subr.bf16.mxu0 %v5041
    %7133 = vmatpush1.bf16.msra.mxu0 %v5040
    %7134 = vmatprep.subr.bf16.mxu0 %v5061
    %7135 = vmatpush1.bf16.msra.mxu0 %v5060
    %7136 = vmatprep.subr.bf16.mxu0 %v5081
    %7137 = vmatpush1.bf16.msra.mxu0 %v5080
    %7138 = vmatprep.subr.bf16.mxu0 %v5101
    %7139 = vmatpush1.bf16.msra.mxu0 %v5100
    %7140 = vmatprep.subr.bf16.mxu0 %v5121
    %7141 = vmatpush1.bf16.msra.mxu0 %v5120
    %7142 = vmatprep.subr.bf16.mxu0 %v5141
    %7143 = vmatpush1.bf16.msra.mxu0 %v5140
    %7144 = vmatprep.subr.bf16.mxu0 %v5161
    %7145 = vmatpush1.bf16.msra.mxu0 %v5160
    %7146 = vmatprep.subr.bf16.mxu0 0
    %7147 = vmatpush1.bf16.msra.mxu0 0
    %7148 = vmatprep.subr.bf16.mxu0 0
    %7149 = vmatpush1.bf16.msra.mxu0 0
    %7150 = vmatprep.subr.bf16.mxu0 0
    %7151 = vmatpush1.bf16.msra.mxu0 0
    %7152 = vmatprep.subr.bf16.mxu0 0
    %7153 = vmatpush1.bf16.msra.mxu0 0
    %7154 = vmatprep.mubr.bf16.mxu0 %v5724
    %7155 = vmatmul.mubr.bf16.gmra.mrb[0].mxu0 %v2348
    %v7156 = vpop.f32.mrb[0].mxu0
    %v7157 = vadd.f32 %v7084, %v7156
    %v7158 = vpop.f32.mrb[0].mxu0
    %v7159 = vadd.f32 %v7086, %v7158
    %v7160 = vpop.f32.mrb[0].mxu0
    %v7161 = vadd.f32 %v7088, %v7160
    %v7162 = vpop.f32.mrb[0].mxu0
    %v7163 = vadd.f32 %v7090, %v7162
    %7164 = vmatprep.mubr.bf16.mxu0 %v5727
    %7165 = vmatmul.mubr.bf16.gmra.mrb[0].mxu0 %v2352
    %v7166 = vpop.f32.mrb[0].mxu0
    %v7167 = vadd.f32 %v7094, %v7166
    %v7168 = vpop.f32.mrb[0].mxu0
    %v7169 = vadd.f32 %v7096, %v7168
    %v7170 = vpop.f32.mrb[0].mxu0
    %v7171 = vadd.f32 %v7098, %v7170
    %v7172 = vpop.f32.mrb[0].mxu0
    %v7173 = vadd.f32 %v7100, %v7172
    %7174 = vmatprep.mubr.bf16.mxu0 %v5730
    %7175 = vmatmul.mubr.bf16.gmra.mrb[0].mxu0 %v2356
    %v7176 = vpop.f32.mrb[0].mxu0
    %v7177 = vadd.f32 %v7104, %v7176
    %v7178 = vpop.f32.mrb[0].mxu0
    %v7179 = vadd.f32 %v7106, %v7178
    %v7180 = vpop.f32.mrb[0].mxu0
    %v7181 = vadd.f32 %v7108, %v7180
    %v7182 = vpop.f32.mrb[0].mxu0
    %v7183 = vadd.f32 %v7110, %v7182
    %7184 = vmatprep.mubr.bf16.mxu0 %v5733
    %7185 = vmatmul.mubr.bf16.gmra.mrb[0].mxu0 %v2360
    %v7186 = vpop.f32.mrb[0].mxu0
    %v7187 = vadd.f32 %v7114, %v7186
    %v7188 = vpop.f32.mrb[0].mxu0
    %v7189 = vadd.f32 %v7116, %v7188
    %v7190 = vpop.f32.mrb[0].mxu0
    %v7191 = vadd.f32 %v7118, %v7190
    %v7192 = vpop.f32.mrb[0].mxu0
    %v7193 = vadd.f32 %v7120, %v7192
    %7194 = vdwg.mxu0
    %v7227 = vrot.slane %v5843, 4
    %v7228 = vrot.slane %v5845, 4
    %v7229 = vrot.slane %v5989, 4
    %v7230 = vrot.slane %v5991, 4
    %v7231 = vrot.slane %v5847, 4
    %v7232 = vsel %vm1616, %v7227, %v7231
    %v7233 = vrot.slane %v5849, 4
    %v7234 = vsel %vm1616, %v7228, %v7233
    %v7235 = vrot.slane %v5993, 4
    %v7236 = vsel %vm1616, %v7229, %v7235
    %v7237 = vrot.slane %v5995, 4
    %v7238 = vsel %vm1616, %v7230, %v7237
    %v7239 = vrot.slane %v5853, 4
    %v7240 = vsel %vm1616, %v7231, %v7239
    %v7241 = vrot.slane %v5855, 4
    %v7242 = vsel %vm1616, %v7233, %v7241
    %v7243 = vrot.slane %v5999, 4
    %v7244 = vsel %vm1616, %v7235, %v7243
    %v7245 = vrot.slane %v6001, 4
    %v7246 = vsel %vm1616, %v7237, %v7245
    %v7247 = vrot.slane %v5857, 4
    %v7248 = vsel %vm1616, %v7239, %v7247
    %v7249 = vrot.slane %v5859, 4
    %v7250 = vsel %vm1616, %v7241, %v7249
    %v7251 = vrot.slane %v6003, 4
    %v7252 = vsel %vm1616, %v7243, %v7251
    %v7253 = vrot.slane %v6005, 4
    %v7254 = vsel %vm1616, %v7245, %v7253
    %v7255 = vrot.slane %v5863, 4
    %v7256 = vsel %vm1616, %v7247, %v7255
    %v7257 = vrot.slane %v5865, 4
    %v7258 = vsel %vm1616, %v7249, %v7257
    %v7259 = vrot.slane %v6009, 4
    %v7260 = vsel %vm1616, %v7251, %v7259
    %v7261 = vrot.slane %v6011, 4
    %v7262 = vsel %vm1616, %v7253, %v7261
    %v7263 = vrot.slane %v5867, 4
    %v7264 = vsel %vm1616, %v7255, %v7263
    %v7265 = vrot.slane %v5869, 4
    %v7266 = vsel %vm1616, %v7257, %v7265
    %v7267 = vrot.slane %v6013, 4
    %v7268 = vsel %vm1616, %v7259, %v7267
    %v7269 = vrot.slane %v6015, 4
    %v7270 = vsel %vm1616, %v7261, %v7269
    %v7271 = vrot.slane %v5873, 4
    %v7272 = vsel %vm1616, %v7263, %v7271
    %v7273 = vrot.slane %v5875, 4
    %v7274 = vsel %vm1616, %v7265, %v7273
    %v7275 = vrot.slane %v6019, 4
    %v7276 = vsel %vm1616, %v7267, %v7275
    %v7277 = vrot.slane %v6021, 4
    %v7278 = vsel %vm1616, %v7269, %v7277
    %v7279 = vrot.slane %v5877, 4
    %v7280 = vsel %vm1616, %v7271, %v7279
    %v7281 = vrot.slane %v5879, 4
    %v7282 = vsel %vm1616, %v7273, %v7281
    %v7283 = vrot.slane %v6023, 4
    %v7284 = vsel %vm1616, %v7275, %v7283
    %v7285 = vrot.slane %v6025, 4
    %v7286 = vsel %vm1616, %v7277, %v7285
    %v7319 = vsel %vm1616, 0.0, %v7227
    %v7320 = vsel %vm1616, 0.0, %v7228
    %v7321 = vsel %vm1616, 0.0, %v7229
    %v7322 = vsel %vm1616, 0.0, %v7230
    %vm7355 = vcmask 1041408
    %v7356 = vrot.slane %v6135, 6
    %v7357 = vrot.slane %v6137, 6
    %v7358 = vrot.slane %v6281, 6
    %v7359 = vrot.slane %v6283, 6
    %v7360 = vrot.slane %v6139, 6
    %v7361 = vsel %vm7355, %v7356, %v7360
    %v7362 = vrot.slane %v6141, 6
    %v7363 = vsel %vm7355, %v7357, %v7362
    %v7364 = vrot.slane %v6285, 6
    %v7365 = vsel %vm7355, %v7358, %v7364
    %v7366 = vrot.slane %v6287, 6
    %v7367 = vsel %vm7355, %v7359, %v7366
    %v7368 = vrot.slane %v6145, 6
    %v7369 = vsel %vm7355, %v7360, %v7368
    %v7370 = vrot.slane %v6147, 6
    %v7371 = vsel %vm7355, %v7362, %v7370
    %v7372 = vrot.slane %v6291, 6
    %v7373 = vsel %vm7355, %v7364, %v7372
    %v7374 = vrot.slane %v6293, 6
    %v7375 = vsel %vm7355, %v7366, %v7374
    %v7376 = vrot.slane %v6149, 6
    %v7377 = vsel %vm7355, %v7368, %v7376
    %v7378 = vrot.slane %v6151, 6
    %v7379 = vsel %vm7355, %v7370, %v7378
    %v7380 = vrot.slane %v6295, 6
    %v7381 = vsel %vm7355, %v7372, %v7380
    %v7382 = vrot.slane %v6297, 6
    %v7383 = vsel %vm7355, %v7374, %v7382
    %v7384 = vrot.slane %v6155, 6
    %v7385 = vsel %vm7355, %v7376, %v7384
    %v7386 = vrot.slane %v6157, 6
    %v7387 = vsel %vm7355, %v7378, %v7386
    %v7388 = vrot.slane %v6301, 6
    %v7389 = vsel %vm7355, %v7380, %v7388
    %v7390 = vrot.slane %v6303, 6
    %v7391 = vsel %vm7355, %v7382, %v7390
    %v7392 = vrot.slane %v6159, 6
    %v7393 = vsel %vm7355, %v7384, %v7392
    %v7394 = vrot.slane %v6161, 6
    %v7395 = vsel %vm7355, %v7386, %v7394
    %v7396 = vrot.slane %v6305, 6
    %v7397 = vsel %vm7355, %v7388, %v7396
    %v7398 = vrot.slane %v6307, 6
    %v7399 = vsel %vm7355, %v7390, %v7398
    %v7400 = vrot.slane %v6165, 6
    %v7401 = vsel %vm7355, %v7392, %v7400
    %v7402 = vrot.slane %v6167, 6
    %v7403 = vsel %vm7355, %v7394, %v7402
    %v7404 = vrot.slane %v6311, 6
    %v7405 = vsel %vm7355, %v7396, %v7404
    %v7406 = vrot.slane %v6313, 6
    %v7407 = vsel %vm7355, %v7398, %v7406
    %v7408 = vrot.slane %v6169, 6
    %v7409 = vsel %vm7355, %v7400, %v7408
    %v7410 = vrot.slane %v6171, 6
    %v7411 = vsel %vm7355, %v7402, %v7410
    %v7412 = vrot.slane %v6315, 6
    %v7413 = vsel %vm7355, %v7404, %v7412
    %v7414 = vrot.slane %v6317, 6
    %v7415 = vsel %vm7355, %v7406, %v7414
    %v7448 = vsel %vm7355, 0.0, %v7356
    %v7449 = vsel %vm7355, 0.0, %v7357
    %v7450 = vsel %vm7355, 0.0, %v7358
    %v7451 = vsel %vm7355, 0.0, %v7359
    %v7452 = vadd.f32 %v7319, %v7448
    %v7453 = vadd.f32 %v7320, %v7449
    %v7454 = vadd.f32 %v7321, %v7450
    %v7455 = vadd.f32 %v7322, %v7451
    %v7456 = vadd.f32 %v7232, %v7361
    %v7457 = vadd.f32 %v7234, %v7363
    %v7458 = vadd.f32 %v7236, %v7365
    %v7459 = vadd.f32 %v7238, %v7367
    %v7460 = vadd.f32 %v7240, %v7369
    %v7461 = vadd.f32 %v7242, %v7371
    %v7462 = vadd.f32 %v7244, %v7373
    %v7463 = vadd.f32 %v7246, %v7375
    %v7464 = vadd.f32 %v7248, %v7377
    %v7465 = vadd.f32 %v7250, %v7379
    %v7466 = vadd.f32 %v7252, %v7381
    %v7467 = vadd.f32 %v7254, %v7383
    %v7468 = vadd.f32 %v7256, %v7385
    %v7469 = vadd.f32 %v7258, %v7387
    %v7470 = vadd.f32 %v7260, %v7389
    %v7471 = vadd.f32 %v7262, %v7391
    %v7472 = vadd.f32 %v7264, %v7393
    %v7473 = vadd.f32 %v7266, %v7395
    %v7474 = vadd.f32 %v7268, %v7397
    %v7475 = vadd.f32 %v7270, %v7399
    %v7476 = vadd.f32 %v7272, %v7401
    %v7477 = vadd.f32 %v7274, %v7403
    %v7478 = vadd.f32 %v7276, %v7405
    %v7479 = vadd.f32 %v7278, %v7407
    %v7480 = vadd.f32 %v7280, %v7409
    %v7481 = vadd.f32 %v7282, %v7411
    %v7482 = vadd.f32 %v7284, %v7413
    %v7483 = vadd.f32 %v7286, %v7415
    %v7484 = vadd.f32 %v7452, %v6427
    %v7485 = vadd.f32 %v7453, %v6429
    %v7486 = vadd.f32 %v7454, %v6573
    %v7487 = vadd.f32 %v7455, %v6575
    %v7488 = vadd.f32 %v7456, %v6431
    %v7489 = vadd.f32 %v7457, %v6433
    %v7490 = vadd.f32 %v7458, %v6577
    %v7491 = vadd.f32 %v7459, %v6579
    %v7492 = vadd.f32 %v7460, %v6437
    %v7493 = vadd.f32 %v7461, %v6439
    %v7494 = vadd.f32 %v7462, %v6583
    %v7495 = vadd.f32 %v7463, %v6585
    %v7496 = vadd.f32 %v7464, %v6441
    %v7497 = vadd.f32 %v7465, %v6443
    %v7498 = vadd.f32 %v7466, %v6587
    %v7499 = vadd.f32 %v7467, %v6589
    %v7500 = vadd.f32 %v7468, %v6447
    %v7501 = vadd.f32 %v7469, %v6449
    %v7502 = vadd.f32 %v7470, %v6593
    %v7503 = vadd.f32 %v7471, %v6595
    %v7504 = vadd.f32 %v7472, %v6451
    %v7505 = vadd.f32 %v7473, %v6453
    %v7506 = vadd.f32 %v7474, %v6597
    %v7507 = vadd.f32 %v7475, %v6599
    %v7508 = vadd.f32 %v7476, %v6457
    %v7509 = vadd.f32 %v7477, %v6459
    %v7510 = vadd.f32 %v7478, %v6603
    %v7511 = vadd.f32 %v7479, %v6605
    %v7512 = vadd.f32 %v7480, %v6461
    %v7513 = vadd.f32 %v7481, %v6463
    %v7514 = vadd.f32 %v7482, %v6607
    %v7515 = vadd.f32 %v7483, %v6609
    %v7548 = vrot.slane %v6719, 2
    %v7549 = vrot.slane %v6723, 2
    %v7550 = vsel %vm1294, %v7548, %v7549
    %v7551 = vrot.slane %v6721, 2
    %v7552 = vrot.slane %v6725, 2
    %v7553 = vsel %vm1294, %v7551, %v7552
    %v7554 = vrot.slane %v6865, 2
    %v7555 = vrot.slane %v6869, 2
    %v7556 = vsel %vm1294, %v7554, %v7555
    %v7557 = vrot.slane %v6867, 2
    %v7558 = vrot.slane %v6871, 2
    %v7559 = vsel %vm1294, %v7557, %v7558
    %v7560 = vrot.slane %v6729, 2
    %v7561 = vsel %vm1294, %v7549, %v7560
    %v7562 = vrot.slane %v6731, 2
    %v7563 = vsel %vm1294, %v7552, %v7562
    %v7564 = vrot.slane %v6875, 2
    %v7565 = vsel %vm1294, %v7555, %v7564
    %v7566 = vrot.slane %v6877, 2
    %v7567 = vsel %vm1294, %v7558, %v7566
    %v7568 = vrot.slane %v6733, 2
    %v7569 = vsel %vm1294, %v7560, %v7568
    %v7570 = vrot.slane %v6735, 2
    %v7571 = vsel %vm1294, %v7562, %v7570
    %v7572 = vrot.slane %v6879, 2
    %v7573 = vsel %vm1294, %v7564, %v7572
    %v7574 = vrot.slane %v6881, 2
    %v7575 = vsel %vm1294, %v7566, %v7574
    %v7576 = vrot.slane %v6739, 2
    %v7577 = vsel %vm1294, %v7568, %v7576
    %v7578 = vrot.slane %v6741, 2
    %v7579 = vsel %vm1294, %v7570, %v7578
    %v7580 = vrot.slane %v6885, 2
    %v7581 = vsel %vm1294, %v7572, %v7580
    %v7582 = vrot.slane %v6887, 2
    %v7583 = vsel %vm1294, %v7574, %v7582
    %v7584 = vrot.slane %v6743, 2
    %v7585 = vsel %vm1294, %v7576, %v7584
    %v7586 = vrot.slane %v6745, 2
    %v7587 = vsel %vm1294, %v7578, %v7586
    %v7588 = vrot.slane %v6889, 2
    %v7589 = vsel %vm1294, %v7580, %v7588
    %v7590 = vrot.slane %v6891, 2
    %v7591 = vsel %vm1294, %v7582, %v7590
    %v7592 = vrot.slane %v6749, 2
    %v7593 = vsel %vm1294, %v7584, %v7592
    %v7594 = vrot.slane %v6751, 2
    %v7595 = vsel %vm1294, %v7586, %v7594
    %v7596 = vrot.slane %v6895, 2
    %v7597 = vsel %vm1294, %v7588, %v7596
    %v7598 = vrot.slane %v6897, 2
    %v7599 = vsel %vm1294, %v7590, %v7598
    %v7600 = vrot.slane %v6753, 2
    %v7601 = vsel %vm1294, %v7592, %v7600
    %v7602 = vrot.slane %v6755, 2
    %v7603 = vsel %vm1294, %v7594, %v7602
    %v7604 = vrot.slane %v6899, 2
    %v7605 = vsel %vm1294, %v7596, %v7604
    %v7606 = vrot.slane %v6901, 2
    %v7607 = vsel %vm1294, %v7598, %v7606
    %v7640 = vsel %vm1294, %v7600, 0.0
    %v7641 = vsel %vm1294, %v7602, 0.0
    %v7642 = vsel %vm1294, %v7604, 0.0
    %v7643 = vsel %vm1294, %v7606, 0.0
    %v7644 = vadd.f32 %v7484, %v7550
    %v7645 = vadd.f32 %v7485, %v7553
    %v7646 = vadd.f32 %v7486, %v7556
    %v7647 = vadd.f32 %v7487, %v7559
    %v7648 = vadd.f32 %v7488, %v7561
    %v7649 = vadd.f32 %v7489, %v7563
    %v7650 = vadd.f32 %v7490, %v7565
    %v7651 = vadd.f32 %v7491, %v7567
    %v7652 = vadd.f32 %v7492, %v7569
    %v7653 = vadd.f32 %v7493, %v7571
    %v7654 = vadd.f32 %v7494, %v7573
    %v7655 = vadd.f32 %v7495, %v7575
    %v7656 = vadd.f32 %v7496, %v7577
    %v7657 = vadd.f32 %v7497, %v7579
    %v7658 = vadd.f32 %v7498, %v7581
    %v7659 = vadd.f32 %v7499, %v7583
    %v7660 = vadd.f32 %v7500, %v7585
    %v7661 = vadd.f32 %v7501, %v7587
    %v7662 = vadd.f32 %v7502, %v7589
    %v7663 = vadd.f32 %v7503, %v7591
    %v7664 = vadd.f32 %v7504, %v7593
    %v7665 = vadd.f32 %v7505, %v7595
    %v7666 = vadd.f32 %v7506, %v7597
    %v7667 = vadd.f32 %v7507, %v7599
    %v7668 = vadd.f32 %v7508, %v7601
    %v7669 = vadd.f32 %v7509, %v7603
    %v7670 = vadd.f32 %v7510, %v7605
    %v7671 = vadd.f32 %v7511, %v7607
    %v7672 = vadd.f32 %v7512, %v7640
    %v7673 = vadd.f32 %v7513, %v7641
    %v7674 = vadd.f32 %v7514, %v7642
    %v7675 = vadd.f32 %v7515, %v7643
    %v7708 = vrot.slane %v7011, 4
    %v7709 = vrot.slane %v7015, 4
    %v7710 = vsel %vm1616, %v7708, %v7709
    %v7711 = vrot.slane %v7013, 4
    %v7712 = vrot.slane %v7017, 4
    %v7713 = vsel %vm1616, %v7711, %v7712
    %v7714 = vrot.slane %v7157, 4
    %v7715 = vrot.slane %v7161, 4
    %v7716 = vsel %vm1616, %v7714, %v7715
    %v7717 = vrot.slane %v7159, 4
    %v7718 = vrot.slane %v7163, 4
    %v7719 = vsel %vm1616, %v7717, %v7718
    %v7720 = vrot.slane %v7021, 4
    %v7721 = vsel %vm1616, %v7709, %v7720
    %v7722 = vrot.slane %v7023, 4
    %v7723 = vsel %vm1616, %v7712, %v7722
    %v7724 = vrot.slane %v7167, 4
    %v7725 = vsel %vm1616, %v7715, %v7724
    %v7726 = vrot.slane %v7169, 4
    %v7727 = vsel %vm1616, %v7718, %v7726
    %v7728 = vrot.slane %v7025, 4
    %v7729 = vsel %vm1616, %v7720, %v7728
    %v7730 = vrot.slane %v7027, 4
    %v7731 = vsel %vm1616, %v7722, %v7730
    %v7732 = vrot.slane %v7171, 4
    %v7733 = vsel %vm1616, %v7724, %v7732
    %v7734 = vrot.slane %v7173, 4
    %v7735 = vsel %vm1616, %v7726, %v7734
    %v7736 = vrot.slane %v7031, 4
    %v7737 = vsel %vm1616, %v7728, %v7736
    %v7738 = vrot.slane %v7033, 4
    %v7739 = vsel %vm1616, %v7730, %v7738
    %v7740 = vrot.slane %v7177, 4
    %v7741 = vsel %vm1616, %v7732, %v7740
    %v7742 = vrot.slane %v7179, 4
    %v7743 = vsel %vm1616, %v7734, %v7742
    %v7744 = vrot.slane %v7035, 4
    %v7745 = vsel %vm1616, %v7736, %v7744
    %v7746 = vrot.slane %v7037, 4
    %v7747 = vsel %vm1616, %v7738, %v7746
    %v7748 = vrot.slane %v7181, 4
    %v7749 = vsel %vm1616, %v7740, %v7748
    %v7750 = vrot.slane %v7183, 4
    %v7751 = vsel %vm1616, %v7742, %v7750
    %v7752 = vrot.slane %v7041, 4
    %v7753 = vsel %vm1616, %v7744, %v7752
    %v7754 = vrot.slane %v7043, 4
    %v7755 = vsel %vm1616, %v7746, %v7754
    %v7756 = vrot.slane %v7187, 4
    %v7757 = vsel %vm1616, %v7748, %v7756
    %v7758 = vrot.slane %v7189, 4
    %v7759 = vsel %vm1616, %v7750, %v7758
    %v7760 = vrot.slane %v7045, 4
    %v7761 = vsel %vm1616, %v7752, %v7760
    %v7762 = vrot.slane %v7047, 4
    %v7763 = vsel %vm1616, %v7754, %v7762
    %v7764 = vrot.slane %v7191, 4
    %v7765 = vsel %vm1616, %v7756, %v7764
    %v7766 = vrot.slane %v7193, 4
    %v7767 = vsel %vm1616, %v7758, %v7766
    %v7800 = vsel %vm1616, %v7760, 0.0
    %v7801 = vsel %vm1616, %v7762, 0.0
    %v7802 = vsel %vm1616, %v7764, 0.0
    %v7803 = vsel %vm1616, %v7766, 0.0
    %v7804 = vadd.f32 %v7644, %v7710
    %v7805 = vadd.f32 %v7645, %v7713
    %v7806 = vadd.f32 %v7646, %v7716
    %v7807 = vadd.f32 %v7647, %v7719
    %v7808 = vadd.f32 %v7648, %v7721
    %v7809 = vadd.f32 %v7649, %v7723
    %v7810 = vadd.f32 %v7650, %v7725
    %v7811 = vadd.f32 %v7651, %v7727
    %v7812 = vadd.f32 %v7652, %v7729
    %v7813 = vadd.f32 %v7653, %v7731
    %v7814 = vadd.f32 %v7654, %v7733
    %v7815 = vadd.f32 %v7655, %v7735
    %v7816 = vadd.f32 %v7656, %v7737
    %v7817 = vadd.f32 %v7657, %v7739
    %v7818 = vadd.f32 %v7658, %v7741
    %v7819 = vadd.f32 %v7659, %v7743
    %v7820 = vadd.f32 %v7660, %v7745
    %v7821 = vadd.f32 %v7661, %v7747
    %v7822 = vadd.f32 %v7662, %v7749
    %v7823 = vadd.f32 %v7663, %v7751
    %v7824 = vadd.f32 %v7664, %v7753
    %v7825 = vadd.f32 %v7665, %v7755
    %v7826 = vadd.f32 %v7666, %v7757
    %v7827 = vadd.f32 %v7667, %v7759
    %v7828 = vadd.f32 %v7668, %v7761
    %v7829 = vadd.f32 %v7669, %v7763
    %v7830 = vadd.f32 %v7670, %v7765
    %v7831 = vadd.f32 %v7671, %v7767
    %v7832 = vadd.f32 %v7672, %v7800
    %v7833 = vadd.f32 %v7673, %v7801
    %v7834 = vadd.f32 %v7674, %v7802
    %v7835 = vadd.f32 %v7675, %v7803
    %v7836 = vld [vmem:[#allocation8] sm:$0xf]
    %v7838 = vlaneseq
    %v7839 = vshrl.u32 %v7838, 7
    %v7840 = vsub.s32 0, %v7839
    %v7841 = vrot.slane %v7836, %v7840
    %v7842 = vlaneseq
    %v7843 = vshrl.u32 %v7842, 7
    %v7844 = vsub.s32 1, %v7843
    %v7845 = vrot.slane %v7836, %v7844
    %v7846 = vlaneseq
    %v7847 = vshrl.u32 %v7846, 7
    %v7848 = vsub.s32 2, %v7847
    %v7849 = vrot.slane %v7836, %v7848
    %v7850 = vlaneseq
    %v7851 = vshrl.u32 %v7850, 7
    %v7852 = vsub.s32 3, %v7851
    %v7853 = vrot.slane %v7836, %v7852
    %v7858 = vadd.f32 %v7804, %v7841
    %v7859 = vadd.f32 %v7805, %v7845
    %v7860 = vadd.f32 %v7806, %v7849
    %v7861 = vadd.f32 %v7807, %v7853
    %v7862 = vadd.f32 %v7808, %v7841
    %v7863 = vadd.f32 %v7809, %v7845
    %v7864 = vadd.f32 %v7810, %v7849
    %v7865 = vadd.f32 %v7811, %v7853
    %v7866 = vadd.f32 %v7812, %v7841
    %v7867 = vadd.f32 %v7813, %v7845
    %v7868 = vadd.f32 %v7814, %v7849
    %v7869 = vadd.f32 %v7815, %v7853
    %v7870 = vadd.f32 %v7816, %v7841
    %v7871 = vadd.f32 %v7817, %v7845
    %v7872 = vadd.f32 %v7818, %v7849
    %v7873 = vadd.f32 %v7819, %v7853
    %v7874 = vadd.f32 %v7820, %v7841
    %v7875 = vadd.f32 %v7821, %v7845
    %v7876 = vadd.f32 %v7822, %v7849
    %v7877 = vadd.f32 %v7823, %v7853
    %v7878 = vadd.f32 %v7824, %v7841
    %v7879 = vadd.f32 %v7825, %v7845
    %v7880 = vadd.f32 %v7826, %v7849
    %v7881 = vadd.f32 %v7827, %v7853
    %v7882 = vadd.f32 %v7828, %v7841
    %v7883 = vadd.f32 %v7829, %v7845
    %v7884 = vadd.f32 %v7830, %v7849
    %v7885 = vadd.f32 %v7831, %v7853
    %v7886 = vadd.f32 %v7832, %v7841
    %v7887 = vadd.f32 %v7833, %v7845
    %v7888 = vadd.f32 %v7834, %v7849
    %v7889 = vadd.f32 %v7835, %v7853
    %v7890 = vmax.f32 %v7858, 0.0
    %v7891 = vmax.f32 %v7859, 0.0
    %v7892 = vmax.f32 %v7860, 0.0
    %v7893 = vmax.f32 %v7861, 0.0
    %v7894 = vmax.f32 %v7862, 0.0
    %v7895 = vmax.f32 %v7863, 0.0
    %v7896 = vmax.f32 %v7864, 0.0
    %v7897 = vmax.f32 %v7865, 0.0
    %v7898 = vmax.f32 %v7866, 0.0
    %v7899 = vmax.f32 %v7867, 0.0
    %v7900 = vmax.f32 %v7868, 0.0
    %v7901 = vmax.f32 %v7869, 0.0
    %v7902 = vmax.f32 %v7870, 0.0
    %v7903 = vmax.f32 %v7871, 0.0
    %v7904 = vmax.f32 %v7872, 0.0
    %v7905 = vmax.f32 %v7873, 0.0
    %v7906 = vmax.f32 %v7874, 0.0
    %v7907 = vmax.f32 %v7875, 0.0
    %v7908 = vmax.f32 %v7876, 0.0
    %v7909 = vmax.f32 %v7877, 0.0
    %v7910 = vmax.f32 %v7878, 0.0
    %v7911 = vmax.f32 %v7879, 0.0
    %v7912 = vmax.f32 %v7880, 0.0
    %v7913 = vmax.f32 %v7881, 0.0
    %v7914 = vmax.f32 %v7882, 0.0
    %v7915 = vmax.f32 %v7883, 0.0
    %v7916 = vmax.f32 %v7884, 0.0
    %v7917 = vmax.f32 %v7885, 0.0
    %v7918 = vmax.f32 %v7886, 0.0
    %v7919 = vmax.f32 %v7887, 0.0
    %v7920 = vmax.f32 %v7888, 0.0
    %v7921 = vmax.f32 %v7889, 0.0
    %7954 = vrot.lane.b32.xlu0 %v7890, 96
    %v7955 = vpop.permute.xlu0 %7954
    %7956 = vrot.lane.b32.xlu0 %v7891, 96
    %v7957 = vpop.permute.xlu0 %7956
    %7958 = vrot.lane.b32.xlu0 %v7892, 96
    %v7959 = vpop.permute.xlu0 %7958
    %7960 = vrot.lane.b32.xlu0 %v7893, 96
    %v7961 = vpop.permute.xlu0 %7960
    %7962 = vrot.lane.b32.xlu0 %v7894, 96
    %v7963 = vpop.permute.xlu0 %7962
    %7964 = vrot.lane.b32.xlu0 %v7895, 96
    %v7965 = vpop.permute.xlu0 %7964
    %7966 = vrot.lane.b32.xlu0 %v7896, 96
    %v7967 = vpop.permute.xlu0 %7966
    %7968 = vrot.lane.b32.xlu0 %v7897, 96
    %v7969 = vpop.permute.xlu0 %7968
    %7970 = vrot.lane.b32.xlu0 %v7898, 96
    %v7971 = vpop.permute.xlu0 %7970
    %7972 = vrot.lane.b32.xlu0 %v7899, 96
    %v7973 = vpop.permute.xlu0 %7972
    %7974 = vrot.lane.b32.xlu0 %v7900, 96
    %v7975 = vpop.permute.xlu0 %7974
    %7976 = vrot.lane.b32.xlu0 %v7901, 96
    %v7977 = vpop.permute.xlu0 %7976
    %7978 = vrot.lane.b32.xlu0 %v7902, 96
    %v7979 = vpop.permute.xlu0 %7978
    %7980 = vrot.lane.b32.xlu0 %v7903, 96
    %v7981 = vpop.permute.xlu0 %7980
    %7982 = vrot.lane.b32.xlu0 %v7904, 96
    %v7983 = vpop.permute.xlu0 %7982
    %7984 = vrot.lane.b32.xlu0 %v7905, 96
    %v7985 = vpop.permute.xlu0 %7984
    %7986 = vrot.lane.b32.xlu0 %v7906, 96
    %v7987 = vpop.permute.xlu0 %7986
    %7988 = vrot.lane.b32.xlu0 %v7907, 96
    %v7989 = vpop.permute.xlu0 %7988
    %7990 = vrot.lane.b32.xlu0 %v7908, 96
    %v7991 = vpop.permute.xlu0 %7990
    %7992 = vrot.lane.b32.xlu0 %v7909, 96
    %v7993 = vpop.permute.xlu0 %7992
    %7994 = vrot.lane.b32.xlu0 %v7910, 96
    %v7995 = vpop.permute.xlu0 %7994
    %7996 = vrot.lane.b32.xlu0 %v7911, 96
    %v7997 = vpop.permute.xlu0 %7996
    %7998 = vrot.lane.b32.xlu0 %v7912, 96
    %v7999 = vpop.permute.xlu0 %7998
    %8000 = vrot.lane.b32.xlu0 %v7913, 96
    %v8001 = vpop.permute.xlu0 %8000
    %8002 = vrot.lane.b32.xlu0 %v7914, 96
    %v8003 = vpop.permute.xlu0 %8002
    %8004 = vrot.lane.b32.xlu0 %v7915, 96
    %v8005 = vpop.permute.xlu0 %8004
    %8006 = vrot.lane.b32.xlu0 %v7916, 96
    %v8007 = vpop.permute.xlu0 %8006
    %8008 = vrot.lane.b32.xlu0 %v7917, 96
    %v8009 = vpop.permute.xlu0 %8008
    %8010 = vrot.lane.b32.xlu0 %v7918, 96
    %v8011 = vpop.permute.xlu0 %8010
    %8012 = vrot.lane.b32.xlu0 %v7919, 96
    %v8013 = vpop.permute.xlu0 %8012
    %8014 = vrot.lane.b32.xlu0 %v7920, 96
    %v8015 = vpop.permute.xlu0 %8014
    %8016 = vrot.lane.b32.xlu0 %v7921, 96
    %v8017 = vpop.permute.xlu0 %8016
    %vm8018 = vcmask 785408
    %v8019 = vsel %vm8018, %v7955, %v7957
    %v8020 = vsel %vm8018, %v7957, %v7959
    %v8021 = vsel %vm8018, %v7959, %v7961
    %v8022 = vsel %vm8018, %v7963, %v7965
    %v8023 = vsel %vm8018, %v7965, %v7967
    %v8024 = vsel %vm8018, %v7967, %v7969
    %v8025 = vsel %vm8018, %v7971, %v7973
    %v8026 = vsel %vm8018, %v7973, %v7975
    %v8027 = vsel %vm8018, %v7975, %v7977
    %v8028 = vsel %vm8018, %v7979, %v7981
    %v8029 = vsel %vm8018, %v7981, %v7983
    %v8030 = vsel %vm8018, %v7983, %v7985
    %v8031 = vsel %vm8018, %v7987, %v7989
    %v8032 = vsel %vm8018, %v7989, %v7991
    %v8033 = vsel %vm8018, %v7991, %v7993
    %v8034 = vsel %vm8018, %v7995, %v7997
    %v8035 = vsel %vm8018, %v7997, %v7999
    %v8036 = vsel %vm8018, %v7999, %v8001
    %v8037 = vsel %vm8018, %v8003, %v8005
    %v8038 = vsel %vm8018, %v8005, %v8007
    %v8039 = vsel %vm8018, %v8007, %v8009
    %v8040 = vsel %vm8018, %v8011, %v8013
    %v8041 = vsel %vm8018, %v8013, %v8015
    %v8042 = vsel %vm8018, %v8015, %v8017
    %v8075 = vsel %vm358, %v7961, 0.0
    %v8076 = vsel %vm358, %v7969, 0.0
    %v8077 = vsel %vm358, %v7977, 0.0
    %v8078 = vsel %vm358, %v7985, 0.0
    %v8079 = vsel %vm358, %v7993, 0.0
    %v8080 = vsel %vm358, %v8001, 0.0
    %v8081 = vsel %vm358, %v8009, 0.0
    %v8082 = vsel %vm358, %v8017, 0.0
    %v8083 = vmax.f32 %v7890, %v8019
    %v8084 = vmax.f32 %v7891, %v8020
    %v8085 = vmax.f32 %v7892, %v8021
    %v8086 = vmax.f32 %v7893, %v8075
    %v8087 = vmax.f32 %v7894, %v8022
    %v8088 = vmax.f32 %v7895, %v8023
    %v8089 = vmax.f32 %v7896, %v8024
    %v8090 = vmax.f32 %v7897, %v8076
    %v8091 = vmax.f32 %v7898, %v8025
    %v8092 = vmax.f32 %v7899, %v8026
    %v8093 = vmax.f32 %v7900, %v8027
    %v8094 = vmax.f32 %v7901, %v8077
    %v8095 = vmax.f32 %v7902, %v8028
    %v8096 = vmax.f32 %v7903, %v8029
    %v8097 = vmax.f32 %v7904, %v8030
    %v8098 = vmax.f32 %v7905, %v8078
    %v8099 = vmax.f32 %v7906, %v8031
    %v8100 = vmax.f32 %v7907, %v8032
    %v8101 = vmax.f32 %v7908, %v8033
    %v8102 = vmax.f32 %v7909, %v8079
    %v8103 = vmax.f32 %v7910, %v8034
    %v8104 = vmax.f32 %v7911, %v8035
    %v8105 = vmax.f32 %v7912, %v8036
    %v8106 = vmax.f32 %v7913, %v8080
    %v8107 = vmax.f32 %v7914, %v8037
    %v8108 = vmax.f32 %v7915, %v8038
    %v8109 = vmax.f32 %v7916, %v8039
    %v8110 = vmax.f32 %v7917, %v8081
    %v8111 = vmax.f32 %v7918, %v8040
    %v8112 = vmax.f32 %v7919, %v8041
    %v8113 = vmax.f32 %v7920, %v8042
    %v8114 = vmax.f32 %v7921, %v8082
    %v8147 = vrot.slane %v8083, 2
    %v8148 = vrot.slane %v8087, 2
    %v8149 = vsel %vm1294, %v8147, %v8148
    %v8150 = vrot.slane %v8084, 2
    %v8151 = vrot.slane %v8088, 2
    %v8152 = vsel %vm1294, %v8150, %v8151
    %v8153 = vrot.slane %v8085, 2
    %v8154 = vrot.slane %v8089, 2
    %v8155 = vsel %vm1294, %v8153, %v8154
    %v8156 = vrot.slane %v8086, 2
    %v8157 = vrot.slane %v8090, 2
    %v8158 = vsel %vm1294, %v8156, %v8157
    %v8159 = vrot.slane %v8091, 2
    %v8160 = vsel %vm1294, %v8148, %v8159
    %v8161 = vrot.slane %v8092, 2
    %v8162 = vsel %vm1294, %v8151, %v8161
    %v8163 = vrot.slane %v8093, 2
    %v8164 = vsel %vm1294, %v8154, %v8163
    %v8165 = vrot.slane %v8094, 2
    %v8166 = vsel %vm1294, %v8157, %v8165
    %v8167 = vrot.slane %v8095, 2
    %v8168 = vsel %vm1294, %v8159, %v8167
    %v8169 = vrot.slane %v8096, 2
    %v8170 = vsel %vm1294, %v8161, %v8169
    %v8171 = vrot.slane %v8097, 2
    %v8172 = vsel %vm1294, %v8163, %v8171
    %v8173 = vrot.slane %v8098, 2
    %v8174 = vsel %vm1294, %v8165, %v8173
    %v8175 = vrot.slane %v8099, 2
    %v8176 = vsel %vm1294, %v8167, %v8175
    %v8177 = vrot.slane %v8100, 2
    %v8178 = vsel %vm1294, %v8169, %v8177
    %v8179 = vrot.slane %v8101, 2
    %v8180 = vsel %vm1294, %v8171, %v8179
    %v8181 = vrot.slane %v8102, 2
    %v8182 = vsel %vm1294, %v8173, %v8181
    %v8183 = vrot.slane %v8103, 2
    %v8184 = vsel %vm1294, %v8175, %v8183
    %v8185 = vrot.slane %v8104, 2
    %v8186 = vsel %vm1294, %v8177, %v8185
    %v8187 = vrot.slane %v8105, 2
    %v8188 = vsel %vm1294, %v8179, %v8187
    %v8189 = vrot.slane %v8106, 2
    %v8190 = vsel %vm1294, %v8181, %v8189
    %v8191 = vrot.slane %v8107, 2
    %v8192 = vsel %vm1294, %v8183, %v8191
    %v8193 = vrot.slane %v8108, 2
    %v8194 = vsel %vm1294, %v8185, %v8193
    %v8195 = vrot.slane %v8109, 2
    %v8196 = vsel %vm1294, %v8187, %v8195
    %v8197 = vrot.slane %v8110, 2
    %v8198 = vsel %vm1294, %v8189, %v8197
    %v8199 = vrot.slane %v8111, 2
    %v8200 = vsel %vm1294, %v8191, %v8199
    %v8201 = vrot.slane %v8112, 2
    %v8202 = vsel %vm1294, %v8193, %v8201
    %v8203 = vrot.slane %v8113, 2
    %v8204 = vsel %vm1294, %v8195, %v8203
    %v8205 = vrot.slane %v8114, 2
    %v8206 = vsel %vm1294, %v8197, %v8205
    %v8239 = vsel %vm1294, %v8199, 0.0
    %v8240 = vsel %vm1294, %v8201, 0.0
    %v8241 = vsel %vm1294, %v8203, 0.0
    %v8242 = vsel %vm1294, %v8205, 0.0
    %v8243 = vmax.f32 %v8083, %v8149
    %v8244 = vmax.f32 %v8084, %v8152
    %v8245 = vmax.f32 %v8085, %v8155
    %v8246 = vmax.f32 %v8086, %v8158
    %v8247 = vmax.f32 %v8087, %v8160
    %v8248 = vmax.f32 %v8088, %v8162
    %v8249 = vmax.f32 %v8089, %v8164
    %v8250 = vmax.f32 %v8090, %v8166
    %v8251 = vmax.f32 %v8091, %v8168
    %v8252 = vmax.f32 %v8092, %v8170
    %v8253 = vmax.f32 %v8093, %v8172
    %v8254 = vmax.f32 %v8094, %v8174
    %v8255 = vmax.f32 %v8095, %v8176
    %v8256 = vmax.f32 %v8096, %v8178
    %v8257 = vmax.f32 %v8097, %v8180
    %v8258 = vmax.f32 %v8098, %v8182
    %v8259 = vmax.f32 %v8099, %v8184
    %v8260 = vmax.f32 %v8100, %v8186
    %v8261 = vmax.f32 %v8101, %v8188
    %v8262 = vmax.f32 %v8102, %v8190
    %v8263 = vmax.f32 %v8103, %v8192
    %v8264 = vmax.f32 %v8104, %v8194
    %v8265 = vmax.f32 %v8105, %v8196
    %v8266 = vmax.f32 %v8106, %v8198
    %v8267 = vmax.f32 %v8107, %v8200
    %v8268 = vmax.f32 %v8108, %v8202
    %v8269 = vmax.f32 %v8109, %v8204
    %v8270 = vmax.f32 %v8110, %v8206
    %v8271 = vmax.f32 %v8111, %v8239
    %v8272 = vmax.f32 %v8112, %v8240
    %v8273 = vmax.f32 %v8113, %v8241
    %v8274 = vmax.f32 %v8114, %v8242
    %v8283 = vrot.slane %v8259, 7
    %vm8284 = vcmask 1041409
    %v8285 = vsel %vm8284, %v8283, %v8243
    %v8286 = vrot.slane %v8260, 7
    %v8287 = vsel %vm8284, %v8286, %v8244
    %v8288 = vrot.slane %v8261, 7
    %v8289 = vsel %vm8284, %v8288, %v8245
    %v8290 = vrot.slane %v8262, 7
    %v8291 = vsel %vm8284, %v8290, %v8246
    %v8296 = vrot.slane %v8243, 4
    %v8297 = vrot.slane %v8259, 3
    %v8298 = vsel %vm8284, %v8297, %v8296
    %v8299 = vrot.slane %v8244, 4
    %v8300 = vrot.slane %v8260, 3
    %v8301 = vsel %vm8284, %v8300, %v8299
    %v8302 = vrot.slane %v8245, 4
    %v8303 = vrot.slane %v8261, 3
    %v8304 = vsel %vm8284, %v8303, %v8302
    %v8305 = vrot.slane %v8246, 4
    %v8306 = vrot.slane %v8262, 3
    %v8307 = vsel %vm8284, %v8306, %v8305
    %8308 = vrot.lane.b32.xlu0 %v8298, 64
    %v8309 = vpop.permute.xlu0 %8308
    %8310 = vrot.lane.b32.xlu0 %v8301, 64
    %v8311 = vpop.permute.xlu0 %8310
    %8312 = vrot.lane.b32.xlu0 %v8304, 64
    %v8313 = vpop.permute.xlu0 %8312
    %8314 = vrot.lane.b32.xlu0 %v8307, 64
    %v8315 = vpop.permute.xlu0 %8314
    %v8316 = vsel %vm5722, %v8309, %v8311
    %v8317 = vsel %vm5722, %v8311, %v8313
    %v8318 = vsel %vm5722, %v8313, %v8315
    %v8331 = vrot.slane %v8263, 7
    %v8332 = vsel %vm8284, %v8331, %v8247
    %v8333 = vrot.slane %v8264, 7
    %v8334 = vsel %vm8284, %v8333, %v8248
    %v8335 = vrot.slane %v8265, 7
    %v8336 = vsel %vm8284, %v8335, %v8249
    %v8337 = vrot.slane %v8266, 7
    %v8338 = vsel %vm8284, %v8337, %v8250
    %v8343 = vrot.slane %v8247, 4
    %v8344 = vrot.slane %v8263, 3
    %v8345 = vsel %vm8284, %v8344, %v8343
    %v8346 = vrot.slane %v8248, 4
    %v8347 = vrot.slane %v8264, 3
    %v8348 = vsel %vm8284, %v8347, %v8346
    %v8349 = vrot.slane %v8249, 4
    %v8350 = vrot.slane %v8265, 3
    %v8351 = vsel %vm8284, %v8350, %v8349
    %v8352 = vrot.slane %v8250, 4
    %v8353 = vrot.slane %v8266, 3
    %v8354 = vsel %vm8284, %v8353, %v8352
    %8355 = vrot.lane.b32.xlu0 %v8345, 64
    %v8356 = vpop.permute.xlu0 %8355
    %8357 = vrot.lane.b32.xlu0 %v8348, 64
    %v8358 = vpop.permute.xlu0 %8357
    %8359 = vrot.lane.b32.xlu0 %v8351, 64
    %v8360 = vpop.permute.xlu0 %8359
    %8361 = vrot.lane.b32.xlu0 %v8354, 64
    %v8362 = vpop.permute.xlu0 %8361
    %v8363 = vsel %vm5722, %v8356, %v8358
    %v8364 = vsel %vm5722, %v8358, %v8360
    %v8365 = vsel %vm5722, %v8360, %v8362
    %v8378 = vrot.slane %v8267, 7
    %v8379 = vsel %vm8284, %v8378, %v8251
    %v8380 = vrot.slane %v8268, 7
    %v8381 = vsel %vm8284, %v8380, %v8252
    %v8382 = vrot.slane %v8269, 7
    %v8383 = vsel %vm8284, %v8382, %v8253
    %v8384 = vrot.slane %v8270, 7
    %v8385 = vsel %vm8284, %v8384, %v8254
    %v8390 = vrot.slane %v8251, 4
    %v8391 = vrot.slane %v8267, 3
    %v8392 = vsel %vm8284, %v8391, %v8390
    %v8393 = vrot.slane %v8252, 4
    %v8394 = vrot.slane %v8268, 3
    %v8395 = vsel %vm8284, %v8394, %v8393
    %v8396 = vrot.slane %v8253, 4
    %v8397 = vrot.slane %v8269, 3
    %v8398 = vsel %vm8284, %v8397, %v8396
    %v8399 = vrot.slane %v8254, 4
    %v8400 = vrot.slane %v8270, 3
    %v8401 = vsel %vm8284, %v8400, %v8399
    %8402 = vrot.lane.b32.xlu0 %v8392, 64
    %v8403 = vpop.permute.xlu0 %8402
    %8404 = vrot.lane.b32.xlu0 %v8395, 64
    %v8405 = vpop.permute.xlu0 %8404
    %8406 = vrot.lane.b32.xlu0 %v8398, 64
    %v8407 = vpop.permute.xlu0 %8406
    %8408 = vrot.lane.b32.xlu0 %v8401, 64
    %v8409 = vpop.permute.xlu0 %8408
    %v8410 = vsel %vm5722, %v8403, %v8405
    %v8411 = vsel %vm5722, %v8405, %v8407
    %v8412 = vsel %vm5722, %v8407, %v8409
    %v8425 = vrot.slane %v8271, 7
    %v8426 = vsel %vm8284, %v8425, %v8255
    %v8427 = vrot.slane %v8272, 7
    %v8428 = vsel %vm8284, %v8427, %v8256
    %v8429 = vrot.slane %v8273, 7
    %v8430 = vsel %vm8284, %v8429, %v8257
    %v8431 = vrot.slane %v8274, 7
    %v8432 = vsel %vm8284, %v8431, %v8258
    %v8437 = vsel %vm5722, %v8291, %v8309
    %v8438 = vsel %vm5722, %v8338, %v8356
    %v8439 = vsel %vm5722, %v8385, %v8403
    %v8440 = vpack.c.bf16 %v8285, %v8285
    %v8441 = vpack.c.bf16 %v8287, %v8287
    %v8442 = vpack.c.bf16 %v8289, %v8289
    %v8443 = vpack.c.bf16 %v8437, %v8437
    %v8444 = vpack.c.bf16 %v8316, %v8316
    %v8445 = vpack.c.bf16 %v8317, %v8317
    %v8446 = vpack.c.bf16 %v8318, %v8318
    %v8447 = vpack.c.bf16 %v8332, %v8332
    %v8448 = vpack.c.bf16 %v8334, %v8334
    %v8449 = vpack.c.bf16 %v8336, %v8336
    %v8450 = vpack.c.bf16 %v8438, %v8438
    %v8451 = vpack.c.bf16 %v8363, %v8363
    %v8452 = vpack.c.bf16 %v8364, %v8364
    %v8453 = vpack.c.bf16 %v8365, %v8365
    %v8454 = vpack.c.bf16 %v8379, %v8379
    %v8455 = vpack.c.bf16 %v8381, %v8381
    %v8456 = vpack.c.bf16 %v8383, %v8383
    %v8457 = vpack.c.bf16 %v8439, %v8439
    %v8458 = vpack.c.bf16 %v8410, %v8410
    %v8459 = vpack.c.bf16 %v8411, %v8411
    %v8460 = vpack.c.bf16 %v8412, %v8412
    %v8461 = vpack.c.bf16 %v8426, %v8426
    %v8462 = vpack.c.bf16 %v8428, %v8428
    %v8463 = vpack.c.bf16 %v8430, %v8430
    %v8464 = vpack.c.bf16 %v8432, %v8432
    %v8465 = vld [vmem:[%s5] sm:$0xf]
    %v8466 = vld [vmem:[%s5 + $0x4] sm:$0xf]
    %v8467 = vld [vmem:[%s5 + $0x8] sm:$0xf]
    %v8468 = vld [vmem:[%s5 + $0xc] sm:$0xf]
    %v8469 = vld [vmem:[%s5 + $0x10] sm:$0xf]
    %v8470 = vld [vmem:[%s5 + $0x14] sm:$0xf]
    %v8471 = vld [vmem:[%s5 + $0x18] sm:$0xf]
    %v8472 = vld [vmem:[%s5 + $0x1c] sm:$0xf]
    %v8473 = vld [vmem:[%s5 + $0x20] sm:$0xf]
    %v8474 = vld [vmem:[%s5 + $0x24] sm:$0xf]
    %v8475 = vld [vmem:[%s5 + $0x28] sm:$0xf]
    %v8476 = vld [vmem:[%s5 + $0x2c] sm:$0xf]
    %v8477 = vld [vmem:[%s5 + $0x30] sm:$0xf]
    %v8478 = vld [vmem:[%s5 + $0x34] sm:$0xf]
    %v8479 = vld [vmem:[%s5 + $0x38] sm:$0xf]
    %v8480 = vld [vmem:[%s5 + $0x3c] sm:$0xf]
    %v8481 = vld [vmem:[%s5 + $0x40] sm:$0xf]
    %v8482 = vld [vmem:[%s5 + $0x44] sm:$0xf]
    %v8483 = vld [vmem:[%s5 + $0x48] sm:$0xf]
    %v8484 = vld [vmem:[%s5 + $0x4c] sm:$0xf]
    %v8485 = vld [vmem:[%s5 + $0x50] sm:$0xf]
    %v8486 = vld [vmem:[%s5 + $0x54] sm:$0xf]
    %v8487 = vld [vmem:[%s5 + $0x58] sm:$0xf]
    %v8488 = vld [vmem:[%s5 + $0x5c] sm:$0xf]
    %v8489 = vld [vmem:[%s5 + $0x60] sm:$0xf]
    %v8490 = vld [vmem:[%s5 + $0x64] sm:$0xf]
    %v8491 = vld [vmem:[%s5 + $0x68] sm:$0xf]
    %v8492 = vld [vmem:[%s5 + $0x6c] sm:$0xf]
    %v8493 = vld [vmem:[%s5 + $0x70] sm:$0xf]
    %v8494 = vld [vmem:[%s5 + $0x74] sm:$0xf]
    %v8495 = vld [vmem:[%s5 + $0x78] sm:$0xf]
    %v8496 = vld [vmem:[%s5 + $0x7c] sm:$0xf]
    %v8497 = vld [vmem:[%s5 + $0x80] sm:$0xf]
    %v8498 = vld [vmem:[%s5 + $0x84] sm:$0xf]
    %v8499 = vld [vmem:[%s5 + $0x88] sm:$0xf]
    %v8500 = vld [vmem:[%s5 + $0x8c] sm:$0xf]
    %v8501 = vld [vmem:[%s5 + $0x90] sm:$0xf]
    %v8502 = vld [vmem:[%s5 + $0x94] sm:$0xf]
    %v8503 = vld [vmem:[%s5 + $0x98] sm:$0xf]
    %v8504 = vld [vmem:[%s5 + $0x9c] sm:$0xf]
    %v8505 = vld [vmem:[%s5 + $0xa0] sm:$0xf]
    %v8506 = vld [vmem:[%s5 + $0xa4] sm:$0xf]
    %v8507 = vld [vmem:[%s5 + $0xa8] sm:$0xf]
    %v8508 = vld [vmem:[%s5 + $0xac] sm:$0xf]
    %v8509 = vld [vmem:[%s5 + $0xb0] sm:$0xf]
    %v8510 = vld [vmem:[%s5 + $0xb4] sm:$0xf]
    %v8511 = vld [vmem:[%s5 + $0xb8] sm:$0xf]
    %v8512 = vld [vmem:[%s5 + $0xbc] sm:$0xf]
    %v8513 = vld [vmem:[%s5 + $0xc0] sm:$0xf]
    %v8514 = vld [vmem:[%s5 + $0xc4] sm:$0xf]
    %v8515 = vld [vmem:[%s5 + $0xc8] sm:$0xf]
    %v8516 = vld [vmem:[%s5 + $0xcc] sm:$0xf]
    %v8517 = vld [vmem:[%s5 + $0xd0] sm:$0xf]
    %v8518 = vld [vmem:[%s5 + $0xd4] sm:$0xf]
    %v8519 = vld [vmem:[%s5 + $0xd8] sm:$0xf]
    %v8520 = vld [vmem:[%s5 + $0xdc] sm:$0xf]
    %v8521 = vld [vmem:[%s5 + $0xe0] sm:$0xf]
    %v8522 = vld [vmem:[%s5 + $0xe4] sm:$0xf]
    %v8523 = vld [vmem:[%s5 + $0xe8] sm:$0xf]
    %v8524 = vld [vmem:[%s5 + $0xec] sm:$0xf]
    %v8525 = vld [vmem:[%s5 + $0xf0] sm:$0xf]
    %v8526 = vld [vmem:[%s5 + $0xf4] sm:$0xf]
    %v8527 = vld [vmem:[%s5 + $0xf8] sm:$0xf]
    %v8528 = vld [vmem:[%s5 + $0xfc] sm:$0xf]
    %v8529 = vld [vmem:[%s5 + $0x100] sm:$0xf]
    %v8530 = vld [vmem:[%s5 + $0x104] sm:$0xf]
    %v8531 = vld [vmem:[%s5 + $0x108] sm:$0xf]
    %v8532 = vld [vmem:[%s5 + $0x10c] sm:$0xf]
    %v8533 = vld [vmem:[%s5 + $0x110] sm:$0xf]
    %v8534 = vld [vmem:[%s5 + $0x114] sm:$0xf]
    %v8535 = vld [vmem:[%s5 + $0x118] sm:$0xf]
    %v8536 = vld [vmem:[%s5 + $0x11c] sm:$0xf]
    %v8537 = vld [vmem:[%s5 + $0x120] sm:$0xf]
    %v8538 = vld [vmem:[%s5 + $0x124] sm:$0xf]
    %v8539 = vld [vmem:[%s5 + $0x128] sm:$0xf]
    %v8540 = vld [vmem:[%s5 + $0x12c] sm:$0xf]
    %v8541 = vld [vmem:[%s5 + $0x130] sm:$0xf]
    %v8542 = vld [vmem:[%s5 + $0x134] sm:$0xf]
    %v8543 = vld [vmem:[%s5 + $0x138] sm:$0xf]
    %v8544 = vld [vmem:[%s5 + $0x13c] sm:$0xf]
    %v8545 = vld [vmem:[%s5 + $0x140] sm:$0xf]
    %v8546 = vld [vmem:[%s5 + $0x144] sm:$0xf]
    %v8547 = vld [vmem:[%s5 + $0x148] sm:$0xf]
    %v8548 = vld [vmem:[%s5 + $0x14c] sm:$0xf]
    %v8549 = vld [vmem:[%s5 + $0x150] sm:$0xf]
    %v8550 = vld [vmem:[%s5 + $0x154] sm:$0xf]
    %v8551 = vld [vmem:[%s5 + $0x158] sm:$0xf]
    %v8552 = vld [vmem:[%s5 + $0x15c] sm:$0xf]
    %v8553 = vld [vmem:[%s5 + $0x160] sm:$0xf]
    %v8554 = vld [vmem:[%s5 + $0x164] sm:$0xf]
    %v8555 = vld [vmem:[%s5 + $0x168] sm:$0xf]
    %v8556 = vld [vmem:[%s5 + $0x16c] sm:$0xf]
    %v8557 = vld [vmem:[%s5 + $0x170] sm:$0xf]
    %v8558 = vld [vmem:[%s5 + $0x174] sm:$0xf]
    %v8559 = vld [vmem:[%s5 + $0x178] sm:$0xf]
    %v8560 = vld [vmem:[%s5 + $0x17c] sm:$0xf]
    %v8561 = vld [vmem:[%s5 + $0x180] sm:$0xf]
    %v8562 = vld [vmem:[%s5 + $0x184] sm:$0xf]
    %v8563 = vld [vmem:[%s5 + $0x188] sm:$0xf]
    %v8564 = vld [vmem:[%s5 + $0x18c] sm:$0xf]
    %v8565 = vld [vmem:[%s5 + $0x190] sm:$0xf]
    %v8566 = vld [vmem:[%s5 + $0x194] sm:$0xf]
    %v8567 = vld [vmem:[%s5 + $0x198] sm:$0xf]
    %v8568 = vld [vmem:[%s5 + $0x19c] sm:$0xf]
    %v8569 = vld [vmem:[%s5 + $0x1a0] sm:$0xf]
    %v8570 = vld [vmem:[%s5 + $0x1a4] sm:$0xf]
    %v8571 = vld [vmem:[%s5 + $0x1a8] sm:$0xf]
    %v8572 = vld [vmem:[%s5 + $0x1ac] sm:$0xf]
    %v8573 = vld [vmem:[%s5 + $0x1b0] sm:$0xf]
    %v8574 = vld [vmem:[%s5 + $0x1b4] sm:$0xf]
    %v8575 = vld [vmem:[%s5 + $0x1b8] sm:$0xf]
    %v8576 = vld [vmem:[%s5 + $0x1bc] sm:$0xf]
    %v8577 = vld [vmem:[%s5 + $0x1c0] sm:$0xf]
    %v8578 = vld [vmem:[%s5 + $0x1c4] sm:$0xf]
    %v8579 = vld [vmem:[%s5 + $0x1c8] sm:$0xf]
    %v8580 = vld [vmem:[%s5 + $0x1cc] sm:$0xf]
    %v8581 = vld [vmem:[%s5 + $0x1d0] sm:$0xf]
    %v8582 = vld [vmem:[%s5 + $0x1d4] sm:$0xf]
    %v8583 = vld [vmem:[%s5 + $0x1d8] sm:$0xf]
    %v8584 = vld [vmem:[%s5 + $0x1dc] sm:$0xf]
    %v8585 = vld [vmem:[%s5 + $0x1e0] sm:$0xf]
    %v8586 = vld [vmem:[%s5 + $0x1e4] sm:$0xf]
    %v8587 = vld [vmem:[%s5 + $0x1e8] sm:$0xf]
    %v8588 = vld [vmem:[%s5 + $0x1ec] sm:$0xf]
    %v8589 = vld [vmem:[%s5 + $0x1f0] sm:$0xf]
    %v8590 = vld [vmem:[%s5 + $0x1f4] sm:$0xf]
    %v8591 = vld [vmem:[%s5 + $0x1f8] sm:$0xf]
    %v8592 = vld [vmem:[%s5 + $0x1fc] sm:$0xf]
    %v8593 = vld [vmem:[%s5 + $0x200] sm:$0xf]
    %v8594 = vld [vmem:[%s5 + $0x204] sm:$0xf]
    %v8595 = vld [vmem:[%s5 + $0x208] sm:$0xf]
    %v8596 = vld [vmem:[%s5 + $0x20c] sm:$0xf]
    %v8597 = vld [vmem:[%s5 + $0x210] sm:$0xf]
    %v8598 = vld [vmem:[%s5 + $0x214] sm:$0xf]
    %v8599 = vld [vmem:[%s5 + $0x218] sm:$0xf]
    %v8600 = vld [vmem:[%s5 + $0x21c] sm:$0xf]
    %v8601 = vld [vmem:[%s5 + $0x220] sm:$0xf]
    %v8602 = vld [vmem:[%s5 + $0x224] sm:$0xf]
    %v8603 = vld [vmem:[%s5 + $0x228] sm:$0xf]
    %v8604 = vld [vmem:[%s5 + $0x22c] sm:$0xf]
    %v8605 = vld [vmem:[%s5 + $0x230] sm:$0xf]
    %v8606 = vld [vmem:[%s5 + $0x234] sm:$0xf]
    %v8607 = vld [vmem:[%s5 + $0x238] sm:$0xf]
    %v8608 = vld [vmem:[%s5 + $0x23c] sm:$0xf]
    %v8609 = vld [vmem:[%s5 + $0x240] sm:$0xf]
    %v8610 = vld [vmem:[%s5 + $0x244] sm:$0xf]
    %v8611 = vld [vmem:[%s5 + $0x248] sm:$0xf]
    %v8612 = vld [vmem:[%s5 + $0x24c] sm:$0xf]
    %v8613 = vld [vmem:[%s5 + $0x250] sm:$0xf]
    %v8614 = vld [vmem:[%s5 + $0x254] sm:$0xf]
    %v8615 = vld [vmem:[%s5 + $0x258] sm:$0xf]
    %v8616 = vld [vmem:[%s5 + $0x25c] sm:$0xf]
    %v8617 = vld [vmem:[%s5 + $0x260] sm:$0xf]
    %v8618 = vld [vmem:[%s5 + $0x264] sm:$0xf]
    %v8619 = vld [vmem:[%s5 + $0x268] sm:$0xf]
    %v8620 = vld [vmem:[%s5 + $0x26c] sm:$0xf]
    %v8621 = vld [vmem:[%s5 + $0x270] sm:$0xf]
    %v8622 = vld [vmem:[%s5 + $0x274] sm:$0xf]
    %v8623 = vld [vmem:[%s5 + $0x278] sm:$0xf]
    %v8624 = vld [vmem:[%s5 + $0x27c] sm:$0xf]
    %v8625 = vld [vmem:[%s5 + $0x280] sm:$0xf]
    %v8626 = vld [vmem:[%s5 + $0x284] sm:$0xf]
    %v8627 = vld [vmem:[%s5 + $0x288] sm:$0xf]
    %v8628 = vld [vmem:[%s5 + $0x28c] sm:$0xf]
    %v8629 = vld [vmem:[%s5 + $0x290] sm:$0xf]
    %v8630 = vld [vmem:[%s5 + $0x294] sm:$0xf]
    %v8631 = vld [vmem:[%s5 + $0x298] sm:$0xf]
    %v8632 = vld [vmem:[%s5 + $0x29c] sm:$0xf]
    %v8633 = vld [vmem:[%s5 + $0x2a0] sm:$0xf]
    %v8634 = vld [vmem:[%s5 + $0x2a4] sm:$0xf]
    %v8635 = vld [vmem:[%s5 + $0x2a8] sm:$0xf]
    %v8636 = vld [vmem:[%s5 + $0x2ac] sm:$0xf]
    %v8637 = vld [vmem:[%s5 + $0x2b0] sm:$0xf]
    %v8638 = vld [vmem:[%s5 + $0x2b4] sm:$0xf]
    %v8639 = vld [vmem:[%s5 + $0x2b8] sm:$0xf]
    %v8640 = vld [vmem:[%s5 + $0x2bc] sm:$0xf]
    %v8641 = vld [vmem:[%s5 + $0x2c0] sm:$0xf]
    %v8642 = vld [vmem:[%s5 + $0x2c4] sm:$0xf]
    %v8643 = vld [vmem:[%s5 + $0x2c8] sm:$0xf]
    %v8644 = vld [vmem:[%s5 + $0x2cc] sm:$0xf]
    %v8645 = vld [vmem:[%s5 + $0x2d0] sm:$0xf]
    %v8646 = vld [vmem:[%s5 + $0x2d4] sm:$0xf]
    %v8647 = vld [vmem:[%s5 + $0x2d8] sm:$0xf]
    %v8648 = vld [vmem:[%s5 + $0x2dc] sm:$0xf]
    %v8649 = vld [vmem:[%s5 + $0x2e0] sm:$0xf]
    %v8650 = vld [vmem:[%s5 + $0x2e4] sm:$0xf]
    %v8651 = vld [vmem:[%s5 + $0x2e8] sm:$0xf]
    %v8652 = vld [vmem:[%s5 + $0x2ec] sm:$0xf]
    %v8653 = vld [vmem:[%s5 + $0x2f0] sm:$0xf]
    %v8654 = vld [vmem:[%s5 + $0x2f4] sm:$0xf]
    %v8655 = vld [vmem:[%s5 + $0x2f8] sm:$0xf]
    %v8656 = vld [vmem:[%s5 + $0x2fc] sm:$0xf]
    %v8657 = vld [vmem:[%s5 + $0x300] sm:$0xf]
    %v8658 = vld [vmem:[%s5 + $0x304] sm:$0xf]
    %v8659 = vld [vmem:[%s5 + $0x308] sm:$0xf]
    %v8660 = vld [vmem:[%s5 + $0x30c] sm:$0xf]
    %v8661 = vld [vmem:[%s5 + $0x310] sm:$0xf]
    %v8662 = vld [vmem:[%s5 + $0x314] sm:$0xf]
    %v8663 = vld [vmem:[%s5 + $0x318] sm:$0xf]
    %v8664 = vld [vmem:[%s5 + $0x31c] sm:$0xf]
    %v8665 = vld [vmem:[%s5 + $0x320] sm:$0xf]
    %v8666 = vld [vmem:[%s5 + $0x324] sm:$0xf]
    %v8667 = vld [vmem:[%s5 + $0x328] sm:$0xf]
    %v8668 = vld [vmem:[%s5 + $0x32c] sm:$0xf]
    %v8669 = vld [vmem:[%s5 + $0x330] sm:$0xf]
    %v8670 = vld [vmem:[%s5 + $0x334] sm:$0xf]
    %v8671 = vld [vmem:[%s5 + $0x338] sm:$0xf]
    %v8672 = vld [vmem:[%s5 + $0x33c] sm:$0xf]
    %v8673 = vld [vmem:[%s5 + $0x340] sm:$0xf]
    %v8674 = vld [vmem:[%s5 + $0x344] sm:$0xf]
    %v8675 = vld [vmem:[%s5 + $0x348] sm:$0xf]
    %v8676 = vld [vmem:[%s5 + $0x34c] sm:$0xf]
    %v8677 = vld [vmem:[%s5 + $0x350] sm:$0xf]
    %v8678 = vld [vmem:[%s5 + $0x354] sm:$0xf]
    %v8679 = vld [vmem:[%s5 + $0x358] sm:$0xf]
    %v8680 = vld [vmem:[%s5 + $0x35c] sm:$0xf]
    %v8681 = vld [vmem:[%s5 + $0x360] sm:$0xf]
    %v8682 = vld [vmem:[%s5 + $0x364] sm:$0xf]
    %v8683 = vld [vmem:[%s5 + $0x368] sm:$0xf]
    %v8684 = vld [vmem:[%s5 + $0x36c] sm:$0xf]
    %v8685 = vld [vmem:[%s5 + $0x370] sm:$0xf]
    %v8686 = vld [vmem:[%s5 + $0x374] sm:$0xf]
    %v8687 = vld [vmem:[%s5 + $0x378] sm:$0xf]
    %v8688 = vld [vmem:[%s5 + $0x37c] sm:$0xf]
    %v8689 = vld [vmem:[%s5 + $0x380] sm:$0xf]
    %v8690 = vld [vmem:[%s5 + $0x384] sm:$0xf]
    %v8691 = vld [vmem:[%s5 + $0x388] sm:$0xf]
    %v8692 = vld [vmem:[%s5 + $0x38c] sm:$0xf]
    %v8693 = vld [vmem:[%s5 + $0x390] sm:$0xf]
    %v8694 = vld [vmem:[%s5 + $0x394] sm:$0xf]
    %v8695 = vld [vmem:[%s5 + $0x398] sm:$0xf]
    %v8696 = vld [vmem:[%s5 + $0x39c] sm:$0xf]
    %v8697 = vld [vmem:[%s5 + $0x3a0] sm:$0xf]
    %v8698 = vld [vmem:[%s5 + $0x3a4] sm:$0xf]
    %v8699 = vld [vmem:[%s5 + $0x3a8] sm:$0xf]
    %v8700 = vld [vmem:[%s5 + $0x3ac] sm:$0xf]
    %v8701 = vld [vmem:[%s5 + $0x3b0] sm:$0xf]
    %v8702 = vld [vmem:[%s5 + $0x3b4] sm:$0xf]
    %v8703 = vld [vmem:[%s5 + $0x3b8] sm:$0xf]
    %v8704 = vld [vmem:[%s5 + $0x3bc] sm:$0xf]
    %v8705 = vld [vmem:[%s5 + $0x3c0] sm:$0xf]
    %v8706 = vld [vmem:[%s5 + $0x3c4] sm:$0xf]
    %v8707 = vld [vmem:[%s5 + $0x3c8] sm:$0xf]
    %v8708 = vld [vmem:[%s5 + $0x3cc] sm:$0xf]
    %v8709 = vld [vmem:[%s5 + $0x3d0] sm:$0xf]
    %v8710 = vld [vmem:[%s5 + $0x3d4] sm:$0xf]
    %v8711 = vld [vmem:[%s5 + $0x3d8] sm:$0xf]
    %v8712 = vld [vmem:[%s5 + $0x3dc] sm:$0xf]
    %v8713 = vld [vmem:[%s5 + $0x3e0] sm:$0xf]
    %v8714 = vld [vmem:[%s5 + $0x3e4] sm:$0xf]
    %v8715 = vld [vmem:[%s5 + $0x3e8] sm:$0xf]
    %v8716 = vld [vmem:[%s5 + $0x3ec] sm:$0xf]
    %v8717 = vld [vmem:[%s5 + $0x3f0] sm:$0xf]
    %v8718 = vld [vmem:[%s5 + $0x3f4] sm:$0xf]
    %v8719 = vld [vmem:[%s5 + $0x3f8] sm:$0xf]
    %v8720 = vld [vmem:[%s5 + $0x3fc] sm:$0xf]
    %v8721 = vld [vmem:[%s5 + $0x400] sm:$0xf]
    %v8722 = vld [vmem:[%s5 + $0x404] sm:$0xf]
    %v8723 = vld [vmem:[%s5 + $0x408] sm:$0xf]
    %v8724 = vld [vmem:[%s5 + $0x40c] sm:$0xf]
    %v8725 = vld [vmem:[%s5 + $0x410] sm:$0xf]
    %v8726 = vld [vmem:[%s5 + $0x414] sm:$0xf]
    %v8727 = vld [vmem:[%s5 + $0x418] sm:$0xf]
    %v8728 = vld [vmem:[%s5 + $0x41c] sm:$0xf]
    %v8729 = vld [vmem:[%s5 + $0x420] sm:$0xf]
    %v8730 = vld [vmem:[%s5 + $0x424] sm:$0xf]
    %v8731 = vld [vmem:[%s5 + $0x428] sm:$0xf]
    %v8732 = vld [vmem:[%s5 + $0x42c] sm:$0xf]
    %v8733 = vld [vmem:[%s5 + $0x430] sm:$0xf]
    %v8734 = vld [vmem:[%s5 + $0x434] sm:$0xf]
    %v8735 = vld [vmem:[%s5 + $0x438] sm:$0xf]
    %v8736 = vld [vmem:[%s5 + $0x43c] sm:$0xf]
    %v8737 = vld [vmem:[%s5 + $0x440] sm:$0xf]
    %v8738 = vld [vmem:[%s5 + $0x444] sm:$0xf]
    %v8739 = vld [vmem:[%s5 + $0x448] sm:$0xf]
    %v8740 = vld [vmem:[%s5 + $0x44c] sm:$0xf]
    %v8741 = vld [vmem:[%s5 + $0x450] sm:$0xf]
    %v8742 = vld [vmem:[%s5 + $0x454] sm:$0xf]
    %v8743 = vld [vmem:[%s5 + $0x458] sm:$0xf]
    %v8744 = vld [vmem:[%s5 + $0x45c] sm:$0xf]
    %v8745 = vld [vmem:[%s5 + $0x460] sm:$0xf]
    %v8746 = vld [vmem:[%s5 + $0x464] sm:$0xf]
    %v8747 = vld [vmem:[%s5 + $0x468] sm:$0xf]
    %v8748 = vld [vmem:[%s5 + $0x46c] sm:$0xf]
    %v8749 = vld [vmem:[%s5 + $0x470] sm:$0xf]
    %v8750 = vld [vmem:[%s5 + $0x474] sm:$0xf]
    %v8751 = vld [vmem:[%s5 + $0x478] sm:$0xf]
    %v8752 = vld [vmem:[%s5 + $0x47c] sm:$0xf]
    %v8753 = vld [vmem:[%s5 + $0x480] sm:$0xf]
    %v8754 = vld [vmem:[%s5 + $0x484] sm:$0xf]
    %v8755 = vld [vmem:[%s5 + $0x488] sm:$0xf]
    %v8756 = vld [vmem:[%s5 + $0x48c] sm:$0xf]
    %v8757 = vld [vmem:[%s5 + $0x490] sm:$0xf]
    %v8758 = vld [vmem:[%s5 + $0x494] sm:$0xf]
    %v8759 = vld [vmem:[%s5 + $0x498] sm:$0xf]
    %v8760 = vld [vmem:[%s5 + $0x49c] sm:$0xf]
    %v8761 = vld [vmem:[%s5 + $0x4a0] sm:$0xf]
    %v8762 = vld [vmem:[%s5 + $0x4a4] sm:$0xf]
    %v8763 = vld [vmem:[%s5 + $0x4a8] sm:$0xf]
    %v8764 = vld [vmem:[%s5 + $0x4ac] sm:$0xf]
    %v8765 = vld [vmem:[%s5 + $0x4b0] sm:$0xf]
    %v8766 = vld [vmem:[%s5 + $0x4b4] sm:$0xf]
    %v8767 = vld [vmem:[%s5 + $0x4b8] sm:$0xf]
    %v8768 = vld [vmem:[%s5 + $0x4bc] sm:$0xf]
    %v8769 = vld [vmem:[%s5 + $0x4c0] sm:$0xf]
    %v8770 = vld [vmem:[%s5 + $0x4c4] sm:$0xf]
    %v8771 = vld [vmem:[%s5 + $0x4c8] sm:$0xf]
    %v8772 = vld [vmem:[%s5 + $0x4cc] sm:$0xf]
    %v8773 = vld [vmem:[%s5 + $0x4d0] sm:$0xf]
    %v8774 = vld [vmem:[%s5 + $0x4d4] sm:$0xf]
    %v8775 = vld [vmem:[%s5 + $0x4d8] sm:$0xf]
    %v8776 = vld [vmem:[%s5 + $0x4dc] sm:$0xf]
    %v8777 = vld [vmem:[%s5 + $0x4e0] sm:$0xf]
    %v8778 = vld [vmem:[%s5 + $0x4e4] sm:$0xf]
    %v8779 = vld [vmem:[%s5 + $0x4e8] sm:$0xf]
    %v8780 = vld [vmem:[%s5 + $0x4ec] sm:$0xf]
    %v8781 = vld [vmem:[%s5 + $0x4f0] sm:$0xf]
    %v8782 = vld [vmem:[%s5 + $0x4f4] sm:$0xf]
    %v8783 = vld [vmem:[%s5 + $0x4f8] sm:$0xf]
    %v8784 = vld [vmem:[%s5 + $0x4fc] sm:$0xf]
    %v8785 = vld [vmem:[%s5 + $0x500] sm:$0xf]
    %v8786 = vld [vmem:[%s5 + $0x504] sm:$0xf]
    %v8787 = vld [vmem:[%s5 + $0x508] sm:$0xf]
    %v8788 = vld [vmem:[%s5 + $0x50c] sm:$0xf]
    %v8789 = vld [vmem:[%s5 + $0x510] sm:$0xf]
    %v8790 = vld [vmem:[%s5 + $0x514] sm:$0xf]
    %v8791 = vld [vmem:[%s5 + $0x518] sm:$0xf]
    %v8792 = vld [vmem:[%s5 + $0x51c] sm:$0xf]
    %v8793 = vld [vmem:[%s5 + $0x520] sm:$0xf]
    %v8794 = vld [vmem:[%s5 + $0x524] sm:$0xf]
    %v8795 = vld [vmem:[%s5 + $0x528] sm:$0xf]
    %v8796 = vld [vmem:[%s5 + $0x52c] sm:$0xf]
    %v8797 = vld [vmem:[%s5 + $0x530] sm:$0xf]
    %v8798 = vld [vmem:[%s5 + $0x534] sm:$0xf]
    %v8799 = vld [vmem:[%s5 + $0x538] sm:$0xf]
    %v8800 = vld [vmem:[%s5 + $0x53c] sm:$0xf]
    %v8801 = vld [vmem:[%s5 + $0x540] sm:$0xf]
    %v8802 = vld [vmem:[%s5 + $0x544] sm:$0xf]
    %v8803 = vld [vmem:[%s5 + $0x548] sm:$0xf]
    %v8804 = vld [vmem:[%s5 + $0x54c] sm:$0xf]
    %v8805 = vld [vmem:[%s5 + $0x550] sm:$0xf]
    %v8806 = vld [vmem:[%s5 + $0x554] sm:$0xf]
    %v8807 = vld [vmem:[%s5 + $0x558] sm:$0xf]
    %v8808 = vld [vmem:[%s5 + $0x55c] sm:$0xf]
    %v8809 = vld [vmem:[%s5 + $0x560] sm:$0xf]
    %v8810 = vld [vmem:[%s5 + $0x564] sm:$0xf]
    %v8811 = vld [vmem:[%s5 + $0x568] sm:$0xf]
    %v8812 = vld [vmem:[%s5 + $0x56c] sm:$0xf]
    %v8813 = vld [vmem:[%s5 + $0x570] sm:$0xf]
    %v8814 = vld [vmem:[%s5 + $0x574] sm:$0xf]
    %v8815 = vld [vmem:[%s5 + $0x578] sm:$0xf]
    %v8816 = vld [vmem:[%s5 + $0x57c] sm:$0xf]
    %v8817 = vld [vmem:[%s5 + $0x580] sm:$0xf]
    %v8818 = vld [vmem:[%s5 + $0x584] sm:$0xf]
    %v8819 = vld [vmem:[%s5 + $0x588] sm:$0xf]
    %v8820 = vld [vmem:[%s5 + $0x58c] sm:$0xf]
    %v8821 = vld [vmem:[%s5 + $0x590] sm:$0xf]
    %v8822 = vld [vmem:[%s5 + $0x594] sm:$0xf]
    %v8823 = vld [vmem:[%s5 + $0x598] sm:$0xf]
    %v8824 = vld [vmem:[%s5 + $0x59c] sm:$0xf]
    %v8825 = vld [vmem:[%s5 + $0x5a0] sm:$0xf]
    %v8826 = vld [vmem:[%s5 + $0x5a4] sm:$0xf]
    %v8827 = vld [vmem:[%s5 + $0x5a8] sm:$0xf]
    %v8828 = vld [vmem:[%s5 + $0x5ac] sm:$0xf]
    %v8829 = vld [vmem:[%s5 + $0x5b0] sm:$0xf]
    %v8830 = vld [vmem:[%s5 + $0x5b4] sm:$0xf]
    %v8831 = vld [vmem:[%s5 + $0x5b8] sm:$0xf]
    %v8832 = vld [vmem:[%s5 + $0x5bc] sm:$0xf]
    %v8833 = vld [vmem:[%s5 + $0x5c0] sm:$0xf]
    %v8834 = vld [vmem:[%s5 + $0x5c4] sm:$0xf]
    %v8835 = vld [vmem:[%s5 + $0x5c8] sm:$0xf]
    %v8836 = vld [vmem:[%s5 + $0x5cc] sm:$0xf]
    %v8837 = vld [vmem:[%s5 + $0x5d0] sm:$0xf]
    %v8838 = vld [vmem:[%s5 + $0x5d4] sm:$0xf]
    %v8839 = vld [vmem:[%s5 + $0x5d8] sm:$0xf]
    %v8840 = vld [vmem:[%s5 + $0x5dc] sm:$0xf]
    %v8841 = vld [vmem:[%s5 + $0x5e0] sm:$0xf]
    %v8842 = vld [vmem:[%s5 + $0x5e4] sm:$0xf]
    %v8843 = vld [vmem:[%s5 + $0x5e8] sm:$0xf]
    %v8844 = vld [vmem:[%s5 + $0x5ec] sm:$0xf]
    %v8845 = vld [vmem:[%s5 + $0x5f0] sm:$0xf]
    %v8846 = vld [vmem:[%s5 + $0x5f4] sm:$0xf]
    %v8847 = vld [vmem:[%s5 + $0x5f8] sm:$0xf]
    %v8848 = vld [vmem:[%s5 + $0x5fc] sm:$0xf]
    %v8849 = vld [vmem:[%s5 + $0x600] sm:$0xf]
    %v8850 = vld [vmem:[%s5 + $0x604] sm:$0xf]
    %v8851 = vld [vmem:[%s5 + $0x608] sm:$0xf]
    %v8852 = vld [vmem:[%s5 + $0x60c] sm:$0xf]
    %v8853 = vld [vmem:[%s5 + $0x610] sm:$0xf]
    %v8854 = vld [vmem:[%s5 + $0x614] sm:$0xf]
    %v8855 = vld [vmem:[%s5 + $0x618] sm:$0xf]
    %v8856 = vld [vmem:[%s5 + $0x61c] sm:$0xf]
    %v8857 = vld [vmem:[#allocation10] sm:$0x1]
    %v8859 = vlaneseq
    %v8860 = vshrl.u32 %v8859, 7
    %v8861 = vsub.s32 0, %v8860
    %v8862 = vrot.slane %v8857, %v8861
    %v9256 = vunpack.c.l.b16 %v8465
    %v9257 = vunpack.c.l.b16 %v8466
    %v9258 = vunpack.c.l.b16 %v8467
    %v9259 = vunpack.c.l.b16 %v8468
    %v9260 = vunpack.c.l.b16 %v8469
    %v9261 = vunpack.c.l.b16 %v8470
    %v9262 = vunpack.c.l.b16 %v8471
    %v9263 = vunpack.c.l.b16 %v8472
    %v9264 = vunpack.c.l.b16 %v8473
    %v9265 = vunpack.c.l.b16 %v8474
    %v9266 = vunpack.c.l.b16 %v8475
    %v9267 = vunpack.c.l.b16 %v8476
    %v9268 = vunpack.c.l.b16 %v8477
    %v9269 = vunpack.c.l.b16 %v8478
    %v9270 = vunpack.c.l.b16 %v8479
    %v9271 = vunpack.c.l.b16 %v8480
    %v9272 = vunpack.c.l.b16 %v8481
    %v9273 = vunpack.c.l.b16 %v8482
    %v9274 = vunpack.c.l.b16 %v8483
    %v9275 = vunpack.c.l.b16 %v8484
    %v9276 = vunpack.c.l.b16 %v8485
    %v9277 = vunpack.c.l.b16 %v8486
    %v9278 = vunpack.c.l.b16 %v8487
    %v9279 = vunpack.c.l.b16 %v8488
    %v9280 = vunpack.c.l.b16 %v8489
    %v9281 = vunpack.c.l.b16 %v8490
    %v9282 = vunpack.c.l.b16 %v8491
    %v9283 = vunpack.c.l.b16 %v8492
    %v9284 = vunpack.c.l.b16 %v8493
    %v9285 = vunpack.c.l.b16 %v8494
    %v9286 = vunpack.c.l.b16 %v8495
    %v9287 = vunpack.c.l.b16 %v8496
    %v9288 = vunpack.c.l.b16 %v8497
    %v9289 = vunpack.c.l.b16 %v8498
    %v9290 = vunpack.c.l.b16 %v8499
    %v9291 = vunpack.c.l.b16 %v8500
    %v9292 = vunpack.c.l.b16 %v8501
    %v9293 = vunpack.c.l.b16 %v8502
    %v9294 = vunpack.c.l.b16 %v8503
    %v9295 = vunpack.c.l.b16 %v8504
    %v9296 = vunpack.c.l.b16 %v8505
    %v9297 = vunpack.c.l.b16 %v8506
    %v9298 = vunpack.c.l.b16 %v8507
    %v9299 = vunpack.c.l.b16 %v8508
    %v9300 = vunpack.c.l.b16 %v8509
    %v9301 = vunpack.c.l.b16 %v8510
    %v9302 = vunpack.c.l.b16 %v8511
    %v9303 = vunpack.c.l.b16 %v8512
    %v9304 = vunpack.c.l.b16 %v8513
    %v9305 = vunpack.c.l.b16 %v8514
    %v9306 = vunpack.c.l.b16 %v8515
    %v9307 = vunpack.c.l.b16 %v8516
    %v9308 = vunpack.c.l.b16 %v8517
    %v9309 = vunpack.c.l.b16 %v8518
    %v9310 = vunpack.c.l.b16 %v8519
    %v9311 = vunpack.c.l.b16 %v8520
    %v9312 = vunpack.c.l.b16 %v8521
    %v9313 = vunpack.c.l.b16 %v8522
    %v9314 = vunpack.c.l.b16 %v8523
    %v9315 = vunpack.c.l.b16 %v8524
    %v9316 = vunpack.c.l.b16 %v8525
    %v9317 = vunpack.c.l.b16 %v8526
    %v9318 = vunpack.c.l.b16 %v8527
    %v9319 = vunpack.c.l.b16 %v8528
    %v9320 = vunpack.c.l.b16 %v8529
    %v9321 = vunpack.c.l.b16 %v8530
    %v9322 = vunpack.c.l.b16 %v8531
    %v9323 = vunpack.c.l.b16 %v8532
    %v9324 = vunpack.c.l.b16 %v8533
    %v9325 = vunpack.c.l.b16 %v8534
    %v9326 = vunpack.c.l.b16 %v8535
    %v9327 = vunpack.c.l.b16 %v8536
    %v9328 = vunpack.c.l.b16 %v8537
    %v9329 = vunpack.c.l.b16 %v8538
    %v9330 = vunpack.c.l.b16 %v8539
    %v9331 = vunpack.c.l.b16 %v8540
    %v9332 = vunpack.c.l.b16 %v8541
    %v9333 = vunpack.c.l.b16 %v8542
    %v9334 = vunpack.c.l.b16 %v8543
    %v9335 = vunpack.c.l.b16 %v8544
    %v9336 = vunpack.c.l.b16 %v8545
    %v9337 = vunpack.c.l.b16 %v8546
    %v9338 = vunpack.c.l.b16 %v8547
    %v9339 = vunpack.c.l.b16 %v8548
    %v9340 = vunpack.c.l.b16 %v8549
    %v9341 = vunpack.c.l.b16 %v8550
    %v9342 = vunpack.c.l.b16 %v8551
    %v9343 = vunpack.c.l.b16 %v8552
    %v9344 = vunpack.c.l.b16 %v8553
    %v9345 = vunpack.c.l.b16 %v8554
    %v9346 = vunpack.c.l.b16 %v8555
    %v9347 = vunpack.c.l.b16 %v8556
    %v9348 = vunpack.c.l.b16 %v8557
    %v9349 = vunpack.c.l.b16 %v8558
    %v9350 = vunpack.c.l.b16 %v8559
    %v9351 = vunpack.c.l.b16 %v8560
    %v9352 = vunpack.c.l.b16 %v8561
    %v9353 = vunpack.c.l.b16 %v8562
    %v9354 = vunpack.c.l.b16 %v8563
    %v9355 = vunpack.c.l.b16 %v8564
    %v9356 = vunpack.c.l.b16 %v8565
    %v9357 = vunpack.c.l.b16 %v8566
    %v9358 = vunpack.c.l.b16 %v8567
    %v9359 = vunpack.c.l.b16 %v8568
    %v9360 = vunpack.c.l.b16 %v8569
    %v9361 = vunpack.c.l.b16 %v8570
    %v9362 = vunpack.c.l.b16 %v8571
    %v9363 = vunpack.c.l.b16 %v8572
    %v9364 = vunpack.c.l.b16 %v8573
    %v9365 = vunpack.c.l.b16 %v8574
    %v9366 = vunpack.c.l.b16 %v8575
    %v9367 = vunpack.c.l.b16 %v8576
    %v9368 = vunpack.c.l.b16 %v8577
    %v9369 = vunpack.c.l.b16 %v8578
    %v9370 = vunpack.c.l.b16 %v8579
    %v9371 = vunpack.c.l.b16 %v8580
    %v9372 = vunpack.c.l.b16 %v8581
    %v9373 = vunpack.c.l.b16 %v8582
    %v9374 = vunpack.c.l.b16 %v8583
    %v9375 = vunpack.c.l.b16 %v8584
    %v9376 = vunpack.c.l.b16 %v8585
    %v9377 = vunpack.c.l.b16 %v8586
    %v9378 = vunpack.c.l.b16 %v8587
    %v9379 = vunpack.c.l.b16 %v8588
    %v9380 = vunpack.c.l.b16 %v8589
    %v9381 = vunpack.c.l.b16 %v8590
    %v9382 = vunpack.c.l.b16 %v8591
    %v9383 = vunpack.c.l.b16 %v8592
    %v9384 = vunpack.c.l.b16 %v8593
    %v9385 = vunpack.c.l.b16 %v8594
    %v9386 = vunpack.c.l.b16 %v8595
    %v9387 = vunpack.c.l.b16 %v8596
    %v9388 = vunpack.c.l.b16 %v8597
    %v9389 = vunpack.c.l.b16 %v8598
    %v9390 = vunpack.c.l.b16 %v8599
    %v9391 = vunpack.c.l.b16 %v8600
    %v9392 = vunpack.c.l.b16 %v8601
    %v9393 = vunpack.c.l.b16 %v8602
    %v9394 = vunpack.c.l.b16 %v8603
    %v9395 = vunpack.c.l.b16 %v8604
    %v9396 = vunpack.c.l.b16 %v8605
    %v9397 = vunpack.c.l.b16 %v8606
    %v9398 = vunpack.c.l.b16 %v8607
    %v9399 = vunpack.c.l.b16 %v8608
    %v9400 = vunpack.c.l.b16 %v8609
    %v9401 = vunpack.c.l.b16 %v8610
    %v9402 = vunpack.c.l.b16 %v8611
    %v9403 = vunpack.c.l.b16 %v8612
    %v9404 = vunpack.c.l.b16 %v8613
    %v9405 = vunpack.c.l.b16 %v8614
    %v9406 = vunpack.c.l.b16 %v8615
    %v9407 = vunpack.c.l.b16 %v8616
    %v9408 = vunpack.c.l.b16 %v8617
    %v9409 = vunpack.c.l.b16 %v8618
    %v9410 = vunpack.c.l.b16 %v8619
    %v9411 = vunpack.c.l.b16 %v8620
    %v9412 = vunpack.c.l.b16 %v8621
    %v9413 = vunpack.c.l.b16 %v8622
    %v9414 = vunpack.c.l.b16 %v8623
    %v9415 = vunpack.c.l.b16 %v8624
    %v9416 = vunpack.c.l.b16 %v8625
    %v9417 = vunpack.c.l.b16 %v8626
    %v9418 = vunpack.c.l.b16 %v8627
    %v9419 = vunpack.c.l.b16 %v8628
    %v9420 = vunpack.c.l.b16 %v8629
    %v9421 = vunpack.c.l.b16 %v8630
    %v9422 = vunpack.c.l.b16 %v8631
    %v9423 = vunpack.c.l.b16 %v8632
    %v9424 = vunpack.c.l.b16 %v8633
    %v9425 = vunpack.c.l.b16 %v8634
    %v9426 = vunpack.c.l.b16 %v8635
    %v9427 = vunpack.c.l.b16 %v8636
    %v9428 = vunpack.c.l.b16 %v8637
    %v9429 = vunpack.c.l.b16 %v8638
    %v9430 = vunpack.c.l.b16 %v8639
    %v9431 = vunpack.c.l.b16 %v8640
    %v9432 = vunpack.c.l.b16 %v8641
    %v9433 = vunpack.c.l.b16 %v8642
    %v9434 = vunpack.c.l.b16 %v8643
    %v9435 = vunpack.c.l.b16 %v8644
    %v9436 = vunpack.c.l.b16 %v8645
    %v9437 = vunpack.c.l.b16 %v8646
    %v9438 = vunpack.c.l.b16 %v8647
    %v9439 = vunpack.c.l.b16 %v8648
    %v9440 = vunpack.c.l.b16 %v8649
    %v9441 = vunpack.c.l.b16 %v8650
    %v9442 = vunpack.c.l.b16 %v8651
    %v9443 = vunpack.c.l.b16 %v8652
    %v9444 = vunpack.c.l.b16 %v8653
    %v9445 = vunpack.c.l.b16 %v8654
    %v9446 = vunpack.c.l.b16 %v8655
    %v9447 = vunpack.c.l.b16 %v8656
    %v9448 = vunpack.c.l.b16 %v8657
    %v9449 = vunpack.c.l.b16 %v8658
    %v9450 = vunpack.c.l.b16 %v8659
    %v9451 = vunpack.c.l.b16 %v8660
    %v9452 = vunpack.c.l.b16 %v8661
    %v9453 = vunpack.c.l.b16 %v8662
    %v9454 = vunpack.c.l.b16 %v8663
    %v9455 = vunpack.c.l.b16 %v8664
    %v9456 = vunpack.c.l.b16 %v8665
    %v9457 = vunpack.c.l.b16 %v8666
    %v9458 = vunpack.c.l.b16 %v8667
    %v9459 = vunpack.c.l.b16 %v8668
    %v9460 = vunpack.c.l.b16 %v8669
    %v9461 = vunpack.c.l.b16 %v8670
    %v9462 = vunpack.c.l.b16 %v8671
    %v9463 = vunpack.c.l.b16 %v8672
    %v9464 = vunpack.c.l.b16 %v8673
    %v9465 = vunpack.c.l.b16 %v8674
    %v9466 = vunpack.c.l.b16 %v8675
    %v9467 = vunpack.c.l.b16 %v8676
    %v9468 = vunpack.c.l.b16 %v8677
    %v9469 = vunpack.c.l.b16 %v8678
    %v9470 = vunpack.c.l.b16 %v8679
    %v9471 = vunpack.c.l.b16 %v8680
    %v9472 = vunpack.c.l.b16 %v8681
    %v9473 = vunpack.c.l.b16 %v8682
    %v9474 = vunpack.c.l.b16 %v8683
    %v9475 = vunpack.c.l.b16 %v8684
    %v9476 = vunpack.c.l.b16 %v8685
    %v9477 = vunpack.c.l.b16 %v8686
    %v9478 = vunpack.c.l.b16 %v8687
    %v9479 = vunpack.c.l.b16 %v8688
    %v9480 = vunpack.c.l.b16 %v8689
    %v9481 = vunpack.c.l.b16 %v8690
    %v9482 = vunpack.c.l.b16 %v8691
    %v9483 = vunpack.c.l.b16 %v8692
    %v9484 = vunpack.c.l.b16 %v8693
    %v9485 = vunpack.c.l.b16 %v8694
    %v9486 = vunpack.c.l.b16 %v8695
    %v9487 = vunpack.c.l.b16 %v8696
    %v9488 = vunpack.c.l.b16 %v8697
    %v9489 = vunpack.c.l.b16 %v8698
    %v9490 = vunpack.c.l.b16 %v8699
    %v9491 = vunpack.c.l.b16 %v8700
    %v9492 = vunpack.c.l.b16 %v8701
    %v9493 = vunpack.c.l.b16 %v8702
    %v9494 = vunpack.c.l.b16 %v8703
    %v9495 = vunpack.c.l.b16 %v8704
    %v9496 = vunpack.c.l.b16 %v8705
    %v9497 = vunpack.c.l.b16 %v8706
    %v9498 = vunpack.c.l.b16 %v8707
    %v9499 = vunpack.c.l.b16 %v8708
    %v9500 = vunpack.c.l.b16 %v8709
    %v9501 = vunpack.c.l.b16 %v8710
    %v9502 = vunpack.c.l.b16 %v8711
    %v9503 = vunpack.c.l.b16 %v8712
    %v9504 = vunpack.c.l.b16 %v8713
    %v9505 = vunpack.c.l.b16 %v8714
    %v9506 = vunpack.c.l.b16 %v8715
    %v9507 = vunpack.c.l.b16 %v8716
    %v9508 = vunpack.c.l.b16 %v8717
    %v9509 = vunpack.c.l.b16 %v8718
    %v9510 = vunpack.c.l.b16 %v8719
    %v9511 = vunpack.c.l.b16 %v8720
    %v9512 = vunpack.c.l.b16 %v8721
    %v9513 = vunpack.c.l.b16 %v8722
    %v9514 = vunpack.c.l.b16 %v8723
    %v9515 = vunpack.c.l.b16 %v8724
    %v9516 = vunpack.c.l.b16 %v8725
    %v9517 = vunpack.c.l.b16 %v8726
    %v9518 = vunpack.c.l.b16 %v8727
    %v9519 = vunpack.c.l.b16 %v8728
    %v9520 = vunpack.c.l.b16 %v8729
    %v9521 = vunpack.c.l.b16 %v8730
    %v9522 = vunpack.c.l.b16 %v8731
    %v9523 = vunpack.c.l.b16 %v8732
    %v9524 = vunpack.c.l.b16 %v8733
    %v9525 = vunpack.c.l.b16 %v8734
    %v9526 = vunpack.c.l.b16 %v8735
    %v9527 = vunpack.c.l.b16 %v8736
    %v9528 = vunpack.c.l.b16 %v8737
    %v9529 = vunpack.c.l.b16 %v8738
    %v9530 = vunpack.c.l.b16 %v8739
    %v9531 = vunpack.c.l.b16 %v8740
    %v9532 = vunpack.c.l.b16 %v8741
    %v9533 = vunpack.c.l.b16 %v8742
    %v9534 = vunpack.c.l.b16 %v8743
    %v9535 = vunpack.c.l.b16 %v8744
    %v9536 = vunpack.c.l.b16 %v8745
    %v9537 = vunpack.c.l.b16 %v8746
    %v9538 = vunpack.c.l.b16 %v8747
    %v9539 = vunpack.c.l.b16 %v8748
    %v9540 = vunpack.c.l.b16 %v8749
    %v9541 = vunpack.c.l.b16 %v8750
    %v9542 = vunpack.c.l.b16 %v8751
    %v9543 = vunpack.c.l.b16 %v8752
    %v9544 = vunpack.c.l.b16 %v8753
    %v9545 = vunpack.c.l.b16 %v8754
    %v9546 = vunpack.c.l.b16 %v8755
    %v9547 = vunpack.c.l.b16 %v8756
    %v9548 = vunpack.c.l.b16 %v8757
    %v9549 = vunpack.c.l.b16 %v8758
    %v9550 = vunpack.c.l.b16 %v8759
    %v9551 = vunpack.c.l.b16 %v8760
    %v9552 = vunpack.c.l.b16 %v8761
    %v9553 = vunpack.c.l.b16 %v8762
    %v9554 = vunpack.c.l.b16 %v8763
    %v9555 = vunpack.c.l.b16 %v8764
    %v9556 = vunpack.c.l.b16 %v8765
    %v9557 = vunpack.c.l.b16 %v8766
    %v9558 = vunpack.c.l.b16 %v8767
    %v9559 = vunpack.c.l.b16 %v8768
    %v9560 = vunpack.c.l.b16 %v8769
    %v9561 = vunpack.c.l.b16 %v8770
    %v9562 = vunpack.c.l.b16 %v8771
    %v9563 = vunpack.c.l.b16 %v8772
    %v9564 = vunpack.c.l.b16 %v8773
    %v9565 = vunpack.c.l.b16 %v8774
    %v9566 = vunpack.c.l.b16 %v8775
    %v9567 = vunpack.c.l.b16 %v8776
    %v9568 = vunpack.c.l.b16 %v8777
    %v9569 = vunpack.c.l.b16 %v8778
    %v9570 = vunpack.c.l.b16 %v8779
    %v9571 = vunpack.c.l.b16 %v8780
    %v9572 = vunpack.c.l.b16 %v8781
    %v9573 = vunpack.c.l.b16 %v8782
    %v9574 = vunpack.c.l.b16 %v8783
    %v9575 = vunpack.c.l.b16 %v8784
    %v9576 = vunpack.c.l.b16 %v8785
    %v9577 = vunpack.c.l.b16 %v8786
    %v9578 = vunpack.c.l.b16 %v8787
    %v9579 = vunpack.c.l.b16 %v8788
    %v9580 = vunpack.c.l.b16 %v8789
    %v9581 = vunpack.c.l.b16 %v8790
    %v9582 = vunpack.c.l.b16 %v8791
    %v9583 = vunpack.c.l.b16 %v8792
    %v9584 = vunpack.c.l.b16 %v8793
    %v9585 = vunpack.c.l.b16 %v8794
    %v9586 = vunpack.c.l.b16 %v8795
    %v9587 = vunpack.c.l.b16 %v8796
    %v9588 = vunpack.c.l.b16 %v8797
    %v9589 = vunpack.c.l.b16 %v8798
    %v9590 = vunpack.c.l.b16 %v8799
    %v9591 = vunpack.c.l.b16 %v8800
    %v9592 = vunpack.c.l.b16 %v8801
    %v9593 = vunpack.c.l.b16 %v8802
    %v9594 = vunpack.c.l.b16 %v8803
    %v9595 = vunpack.c.l.b16 %v8804
    %v9596 = vunpack.c.l.b16 %v8805
    %v9597 = vunpack.c.l.b16 %v8806
    %v9598 = vunpack.c.l.b16 %v8807
    %v9599 = vunpack.c.l.b16 %v8808
    %v9600 = vunpack.c.l.b16 %v8809
    %v9601 = vunpack.c.l.b16 %v8810
    %v9602 = vunpack.c.l.b16 %v8811
    %v9603 = vunpack.c.l.b16 %v8812
    %v9604 = vunpack.c.l.b16 %v8813
    %v9605 = vunpack.c.l.b16 %v8814
    %v9606 = vunpack.c.l.b16 %v8815
    %v9607 = vunpack.c.l.b16 %v8816
    %v9608 = vunpack.c.l.b16 %v8817
    %v9609 = vunpack.c.l.b16 %v8818
    %v9610 = vunpack.c.l.b16 %v8819
    %v9611 = vunpack.c.l.b16 %v8820
    %v9612 = vunpack.c.l.b16 %v8821
    %v9613 = vunpack.c.l.b16 %v8822
    %v9614 = vunpack.c.l.b16 %v8823
    %v9615 = vunpack.c.l.b16 %v8824
    %v9616 = vunpack.c.l.b16 %v8825
    %v9617 = vunpack.c.l.b16 %v8826
    %v9618 = vunpack.c.l.b16 %v8827
    %v9619 = vunpack.c.l.b16 %v8828
    %v9620 = vunpack.c.l.b16 %v8829
    %v9621 = vunpack.c.l.b16 %v8830
    %v9622 = vunpack.c.l.b16 %v8831
    %v9623 = vunpack.c.l.b16 %v8832
    %v9624 = vunpack.c.l.b16 %v8833
    %v9625 = vunpack.c.l.b16 %v8834
    %v9626 = vunpack.c.l.b16 %v8835
    %v9627 = vunpack.c.l.b16 %v8836
    %v9628 = vunpack.c.l.b16 %v8837
    %v9629 = vunpack.c.l.b16 %v8838
    %v9630 = vunpack.c.l.b16 %v8839
    %v9631 = vunpack.c.l.b16 %v8840
    %v9632 = vunpack.c.l.b16 %v8841
    %v9633 = vunpack.c.l.b16 %v8842
    %v9634 = vunpack.c.l.b16 %v8843
    %v9635 = vunpack.c.l.b16 %v8844
    %v9636 = vunpack.c.l.b16 %v8845
    %v9637 = vunpack.c.l.b16 %v8846
    %v9638 = vunpack.c.l.b16 %v8847
    %v9639 = vunpack.c.l.b16 %v8848
    %v9640 = vunpack.c.l.b16 %v8849
    %v9641 = vunpack.c.l.b16 %v8850
    %v9642 = vunpack.c.l.b16 %v8851
    %v9643 = vunpack.c.l.b16 %v8852
    %v9644 = vunpack.c.l.b16 %v8853
    %v9645 = vunpack.c.l.b16 %v8854
    %v9646 = vunpack.c.l.b16 %v8855
    %v9647 = vunpack.c.l.b16 %v8856
    %v9648 = vpack.c.b16 %v9257, %v9256
    %v9649 = vpack.c.b16 %v9259, %v9258
    %v9650 = vpack.c.b16 %v9261, %v9260
    %v9651 = vpack.c.b16 %v9263, %v9262
    %v9652 = vpack.c.b16 %v9265, %v9264
    %v9653 = vpack.c.b16 %v9267, %v9266
    %v9654 = vpack.c.b16 %v9269, %v9268
    %v9655 = vpack.c.b16 %v9271, %v9270
    %v9656 = vpack.c.b16 %v9273, %v9272
    %v9657 = vpack.c.b16 %v9275, %v9274
    %v9658 = vpack.c.b16 %v9277, %v9276
    %v9659 = vpack.c.b16 %v9279, %v9278
    %v9660 = vpack.c.b16 %v9281, %v9280
    %v9661 = vpack.c.b16 %v9283, %v9282
    %v9662 = vpack.c.b16 %v9285, %v9284
    %v9663 = vpack.c.b16 %v9287, %v9286
    %v9664 = vpack.c.b16 %v9289, %v9288
    %v9665 = vpack.c.b16 %v9291, %v9290
    %v9666 = vpack.c.b16 %v9293, %v9292
    %v9667 = vpack.c.b16 %v9295, %v9294
    %v9668 = vpack.c.b16 %v9297, %v9296
    %v9669 = vpack.c.b16 %v9299, %v9298
    %v9670 = vpack.c.b16 %v9301, %v9300
    %v9671 = vpack.c.b16 %v9303, %v9302
    %v9672 = vpack.c.b16 %v9305, %v9304
    %v9673 = vpack.c.b16 %v9307, %v9306
    %v9674 = vpack.c.b16 %v9309, %v9308
    %v9675 = vpack.c.b16 %v9311, %v9310
    %v9676 = vpack.c.b16 %v9313, %v9312
    %v9677 = vpack.c.b16 %v9315, %v9314
    %v9678 = vpack.c.b16 %v9317, %v9316
    %v9679 = vpack.c.b16 %v9319, %v9318
    %v9680 = vpack.c.b16 %v9321, %v9320
    %v9681 = vpack.c.b16 %v9323, %v9322
    %v9682 = vpack.c.b16 %v9325, %v9324
    %v9683 = vpack.c.b16 %v9327, %v9326
    %v9684 = vpack.c.b16 %v9329, %v9328
    %v9685 = vpack.c.b16 %v9331, %v9330
    %v9686 = vpack.c.b16 %v9333, %v9332
    %v9687 = vpack.c.b16 %v9335, %v9334
    %v9688 = vpack.c.b16 %v9337, %v9336
    %v9689 = vpack.c.b16 %v9339, %v9338
    %v9690 = vpack.c.b16 %v9341, %v9340
    %v9691 = vpack.c.b16 %v9343, %v9342
    %v9692 = vpack.c.b16 %v9345, %v9344
    %v9693 = vpack.c.b16 %v9347, %v9346
    %v9694 = vpack.c.b16 %v9349, %v9348
    %v9695 = vpack.c.b16 %v9351, %v9350
    %v9696 = vpack.c.b16 %v9353, %v9352
    %v9697 = vpack.c.b16 %v9355, %v9354
    %v9698 = vpack.c.b16 %v9357, %v9356
    %v9699 = vpack.c.b16 %v9359, %v9358
    %v9700 = vpack.c.b16 %v9361, %v9360
    %v9701 = vpack.c.b16 %v9363, %v9362
    %v9702 = vpack.c.b16 %v9365, %v9364
    %v9703 = vpack.c.b16 %v9367, %v9366
    %v9704 = vpack.c.b16 %v9369, %v9368
    %v9705 = vpack.c.b16 %v9371, %v9370
    %v9706 = vpack.c.b16 %v9373, %v9372
    %v9707 = vpack.c.b16 %v9375, %v9374
    %v9708 = vpack.c.b16 %v9377, %v9376
    %v9709 = vpack.c.b16 %v9379, %v9378
    %v9710 = vpack.c.b16 %v9381, %v9380
    %v9711 = vpack.c.b16 %v9383, %v9382
    %v9712 = vpack.c.b16 %v9385, %v9384
    %v9713 = vpack.c.b16 %v9387, %v9386
    %v9714 = vpack.c.b16 %v9389, %v9388
    %v9715 = vpack.c.b16 %v9391, %v9390
    %v9716 = vpack.c.b16 %v9393, %v9392
    %v9717 = vpack.c.b16 %v9395, %v9394
    %v9718 = vpack.c.b16 %v9397, %v9396
    %v9719 = vpack.c.b16 %v9399, %v9398
    %v9720 = vpack.c.b16 %v9401, %v9400
    %v9721 = vpack.c.b16 %v9403, %v9402
    %v9722 = vpack.c.b16 %v9405, %v9404
    %v9723 = vpack.c.b16 %v9407, %v9406
    %v9724 = vpack.c.b16 %v9409, %v9408
    %v9725 = vpack.c.b16 %v9411, %v9410
    %v9726 = vpack.c.b16 %v9413, %v9412
    %v9727 = vpack.c.b16 %v9415, %v9414
    %v9728 = vpack.c.b16 %v9417, %v9416
    %v9729 = vpack.c.b16 %v9419, %v9418
    %v9730 = vpack.c.b16 %v9421, %v9420
    %v9731 = vpack.c.b16 %v9423, %v9422
    %v9732 = vpack.c.b16 %v9425, %v9424
    %v9733 = vpack.c.b16 %v9427, %v9426
    %v9734 = vpack.c.b16 %v9429, %v9428
    %v9735 = vpack.c.b16 %v9431, %v9430
    %v9736 = vpack.c.b16 %v9433, %v9432
    %v9737 = vpack.c.b16 %v9435, %v9434
    %v9738 = vpack.c.b16 %v9437, %v9436
    %v9739 = vpack.c.b16 %v9439, %v9438
    %v9740 = vpack.c.b16 %v9441, %v9440
    %v9741 = vpack.c.b16 %v9443, %v9442
    %v9742 = vpack.c.b16 %v9445, %v9444
    %v9743 = vpack.c.b16 %v9447, %v9446
    %v9744 = vpack.c.b16 %v9449, %v9448
    %v9745 = vpack.c.b16 %v9451, %v9450
    %v9746 = vpack.c.b16 %v9453, %v9452
    %v9747 = vpack.c.b16 %v9455, %v9454
    %v9748 = vpack.c.b16 %v9457, %v9456
    %v9749 = vpack.c.b16 %v9459, %v9458
    %v9750 = vpack.c.b16 %v9461, %v9460
    %v9751 = vpack.c.b16 %v9463, %v9462
    %v9752 = vpack.c.b16 %v9465, %v9464
    %v9753 = vpack.c.b16 %v9467, %v9466
    %v9754 = vpack.c.b16 %v9469, %v9468
    %v9755 = vpack.c.b16 %v9471, %v9470
    %v9756 = vpack.c.b16 %v9473, %v9472
    %v9757 = vpack.c.b16 %v9475, %v9474
    %v9758 = vpack.c.b16 %v9477, %v9476
    %v9759 = vpack.c.b16 %v9479, %v9478
    %v9760 = vpack.c.b16 %v9481, %v9480
    %v9761 = vpack.c.b16 %v9483, %v9482
    %v9762 = vpack.c.b16 %v9485, %v9484
    %v9763 = vpack.c.b16 %v9487, %v9486
    %v9764 = vpack.c.b16 %v9489, %v9488
    %v9765 = vpack.c.b16 %v9491, %v9490
    %v9766 = vpack.c.b16 %v9493, %v9492
    %v9767 = vpack.c.b16 %v9495, %v9494
    %v9768 = vpack.c.b16 %v9497, %v9496
    %v9769 = vpack.c.b16 %v9499, %v9498
    %v9770 = vpack.c.b16 %v9501, %v9500
    %v9771 = vpack.c.b16 %v9503, %v9502
    %v9772 = vpack.c.b16 %v9505, %v9504
    %v9773 = vpack.c.b16 %v9507, %v9506
    %v9774 = vpack.c.b16 %v9509, %v9508
    %v9775 = vpack.c.b16 %v9511, %v9510
    %v9776 = vpack.c.b16 %v9513, %v9512
    %v9777 = vpack.c.b16 %v9515, %v9514
    %v9778 = vpack.c.b16 %v9517, %v9516
    %v9779 = vpack.c.b16 %v9519, %v9518
    %v9780 = vpack.c.b16 %v9521, %v9520
    %v9781 = vpack.c.b16 %v9523, %v9522
    %v9782 = vpack.c.b16 %v9525, %v9524
    %v9783 = vpack.c.b16 %v9527, %v9526
    %v9784 = vpack.c.b16 %v9529, %v9528
    %v9785 = vpack.c.b16 %v9531, %v9530
    %v9786 = vpack.c.b16 %v9533, %v9532
    %v9787 = vpack.c.b16 %v9535, %v9534
    %v9788 = vpack.c.b16 %v9537, %v9536
    %v9789 = vpack.c.b16 %v9539, %v9538
    %v9790 = vpack.c.b16 %v9541, %v9540
    %v9791 = vpack.c.b16 %v9543, %v9542
    %v9792 = vpack.c.b16 %v9545, %v9544
    %v9793 = vpack.c.b16 %v9547, %v9546
    %v9794 = vpack.c.b16 %v9549, %v9548
    %v9795 = vpack.c.b16 %v9551, %v9550
    %v9796 = vpack.c.b16 %v9553, %v9552
    %v9797 = vpack.c.b16 %v9555, %v9554
    %v9798 = vpack.c.b16 %v9557, %v9556
    %v9799 = vpack.c.b16 %v9559, %v9558
    %v9800 = vpack.c.b16 %v9561, %v9560
    %v9801 = vpack.c.b16 %v9563, %v9562
    %v9802 = vpack.c.b16 %v9565, %v9564
    %v9803 = vpack.c.b16 %v9567, %v9566
    %v9804 = vpack.c.b16 %v9569, %v9568
    %v9805 = vpack.c.b16 %v9571, %v9570
    %v9806 = vpack.c.b16 %v9573, %v9572
    %v9807 = vpack.c.b16 %v9575, %v9574
    %v9808 = vpack.c.b16 %v9577, %v9576
    %v9809 = vpack.c.b16 %v9579, %v9578
    %v9810 = vpack.c.b16 %v9581, %v9580
    %v9811 = vpack.c.b16 %v9583, %v9582
    %v9812 = vpack.c.b16 %v9585, %v9584
    %v9813 = vpack.c.b16 %v9587, %v9586
    %v9814 = vpack.c.b16 %v9589, %v9588
    %v9815 = vpack.c.b16 %v9591, %v9590
    %v9816 = vpack.c.b16 %v9593, %v9592
    %v9817 = vpack.c.b16 %v9595, %v9594
    %v9818 = vpack.c.b16 %v9597, %v9596
    %v9819 = vpack.c.b16 %v9599, %v9598
    %v9820 = vpack.c.b16 %v9601, %v9600
    %v9821 = vpack.c.b16 %v9603, %v9602
    %v9822 = vpack.c.b16 %v9605, %v9604
    %v9823 = vpack.c.b16 %v9607, %v9606
    %v9824 = vpack.c.b16 %v9609, %v9608
    %v9825 = vpack.c.b16 %v9611, %v9610
    %v9826 = vpack.c.b16 %v9613, %v9612
    %v9827 = vpack.c.b16 %v9615, %v9614
    %v9828 = vpack.c.b16 %v9617, %v9616
    %v9829 = vpack.c.b16 %v9619, %v9618
    %v9830 = vpack.c.b16 %v9621, %v9620
    %v9831 = vpack.c.b16 %v9623, %v9622
    %v9832 = vpack.c.b16 %v9625, %v9624
    %v9833 = vpack.c.b16 %v9627, %v9626
    %v9834 = vpack.c.b16 %v9629, %v9628
    %v9835 = vpack.c.b16 %v9631, %v9630
    %v9836 = vpack.c.b16 %v9633, %v9632
    %v9837 = vpack.c.b16 %v9635, %v9634
    %v9838 = vpack.c.b16 %v9637, %v9636
    %v9839 = vpack.c.b16 %v9639, %v9638
    %v9840 = vpack.c.b16 %v9641, %v9640
    %v9841 = vpack.c.b16 %v9643, %v9642
    %v9842 = vpack.c.b16 %v9645, %v9644
    %v9843 = vpack.c.b16 %v9647, %v9646
    %v10041 = vsel %vm5722, %v8464, 0
    %10043 = vmatprep.subr.bf16.mxu0 0
    %10044 = vmatpush1.bf16.msra.mxu0 %v9648
    %10045 = vmatprep.subr.bf16.mxu0 0
    %10046 = vmatpush1.bf16.msra.mxu0 %v9649
    %10047 = vmatprep.subr.bf16.mxu0 0
    %10048 = vmatpush1.bf16.msra.mxu0 %v9650
    %10049 = vmatprep.subr.bf16.mxu0 0
    %10050 = vmatpush1.bf16.msra.mxu0 %v9651
    %10051 = vmatprep.subr.bf16.mxu0 0
    %10052 = vmatpush1.bf16.msra.mxu0 %v9652
    %10053 = vmatprep.subr.bf16.mxu0 0
    %10054 = vmatpush1.bf16.msra.mxu0 %v9653
    %10055 = vmatprep.subr.bf16.mxu0 0
    %10056 = vmatpush1.bf16.msra.mxu0 %v9654
    %10057 = vmatprep.subr.bf16.mxu0 0
    %10058 = vmatpush1.bf16.msra.mxu0 %v9655
    %10059 = vmatprep.subr.bf16.mxu0 0
    %10060 = vmatpush1.bf16.msra.mxu0 %v9656
    %10061 = vmatprep.subr.bf16.mxu0 0
    %10062 = vmatpush1.bf16.msra.mxu0 %v9657
    %10063 = vmatprep.subr.bf16.mxu0 0
    %10064 = vmatpush1.bf16.msra.mxu0 %v9658
    %10065 = vmatprep.subr.bf16.mxu0 0
    %10066 = vmatpush1.bf16.msra.mxu0 %v9659
    %10067 = vmatprep.subr.bf16.mxu0 0
    %10068 = vmatpush1.bf16.msra.mxu0 %v9660
    %10069 = vmatprep.subr.bf16.mxu0 0
    %10070 = vmatpush1.bf16.msra.mxu0 %v9661
    %10071 = vmatprep.subr.bf16.mxu0 0
    %10072 = vmatpush1.bf16.msra.mxu0 %v9662
    %10073 = vmatprep.subr.bf16.mxu0 0
    %10074 = vmatpush1.bf16.msra.mxu0 %v9663
    %10075 = vmatprep.mubr.bf16.mxu0 %v8441
    %10076 = vmatmul.mubr.bf16.gmra.mrb[0].mxu0 %v8440
    %v10077 = vpop.f32.mrb[0].mxu0
    %v10078 = vadd.f32 %v8862, %v10077
    %v10079 = vpop.f32.mrb[0].mxu0
    %v10080 = vpop.f32.mrb[0].mxu0
    %v10081 = vpop.f32.mrb[0].mxu0
    %10082 = vdwg.mxu0
    %10083 = vmatprep.subr.bf16.mxu0 0
    %10084 = vmatpush1.bf16.msra.mxu0 %v9664
    %10085 = vmatprep.subr.bf16.mxu0 0
    %10086 = vmatpush1.bf16.msra.mxu0 %v9665
    %10087 = vmatprep.subr.bf16.mxu0 0
    %10088 = vmatpush1.bf16.msra.mxu0 %v9666
    %10089 = vmatprep.subr.bf16.mxu0 0
    %10090 = vmatpush1.bf16.msra.mxu0 %v9667
    %10091 = vmatprep.subr.bf16.mxu0 0
    %10092 = vmatpush1.bf16.msra.mxu0 %v9668
    %10093 = vmatprep.subr.bf16.mxu0 0
    %10094 = vmatpush1.bf16.msra.mxu0 %v9669
    %10095 = vmatprep.subr.bf16.mxu0 0
    %10096 = vmatpush1.bf16.msra.mxu0 %v9670
    %10097 = vmatprep.subr.bf16.mxu0 0
    %10098 = vmatpush1.bf16.msra.mxu0 %v9671
    %10099 = vmatprep.subr.bf16.mxu0 0
    %10100 = vmatpush1.bf16.msra.mxu0 %v9672
    %10101 = vmatprep.subr.bf16.mxu0 0
    %10102 = vmatpush1.bf16.msra.mxu0 %v9673
    %10103 = vmatprep.subr.bf16.mxu0 0
    %10104 = vmatpush1.bf16.msra.mxu0 %v9674
    %10105 = vmatprep.subr.bf16.mxu0 0
    %10106 = vmatpush1.bf16.msra.mxu0 %v9675
    %10107 = vmatprep.subr.bf16.mxu0 0
    %10108 = vmatpush1.bf16.msra.mxu0 %v9676
    %10109 = vmatprep.subr.bf16.mxu0 0
    %10110 = vmatpush1.bf16.msra.mxu0 %v9677
    %10111 = vmatprep.subr.bf16.mxu0 0
    %10112 = vmatpush1.bf16.msra.mxu0 %v9678
    %10113 = vmatprep.subr.bf16.mxu0 0
    %10114 = vmatpush1.bf16.msra.mxu0 %v9679
    %10115 = vmatprep.mubr.bf16.mxu0 %v8443
    %10116 = vmatmul.mubr.bf16.gmra.mrb[0].mxu0 %v8442
    %v10117 = vpop.f32.mrb[0].mxu0
    %v10118 = vadd.f32 %v10078, %v10117
    %v10119 = vpop.f32.mrb[0].mxu0
    %v10120 = vpop.f32.mrb[0].mxu0
    %v10121 = vpop.f32.mrb[0].mxu0
    %10122 = vdwg.mxu0
    %10123 = vmatprep.subr.bf16.mxu0 0
    %10124 = vmatpush1.bf16.msra.mxu0 %v9680
    %10125 = vmatprep.subr.bf16.mxu0 0
    %10126 = vmatpush1.bf16.msra.mxu0 %v9681
    %10127 = vmatprep.subr.bf16.mxu0 0
    %10128 = vmatpush1.bf16.msra.mxu0 %v9682
    %10129 = vmatprep.subr.bf16.mxu0 0
    %10130 = vmatpush1.bf16.msra.mxu0 %v9683
    %10131 = vmatprep.subr.bf16.mxu0 0
    %10132 = vmatpush1.bf16.msra.mxu0 %v9684
    %10133 = vmatprep.subr.bf16.mxu0 0
    %10134 = vmatpush1.bf16.msra.mxu0 %v9685
    %10135 = vmatprep.subr.bf16.mxu0 0
    %10136 = vmatpush1.bf16.msra.mxu0 %v9686
    %10137 = vmatprep.subr.bf16.mxu0 0
    %10138 = vmatpush1.bf16.msra.mxu0 %v9687
    %10139 = vmatprep.subr.bf16.mxu0 0
    %10140 = vmatpush1.bf16.msra.mxu0 %v9688
    %10141 = vmatprep.subr.bf16.mxu0 0
    %10142 = vmatpush1.bf16.msra.mxu0 %v9689
    %10143 = vmatprep.subr.bf16.mxu0 0
    %10144 = vmatpush1.bf16.msra.mxu0 %v9690
    %10145 = vmatprep.subr.bf16.mxu0 0
    %10146 = vmatpush1.bf16.msra.mxu0 %v9691
    %10147 = vmatprep.subr.bf16.mxu0 0
    %10148 = vmatpush1.bf16.msra.mxu0 %v9692
    %10149 = vmatprep.subr.bf16.mxu0 0
    %10150 = vmatpush1.bf16.msra.mxu0 %v9693
    %10151 = vmatprep.subr.bf16.mxu0 0
    %10152 = vmatpush1.bf16.msra.mxu0 %v9694
    %10153 = vmatprep.subr.bf16.mxu0 0
    %10154 = vmatpush1.bf16.msra.mxu0 %v9695
    %10155 = vmatprep.mubr.bf16.mxu0 %v8445
    %10156 = vmatmul.mubr.bf16.gmra.mrb[0].mxu0 %v8444
    %v10157 = vpop.f32.mrb[0].mxu0
    %v10158 = vadd.f32 %v10118, %v10157
    %v10159 = vpop.f32.mrb[0].mxu0
    %v10160 = vpop.f32.mrb[0].mxu0
    %v10161 = vpop.f32.mrb[0].mxu0
    %10162 = vdwg.mxu0
    %10163 = vmatprep.subr.bf16.mxu0 0
    %10164 = vmatpush1.bf16.msra.mxu0 %v9696
    %10165 = vmatprep.subr.bf16.mxu0 0
    %10166 = vmatpush1.bf16.msra.mxu0 %v9697
    %10167 = vmatprep.subr.bf16.mxu0 0
    %10168 = vmatpush1.bf16.msra.mxu0 %v9698
    %10169 = vmatprep.subr.bf16.mxu0 0
    %10170 = vmatpush1.bf16.msra.mxu0 %v9699
    %10171 = vmatprep.subr.bf16.mxu0 0
    %10172 = vmatpush1.bf16.msra.mxu0 %v9700
    %10173 = vmatprep.subr.bf16.mxu0 0
    %10174 = vmatpush1.bf16.msra.mxu0 %v9701
    %10175 = vmatprep.subr.bf16.mxu0 0
    %10176 = vmatpush1.bf16.msra.mxu0 %v9702
    %10177 = vmatprep.subr.bf16.mxu0 0
    %10178 = vmatpush1.bf16.msra.mxu0 %v9703
    %10179 = vmatprep.subr.bf16.mxu0 0
    %10180 = vmatpush1.bf16.msra.mxu0 %v9704
    %10181 = vmatprep.subr.bf16.mxu0 0
    %10182 = vmatpush1.bf16.msra.mxu0 %v9705
    %10183 = vmatprep.subr.bf16.mxu0 0
    %10184 = vmatpush1.bf16.msra.mxu0 %v9706
    %10185 = vmatprep.subr.bf16.mxu0 0
    %10186 = vmatpush1.bf16.msra.mxu0 %v9707
    %10187 = vmatprep.subr.bf16.mxu0 0
    %10188 = vmatpush1.bf16.msra.mxu0 %v9708
    %10189 = vmatprep.subr.bf16.mxu0 0
    %10190 = vmatpush1.bf16.msra.mxu0 %v9709
    %10191 = vmatprep.subr.bf16.mxu0 0
    %10192 = vmatpush1.bf16.msra.mxu0 %v9710
    %10193 = vmatprep.subr.bf16.mxu0 0
    %10194 = vmatpush1.bf16.msra.mxu0 %v9711
    %10195 = vmatprep.mubr.bf16.mxu0 %v8447
    %10196 = vmatmul.mubr.bf16.gmra.mrb[0].mxu0 %v8446
    %v10197 = vpop.f32.mrb[0].mxu0
    %v10198 = vadd.f32 %v10158, %v10197
    %v10199 = vpop.f32.mrb[0].mxu0
    %v10200 = vpop.f32.mrb[0].mxu0
    %v10201 = vpop.f32.mrb[0].mxu0
    %10202 = vdwg.mxu0
    %10203 = vmatprep.subr.bf16.mxu0 0
    %10204 = vmatpush1.bf16.msra.mxu0 %v9712
    %10205 = vmatprep.subr.bf16.mxu0 0
    %10206 = vmatpush1.bf16.msra.mxu0 %v9713
    %10207 = vmatprep.subr.bf16.mxu0 0
    %10208 = vmatpush1.bf16.msra.mxu0 %v9714
    %10209 = vmatprep.subr.bf16.mxu0 0
    %10210 = vmatpush1.bf16.msra.mxu0 %v9715
    %10211 = vmatprep.subr.bf16.mxu0 0
    %10212 = vmatpush1.bf16.msra.mxu0 %v9716
    %10213 = vmatprep.subr.bf16.mxu0 0
    %10214 = vmatpush1.bf16.msra.mxu0 %v9717
    %10215 = vmatprep.subr.bf16.mxu0 0
    %10216 = vmatpush1.bf16.msra.mxu0 %v9718
    %10217 = vmatprep.subr.bf16.mxu0 0
    %10218 = vmatpush1.bf16.msra.mxu0 %v9719
    %10219 = vmatprep.subr.bf16.mxu0 0
    %10220 = vmatpush1.bf16.msra.mxu0 %v9720
    %10221 = vmatprep.subr.bf16.mxu0 0
    %10222 = vmatpush1.bf16.msra.mxu0 %v9721
    %10223 = vmatprep.subr.bf16.mxu0 0
    %10224 = vmatpush1.bf16.msra.mxu0 %v9722
    %10225 = vmatprep.subr.bf16.mxu0 0
    %10226 = vmatpush1.bf16.msra.mxu0 %v9723
    %10227 = vmatprep.subr.bf16.mxu0 0
    %10228 = vmatpush1.bf16.msra.mxu0 %v9724
    %10229 = vmatprep.subr.bf16.mxu0 0
    %10230 = vmatpush1.bf16.msra.mxu0 %v9725
    %10231 = vmatprep.subr.bf16.mxu0 0
    %10232 = vmatpush1.bf16.msra.mxu0 %v9726
    %10233 = vmatprep.subr.bf16.mxu0 0
    %10234 = vmatpush1.bf16.msra.mxu0 %v9727
    %10235 = vmatprep.mubr.bf16.mxu0 %v8449
    %10236 = vmatmul.mubr.bf16.gmra.mrb[0].mxu0 %v8448
    %v10237 = vpop.f32.mrb[0].mxu0
    %v10238 = vadd.f32 %v10198, %v10237
    %v10239 = vpop.f32.mrb[0].mxu0
    %v10240 = vpop.f32.mrb[0].mxu0
    %v10241 = vpop.f32.mrb[0].mxu0
    %10242 = vdwg.mxu0
    %10243 = vmatprep.subr.bf16.mxu0 0
    %10244 = vmatpush1.bf16.msra.mxu0 %v9728
    %10245 = vmatprep.subr.bf16.mxu0 0
    %10246 = vmatpush1.bf16.msra.mxu0 %v9729
    %10247 = vmatprep.subr.bf16.mxu0 0
    %10248 = vmatpush1.bf16.msra.mxu0 %v9730
    %10249 = vmatprep.subr.bf16.mxu0 0
    %10250 = vmatpush1.bf16.msra.mxu0 %v9731
    %10251 = vmatprep.subr.bf16.mxu0 0
    %10252 = vmatpush1.bf16.msra.mxu0 %v9732
    %10253 = vmatprep.subr.bf16.mxu0 0
    %10254 = vmatpush1.bf16.msra.mxu0 %v9733
    %10255 = vmatprep.subr.bf16.mxu0 0
    %10256 = vmatpush1.bf16.msra.mxu0 %v9734
    %10257 = vmatprep.subr.bf16.mxu0 0
    %10258 = vmatpush1.bf16.msra.mxu0 %v9735
    %10259 = vmatprep.subr.bf16.mxu0 0
    %10260 = vmatpush1.bf16.msra.mxu0 %v9736
    %10261 = vmatprep.subr.bf16.mxu0 0
    %10262 = vmatpush1.bf16.msra.mxu0 %v9737
    %10263 = vmatprep.subr.bf16.mxu0 0
    %10264 = vmatpush1.bf16.msra.mxu0 %v9738
    %10265 = vmatprep.subr.bf16.mxu0 0
    %10266 = vmatpush1.bf16.msra.mxu0 %v9739
    %10267 = vmatprep.subr.bf16.mxu0 0
    %10268 = vmatpush1.bf16.msra.mxu0 %v9740
    %10269 = vmatprep.subr.bf16.mxu0 0
    %10270 = vmatpush1.bf16.msra.mxu0 %v9741
    %10271 = vmatprep.subr.bf16.mxu0 0
    %10272 = vmatpush1.bf16.msra.mxu0 %v9742
    %10273 = vmatprep.subr.bf16.mxu0 0
    %10274 = vmatpush1.bf16.msra.mxu0 %v9743
    %10275 = vmatprep.mubr.bf16.mxu0 %v8451
    %10276 = vmatmul.mubr.bf16.gmra.mrb[0].mxu0 %v8450
    %v10277 = vpop.f32.mrb[0].mxu0
    %v10278 = vadd.f32 %v10238, %v10277
    %v10279 = vpop.f32.mrb[0].mxu0
    %v10280 = vpop.f32.mrb[0].mxu0
    %v10281 = vpop.f32.mrb[0].mxu0
    %10282 = vdwg.mxu0
    %10283 = vmatprep.subr.bf16.mxu0 0
    %10284 = vmatpush1.bf16.msra.mxu0 %v9744
    %10285 = vmatprep.subr.bf16.mxu0 0
    %10286 = vmatpush1.bf16.msra.mxu0 %v9745
    %10287 = vmatprep.subr.bf16.mxu0 0
    %10288 = vmatpush1.bf16.msra.mxu0 %v9746
    %10289 = vmatprep.subr.bf16.mxu0 0
    %10290 = vmatpush1.bf16.msra.mxu0 %v9747
    %10291 = vmatprep.subr.bf16.mxu0 0
    %10292 = vmatpush1.bf16.msra.mxu0 %v9748
    %10293 = vmatprep.subr.bf16.mxu0 0
    %10294 = vmatpush1.bf16.msra.mxu0 %v9749
    %10295 = vmatprep.subr.bf16.mxu0 0
    %10296 = vmatpush1.bf16.msra.mxu0 %v9750
    %10297 = vmatprep.subr.bf16.mxu0 0
    %10298 = vmatpush1.bf16.msra.mxu0 %v9751
    %10299 = vmatprep.subr.bf16.mxu0 0
    %10300 = vmatpush1.bf16.msra.mxu0 %v9752
    %10301 = vmatprep.subr.bf16.mxu0 0
    %10302 = vmatpush1.bf16.msra.mxu0 %v9753
    %10303 = vmatprep.subr.bf16.mxu0 0
    %10304 = vmatpush1.bf16.msra.mxu0 %v9754
    %10305 = vmatprep.subr.bf16.mxu0 0
    %10306 = vmatpush1.bf16.msra.mxu0 %v9755
    %10307 = vmatprep.subr.bf16.mxu0 0
    %10308 = vmatpush1.bf16.msra.mxu0 %v9756
    %10309 = vmatprep.subr.bf16.mxu0 0
    %10310 = vmatpush1.bf16.msra.mxu0 %v9757
    %10311 = vmatprep.subr.bf16.mxu0 0
    %10312 = vmatpush1.bf16.msra.mxu0 %v9758
    %10313 = vmatprep.subr.bf16.mxu0 0
    %10314 = vmatpush1.bf16.msra.mxu0 %v9759
    %10315 = vmatprep.mubr.bf16.mxu0 %v8453
    %10316 = vmatmul.mubr.bf16.gmra.mrb[0].mxu0 %v8452
    %v10317 = vpop.f32.mrb[0].mxu0
    %v10318 = vadd.f32 %v10278, %v10317
    %v10319 = vpop.f32.mrb[0].mxu0
    %v10320 = vpop.f32.mrb[0].mxu0
    %v10321 = vpop.f32.mrb[0].mxu0
    %10322 = vdwg.mxu0
    %10323 = vmatprep.subr.bf16.mxu0 0
    %10324 = vmatpush1.bf16.msra.mxu0 %v9760
    %10325 = vmatprep.subr.bf16.mxu0 0
    %10326 = vmatpush1.bf16.msra.mxu0 %v9761
    %10327 = vmatprep.subr.bf16.mxu0 0
    %10328 = vmatpush1.bf16.msra.mxu0 %v9762
    %10329 = vmatprep.subr.bf16.mxu0 0
    %10330 = vmatpush1.bf16.msra.mxu0 %v9763
    %10331 = vmatprep.subr.bf16.mxu0 0
    %10332 = vmatpush1.bf16.msra.mxu0 %v9764
    %10333 = vmatprep.subr.bf16.mxu0 0
    %10334 = vmatpush1.bf16.msra.mxu0 %v9765
    %10335 = vmatprep.subr.bf16.mxu0 0
    %10336 = vmatpush1.bf16.msra.mxu0 %v9766
    %10337 = vmatprep.subr.bf16.mxu0 0
    %10338 = vmatpush1.bf16.msra.mxu0 %v9767
    %10339 = vmatprep.subr.bf16.mxu0 0
    %10340 = vmatpush1.bf16.msra.mxu0 %v9768
    %10341 = vmatprep.subr.bf16.mxu0 0
    %10342 = vmatpush1.bf16.msra.mxu0 %v9769
    %10343 = vmatprep.subr.bf16.mxu0 0
    %10344 = vmatpush1.bf16.msra.mxu0 %v9770
    %10345 = vmatprep.subr.bf16.mxu0 0
    %10346 = vmatpush1.bf16.msra.mxu0 %v9771
    %10347 = vmatprep.subr.bf16.mxu0 0
    %10348 = vmatpush1.bf16.msra.mxu0 %v9772
    %10349 = vmatprep.subr.bf16.mxu0 0
    %10350 = vmatpush1.bf16.msra.mxu0 %v9773
    %10351 = vmatprep.subr.bf16.mxu0 0
    %10352 = vmatpush1.bf16.msra.mxu0 %v9774
    %10353 = vmatprep.subr.bf16.mxu0 0
    %10354 = vmatpush1.bf16.msra.mxu0 %v9775
    %10355 = vmatprep.mubr.bf16.mxu0 %v8455
    %10356 = vmatmul.mubr.bf16.gmra.mrb[0].mxu0 %v8454
    %v10357 = vpop.f32.mrb[0].mxu0
    %v10358 = vadd.f32 %v10318, %v10357
    %v10359 = vpop.f32.mrb[0].mxu0
    %v10360 = vpop.f32.mrb[0].mxu0
    %v10361 = vpop.f32.mrb[0].mxu0
    %10362 = vdwg.mxu0
    %10363 = vmatprep.subr.bf16.mxu0 0
    %10364 = vmatpush1.bf16.msra.mxu0 %v9776
    %10365 = vmatprep.subr.bf16.mxu0 0
    %10366 = vmatpush1.bf16.msra.mxu0 %v9777
    %10367 = vmatprep.subr.bf16.mxu0 0
    %10368 = vmatpush1.bf16.msra.mxu0 %v9778
    %10369 = vmatprep.subr.bf16.mxu0 0
    %10370 = vmatpush1.bf16.msra.mxu0 %v9779
    %10371 = vmatprep.subr.bf16.mxu0 0
    %10372 = vmatpush1.bf16.msra.mxu0 %v9780
    %10373 = vmatprep.subr.bf16.mxu0 0
    %10374 = vmatpush1.bf16.msra.mxu0 %v9781
    %10375 = vmatprep.subr.bf16.mxu0 0
    %10376 = vmatpush1.bf16.msra.mxu0 %v9782
    %10377 = vmatprep.subr.bf16.mxu0 0
    %10378 = vmatpush1.bf16.msra.mxu0 %v9783
    %10379 = vmatprep.subr.bf16.mxu0 0
    %10380 = vmatpush1.bf16.msra.mxu0 %v9784
    %10381 = vmatprep.subr.bf16.mxu0 0
    %10382 = vmatpush1.bf16.msra.mxu0 %v9785
    %10383 = vmatprep.subr.bf16.mxu0 0
    %10384 = vmatpush1.bf16.msra.mxu0 %v9786
    %10385 = vmatprep.subr.bf16.mxu0 0
    %10386 = vmatpush1.bf16.msra.mxu0 %v9787
    %10387 = vmatprep.subr.bf16.mxu0 0
    %10388 = vmatpush1.bf16.msra.mxu0 %v9788
    %10389 = vmatprep.subr.bf16.mxu0 0
    %10390 = vmatpush1.bf16.msra.mxu0 %v9789
    %10391 = vmatprep.subr.bf16.mxu0 0
    %10392 = vmatpush1.bf16.msra.mxu0 %v9790
    %10393 = vmatprep.subr.bf16.mxu0 0
    %10394 = vmatpush1.bf16.msra.mxu0 %v9791
    %10395 = vmatprep.mubr.bf16.mxu0 %v8457
    %10396 = vmatmul.mubr.bf16.gmra.mrb[0].mxu0 %v8456
    %v10397 = vpop.f32.mrb[0].mxu0
    %v10398 = vadd.f32 %v10358, %v10397
    %v10399 = vpop.f32.mrb[0].mxu0
    %v10400 = vpop.f32.mrb[0].mxu0
    %v10401 = vpop.f32.mrb[0].mxu0
    %10402 = vdwg.mxu0
    %10403 = vmatprep.subr.bf16.mxu0 0
    %10404 = vmatpush1.bf16.msra.mxu0 %v9792
    %10405 = vmatprep.subr.bf16.mxu0 0
    %10406 = vmatpush1.bf16.msra.mxu0 %v9793
    %10407 = vmatprep.subr.bf16.mxu0 0
    %10408 = vmatpush1.bf16.msra.mxu0 %v9794
    %10409 = vmatprep.subr.bf16.mxu0 0
    %10410 = vmatpush1.bf16.msra.mxu0 %v9795
    %10411 = vmatprep.subr.bf16.mxu0 0
    %10412 = vmatpush1.bf16.msra.mxu0 %v9796
    %10413 = vmatprep.subr.bf16.mxu0 0
    %10414 = vmatpush1.bf16.msra.mxu0 %v9797
    %10415 = vmatprep.subr.bf16.mxu0 0
    %10416 = vmatpush1.bf16.msra.mxu0 %v9798
    %10417 = vmatprep.subr.bf16.mxu0 0
    %10418 = vmatpush1.bf16.msra.mxu0 %v9799
    %10419 = vmatprep.subr.bf16.mxu0 0
    %10420 = vmatpush1.bf16.msra.mxu0 %v9800
    %10421 = vmatprep.subr.bf16.mxu0 0
    %10422 = vmatpush1.bf16.msra.mxu0 %v9801
    %10423 = vmatprep.subr.bf16.mxu0 0
    %10424 = vmatpush1.bf16.msra.mxu0 %v9802
    %10425 = vmatprep.subr.bf16.mxu0 0
    %10426 = vmatpush1.bf16.msra.mxu0 %v9803
    %10427 = vmatprep.subr.bf16.mxu0 0
    %10428 = vmatpush1.bf16.msra.mxu0 %v9804
    %10429 = vmatprep.subr.bf16.mxu0 0
    %10430 = vmatpush1.bf16.msra.mxu0 %v9805
    %10431 = vmatprep.subr.bf16.mxu0 0
    %10432 = vmatpush1.bf16.msra.mxu0 %v9806
    %10433 = vmatprep.subr.bf16.mxu0 0
    %10434 = vmatpush1.bf16.msra.mxu0 %v9807
    %10435 = vmatprep.mubr.bf16.mxu0 %v8459
    %10436 = vmatmul.mubr.bf16.gmra.mrb[0].mxu0 %v8458
    %v10437 = vpop.f32.mrb[0].mxu0
    %v10438 = vadd.f32 %v10398, %v10437
    %v10439 = vpop.f32.mrb[0].mxu0
    %v10440 = vpop.f32.mrb[0].mxu0
    %v10441 = vpop.f32.mrb[0].mxu0
    %10442 = vdwg.mxu0
    %10443 = vmatprep.subr.bf16.mxu0 0
    %10444 = vmatpush1.bf16.msra.mxu0 %v9808
    %10445 = vmatprep.subr.bf16.mxu0 0
    %10446 = vmatpush1.bf16.msra.mxu0 %v9809
    %10447 = vmatprep.subr.bf16.mxu0 0
    %10448 = vmatpush1.bf16.msra.mxu0 %v9810
    %10449 = vmatprep.subr.bf16.mxu0 0
    %10450 = vmatpush1.bf16.msra.mxu0 %v9811
    %10451 = vmatprep.subr.bf16.mxu0 0
    %10452 = vmatpush1.bf16.msra.mxu0 %v9812
    %10453 = vmatprep.subr.bf16.mxu0 0
    %10454 = vmatpush1.bf16.msra.mxu0 %v9813
    %10455 = vmatprep.subr.bf16.mxu0 0
    %10456 = vmatpush1.bf16.msra.mxu0 %v9814
    %10457 = vmatprep.subr.bf16.mxu0 0
    %10458 = vmatpush1.bf16.msra.mxu0 %v9815
    %10459 = vmatprep.subr.bf16.mxu0 0
    %10460 = vmatpush1.bf16.msra.mxu0 %v9816
    %10461 = vmatprep.subr.bf16.mxu0 0
    %10462 = vmatpush1.bf16.msra.mxu0 %v9817
    %10463 = vmatprep.subr.bf16.mxu0 0
    %10464 = vmatpush1.bf16.msra.mxu0 %v9818
    %10465 = vmatprep.subr.bf16.mxu0 0
    %10466 = vmatpush1.bf16.msra.mxu0 %v9819
    %10467 = vmatprep.subr.bf16.mxu0 0
    %10468 = vmatpush1.bf16.msra.mxu0 %v9820
    %10469 = vmatprep.subr.bf16.mxu0 0
    %10470 = vmatpush1.bf16.msra.mxu0 %v9821
    %10471 = vmatprep.subr.bf16.mxu0 0
    %10472 = vmatpush1.bf16.msra.mxu0 %v9822
    %10473 = vmatprep.subr.bf16.mxu0 0
    %10474 = vmatpush1.bf16.msra.mxu0 %v9823
    %10475 = vmatprep.mubr.bf16.mxu0 %v8461
    %10476 = vmatmul.mubr.bf16.gmra.mrb[0].mxu0 %v8460
    %v10477 = vpop.f32.mrb[0].mxu0
    %v10478 = vadd.f32 %v10438, %v10477
    %v10479 = vpop.f32.mrb[0].mxu0
    %v10480 = vpop.f32.mrb[0].mxu0
    %v10481 = vpop.f32.mrb[0].mxu0
    %10482 = vdwg.mxu0
    %10483 = vmatprep.subr.bf16.mxu0 0
    %10484 = vmatpush1.bf16.msra.mxu0 %v9824
    %10485 = vmatprep.subr.bf16.mxu0 0
    %10486 = vmatpush1.bf16.msra.mxu0 %v9825
    %10487 = vmatprep.subr.bf16.mxu0 0
    %10488 = vmatpush1.bf16.msra.mxu0 %v9826
    %10489 = vmatprep.subr.bf16.mxu0 0
    %10490 = vmatpush1.bf16.msra.mxu0 %v9827
    %10491 = vmatprep.subr.bf16.mxu0 0
    %10492 = vmatpush1.bf16.msra.mxu0 %v9828
    %10493 = vmatprep.subr.bf16.mxu0 0
    %10494 = vmatpush1.bf16.msra.mxu0 %v9829
    %10495 = vmatprep.subr.bf16.mxu0 0
    %10496 = vmatpush1.bf16.msra.mxu0 %v9830
    %10497 = vmatprep.subr.bf16.mxu0 0
    %10498 = vmatpush1.bf16.msra.mxu0 %v9831
    %10499 = vmatprep.subr.bf16.mxu0 0
    %10500 = vmatpush1.bf16.msra.mxu0 %v9832
    %10501 = vmatprep.subr.bf16.mxu0 0
    %10502 = vmatpush1.bf16.msra.mxu0 %v9833
    %10503 = vmatprep.subr.bf16.mxu0 0
    %10504 = vmatpush1.bf16.msra.mxu0 %v9834
    %10505 = vmatprep.subr.bf16.mxu0 0
    %10506 = vmatpush1.bf16.msra.mxu0 %v9835
    %10507 = vmatprep.subr.bf16.mxu0 0
    %10508 = vmatpush1.bf16.msra.mxu0 %v9836
    %10509 = vmatprep.subr.bf16.mxu0 0
    %10510 = vmatpush1.bf16.msra.mxu0 %v9837
    %10511 = vmatprep.subr.bf16.mxu0 0
    %10512 = vmatpush1.bf16.msra.mxu0 %v9838
    %10513 = vmatprep.subr.bf16.mxu0 0
    %10514 = vmatpush1.bf16.msra.mxu0 %v9839
    %10515 = vmatprep.mubr.bf16.mxu0 %v8463
    %10516 = vmatmul.mubr.bf16.gmra.mrb[0].mxu0 %v8462
    %v10517 = vpop.f32.mrb[0].mxu0
    %v10518 = vadd.f32 %v10478, %v10517
    %v10519 = vpop.f32.mrb[0].mxu0
    %v10520 = vpop.f32.mrb[0].mxu0
    %v10521 = vpop.f32.mrb[0].mxu0
    %10522 = vdwg.mxu0
    %10523 = vmatprep.subr.bf16.mxu0 0
    %10524 = vmatpush1.bf16.msra.mxu0 %v9840
    %10525 = vmatprep.subr.bf16.mxu0 0
    %10526 = vmatpush1.bf16.msra.mxu0 %v9841
    %10527 = vmatprep.subr.bf16.mxu0 0
    %10528 = vmatpush1.bf16.msra.mxu0 %v9842
    %10529 = vmatprep.subr.bf16.mxu0 0
    %10530 = vmatpush1.bf16.msra.mxu0 %v9843
    %10531 = vmatprep.subr.bf16.mxu0 0
    %10532 = vmatpush1.bf16.msra.mxu0 0
    %10533 = vmatprep.subr.bf16.mxu0 0
    %10534 = vmatpush1.bf16.msra.mxu0 0
    %10535 = vmatprep.subr.bf16.mxu0 0
    %10536 = vmatpush1.bf16.msra.mxu0 0
    %10537 = vmatprep.subr.bf16.mxu0 0
    %10538 = vmatpush1.bf16.msra.mxu0 0
    %10539 = vmatprep.subr.bf16.mxu0 0
    %10540 = vmatpush1.bf16.msra.mxu0 0
    %10541 = vmatprep.subr.bf16.mxu0 0
    %10542 = vmatpush1.bf16.msra.mxu0 0
    %10543 = vmatprep.subr.bf16.mxu0 0
    %10544 = vmatpush1.bf16.msra.mxu0 0
    %10545 = vmatprep.subr.bf16.mxu0 0
    %10546 = vmatpush1.bf16.msra.mxu0 0
    %10547 = vmatprep.subr.bf16.mxu0 0
    %10548 = vmatpush1.bf16.msra.mxu0 0
    %10549 = vmatprep.subr.bf16.mxu0 0
    %10550 = vmatpush1.bf16.msra.mxu0 0
    %10551 = vmatprep.subr.bf16.mxu0 0
    %10552 = vmatpush1.bf16.msra.mxu0 0
    %10553 = vmatprep.subr.bf16.mxu0 0
    %10554 = vmatpush1.bf16.msra.mxu0 0
    %10555 = vmatprep.mubr.bf16.mxu0 0
    %10556 = vmatmul.mubr.bf16.gmra.mrb[0].mxu0 %v10041
    %v10557 = vpop.f32.mrb[0].mxu0
    %v10558 = vadd.f32 %v10518, %v10557
    %v10559 = vpop.f32.mrb[0].mxu0
    %v10560 = vpop.f32.mrb[0].mxu0
    %v10561 = vpop.f32.mrb[0].mxu0
    %10562 = vdwg.mxu0
    %vm10563 = vcmask 74752
    %10564 = vst.msk [vmem:[#allocation11] sm:$0x3] %vm10563, %v10558
    // Predicated region
    $region50: #{cnn_forward.1} parent=1 // pred_check
      _
    $region51: #{cnn_forward.1} parent=1 // pred_check_branch
      %10566 = sbr.rel (0) target = $region53
    $region52: #{cnn_forward.1} parent=1 // pred_region
      %s10568 = ssub.s32 32, 32
      %10569 = vsyncadd [#allocation4], %s10568
      %s10571 = sshll.u32 [#allocation11], 4
      %s10572 = int_to_ptr.vmem [resolvable:$true] %s10571
      %10574 = dma.vmem_to_hbm [thread:$0]  %s10572, 32, %s7, [#allocation4]
    $region53: #{cnn_forward.1} parent=1 // pred_fallthru
      _
    // Predicated region
    $region54: #{cnn_forward.1} parent=1 // pred_check
      _
    $region55: #{cnn_forward.1} parent=1 // pred_check_branch
      %10576 = sbr.rel (0) target = $region57
    $region56: #{cnn_forward.1} parent=1 // pred_region
      %10577 = dma.done [#allocation4], 32
    $region57: #{cnn_forward.1} parent=1 // pred_fallthru
      _
    %10578 = vsyncpa [#allocation3], 1
    %10579 = vsyncpa [#allocation6], 1
    %10580 = vsyncpa [#allocation9], 1
    %10581 = vsyncpa [#allocation4], 1

</llo_original>
